<compile_context>
chip_gen: v7x
topology: tpu7x:2x2x1
jax: 0.10.0
libtpu: 0.0.40
codegen_flags: <defaults>
</compile_context>

<pallas_src>
import functools

import jax
import jax.numpy as jnp
from jax.experimental import pallas as pl
from jax.experimental.pallas import tpu as pltpu


def _round_up(n, m):
    return ((n + m - 1) // m) * m


@functools.lru_cache(maxsize=None)
def _vmem_limit_bytes():
    """Generation-aware VMEM budget (leave headroom for compiler scratch)."""
    try:
        cap = pltpu.get_tpu_info().vmem_capacity_bytes
    except Exception:
        return 48 * 1024 * 1024
    if cap <= 64 * 1024 * 1024:                       # v7x-class (64 MiB)
        return cap - 8 * 1024 * 1024
    return min(cap - 32 * 1024 * 1024, 96 * 1024 * 1024)  # v5e / v6e (128 MiB)


def _compiler_params(n_parallel_axes):
    return pltpu.CompilerParams(
        dimension_semantics=("parallel",) * n_parallel_axes,
        vmem_limit_bytes=_vmem_limit_bytes(),
    )


# --------------------------- Pallas kernels ---------------------------------

def _conv_bn_relu_kernel(stack_ref, w_ref, shift_ref, mask_ref, o_ref,
                         *, kH, kW, Fp, win, off):
    """One dense-block layer on the flattened padded stack.

    stack_ref : (1, C, 1, L)        bf16  flattened padded dense stack (read)
    w_ref     : (kH*kW, gr, C)      bf16  per-tap conv weights, BN scale folded
    shift_ref : (gr, 1)             f32   folded BN shift (+ conv bias)
    mask_ref  : (1, win)            f32   1.0 on valid F columns, 0.0 on pad
    o_ref     : (1, gr, 1, L)       bf16  this layer's channel slice of stack
    """
    acc = None
    for dh in range(kH):
        for dw in range(kW):
            t = dh * kW + dw
            start = dh * Fp + dw
            tap = stack_ref[0, :, 0, start:start + win]          # (C, win) bf16
            part = jax.lax.dot_general(                          # (gr, win) f32
                w_ref[t], tap, (((1,), (0,)), ((), ())),
                preferred_element_type=jnp.float32)
            acc = part if acc is None else acc + part
    # f32 epilogue (BN shift + ReLU), masked so the F-padding columns stay 0.
    y = jnp.maximum(acc + shift_ref[...], 0.0) * mask_ref[...]
    # Write the whole padded channel slice: zero borders + interior values.
    o_ref[...] = jnp.zeros_like(o_ref)
    o_ref[0, :, 0, off:off + win] = y.astype(o_ref.dtype)


def _tdf_residual_kernel(x_ref, w1_ref, w2_ref, aff_ref, o_ref):
    """TDF bottleneck MLP along F (Linear->BN->ReLU x2) + residual add.

    Processes one (batch, gr-channel) tile per grid step.
    x_ref   : (1, 1, T, F) bf16
    w1_ref  : (F, U)       bf16   pre-transposed Linear1 weight (y = x @ w1)
    w2_ref  : (U, F)       bf16   pre-transposed Linear2 weight
    aff_ref : (1, 1, 4)    f32    [s1, b1, s2, b2] folded BN affine for this gr
    o_ref   : (1, 1, T, F) f32    = x + tdf(x)
    """
    x = x_ref[0, 0]                                              # (T, F) bf16
    a = aff_ref[0]                                               # (1, 4) f32
    s1, b1, s2, b2 = a[:, 0:1], a[:, 1:2], a[:, 2:3], a[:, 3:4]  # (1, 1) each
    h = jnp.dot(x, w1_ref[...], preferred_element_type=jnp.float32)
    h = jnp.maximum(h * s1 + b1, 0.0)                            # (T, U)
    z = jnp.dot(h.astype(jnp.bfloat16), w2_ref[...],
                preferred_element_type=jnp.float32)              # (T, F)
    z = jnp.maximum(z * s2 + b2, 0.0)
    # TODO(synk): emit bf16 here if the downstream consumer tolerates it.
    o_ref[0, 0] = x.astype(jnp.float32) + z


# --------------------------- wrappers ----------------------------------------

def _conv_layer_into_stack(stack, w3d, shift2d, fmask, *, layer_idx, cin_p, gr,
                           kH, kW, Fp, win, off):
    """Conv+BN+ReLU of one dense-block layer, written in place into `stack`."""
    B, C_total, _, L = stack.shape
    KHW, gr_w, C_in = w3d.shape
    assert gr_w == gr and KHW == kH * kW
    ch_block = cin_p // gr + layer_idx               # output channel-block index
    kern = functools.partial(_conv_bn_relu_kernel,
                             kH=kH, kW=kW, Fp=Fp, win=win, off=off)
    return pl.pallas_call(
        kern,
        out_shape=jax.ShapeDtypeStruct(stack.shape, stack.dtype),
        grid=(B,),
        in_specs=[
            pl.BlockSpec((1, C_in, 1, L), lambda b: (b, 0, 0, 0)),
            pl.BlockSpec((KHW, gr, C_in), lambda b: (0, 0, 0)),
            pl.BlockSpec((gr, 1), lambda b: (0, 0)),
            pl.BlockSpec((1, win), lambda b: (0, 0)),
        ],
        out_specs=pl.BlockSpec((1, gr, 1, L),
                               lambda b, _cb=ch_block: (b, _cb, 0, 0)),
        input_output_aliases={0: 0},                 # write back into the stack
        compiler_params=_compiler_params(1),
    )(stack, w3d, shift2d, fmask)


def tdf_residual(x, w1t, w2t, aff):
    """x: [B, gr, T, F] bf16 -> x + TDF(x), f32."""
    B, gr, T, F = x.shape
    U = w1t.shape[1]
    return pl.pallas_call(
        _tdf_residual_kernel,
        out_shape=jax.ShapeDtypeStruct((B, gr, T, F), jnp.float32),
        grid=(B, gr),
        in_specs=[
            pl.BlockSpec((1, 1, T, F), lambda b, g: (b, g, 0, 0)),
            pl.BlockSpec((F, U), lambda b, g: (0, 0)),
            pl.BlockSpec((U, F), lambda b, g: (0, 0)),
            pl.BlockSpec((1, 1, 4), lambda b, g: (g, 0, 0)),
        ],
        out_specs=pl.BlockSpec((1, 1, T, F), lambda b, g: (b, g, 0, 0)),
        compiler_params=_compiler_params(2),
    )(x, w1t, w2t, aff)


# --------------------------- params -------------------------------------------

def _fold_bn(gamma, beta, mean, var, eps=1e-5):
    scale = gamma / jnp.sqrt(var + eps)
    shift = beta - mean * scale
    return scale, shift


def init_params(key, in_channels, num_layers, gr, kt, kf, f,
                bn_factor=16, min_bn_units=16):
    # PyTorch: Conv2d kernel_size=(kf, kt) over (T, F), padding=(kt//2, kf//2).
    kH, kW = kf, kt
    padH, padW = kt // 2, kf // 2
    cin_p = _round_up(in_channels, gr)               # pad input chans to gr mult
    params = {'tfc': []}
    c_real = in_channels
    for i in range(num_layers):
        key, k1, k2, k3, k4, k5, k6 = jax.random.split(key, 7)
        w_raw = jax.random.normal(k1, (gr, c_real, kH, kW), jnp.float32) * 0.1
        b = jax.random.normal(k2, (gr,), jnp.float32) * 0.1
        gamma = jax.random.uniform(k3, (gr,), jnp.float32, minval=0.5, maxval=1.5)
        beta = jax.random.normal(k4, (gr,), jnp.float32) * 0.1
        mean = jax.random.normal(k5, (gr,), jnp.float32) * 0.1
        var = jax.random.uniform(k6, (gr,), jnp.float32, minval=0.5, maxval=1.5)
        scale, shift_bn = _fold_bn(gamma, beta, mean, var)
        shift_total = shift_bn + scale * b           # fold conv bias into shift
        # Fold BN scale into the weight; lay it out against the stack channel
        # order [input(in_channels) | zero-pad(cin_p-in_channels) | out0 | out1 ...].
        c_pad = cin_p + i * gr
        w_scaled = w_raw * scale[:, None, None, None]
        w_stack = jnp.zeros((gr, c_pad, kH, kW), jnp.float32)
        w_stack = w_stack.at[:, :in_channels].set(w_scaled[:, :in_channels])
        if c_real > in_channels:
            w_stack = w_stack.at[:, cin_p:].set(w_scaled[:, in_channels:])
        w3d = jnp.transpose(w_stack, (2, 3, 0, 1)).reshape(kH * kW, gr, c_pad)
        params['tfc'].append({
            'w3d': w3d.astype(jnp.bfloat16),
            'shift2d': shift_total.reshape(gr, 1).astype(jnp.float32),
            # f32 originals kept only for the pure-JAX reference check:
            'w_raw': w_raw, 'scale': scale, 'shift': shift_total,
        })
        c_real += gr

    # TDF (bn_factor is not None -> bottleneck MLP, bias=False)
    bn_units = max(f // bn_factor, min_bn_units)
    key, k1, k2 = jax.random.split(key, 3)
    w1_raw = jax.random.normal(k1, (bn_units, f), jnp.float32) * 0.1  # Linear(f,U)
    w2_raw = jax.random.normal(k2, (f, bn_units), jnp.float32) * 0.1  # Linear(U,f)
    affs, bn_ref = [], []
    for _ in range(2):
        key, k3, k4, k5, k6 = jax.random.split(key, 5)
        gamma = jax.random.uniform(k3, (gr,), jnp.float32, minval=0.5, maxval=1.5)
        beta = jax.random.normal(k4, (gr,), jnp.float32) * 0.1
        mean = jax.random.normal(k5, (gr,), jnp.float32) * 0.1
        var = jax.random.uniform(k6, (gr,), jnp.float32, minval=0.5, maxval=1.5)
        sc, sh = _fold_bn(gamma, beta, mean, var)
        affs += [sc, sh]
        bn_ref.append((sc, sh))
    aff = jnp.stack(affs, axis=-1).reshape(gr, 1, 4).astype(jnp.float32)
    params['tdf'] = {
        'w1t': jnp.transpose(w1_raw).astype(jnp.bfloat16),            # (F, U)
        'w2t': jnp.transpose(w2_raw).astype(jnp.bfloat16),            # (U, F)
        'aff': aff,
        'w1_raw': w1_raw, 'w2_raw': w2_raw, 'bn_ref': bn_ref,
    }
    params['meta'] = dict(kH=kH, kW=kW, padH=padH, padW=padW, gr=gr,
                          cin_p=cin_p, in_c=in_channels)
    return params


# --------------------------- forward ------------------------------------------

def tfc_tdf_forward(x, params):
    m = params['meta']
    kH, kW, padH, padW = m['kH'], m['kW'], m['padH'], m['padW']
    gr, cin_p, in_c = m['gr'], m['cin_p'], m['in_c']
    B, C_in, T, F = x.shape
    assert C_in == in_c
    Tp, Fp = T + 2 * padH, F + 2 * padW
    To, Fo = Tp - kH + 1, Fp - kW + 1
    # Dense concat (and PyTorch itself) requires shape-preserving convs.
    assert To == T and Fo == F, "TFC dense concat requires kt == kf (odd)"
    n_layers = len(params['tfc'])
    C_total = cin_p + n_layers * gr
    win = To * Fp                      # flattened output window length
    off = padH * Fp + padW             # flat offset of the padded interior
    flat_len = Tp * Fp
    L = _round_up(flat_len + (kW - 1), 128)   # tap-overrun tail + lane padding

    # Build the flattened, padded, channel-stacked dense buffer once.
    xb = x.astype(jnp.bfloat16)
    xpad = jnp.pad(xb, ((0, 0), (0, 0), (padH, padH), (padW, padW)))
    stack = jnp.zeros((B, C_total, 1, L), jnp.bfloat16)
    stack = stack.at[:, :in_c, 0, :flat_len].set(xpad.reshape(B, in_c, flat_len))

    # Validity mask for the F columns inside each flattened output row.
    cols = jnp.arange(win, dtype=jnp.int32) % Fp
    fmask = (cols < Fo).astype(jnp.float32).reshape(1, win)

    # ----- TFC: densely connected conv layers, written in place into `stack`.
    for i, layer in enumerate(params['tfc']):
        stack = _conv_layer_into_stack(stack, layer['w3d'], layer['shift2d'],
                                       fmask, layer_idx=i, cin_p=cin_p, gr=gr,
                                       kH=kH, kW=kW, Fp=Fp, win=win, off=off)

    # Last layer's output (interior region) feeds the TDF + residual.
    c_last = cin_p + (n_layers - 1) * gr
    x_last = stack[:, c_last:c_last + gr, 0, :flat_len].reshape(B, gr, Tp, Fp)
    x_last = x_last[:, :, padH:padH + T, padW:padW + F]          # (B,gr,T,F) bf16

    t = params['tdf']
    return tdf_residual(x_last, t['w1t'], t['w2t'], t['aff'])


# --------------------------- pure-JAX reference -------------------------------

def reference_forward(x, params):
    """f32 reference straight from the PyTorch spec (eval-mode BN)."""
    m = params['meta']
    padH, padW = m['padH'], m['padW']
    hi = jax.lax.Precision.HIGHEST
    cat, y = x, None
    n = len(params['tfc'])
    for i, layer in enumerate(params['tfc']):
        y = jax.lax.conv_general_dilated(
            cat, layer['w_raw'], window_strides=(1, 1),
            padding=((padH, padH), (padW, padW)),
            dimension_numbers=('NCHW', 'OIHW', 'NCHW'), precision=hi)
        y = y * layer['scale'][None, :, None, None] \
            + layer['shift'][None, :, None, None]
        y = jnp.maximum(y, 0.0)
        if i + 1 < n:
            cat = jnp.concatenate([cat, y], axis=1)
    t = params['tdf']
    (s1, b1), (s2, b2) = t['bn_ref']
    h = jnp.einsum('bgtf,uf->bgtu', y, t['w1_raw'], precision=hi)
    h = jnp.maximum(h * s1[None, :, None, None] + b1[None, :, None, None], 0.0)
    z = jnp.einsum('bgtu,fu->bgtf', h, t['w2_raw'], precision=hi)
    z = jnp.maximum(z * s2[None, :, None, None] + b2[None, :, None, None], 0.0)
    return y + z


# --------------------------- demo --------------------------------------------

if __name__ == "__main__":
    B, in_channels, T, F = 2, 4, 16, 16
    num_layers, gr, kt, kf = 3, 4, 3, 3

    key = jax.random.PRNGKey(0)
    kx, kp = jax.random.split(key)
    x = jax.random.normal(kx, (B, in_channels, T, F), jnp.float32)
    params = init_params(kp, in_channels, num_layers, gr, kt, kf, F,
                         bn_factor=16, min_bn_units=16)

    fwd = jax.jit(lambda v: tfc_tdf_forward(v, params))
    out = jax.block_until_ready(fwd(x))
    assert out.shape == (B, gr, T, F), out.shape
    assert out.dtype == jnp.float32

    ref = reference_forward(x, params)
    max_err = float(jnp.max(jnp.abs(out - ref)))
    assert max_err < 0.15, f"max abs error vs reference = {max_err}"
    print("KERNEL_OK")
</pallas_src>

<mosaic_0001>
module attributes {stable_mosaic.version = 11 : i64} {
  func.func @_conv_bn_relu_kernel(%arg0: i32, %arg1: memref<1x12x1x384xbf16, #tpu.memory_space<vmem>>, %arg2: memref<9x4x12xbf16, #tpu.memory_space<vmem>>, %arg3: memref<4x1xf32, #tpu.memory_space<vmem>>, %arg4: memref<1x288xf32, #tpu.memory_space<vmem>>, %arg5: memref<1x4x1x384xbf16, #tpu.memory_space<vmem>>) attributes {dimension_semantics = [#tpu.dimension_semantics<parallel>], iteration_bounds = array<i64: 2>, scalar_prefetch = 0 : i64, scratch_operands = 0 : i64, tpu.core_type = #tpu.core_type<tc>, window_params = [{transform_indices = @transform_0, window_bounds = array<i64: 1, 12, 1, 384>}, {pipeline_mode = #tpu.pipeline_mode<synchronous>, transform_indices = @transform_1, window_bounds = array<i64: 9, 4, 12>}, {pipeline_mode = #tpu.pipeline_mode<synchronous>, transform_indices = @transform_2, window_bounds = array<i64: 4, 1>}, {pipeline_mode = #tpu.pipeline_mode<synchronous>, transform_indices = @transform_3, window_bounds = array<i64: 1, 288>}, {transform_indices = @transform_4, window_bounds = array<i64: 1, 4, 1, 384>}]} {
    %c0 = arith.constant 0 : index
    %c0_0 = arith.constant 0 : index
    %c0_1 = arith.constant 0 : index
    %c0_2 = arith.constant 0 : index
    %0 = vector.load %arg1[%c0, %c0_0, %c0_1, %c0_2] : memref<1x12x1x384xbf16, #tpu.memory_space<vmem>>, vector<1x12x1x288xbf16>
    %1 = vector.shape_cast %0 : vector<1x12x1x288xbf16> to vector<12x288xbf16>
    %c0_3 = arith.constant 0 : index
    %c0_4 = arith.constant 0 : index
    %c0_5 = arith.constant 0 : index
    %2 = vector.load %arg2[%c0_3, %c0_4, %c0_5] : memref<9x4x12xbf16, #tpu.memory_space<vmem>>, vector<1x4x12xbf16>
    %3 = vector.shape_cast %2 : vector<1x4x12xbf16> to vector<4x12xbf16>
    %cst = arith.constant dense<0.000000e+00> : vector<4x288xf32>
    %4 = tpu.matmul %3, %1, %cst {dimension_numbers = #tpu.dot_dimension_numbers<[1], [0], [0], [1], [0, 0, 1, 1], [], []>} : vector<4x12xbf16>, vector<12x288xbf16>, vector<4x288xf32> -> vector<4x288xf32>
    %c0_6 = arith.constant 0 : index
    %c0_7 = arith.constant 0 : index
    %c0_8 = arith.constant 0 : index
    %c1 = arith.constant 1 : index
    %5 = vector.load %arg1[%c0_6, %c0_7, %c0_8, %c1] : memref<1x12x1x384xbf16, #tpu.memory_space<vmem>>, vector<1x12x1x288xbf16>
    %6 = vector.shape_cast %5 : vector<1x12x1x288xbf16> to vector<12x288xbf16>
    %c1_9 = arith.constant 1 : index
    %c0_10 = arith.constant 0 : index
    %c0_11 = arith.constant 0 : index
    %7 = vector.load %arg2[%c1_9, %c0_10, %c0_11] : memref<9x4x12xbf16, #tpu.memory_space<vmem>>, vector<1x4x12xbf16>
    %8 = vector.shape_cast %7 : vector<1x4x12xbf16> to vector<4x12xbf16>
    %cst_12 = arith.constant dense<0.000000e+00> : vector<4x288xf32>
    %9 = tpu.matmul %8, %6, %cst_12 {dimension_numbers = #tpu.dot_dimension_numbers<[1], [0], [0], [1], [0, 0, 1, 1], [], []>} : vector<4x12xbf16>, vector<12x288xbf16>, vector<4x288xf32> -> vector<4x288xf32>
    %10 = arith.addf %4, %9 : vector<4x288xf32>
    %c0_13 = arith.constant 0 : index
    %c0_14 = arith.constant 0 : index
    %c0_15 = arith.constant 0 : index
    %c2 = arith.constant 2 : index
    %11 = vector.load %arg1[%c0_13, %c0_14, %c0_15, %c2] : memref<1x12x1x384xbf16, #tpu.memory_space<vmem>>, vector<1x12x1x288xbf16>
    %12 = vector.shape_cast %11 : vector<1x12x1x288xbf16> to vector<12x288xbf16>
    %c2_16 = arith.constant 2 : index
    %c0_17 = arith.constant 0 : index
    %c0_18 = arith.constant 0 : index
    %13 = vector.load %arg2[%c2_16, %c0_17, %c0_18] : memref<9x4x12xbf16, #tpu.memory_space<vmem>>, vector<1x4x12xbf16>
    %14 = vector.shape_cast %13 : vector<1x4x12xbf16> to vector<4x12xbf16>
    %cst_19 = arith.constant dense<0.000000e+00> : vector<4x288xf32>
    %15 = tpu.matmul %14, %12, %cst_19 {dimension_numbers = #tpu.dot_dimension_numbers<[1], [0], [0], [1], [0, 0, 1, 1], [], []>} : vector<4x12xbf16>, vector<12x288xbf16>, vector<4x288xf32> -> vector<4x288xf32>
    %16 = arith.addf %10, %15 : vector<4x288xf32>
    %c0_20 = arith.constant 0 : index
    %c0_21 = arith.constant 0 : index
    %c0_22 = arith.constant 0 : index
    %c18 = arith.constant 18 : index
    %17 = vector.load %arg1[%c0_20, %c0_21, %c0_22, %c18] : memref<1x12x1x384xbf16, #tpu.memory_space<vmem>>, vector<1x12x1x288xbf16>
    %18 = vector.shape_cast %17 : vector<1x12x1x288xbf16> to vector<12x288xbf16>
    %c3 = arith.constant 3 : index
    %c0_23 = arith.constant 0 : index
    %c0_24 = arith.constant 0 : index
    %19 = vector.load %arg2[%c3, %c0_23, %c0_24] : memref<9x4x12xbf16, #tpu.memory_space<vmem>>, vector<1x4x12xbf16>
    %20 = vector.shape_cast %19 : vector<1x4x12xbf16> to vector<4x12xbf16>
    %cst_25 = arith.constant dense<0.000000e+00> : vector<4x288xf32>
    %21 = tpu.matmul %20, %18, %cst_25 {dimension_numbers = #tpu.dot_dimension_numbers<[1], [0], [0], [1], [0, 0, 1, 1], [], []>} : vector<4x12xbf16>, vector<12x288xbf16>, vector<4x288xf32> -> vector<4x288xf32>
    %22 = arith.addf %16, %21 : vector<4x288xf32>
    %c0_26 = arith.constant 0 : index
    %c0_27 = arith.constant 0 : index
    %c0_28 = arith.constant 0 : index
    %c19 = arith.constant 19 : index
    %23 = vector.load %arg1[%c0_26, %c0_27, %c0_28, %c19] : memref<1x12x1x384xbf16, #tpu.memory_space<vmem>>, vector<1x12x1x288xbf16>
    %24 = vector.shape_cast %23 : vector<1x12x1x288xbf16> to vector<12x288xbf16>
    %c4 = arith.constant 4 : index
    %c0_29 = arith.constant 0 : index
    %c0_30 = arith.constant 0 : index
    %25 = vector.load %arg2[%c4, %c0_29, %c0_30] : memref<9x4x12xbf16, #tpu.memory_space<vmem>>, vector<1x4x12xbf16>
    %26 = vector.shape_cast %25 : vector<1x4x12xbf16> to vector<4x12xbf16>
    %cst_31 = arith.constant dense<0.000000e+00> : vector<4x288xf32>
    %27 = tpu.matmul %26, %24, %cst_31 {dimension_numbers = #tpu.dot_dimension_numbers<[1], [0], [0], [1], [0, 0, 1, 1], [], []>} : vector<4x12xbf16>, vector<12x288xbf16>, vector<4x288xf32> -> vector<4x288xf32>
    %28 = arith.addf %22, %27 : vector<4x288xf32>
    %c0_32 = arith.constant 0 : index
    %c0_33 = arith.constant 0 : index
    %c0_34 = arith.constant 0 : index
    %c20 = arith.constant 20 : index
    %29 = vector.load %arg1[%c0_32, %c0_33, %c0_34, %c20] : memref<1x12x1x384xbf16, #tpu.memory_space<vmem>>, vector<1x12x1x288xbf16>
    %30 = vector.shape_cast %29 : vector<1x12x1x288xbf16> to vector<12x288xbf16>
    %c5 = arith.constant 5 : index
    %c0_35 = arith.constant 0 : index
    %c0_36 = arith.constant 0 : index
    %31 = vector.load %arg2[%c5, %c0_35, %c0_36] : memref<9x4x12xbf16, #tpu.memory_space<vmem>>, vector<1x4x12xbf16>
    %32 = vector.shape_cast %31 : vector<1x4x12xbf16> to vector<4x12xbf16>
    %cst_37 = arith.constant dense<0.000000e+00> : vector<4x288xf32>
    %33 = tpu.matmul %32, %30, %cst_37 {dimension_numbers = #tpu.dot_dimension_numbers<[1], [0], [0], [1], [0, 0, 1, 1], [], []>} : vector<4x12xbf16>, vector<12x288xbf16>, vector<4x288xf32> -> vector<4x288xf32>
    %34 = arith.addf %28, %33 : vector<4x288xf32>
    %c0_38 = arith.constant 0 : index
    %c0_39 = arith.constant 0 : index
    %c0_40 = arith.constant 0 : index
    %c36 = arith.constant 36 : index
    %35 = vector.load %arg1[%c0_38, %c0_39, %c0_40, %c36] : memref<1x12x1x384xbf16, #tpu.memory_space<vmem>>, vector<1x12x1x288xbf16>
    %36 = vector.shape_cast %35 : vector<1x12x1x288xbf16> to vector<12x288xbf16>
    %c6 = arith.constant 6 : index
    %c0_41 = arith.constant 0 : index
    %c0_42 = arith.constant 0 : index
    %37 = vector.load %arg2[%c6, %c0_41, %c0_42] : memref<9x4x12xbf16, #tpu.memory_space<vmem>>, vector<1x4x12xbf16>
    %38 = vector.shape_cast %37 : vector<1x4x12xbf16> to vector<4x12xbf16>
    %cst_43 = arith.constant dense<0.000000e+00> : vector<4x288xf32>
    %39 = tpu.matmul %38, %36, %cst_43 {dimension_numbers = #tpu.dot_dimension_numbers<[1], [0], [0], [1], [0, 0, 1, 1], [], []>} : vector<4x12xbf16>, vector<12x288xbf16>, vector<4x288xf32> -> vector<4x288xf32>
    %40 = arith.addf %34, %39 : vector<4x288xf32>
    %c0_44 = arith.constant 0 : index
    %c0_45 = arith.constant 0 : index
    %c0_46 = arith.constant 0 : index
    %c37 = arith.constant 37 : index
    %41 = vector.load %arg1[%c0_44, %c0_45, %c0_46, %c37] : memref<1x12x1x384xbf16, #tpu.memory_space<vmem>>, vector<1x12x1x288xbf16>
    %42 = vector.shape_cast %41 : vector<1x12x1x288xbf16> to vector<12x288xbf16>
    %c7 = arith.constant 7 : index
    %c0_47 = arith.constant 0 : index
    %c0_48 = arith.constant 0 : index
    %43 = vector.load %arg2[%c7, %c0_47, %c0_48] : memref<9x4x12xbf16, #tpu.memory_space<vmem>>, vector<1x4x12xbf16>
    %44 = vector.shape_cast %43 : vector<1x4x12xbf16> to vector<4x12xbf16>
    %cst_49 = arith.constant dense<0.000000e+00> : vector<4x288xf32>
    %45 = tpu.matmul %44, %42, %cst_49 {dimension_numbers = #tpu.dot_dimension_numbers<[1], [0], [0], [1], [0, 0, 1, 1], [], []>} : vector<4x12xbf16>, vector<12x288xbf16>, vector<4x288xf32> -> vector<4x288xf32>
    %46 = arith.addf %40, %45 : vector<4x288xf32>
    %c0_50 = arith.constant 0 : index
    %c0_51 = arith.constant 0 : index
    %c0_52 = arith.constant 0 : index
    %c38 = arith.constant 38 : index
    %47 = vector.load %arg1[%c0_50, %c0_51, %c0_52, %c38] : memref<1x12x1x384xbf16, #tpu.memory_space<vmem>>, vector<1x12x1x288xbf16>
    %48 = vector.shape_cast %47 : vector<1x12x1x288xbf16> to vector<12x288xbf16>
    %c8 = arith.constant 8 : index
    %c0_53 = arith.constant 0 : index
    %c0_54 = arith.constant 0 : index
    %49 = vector.load %arg2[%c8, %c0_53, %c0_54] : memref<9x4x12xbf16, #tpu.memory_space<vmem>>, vector<1x4x12xbf16>
    %50 = vector.shape_cast %49 : vector<1x4x12xbf16> to vector<4x12xbf16>
    %cst_55 = arith.constant dense<0.000000e+00> : vector<4x288xf32>
    %51 = tpu.matmul %50, %48, %cst_55 {dimension_numbers = #tpu.dot_dimension_numbers<[1], [0], [0], [1], [0, 0, 1, 1], [], []>} : vector<4x12xbf16>, vector<12x288xbf16>, vector<4x288xf32> -> vector<4x288xf32>
    %52 = arith.addf %46, %51 : vector<4x288xf32>
    %c0_56 = arith.constant 0 : index
    %c0_57 = arith.constant 0 : index
    %53 = vector.load %arg3[%c0_56, %c0_57] : memref<4x1xf32, #tpu.memory_space<vmem>>, vector<4x1xf32>
    %54 = vector.broadcast %53 : vector<4x1xf32> to vector<4x288xf32>
    %55 = arith.addf %52, %54 : vector<4x288xf32>
    %cst_58 = arith.constant 0.000000e+00 : f32
    %56 = vector.broadcast %cst_58 : f32 to vector<4x288xf32>
    %57 = arith.maximumf %55, %56 : vector<4x288xf32>
    %c0_59 = arith.constant 0 : index
    %c0_60 = arith.constant 0 : index
    %58 = vector.load %arg4[%c0_59, %c0_60] : memref<1x288xf32, #tpu.memory_space<vmem>>, vector<1x288xf32>
    %59 = vector.broadcast %58 : vector<1x288xf32> to vector<4x288xf32>
    %60 = arith.mulf %57, %59 : vector<4x288xf32>
    %cst_61 = arith.constant 0.000000e+00 : bf16
    %61 = vector.broadcast %cst_61 : bf16 to vector<1x4x1x384xbf16>
    %c0_62 = arith.constant 0 : index
    %c0_63 = arith.constant 0 : index
    %c0_64 = arith.constant 0 : index
    %c0_65 = arith.constant 0 : index
    %62 = vector.load %arg5[%c0_62, %c0_63, %c0_64, %c0_65] : memref<1x4x1x384xbf16, #tpu.memory_space<vmem>>, vector<1x4x1x384xbf16>
    tpu.vector_store %arg5[%c0_62, %c0_63, %c0_64, %c0_65], %61 {strides = array<i32>} : memref<1x4x1x384xbf16, #tpu.memory_space<vmem>>, vector<1x4x1x384xbf16>,
    %63 = arith.truncf %60 : vector<4x288xf32> to vector<4x288xbf16>
    %c0_66 = arith.constant 0 : index
    %c0_67 = arith.constant 0 : index
    %c0_68 = arith.constant 0 : index
    %c19_69 = arith.constant 19 : index
    %64 = vector.load %arg5[%c0_66, %c0_67, %c0_68, %c19_69] : memref<1x4x1x384xbf16, #tpu.memory_space<vmem>>, vector<1x4x1x288xbf16>
    %65 = vector.shape_cast %64 : vector<1x4x1x288xbf16> to vector<4x288xbf16>
    %66 = vector.shape_cast %63 : vector<4x288xbf16> to vector<1x4x1x288xbf16>
    tpu.vector_store %arg5[%c0_66, %c0_67, %c0_68, %c19_69], %66 {strides = array<i32>} : memref<1x4x1x384xbf16, #tpu.memory_space<vmem>>, vector<1x4x1x288xbf16>,
    return
  }
  func.func @transform_0(%arg0: i32) -> (i32, i32, i32, i32) {
    %c0_i32 = arith.constant 0 : i32
    %c0_i32_0 = arith.constant 0 : i32
    %c0_i32_1 = arith.constant 0 : i32
    %c0_i32_2 = arith.constant 0 : i32
    return %arg0, %c0_i32, %c0_i32_0, %c0_i32_1 : i32, i32, i32, i32
  }
  func.func @transform_1(%arg0: i32) -> (i32, i32, i32) {
    %c0_i32 = arith.constant 0 : i32
    %c0_i32_0 = arith.constant 0 : i32
    %c0_i32_1 = arith.constant 0 : i32
    %c0_i32_2 = arith.constant 0 : i32
    return %c0_i32, %c0_i32_0, %c0_i32_1 : i32, i32, i32
  }
  func.func @transform_2(%arg0: i32) -> (i32, i32) {
    %c0_i32 = arith.constant 0 : i32
    %c0_i32_0 = arith.constant 0 : i32
    %c0_i32_1 = arith.constant 0 : i32
    return %c0_i32, %c0_i32_0 : i32, i32
  }
  func.func @transform_3(%arg0: i32) -> (i32, i32) {
    %c0_i32 = arith.constant 0 : i32
    %c0_i32_0 = arith.constant 0 : i32
    %c0_i32_1 = arith.constant 0 : i32
    return %c0_i32, %c0_i32_0 : i32, i32
  }
  func.func @transform_4(%arg0: i32) -> (i32, i32, i32, i32) {
    %c3_i32 = arith.constant 3 : i32
    %c0_i32 = arith.constant 0 : i32
    %c0_i32_0 = arith.constant 0 : i32
    %c0_i32_1 = arith.constant 0 : i32
    return %arg0, %c3_i32, %c0_i32, %c0_i32_0 : i32, i32, i32, i32
  }
}

module attributes {stable_mosaic.version = 11 : i64} {
  func.func @_conv_bn_relu_kernel(%arg0: i32, %arg1: memref<1x8x1x384xbf16, #tpu.memory_space<vmem>>, %arg2: memref<9x4x8xbf16, #tpu.memory_space<vmem>>, %arg3: memref<4x1xf32, #tpu.memory_space<vmem>>, %arg4: memref<1x288xf32, #tpu.memory_space<vmem>>, %arg5: memref<1x4x1x384xbf16, #tpu.memory_space<vmem>>) attributes {dimension_semantics = [#tpu.dimension_semantics<parallel>], iteration_bounds = array<i64: 2>, scalar_prefetch = 0 : i64, scratch_operands = 0 : i64, tpu.core_type = #tpu.core_type<tc>, window_params = [{transform_indices = @transform_0, window_bounds = array<i64: 1, 8, 1, 384>}, {pipeline_mode = #tpu.pipeline_mode<synchronous>, transform_indices = @transform_1, window_bounds = array<i64: 9, 4, 8>}, {pipeline_mode = #tpu.pipeline_mode<synchronous>, transform_indices = @transform_2, window_bounds = array<i64: 4, 1>}, {pipeline_mode = #tpu.pipeline_mode<synchronous>, transform_indices = @transform_3, window_bounds = array<i64: 1, 288>}, {transform_indices = @transform_4, window_bounds = array<i64: 1, 4, 1, 384>}]} {
    %c0 = arith.constant 0 : index
    %c0_0 = arith.constant 0 : index
    %c0_1 = arith.constant 0 : index
    %c0_2 = arith.constant 0 : index
    %0 = vector.load %arg1[%c0, %c0_0, %c0_1, %c0_2] : memref<1x8x1x384xbf16, #tpu.memory_space<vmem>>, vector<1x8x1x288xbf16>
    %1 = vector.shape_cast %0 : vector<1x8x1x288xbf16> to vector<8x288xbf16>
    %c0_3 = arith.constant 0 : index
    %c0_4 = arith.constant 0 : index
    %c0_5 = arith.constant 0 : index
    %2 = vector.load %arg2[%c0_3, %c0_4, %c0_5] : memref<9x4x8xbf16, #tpu.memory_space<vmem>>, vector<1x4x8xbf16>
    %3 = vector.shape_cast %2 : vector<1x4x8xbf16> to vector<4x8xbf16>
    %cst = arith.constant dense<0.000000e+00> : vector<4x288xf32>
    %4 = tpu.matmul %3, %1, %cst {dimension_numbers = #tpu.dot_dimension_numbers<[1], [0], [0], [1], [0, 0, 1, 1], [], []>} : vector<4x8xbf16>, vector<8x288xbf16>, vector<4x288xf32> -> vector<4x288xf32>
    %c0_6 = arith.constant 0 : index
    %c0_7 = arith.constant 0 : index
    %c0_8 = arith.constant 0 : index
    %c1 = arith.constant 1 : index
    %5 = vector.load %arg1[%c0_6, %c0_7, %c0_8, %c1] : memref<1x8x1x384xbf16, #tpu.memory_space<vmem>>, vector<1x8x1x288xbf16>
    %6 = vector.shape_cast %5 : vector<1x8x1x288xbf16> to vector<8x288xbf16>
    %c1_9 = arith.constant 1 : index
    %c0_10 = arith.constant 0 : index
    %c0_11 = arith.constant 0 : index
    %7 = vector.load %arg2[%c1_9, %c0_10, %c0_11] : memref<9x4x8xbf16, #tpu.memory_space<vmem>>, vector<1x4x8xbf16>
    %8 = vector.shape_cast %7 : vector<1x4x8xbf16> to vector<4x8xbf16>
    %cst_12 = arith.constant dense<0.000000e+00> : vector<4x288xf32>
    %9 = tpu.matmul %8, %6, %cst_12 {dimension_numbers = #tpu.dot_dimension_numbers<[1], [0], [0], [1], [0, 0, 1, 1], [], []>} : vector<4x8xbf16>, vector<8x288xbf16>, vector<4x288xf32> -> vector<4x288xf32>
    %10 = arith.addf %4, %9 : vector<4x288xf32>
    %c0_13 = arith.constant 0 : index
    %c0_14 = arith.constant 0 : index
    %c0_15 = arith.constant 0 : index
    %c2 = arith.constant 2 : index
    %11 = vector.load %arg1[%c0_13, %c0_14, %c0_15, %c2] : memref<1x8x1x384xbf16, #tpu.memory_space<vmem>>, vector<1x8x1x288xbf16>
    %12 = vector.shape_cast %11 : vector<1x8x1x288xbf16> to vector<8x288xbf16>
    %c2_16 = arith.constant 2 : index
    %c0_17 = arith.constant 0 : index
    %c0_18 = arith.constant 0 : index
    %13 = vector.load %arg2[%c2_16, %c0_17, %c0_18] : memref<9x4x8xbf16, #tpu.memory_space<vmem>>, vector<1x4x8xbf16>
    %14 = vector.shape_cast %13 : vector<1x4x8xbf16> to vector<4x8xbf16>
    %cst_19 = arith.constant dense<0.000000e+00> : vector<4x288xf32>
    %15 = tpu.matmul %14, %12, %cst_19 {dimension_numbers = #tpu.dot_dimension_numbers<[1], [0], [0], [1], [0, 0, 1, 1], [], []>} : vector<4x8xbf16>, vector<8x288xbf16>, vector<4x288xf32> -> vector<4x288xf32>
    %16 = arith.addf %10, %15 : vector<4x288xf32>
    %c0_20 = arith.constant 0 : index
    %c0_21 = arith.constant 0 : index
    %c0_22 = arith.constant 0 : index
    %c18 = arith.constant 18 : index
    %17 = vector.load %arg1[%c0_20, %c0_21, %c0_22, %c18] : memref<1x8x1x384xbf16, #tpu.memory_space<vmem>>, vector<1x8x1x288xbf16>
    %18 = vector.shape_cast %17 : vector<1x8x1x288xbf16> to vector<8x288xbf16>
    %c3 = arith.constant 3 : index
    %c0_23 = arith.constant 0 : index
    %c0_24 = arith.constant 0 : index
    %19 = vector.load %arg2[%c3, %c0_23, %c0_24] : memref<9x4x8xbf16, #tpu.memory_space<vmem>>, vector<1x4x8xbf16>
    %20 = vector.shape_cast %19 : vector<1x4x8xbf16> to vector<4x8xbf16>
    %cst_25 = arith.constant dense<0.000000e+00> : vector<4x288xf32>
    %21 = tpu.matmul %20, %18, %cst_25 {dimension_numbers = #tpu.dot_dimension_numbers<[1], [0], [0], [1], [0, 0, 1, 1], [], []>} : vector<4x8xbf16>, vector<8x288xbf16>, vector<4x288xf32> -> vector<4x288xf32>
    %22 = arith.addf %16, %21 : vector<4x288xf32>
    %c0_26 = arith.constant 0 : index
    %c0_27 = arith.constant 0 : index
    %c0_28 = arith.constant 0 : index
    %c19 = arith.constant 19 : index
    %23 = vector.load %arg1[%c0_26, %c0_27, %c0_28, %c19] : memref<1x8x1x384xbf16, #tpu.memory_space<vmem>>, vector<1x8x1x288xbf16>
    %24 = vector.shape_cast %23 : vector<1x8x1x288xbf16> to vector<8x288xbf16>
    %c4 = arith.constant 4 : index
    %c0_29 = arith.constant 0 : index
    %c0_30 = arith.constant 0 : index
    %25 = vector.load %arg2[%c4, %c0_29, %c0_30] : memref<9x4x8xbf16, #tpu.memory_space<vmem>>, vector<1x4x8xbf16>
    %26 = vector.shape_cast %25 : vector<1x4x8xbf16> to vector<4x8xbf16>
    %cst_31 = arith.constant dense<0.000000e+00> : vector<4x288xf32>
    %27 = tpu.matmul %26, %24, %cst_31 {dimension_numbers = #tpu.dot_dimension_numbers<[1], [0], [0], [1], [0, 0, 1, 1], [], []>} : vector<4x8xbf16>, vector<8x288xbf16>, vector<4x288xf32> -> vector<4x288xf32>
    %28 = arith.addf %22, %27 : vector<4x288xf32>
    %c0_32 = arith.constant 0 : index
    %c0_33 = arith.constant 0 : index
    %c0_34 = arith.constant 0 : index
    %c20 = arith.constant 20 : index
    %29 = vector.load %arg1[%c0_32, %c0_33, %c0_34, %c20] : memref<1x8x1x384xbf16, #tpu.memory_space<vmem>>, vector<1x8x1x288xbf16>
    %30 = vector.shape_cast %29 : vector<1x8x1x288xbf16> to vector<8x288xbf16>
    %c5 = arith.constant 5 : index
    %c0_35 = arith.constant 0 : index
    %c0_36 = arith.constant 0 : index
    %31 = vector.load %arg2[%c5, %c0_35, %c0_36] : memref<9x4x8xbf16, #tpu.memory_space<vmem>>, vector<1x4x8xbf16>
    %32 = vector.shape_cast %31 : vector<1x4x8xbf16> to vector<4x8xbf16>
    %cst_37 = arith.constant dense<0.000000e+00> : vector<4x288xf32>
    %33 = tpu.matmul %32, %30, %cst_37 {dimension_numbers = #tpu.dot_dimension_numbers<[1], [0], [0], [1], [0, 0, 1, 1], [], []>} : vector<4x8xbf16>, vector<8x288xbf16>, vector<4x288xf32> -> vector<4x288xf32>
    %34 = arith.addf %28, %33 : vector<4x288xf32>
    %c0_38 = arith.constant 0 : index
    %c0_39 = arith.constant 0 : index
    %c0_40 = arith.constant 0 : index
    %c36 = arith.constant 36 : index
    %35 = vector.load %arg1[%c0_38, %c0_39, %c0_40, %c36] : memref<1x8x1x384xbf16, #tpu.memory_space<vmem>>, vector<1x8x1x288xbf16>
    %36 = vector.shape_cast %35 : vector<1x8x1x288xbf16> to vector<8x288xbf16>
    %c6 = arith.constant 6 : index
    %c0_41 = arith.constant 0 : index
    %c0_42 = arith.constant 0 : index
    %37 = vector.load %arg2[%c6, %c0_41, %c0_42] : memref<9x4x8xbf16, #tpu.memory_space<vmem>>, vector<1x4x8xbf16>
    %38 = vector.shape_cast %37 : vector<1x4x8xbf16> to vector<4x8xbf16>
    %cst_43 = arith.constant dense<0.000000e+00> : vector<4x288xf32>
    %39 = tpu.matmul %38, %36, %cst_43 {dimension_numbers = #tpu.dot_dimension_numbers<[1], [0], [0], [1], [0, 0, 1, 1], [], []>} : vector<4x8xbf16>, vector<8x288xbf16>, vector<4x288xf32> -> vector<4x288xf32>
    %40 = arith.addf %34, %39 : vector<4x288xf32>
    %c0_44 = arith.constant 0 : index
    %c0_45 = arith.constant 0 : index
    %c0_46 = arith.constant 0 : index
    %c37 = arith.constant 37 : index
    %41 = vector.load %arg1[%c0_44, %c0_45, %c0_46, %c37] : memref<1x8x1x384xbf16, #tpu.memory_space<vmem>>, vector<1x8x1x288xbf16>
    %42 = vector.shape_cast %41 : vector<1x8x1x288xbf16> to vector<8x288xbf16>
    %c7 = arith.constant 7 : index
    %c0_47 = arith.constant 0 : index
    %c0_48 = arith.constant 0 : index
    %43 = vector.load %arg2[%c7, %c0_47, %c0_48] : memref<9x4x8xbf16, #tpu.memory_space<vmem>>, vector<1x4x8xbf16>
    %44 = vector.shape_cast %43 : vector<1x4x8xbf16> to vector<4x8xbf16>
    %cst_49 = arith.constant dense<0.000000e+00> : vector<4x288xf32>
    %45 = tpu.matmul %44, %42, %cst_49 {dimension_numbers = #tpu.dot_dimension_numbers<[1], [0], [0], [1], [0, 0, 1, 1], [], []>} : vector<4x8xbf16>, vector<8x288xbf16>, vector<4x288xf32> -> vector<4x288xf32>
    %46 = arith.addf %40, %45 : vector<4x288xf32>
    %c0_50 = arith.constant 0 : index
    %c0_51 = arith.constant 0 : index
    %c0_52 = arith.constant 0 : index
    %c38 = arith.constant 38 : index
    %47 = vector.load %arg1[%c0_50, %c0_51, %c0_52, %c38] : memref<1x8x1x384xbf16, #tpu.memory_space<vmem>>, vector<1x8x1x288xbf16>
    %48 = vector.shape_cast %47 : vector<1x8x1x288xbf16> to vector<8x288xbf16>
    %c8 = arith.constant 8 : index
    %c0_53 = arith.constant 0 : index
    %c0_54 = arith.constant 0 : index
    %49 = vector.load %arg2[%c8, %c0_53, %c0_54] : memref<9x4x8xbf16, #tpu.memory_space<vmem>>, vector<1x4x8xbf16>
    %50 = vector.shape_cast %49 : vector<1x4x8xbf16> to vector<4x8xbf16>
    %cst_55 = arith.constant dense<0.000000e+00> : vector<4x288xf32>
    %51 = tpu.matmul %50, %48, %cst_55 {dimension_numbers = #tpu.dot_dimension_numbers<[1], [0], [0], [1], [0, 0, 1, 1], [], []>} : vector<4x8xbf16>, vector<8x288xbf16>, vector<4x288xf32> -> vector<4x288xf32>
    %52 = arith.addf %46, %51 : vector<4x288xf32>
    %c0_56 = arith.constant 0 : index
    %c0_57 = arith.constant 0 : index
    %53 = vector.load %arg3[%c0_56, %c0_57] : memref<4x1xf32, #tpu.memory_space<vmem>>, vector<4x1xf32>
    %54 = vector.broadcast %53 : vector<4x1xf32> to vector<4x288xf32>
    %55 = arith.addf %52, %54 : vector<4x288xf32>
    %cst_58 = arith.constant 0.000000e+00 : f32
    %56 = vector.broadcast %cst_58 : f32 to vector<4x288xf32>
    %57 = arith.maximumf %55, %56 : vector<4x288xf32>
    %c0_59 = arith.constant 0 : index
    %c0_60 = arith.constant 0 : index
    %58 = vector.load %arg4[%c0_59, %c0_60] : memref<1x288xf32, #tpu.memory_space<vmem>>, vector<1x288xf32>
    %59 = vector.broadcast %58 : vector<1x288xf32> to vector<4x288xf32>
    %60 = arith.mulf %57, %59 : vector<4x288xf32>
    %cst_61 = arith.constant 0.000000e+00 : bf16
    %61 = vector.broadcast %cst_61 : bf16 to vector<1x4x1x384xbf16>
    %c0_62 = arith.constant 0 : index
    %c0_63 = arith.constant 0 : index
    %c0_64 = arith.constant 0 : index
    %c0_65 = arith.constant 0 : index
    %62 = vector.load %arg5[%c0_62, %c0_63, %c0_64, %c0_65] : memref<1x4x1x384xbf16, #tpu.memory_space<vmem>>, vector<1x4x1x384xbf16>
    tpu.vector_store %arg5[%c0_62, %c0_63, %c0_64, %c0_65], %61 {strides = array<i32>} : memref<1x4x1x384xbf16, #tpu.memory_space<vmem>>, vector<1x4x1x384xbf16>,
    %63 = arith.truncf %60 : vector<4x288xf32> to vector<4x288xbf16>
    %c0_66 = arith.constant 0 : index
    %c0_67 = arith.constant 0 : index
    %c0_68 = arith.constant 0 : index
    %c19_69 = arith.constant 19 : index
    %64 = vector.load %arg5[%c0_66, %c0_67, %c0_68, %c19_69] : memref<1x4x1x384xbf16, #tpu.memory_space<vmem>>, vector<1x4x1x288xbf16>
    %65 = vector.shape_cast %64 : vector<1x4x1x288xbf16> to vector<4x288xbf16>
    %66 = vector.shape_cast %63 : vector<4x288xbf16> to vector<1x4x1x288xbf16>
    tpu.vector_store %arg5[%c0_66, %c0_67, %c0_68, %c19_69], %66 {strides = array<i32>} : memref<1x4x1x384xbf16, #tpu.memory_space<vmem>>, vector<1x4x1x288xbf16>,
    return
  }
  func.func @transform_0(%arg0: i32) -> (i32, i32, i32, i32) {
    %c0_i32 = arith.constant 0 : i32
    %c0_i32_0 = arith.constant 0 : i32
    %c0_i32_1 = arith.constant 0 : i32
    %c0_i32_2 = arith.constant 0 : i32
    return %arg0, %c0_i32, %c0_i32_0, %c0_i32_1 : i32, i32, i32, i32
  }
  func.func @transform_1(%arg0: i32) -> (i32, i32, i32) {
    %c0_i32 = arith.constant 0 : i32
    %c0_i32_0 = arith.constant 0 : i32
    %c0_i32_1 = arith.constant 0 : i32
    %c0_i32_2 = arith.constant 0 : i32
    return %c0_i32, %c0_i32_0, %c0_i32_1 : i32, i32, i32
  }
  func.func @transform_2(%arg0: i32) -> (i32, i32) {
    %c0_i32 = arith.constant 0 : i32
    %c0_i32_0 = arith.constant 0 : i32
    %c0_i32_1 = arith.constant 0 : i32
    return %c0_i32, %c0_i32_0 : i32, i32
  }
  func.func @transform_3(%arg0: i32) -> (i32, i32) {
    %c0_i32 = arith.constant 0 : i32
    %c0_i32_0 = arith.constant 0 : i32
    %c0_i32_1 = arith.constant 0 : i32
    return %c0_i32, %c0_i32_0 : i32, i32
  }
  func.func @transform_4(%arg0: i32) -> (i32, i32, i32, i32) {
    %c2_i32 = arith.constant 2 : i32
    %c0_i32 = arith.constant 0 : i32
    %c0_i32_0 = arith.constant 0 : i32
    %c0_i32_1 = arith.constant 0 : i32
    return %arg0, %c2_i32, %c0_i32, %c0_i32_0 : i32, i32, i32, i32
  }
}

module attributes {stable_mosaic.version = 11 : i64} {
  func.func @_conv_bn_relu_kernel(%arg0: i32, %arg1: memref<1x4x1x384xbf16, #tpu.memory_space<vmem>>, %arg2: memref<9x4x4xbf16, #tpu.memory_space<vmem>>, %arg3: memref<4x1xf32, #tpu.memory_space<vmem>>, %arg4: memref<1x288xf32, #tpu.memory_space<vmem>>, %arg5: memref<1x4x1x384xbf16, #tpu.memory_space<vmem>>) attributes {dimension_semantics = [#tpu.dimension_semantics<parallel>], iteration_bounds = array<i64: 2>, scalar_prefetch = 0 : i64, scratch_operands = 0 : i64, tpu.core_type = #tpu.core_type<tc>, window_params = [{transform_indices = @transform_0, window_bounds = array<i64: 1, 4, 1, 384>}, {pipeline_mode = #tpu.pipeline_mode<synchronous>, transform_indices = @transform_1, window_bounds = array<i64: 9, 4, 4>}, {pipeline_mode = #tpu.pipeline_mode<synchronous>, transform_indices = @transform_2, window_bounds = array<i64: 4, 1>}, {pipeline_mode = #tpu.pipeline_mode<synchronous>, transform_indices = @transform_3, window_bounds = array<i64: 1, 288>}, {transform_indices = @transform_4, window_bounds = array<i64: 1, 4, 1, 384>}]} {
    %c0 = arith.constant 0 : index
    %c0_0 = arith.constant 0 : index
    %c0_1 = arith.constant 0 : index
    %c0_2 = arith.constant 0 : index
    %0 = vector.load %arg1[%c0, %c0_0, %c0_1, %c0_2] : memref<1x4x1x384xbf16, #tpu.memory_space<vmem>>, vector<1x4x1x288xbf16>
    %1 = vector.shape_cast %0 : vector<1x4x1x288xbf16> to vector<4x288xbf16>
    %c0_3 = arith.constant 0 : index
    %c0_4 = arith.constant 0 : index
    %c0_5 = arith.constant 0 : index
    %2 = vector.load %arg2[%c0_3, %c0_4, %c0_5] : memref<9x4x4xbf16, #tpu.memory_space<vmem>>, vector<1x4x4xbf16>
    %3 = vector.shape_cast %2 : vector<1x4x4xbf16> to vector<4x4xbf16>
    %cst = arith.constant dense<0.000000e+00> : vector<4x288xf32>
    %4 = tpu.matmul %3, %1, %cst {dimension_numbers = #tpu.dot_dimension_numbers<[1], [0], [0], [1], [0, 0, 1, 1], [], []>} : vector<4x4xbf16>, vector<4x288xbf16>, vector<4x288xf32> -> vector<4x288xf32>
    %c0_6 = arith.constant 0 : index
    %c0_7 = arith.constant 0 : index
    %c0_8 = arith.constant 0 : index
    %c1 = arith.constant 1 : index
    %5 = vector.load %arg1[%c0_6, %c0_7, %c0_8, %c1] : memref<1x4x1x384xbf16, #tpu.memory_space<vmem>>, vector<1x4x1x288xbf16>
    %6 = vector.shape_cast %5 : vector<1x4x1x288xbf16> to vector<4x288xbf16>
    %c1_9 = arith.constant 1 : index
    %c0_10 = arith.constant 0 : index
    %c0_11 = arith.constant 0 : index
    %7 = vector.load %arg2[%c1_9, %c0_10, %c0_11] : memref<9x4x4xbf16, #tpu.memory_space<vmem>>, vector<1x4x4xbf16>
    %8 = vector.shape_cast %7 : vector<1x4x4xbf16> to vector<4x4xbf16>
    %cst_12 = arith.constant dense<0.000000e+00> : vector<4x288xf32>
    %9 = tpu.matmul %8, %6, %cst_12 {dimension_numbers = #tpu.dot_dimension_numbers<[1], [0], [0], [1], [0, 0, 1, 1], [], []>} : vector<4x4xbf16>, vector<4x288xbf16>, vector<4x288xf32> -> vector<4x288xf32>
    %10 = arith.addf %4, %9 : vector<4x288xf32>
    %c0_13 = arith.constant 0 : index
    %c0_14 = arith.constant 0 : index
    %c0_15 = arith.constant 0 : index
    %c2 = arith.constant 2 : index
    %11 = vector.load %arg1[%c0_13, %c0_14, %c0_15, %c2] : memref<1x4x1x384xbf16, #tpu.memory_space<vmem>>, vector<1x4x1x288xbf16>
    %12 = vector.shape_cast %11 : vector<1x4x1x288xbf16> to vector<4x288xbf16>
    %c2_16 = arith.constant 2 : index
    %c0_17 = arith.constant 0 : index
    %c0_18 = arith.constant 0 : index
    %13 = vector.load %arg2[%c2_16, %c0_17, %c0_18] : memref<9x4x4xbf16, #tpu.memory_space<vmem>>, vector<1x4x4xbf16>
    %14 = vector.shape_cast %13 : vector<1x4x4xbf16> to vector<4x4xbf16>
    %cst_19 = arith.constant dense<0.000000e+00> : vector<4x288xf32>
    %15 = tpu.matmul %14, %12, %cst_19 {dimension_numbers = #tpu.dot_dimension_numbers<[1], [0], [0], [1], [0, 0, 1, 1], [], []>} : vector<4x4xbf16>, vector<4x288xbf16>, vector<4x288xf32> -> vector<4x288xf32>
    %16 = arith.addf %10, %15 : vector<4x288xf32>
    %c0_20 = arith.constant 0 : index
    %c0_21 = arith.constant 0 : index
    %c0_22 = arith.constant 0 : index
    %c18 = arith.constant 18 : index
    %17 = vector.load %arg1[%c0_20, %c0_21, %c0_22, %c18] : memref<1x4x1x384xbf16, #tpu.memory_space<vmem>>, vector<1x4x1x288xbf16>
    %18 = vector.shape_cast %17 : vector<1x4x1x288xbf16> to vector<4x288xbf16>
    %c3 = arith.constant 3 : index
    %c0_23 = arith.constant 0 : index
    %c0_24 = arith.constant 0 : index
    %19 = vector.load %arg2[%c3, %c0_23, %c0_24] : memref<9x4x4xbf16, #tpu.memory_space<vmem>>, vector<1x4x4xbf16>
    %20 = vector.shape_cast %19 : vector<1x4x4xbf16> to vector<4x4xbf16>
    %cst_25 = arith.constant dense<0.000000e+00> : vector<4x288xf32>
    %21 = tpu.matmul %20, %18, %cst_25 {dimension_numbers = #tpu.dot_dimension_numbers<[1], [0], [0], [1], [0, 0, 1, 1], [], []>} : vector<4x4xbf16>, vector<4x288xbf16>, vector<4x288xf32> -> vector<4x288xf32>
    %22 = arith.addf %16, %21 : vector<4x288xf32>
    %c0_26 = arith.constant 0 : index
    %c0_27 = arith.constant 0 : index
    %c0_28 = arith.constant 0 : index
    %c19 = arith.constant 19 : index
    %23 = vector.load %arg1[%c0_26, %c0_27, %c0_28, %c19] : memref<1x4x1x384xbf16, #tpu.memory_space<vmem>>, vector<1x4x1x288xbf16>
    %24 = vector.shape_cast %23 : vector<1x4x1x288xbf16> to vector<4x288xbf16>
    %c4 = arith.constant 4 : index
    %c0_29 = arith.constant 0 : index
    %c0_30 = arith.constant 0 : index
    %25 = vector.load %arg2[%c4, %c0_29, %c0_30] : memref<9x4x4xbf16, #tpu.memory_space<vmem>>, vector<1x4x4xbf16>
    %26 = vector.shape_cast %25 : vector<1x4x4xbf16> to vector<4x4xbf16>
    %cst_31 = arith.constant dense<0.000000e+00> : vector<4x288xf32>
    %27 = tpu.matmul %26, %24, %cst_31 {dimension_numbers = #tpu.dot_dimension_numbers<[1], [0], [0], [1], [0, 0, 1, 1], [], []>} : vector<4x4xbf16>, vector<4x288xbf16>, vector<4x288xf32> -> vector<4x288xf32>
    %28 = arith.addf %22, %27 : vector<4x288xf32>
    %c0_32 = arith.constant 0 : index
    %c0_33 = arith.constant 0 : index
    %c0_34 = arith.constant 0 : index
    %c20 = arith.constant 20 : index
    %29 = vector.load %arg1[%c0_32, %c0_33, %c0_34, %c20] : memref<1x4x1x384xbf16, #tpu.memory_space<vmem>>, vector<1x4x1x288xbf16>
    %30 = vector.shape_cast %29 : vector<1x4x1x288xbf16> to vector<4x288xbf16>
    %c5 = arith.constant 5 : index
    %c0_35 = arith.constant 0 : index
    %c0_36 = arith.constant 0 : index
    %31 = vector.load %arg2[%c5, %c0_35, %c0_36] : memref<9x4x4xbf16, #tpu.memory_space<vmem>>, vector<1x4x4xbf16>
    %32 = vector.shape_cast %31 : vector<1x4x4xbf16> to vector<4x4xbf16>
    %cst_37 = arith.constant dense<0.000000e+00> : vector<4x288xf32>
    %33 = tpu.matmul %32, %30, %cst_37 {dimension_numbers = #tpu.dot_dimension_numbers<[1], [0], [0], [1], [0, 0, 1, 1], [], []>} : vector<4x4xbf16>, vector<4x288xbf16>, vector<4x288xf32> -> vector<4x288xf32>
    %34 = arith.addf %28, %33 : vector<4x288xf32>
    %c0_38 = arith.constant 0 : index
    %c0_39 = arith.constant 0 : index
    %c0_40 = arith.constant 0 : index
    %c36 = arith.constant 36 : index
    %35 = vector.load %arg1[%c0_38, %c0_39, %c0_40, %c36] : memref<1x4x1x384xbf16, #tpu.memory_space<vmem>>, vector<1x4x1x288xbf16>
    %36 = vector.shape_cast %35 : vector<1x4x1x288xbf16> to vector<4x288xbf16>
    %c6 = arith.constant 6 : index
    %c0_41 = arith.constant 0 : index
    %c0_42 = arith.constant 0 : index
    %37 = vector.load %arg2[%c6, %c0_41, %c0_42] : memref<9x4x4xbf16, #tpu.memory_space<vmem>>, vector<1x4x4xbf16>
    %38 = vector.shape_cast %37 : vector<1x4x4xbf16> to vector<4x4xbf16>
    %cst_43 = arith.constant dense<0.000000e+00> : vector<4x288xf32>
    %39 = tpu.matmul %38, %36, %cst_43 {dimension_numbers = #tpu.dot_dimension_numbers<[1], [0], [0], [1], [0, 0, 1, 1], [], []>} : vector<4x4xbf16>, vector<4x288xbf16>, vector<4x288xf32> -> vector<4x288xf32>
    %40 = arith.addf %34, %39 : vector<4x288xf32>
    %c0_44 = arith.constant 0 : index
    %c0_45 = arith.constant 0 : index
    %c0_46 = arith.constant 0 : index
    %c37 = arith.constant 37 : index
    %41 = vector.load %arg1[%c0_44, %c0_45, %c0_46, %c37] : memref<1x4x1x384xbf16, #tpu.memory_space<vmem>>, vector<1x4x1x288xbf16>
    %42 = vector.shape_cast %41 : vector<1x4x1x288xbf16> to vector<4x288xbf16>
    %c7 = arith.constant 7 : index
    %c0_47 = arith.constant 0 : index
    %c0_48 = arith.constant 0 : index
    %43 = vector.load %arg2[%c7, %c0_47, %c0_48] : memref<9x4x4xbf16, #tpu.memory_space<vmem>>, vector<1x4x4xbf16>
    %44 = vector.shape_cast %43 : vector<1x4x4xbf16> to vector<4x4xbf16>
    %cst_49 = arith.constant dense<0.000000e+00> : vector<4x288xf32>
    %45 = tpu.matmul %44, %42, %cst_49 {dimension_numbers = #tpu.dot_dimension_numbers<[1], [0], [0], [1], [0, 0, 1, 1], [], []>} : vector<4x4xbf16>, vector<4x288xbf16>, vector<4x288xf32> -> vector<4x288xf32>
    %46 = arith.addf %40, %45 : vector<4x288xf32>
    %c0_50 = arith.constant 0 : index
    %c0_51 = arith.constant 0 : index
    %c0_52 = arith.constant 0 : index
    %c38 = arith.constant 38 : index
    %47 = vector.load %arg1[%c0_50, %c0_51, %c0_52, %c38] : memref<1x4x1x384xbf16, #tpu.memory_space<vmem>>, vector<1x4x1x288xbf16>
    %48 = vector.shape_cast %47 : vector<1x4x1x288xbf16> to vector<4x288xbf16>
    %c8 = arith.constant 8 : index
    %c0_53 = arith.constant 0 : index
    %c0_54 = arith.constant 0 : index
    %49 = vector.load %arg2[%c8, %c0_53, %c0_54] : memref<9x4x4xbf16, #tpu.memory_space<vmem>>, vector<1x4x4xbf16>
    %50 = vector.shape_cast %49 : vector<1x4x4xbf16> to vector<4x4xbf16>
    %cst_55 = arith.constant dense<0.000000e+00> : vector<4x288xf32>
    %51 = tpu.matmul %50, %48, %cst_55 {dimension_numbers = #tpu.dot_dimension_numbers<[1], [0], [0], [1], [0, 0, 1, 1], [], []>} : vector<4x4xbf16>, vector<4x288xbf16>, vector<4x288xf32> -> vector<4x288xf32>
    %52 = arith.addf %46, %51 : vector<4x288xf32>
    %c0_56 = arith.constant 0 : index
    %c0_57 = arith.constant 0 : index
    %53 = vector.load %arg3[%c0_56, %c0_57] : memref<4x1xf32, #tpu.memory_space<vmem>>, vector<4x1xf32>
    %54 = vector.broadcast %53 : vector<4x1xf32> to vector<4x288xf32>
    %55 = arith.addf %52, %54 : vector<4x288xf32>
    %cst_58 = arith.constant 0.000000e+00 : f32
    %56 = vector.broadcast %cst_58 : f32 to vector<4x288xf32>
    %57 = arith.maximumf %55, %56 : vector<4x288xf32>
    %c0_59 = arith.constant 0 : index
    %c0_60 = arith.constant 0 : index
    %58 = vector.load %arg4[%c0_59, %c0_60] : memref<1x288xf32, #tpu.memory_space<vmem>>, vector<1x288xf32>
    %59 = vector.broadcast %58 : vector<1x288xf32> to vector<4x288xf32>
    %60 = arith.mulf %57, %59 : vector<4x288xf32>
    %cst_61 = arith.constant 0.000000e+00 : bf16
    %61 = vector.broadcast %cst_61 : bf16 to vector<1x4x1x384xbf16>
    %c0_62 = arith.constant 0 : index
    %c0_63 = arith.constant 0 : index
    %c0_64 = arith.constant 0 : index
    %c0_65 = arith.constant 0 : index
    %62 = vector.load %arg5[%c0_62, %c0_63, %c0_64, %c0_65] : memref<1x4x1x384xbf16, #tpu.memory_space<vmem>>, vector<1x4x1x384xbf16>
    tpu.vector_store %arg5[%c0_62, %c0_63, %c0_64, %c0_65], %61 {strides = array<i32>} : memref<1x4x1x384xbf16, #tpu.memory_space<vmem>>, vector<1x4x1x384xbf16>,
    %63 = arith.truncf %60 : vector<4x288xf32> to vector<4x288xbf16>
    %c0_66 = arith.constant 0 : index
    %c0_67 = arith.constant 0 : index
    %c0_68 = arith.constant 0 : index
    %c19_69 = arith.constant 19 : index
    %64 = vector.load %arg5[%c0_66, %c0_67, %c0_68, %c19_69] : memref<1x4x1x384xbf16, #tpu.memory_space<vmem>>, vector<1x4x1x288xbf16>
    %65 = vector.shape_cast %64 : vector<1x4x1x288xbf16> to vector<4x288xbf16>
    %66 = vector.shape_cast %63 : vector<4x288xbf16> to vector<1x4x1x288xbf16>
    tpu.vector_store %arg5[%c0_66, %c0_67, %c0_68, %c19_69], %66 {strides = array<i32>} : memref<1x4x1x384xbf16, #tpu.memory_space<vmem>>, vector<1x4x1x288xbf16>,
    return
  }
  func.func @transform_0(%arg0: i32) -> (i32, i32, i32, i32) {
    %c0_i32 = arith.constant 0 : i32
    %c0_i32_0 = arith.constant 0 : i32
    %c0_i32_1 = arith.constant 0 : i32
    %c0_i32_2 = arith.constant 0 : i32
    return %arg0, %c0_i32, %c0_i32_0, %c0_i32_1 : i32, i32, i32, i32
  }
  func.func @transform_1(%arg0: i32) -> (i32, i32, i32) {
    %c0_i32 = arith.constant 0 : i32
    %c0_i32_0 = arith.constant 0 : i32
    %c0_i32_1 = arith.constant 0 : i32
    %c0_i32_2 = arith.constant 0 : i32
    return %c0_i32, %c0_i32_0, %c0_i32_1 : i32, i32, i32
  }
  func.func @transform_2(%arg0: i32) -> (i32, i32) {
    %c0_i32 = arith.constant 0 : i32
    %c0_i32_0 = arith.constant 0 : i32
    %c0_i32_1 = arith.constant 0 : i32
    return %c0_i32, %c0_i32_0 : i32, i32
  }
  func.func @transform_3(%arg0: i32) -> (i32, i32) {
    %c0_i32 = arith.constant 0 : i32
    %c0_i32_0 = arith.constant 0 : i32
    %c0_i32_1 = arith.constant 0 : i32
    return %c0_i32, %c0_i32_0 : i32, i32
  }
  func.func @transform_4(%arg0: i32) -> (i32, i32, i32, i32) {
    %c1_i32 = arith.constant 1 : i32
    %c0_i32 = arith.constant 0 : i32
    %c0_i32_0 = arith.constant 0 : i32
    %c0_i32_1 = arith.constant 0 : i32
    return %arg0, %c1_i32, %c0_i32, %c0_i32_0 : i32, i32, i32, i32
  }
}

module attributes {stable_mosaic.version = 11 : i64} {
  func.func @_tdf_residual_kernel(%arg0: i32, %arg1: i32, %arg2: memref<1x1x16x16xbf16, #tpu.memory_space<vmem>>, %arg3: memref<16x16xbf16, #tpu.memory_space<vmem>>, %arg4: memref<16x16xbf16, #tpu.memory_space<vmem>>, %arg5: memref<1x1x4xf32, #tpu.memory_space<vmem>>, %arg6: memref<1x1x16x16xf32, #tpu.memory_space<vmem>>) attributes {dimension_semantics = [#tpu.dimension_semantics<parallel>, #tpu.dimension_semantics<parallel>], iteration_bounds = array<i64: 2, 4>, scalar_prefetch = 0 : i64, scratch_operands = 0 : i64, tpu.core_type = #tpu.core_type<tc>, window_params = [{transform_indices = @transform_0, window_bounds = array<i64: 1, 1, 16, 16>}, {pipeline_mode = #tpu.pipeline_mode<synchronous>, transform_indices = @transform_1, window_bounds = array<i64: 16, 16>}, {pipeline_mode = #tpu.pipeline_mode<synchronous>, transform_indices = @transform_2, window_bounds = array<i64: 16, 16>}, {transform_indices = @transform_3, window_bounds = array<i64: 1, 1, 4>}, {transform_indices = @transform_4, window_bounds = array<i64: 1, 1, 16, 16>}]} {
    %c0 = arith.constant 0 : index
    %c0_0 = arith.constant 0 : index
    %c0_1 = arith.constant 0 : index
    %c0_2 = arith.constant 0 : index
    %0 = vector.load %arg2[%c0, %c0_0, %c0_1, %c0_2] : memref<1x1x16x16xbf16, #tpu.memory_space<vmem>>, vector<1x1x16x16xbf16>
    %1 = vector.shape_cast %0 : vector<1x1x16x16xbf16> to vector<16x16xbf16>
    %c0_3 = arith.constant 0 : index
    %c0_4 = arith.constant 0 : index
    %c0_5 = arith.constant 0 : index
    %2 = vector.load %arg5[%c0_3, %c0_4, %c0_5] : memref<1x1x4xf32, #tpu.memory_space<vmem>>, vector<1x1x4xf32>
    %3 = vector.shape_cast %2 : vector<1x1x4xf32> to vector<1x4xf32>
    %4 = vector.extract_strided_slice %3 {offsets = [0, 0], sizes = [1, 1], strides = [1, 1]} : vector<1x4xf32> to vector<1x1xf32>
    %5 = vector.extract_strided_slice %3 {offsets = [0, 1], sizes = [1, 1], strides = [1, 1]} : vector<1x4xf32> to vector<1x1xf32>
    %6 = vector.extract_strided_slice %3 {offsets = [0, 2], sizes = [1, 1], strides = [1, 1]} : vector<1x4xf32> to vector<1x1xf32>
    %7 = vector.extract_strided_slice %3 {offsets = [0, 3], sizes = [1, 1], strides = [1, 1]} : vector<1x4xf32> to vector<1x1xf32>
    %c0_6 = arith.constant 0 : index
    %c0_7 = arith.constant 0 : index
    %8 = vector.load %arg3[%c0_6, %c0_7] : memref<16x16xbf16, #tpu.memory_space<vmem>>, vector<16x16xbf16>
    %cst = arith.constant dense<0.000000e+00> : vector<16x16xf32>
    %9 = tpu.matmul %1, %8, %cst {dimension_numbers = #tpu.dot_dimension_numbers<[1], [0], [0], [1], [0, 0, 1, 1], [], []>} : vector<16x16xbf16>, vector<16x16xbf16>, vector<16x16xf32> -> vector<16x16xf32>
    %10 = vector.broadcast %4 : vector<1x1xf32> to vector<16x16xf32>
    %11 = arith.mulf %9, %10 : vector<16x16xf32>
    %12 = vector.broadcast %5 : vector<1x1xf32> to vector<16x16xf32>
    %13 = arith.addf %11, %12 : vector<16x16xf32>
    %cst_8 = arith.constant 0.000000e+00 : f32
    %14 = vector.broadcast %cst_8 : f32 to vector<16x16xf32>
    %15 = arith.maximumf %13, %14 : vector<16x16xf32>
    %16 = arith.truncf %15 : vector<16x16xf32> to vector<16x16xbf16>
    %c0_9 = arith.constant 0 : index
    %c0_10 = arith.constant 0 : index
    %17 = vector.load %arg4[%c0_9, %c0_10] : memref<16x16xbf16, #tpu.memory_space<vmem>>, vector<16x16xbf16>
    %cst_11 = arith.constant dense<0.000000e+00> : vector<16x16xf32>
    %18 = tpu.matmul %16, %17, %cst_11 {dimension_numbers = #tpu.dot_dimension_numbers<[1], [0], [0], [1], [0, 0, 1, 1], [], []>} : vector<16x16xbf16>, vector<16x16xbf16>, vector<16x16xf32> -> vector<16x16xf32>
    %19 = vector.broadcast %6 : vector<1x1xf32> to vector<16x16xf32>
    %20 = arith.mulf %18, %19 : vector<16x16xf32>
    %21 = vector.broadcast %7 : vector<1x1xf32> to vector<16x16xf32>
    %22 = arith.addf %20, %21 : vector<16x16xf32>
    %cst_12 = arith.constant 0.000000e+00 : f32
    %23 = vector.broadcast %cst_12 : f32 to vector<16x16xf32>
    %24 = arith.maximumf %22, %23 : vector<16x16xf32>
    %25 = arith.extf %1 : vector<16x16xbf16> to vector<16x16xf32>
    %26 = arith.addf %25, %24 : vector<16x16xf32>
    %c0_13 = arith.constant 0 : index
    %c0_14 = arith.constant 0 : index
    %c0_15 = arith.constant 0 : index
    %c0_16 = arith.constant 0 : index
    %27 = vector.load %arg6[%c0_13, %c0_14, %c0_15, %c0_16] : memref<1x1x16x16xf32, #tpu.memory_space<vmem>>, vector<1x1x16x16xf32>
    %28 = vector.shape_cast %27 : vector<1x1x16x16xf32> to vector<16x16xf32>
    %29 = vector.shape_cast %26 : vector<16x16xf32> to vector<1x1x16x16xf32>
    tpu.vector_store %arg6[%c0_13, %c0_14, %c0_15, %c0_16], %29 {strides = array<i32>} : memref<1x1x16x16xf32, #tpu.memory_space<vmem>>, vector<1x1x16x16xf32>,
    return
  }
  func.func @transform_0(%arg0: i32, %arg1: i32) -> (i32, i32, i32, i32) {
    %c0_i32 = arith.constant 0 : i32
    %c0_i32_0 = arith.constant 0 : i32
    %c0_i32_1 = arith.constant 0 : i32
    return %arg0, %arg1, %c0_i32, %c0_i32_0 : i32, i32, i32, i32
  }
  func.func @transform_1(%arg0: i32, %arg1: i32) -> (i32, i32) {
    %c0_i32 = arith.constant 0 : i32
    %c0_i32_0 = arith.constant 0 : i32
    %c0_i32_1 = arith.constant 0 : i32
    return %c0_i32, %c0_i32_0 : i32, i32
  }
  func.func @transform_2(%arg0: i32, %arg1: i32) -> (i32, i32) {
    %c0_i32 = arith.constant 0 : i32
    %c0_i32_0 = arith.constant 0 : i32
    %c0_i32_1 = arith.constant 0 : i32
    return %c0_i32, %c0_i32_0 : i32, i32
  }
  func.func @transform_3(%arg0: i32, %arg1: i32) -> (i32, i32, i32) {
    %c0_i32 = arith.constant 0 : i32
    %c0_i32_0 = arith.constant 0 : i32
    %c0_i32_1 = arith.constant 0 : i32
    return %arg1, %c0_i32, %c0_i32_0 : i32, i32, i32
  }
  func.func @transform_4(%arg0: i32, %arg1: i32) -> (i32, i32, i32, i32) {
    %c0_i32 = arith.constant 0 : i32
    %c0_i32_0 = arith.constant 0 : i32
    %c0_i32_1 = arith.constant 0 : i32
    return %arg0, %arg1, %c0_i32, %c0_i32_0 : i32, i32, i32, i32
  }
}

</mosaic_0001>

<llo_original>
// kernel: squeeze.1
$region0: #{squeeze.1}
  %s0 = inlined_call_operand.vmem [shape: bf16[2,4,324], index: 0, kind: input, shape index: {}]
  %s1 = inlined_call_operand.vmem [shape: bf16[2,4,18,18], index: 1, kind: output, shape index: {}]
  $region1: #{squeeze.1} parent=0
    #allocation0 [shape = 'u8[98304]{0}', space=vmem, size = 0x18000, scoped, tag = 'scoped mem for output reshape']
    #allocation1 [shape = 'u8[24576]{0}', space=vmem, size = 0x6000, scoped, tag = 'scoped mem for input reshape']
    %s3 = smul.u32 2, 2
    %s4 = sshllo.u32 0, %s3
    %s5 = smul.addr 2, 5
    %s6 = scalar_lea.vmem %s0, %s5
    %s7 = sshrl.u32 %s4, 1
    %s8 = sor.u32 %s4, %s7
    %s9 = sand.u32 %s8, 85
    %s10 = sshrl.u32 %s9, 1
    %s11 = sor.u32 %s9, %s10
    %s12 = sand.u32 51, %s11
    %s13 = sshrl.u32 %s12, 2
    %s14 = sor.u32 %s12, %s13
    %s15 = sand.u32 15, %s14
    %v16 = vld [vmem:[%s6] sm:%s15]
    %v17 = vunpack.c.l.bf16 %v16
    %v18 = vunpack.c.h.bf16 %v16
    %s19 = scalar_lea.vmem [#allocation1], 40
    %20 = vst [vmem:[%s19] sm:%s4] %v17
    %s21 = smul.addr 2, 4
    %s22 = scalar_lea.vmem %s0, %s21
    %s23 = sshrl.u32 %s4, 1
    %s24 = sor.u32 %s4, %s23
    %s25 = sand.u32 %s24, 85
    %s26 = sshrl.u32 %s25, 1
    %s27 = sor.u32 %s25, %s26
    %s28 = sand.u32 51, %s27
    %s29 = sshrl.u32 %s28, 2
    %s30 = sor.u32 %s28, %s29
    %s31 = sand.u32 15, %s30
    %v32 = vld [vmem:[%s22] sm:%s31]
    %v33 = vunpack.c.l.bf16 %v32
    %v34 = vunpack.c.h.bf16 %v32
    %s35 = scalar_lea.vmem [#allocation1], 32
    %36 = vst [vmem:[%s35] sm:%s4] %v33
    %s37 = smul.addr 2, 3
    %s38 = scalar_lea.vmem %s0, %s37
    %s39 = sshrl.u32 %s4, 1
    %s40 = sor.u32 %s4, %s39
    %s41 = sand.u32 %s40, 85
    %s42 = sshrl.u32 %s41, 1
    %s43 = sor.u32 %s41, %s42
    %s44 = sand.u32 51, %s43
    %s45 = sshrl.u32 %s44, 2
    %s46 = sor.u32 %s44, %s45
    %s47 = sand.u32 15, %s46
    %v48 = vld [vmem:[%s38] sm:%s47]
    %v49 = vunpack.c.l.bf16 %v48
    %v50 = vunpack.c.h.bf16 %v48
    %s51 = scalar_lea.vmem [#allocation1], 24
    %52 = vst [vmem:[%s51] sm:%s4] %v49
    %s53 = smul.addr 2, 2
    %s54 = scalar_lea.vmem %s0, %s53
    %s55 = sshrl.u32 %s4, 1
    %s56 = sor.u32 %s4, %s55
    %s57 = sand.u32 %s56, 85
    %s58 = sshrl.u32 %s57, 1
    %s59 = sor.u32 %s57, %s58
    %s60 = sand.u32 51, %s59
    %s61 = sshrl.u32 %s60, 2
    %s62 = sor.u32 %s60, %s61
    %s63 = sand.u32 15, %s62
    %v64 = vld [vmem:[%s54] sm:%s63]
    %v65 = vunpack.c.l.bf16 %v64
    %v66 = vunpack.c.h.bf16 %v64
    %s67 = scalar_lea.vmem [#allocation1], 16
    %68 = vst [vmem:[%s67] sm:%s4] %v65
    %s69 = scalar_lea.vmem %s0, 2
    %s70 = sshrl.u32 %s4, 1
    %s71 = sor.u32 %s4, %s70
    %s72 = sand.u32 %s71, 85
    %s73 = sshrl.u32 %s72, 1
    %s74 = sor.u32 %s72, %s73
    %s75 = sand.u32 51, %s74
    %s76 = sshrl.u32 %s75, 2
    %s77 = sor.u32 %s75, %s76
    %s78 = sand.u32 15, %s77
    %v79 = vld [vmem:[%s69] sm:%s78]
    %v80 = vunpack.c.l.bf16 %v79
    %v81 = vunpack.c.h.bf16 %v79
    %s82 = scalar_lea.vmem [#allocation1], 8
    %83 = vst [vmem:[%s82] sm:%s4] %v80
    %s84 = sshrl.u32 %s4, 1
    %s85 = sor.u32 %s4, %s84
    %s86 = sand.u32 %s85, 85
    %s87 = sshrl.u32 %s86, 1
    %s88 = sor.u32 %s86, %s87
    %s89 = sand.u32 51, %s88
    %s90 = sshrl.u32 %s89, 2
    %s91 = sor.u32 %s89, %s90
    %s92 = sand.u32 15, %s91
    %v93 = vld [vmem:[%s0] sm:%s92]
    %v94 = vunpack.c.l.bf16 %v93
    %v95 = vunpack.c.h.bf16 %v93
    %96 = vst [vmem:[#allocation1] sm:%s4] %v94
    %v97 = vld [vmem:[#allocation1] sm:$0xf]
    %vm98 = vcmask 146432
    %99 = vst.msk [vmem:[#allocation0] ss:$24 sm:$0xf] %vm98, %v97
    %s100 = scalar_lea.vmem [#allocation1], 24
    %v101 = vld [vmem:[%s100] sm:$0xf]
    %vm102 = vcmask 146432
    %s103 = scalar_lea.vmem [#allocation0], 96
    %104 = vst.msk [vmem:[%s103] ss:$24 sm:$0xf] %vm102, %v101
    %s105 = scalar_lea.vmem [#allocation1], 16
    %v106 = vld.sshfl [vmem:[%s105] sm:$0xff pattern:$0x22222301]
    %s107 = scalar_lea.vmem [#allocation1], 40
    %v108 = vld.sshfl [vmem:[%s107] sm:$0xff pattern:$0x23011111]
    %vm109 = vcmask 1047556
    %v110 = vsel %vm109, %v108, %v106
    %111 = vrot.lane.b32.xlu0 %v110, 114
    %v112 = vpop.permute.xlu0 %111
    %vm113 = vcmask 146432
    %s114 = scalar_lea.vmem [#allocation0], 39
    %115 = vst.msk [vmem:[%s114] ss:$-24 sm:$0x3] %vm113, %v112
    %s116 = scalar_lea.vmem [#allocation0], 135
    %117 = vst.msk [vmem:[%s116] ss:$-24 sm:$0xc] %vm113, %v112
    %s118 = scalar_lea.vmem [#allocation0], 231
    %119 = vst.msk [vmem:[%s118] ss:$-24 sm:$0x30] %vm113, %v112
    %s120 = scalar_lea.vmem [#allocation0], 327
    %121 = vst.msk [vmem:[%s120] ss:$-24 sm:$0xc0] %vm113, %v112
    %s122 = scalar_lea.vmem [#allocation1], 8
    %v123 = vld.sshfl [vmem:[%s122] sm:$0xff pattern:$0x22222301]
    %s124 = scalar_lea.vmem [#allocation1], 32
    %v125 = vld.sshfl [vmem:[%s124] sm:$0xff pattern:$0x23011111]
    %vm126 = vcmask 1047556
    %v127 = vsel %vm126, %v125, %v123
    %128 = vrot.lane.b32.xlu0 %v127, 112
    %v129 = vpop.permute.xlu0 %128
    %vm130 = vcmask 146432
    %s131 = scalar_lea.vmem [#allocation0], 32
    %132 = vst.msk [vmem:[%s131] ss:$-24 sm:$0x3] %vm130, %v129
    %s133 = scalar_lea.vmem [#allocation0], 128
    %134 = vst.msk [vmem:[%s133] ss:$-24 sm:$0xc] %vm130, %v129
    %s135 = scalar_lea.vmem [#allocation0], 224
    %136 = vst.msk [vmem:[%s135] ss:$-24 sm:$0x30] %vm130, %v129
    %s137 = scalar_lea.vmem [#allocation0], 320
    %138 = vst.msk [vmem:[%s137] ss:$-24 sm:$0xc0] %vm130, %v129
    %v139 = vld.sshfl [vmem:[#allocation1] sm:$0xff pattern:$0x11111230]
    %s140 = scalar_lea.vmem [#allocation1], 24
    %v141 = vld.sshfl [vmem:[%s140] sm:$0xff pattern:$0x12300000]
    %vm142 = vcmask 1047556
    %v143 = vsel %vm142, %v141, %v139
    %144 = vrot.lane.b32.xlu0 %v143, 110
    %v145 = vpop.permute.xlu0 %144
    %vm146 = vcmask 146432
    %s147 = scalar_lea.vmem [#allocation0], 1
    %148 = vst.msk [vmem:[%s147] ss:$72 sm:$0x3] %vm146, %v145
    %s149 = scalar_lea.vmem [#allocation0], 97
    %150 = vst.msk [vmem:[%s149] ss:$-24 sm:$0xc] %vm146, %v145
    %s151 = scalar_lea.vmem [#allocation0], 4294967105
    %152 = vst.msk [vmem:[%s151] ss:$72 sm:$0x30] %vm146, %v145
    %s153 = scalar_lea.vmem [#allocation0], 289
    %154 = vst.msk [vmem:[%s153] ss:$-24 sm:$0xc0] %vm146, %v145
    %s155 = scalar_lea.vmem [#allocation1], 16
    %v156 = vld.sshfl [vmem:[%s155] sm:$0xff pattern:$0x33333012]
    %s157 = scalar_lea.vmem [#allocation1], 40
    %v158 = vld.sshfl [vmem:[%s157] sm:$0xff pattern:$0x30122222]
    %vm159 = vcmask 1047556
    %v160 = vsel %vm159, %v158, %v156
    %161 = vrot.lane.b32.xlu0 %v160, 96
    %v162 = vpop.permute.xlu0 %161
    %vm163 = vcmask 146432
    %s164 = scalar_lea.vmem [#allocation0], 64
    %165 = vst.msk [vmem:[%s164] ss:$-24 sm:$0x7] %vm163, %v162
    %s166 = scalar_lea.vmem [#allocation0], 4294967168
    %167 = vst.msk [vmem:[%s166] ss:$72 sm:$0x18] %vm163, %v162
    %s168 = scalar_lea.vmem [#allocation0], 256
    %169 = vst.msk [vmem:[%s168] ss:$-24 sm:$0x60] %vm163, %v162
    %s170 = scalar_lea.vmem [#allocation0], 177
    %171 = vst.msk [vmem:[%s170] sm:$0x80] %vm163, %v162
    %s172 = scalar_lea.vmem [#allocation1], 8
    %v173 = vld.sshfl [vmem:[%s172] sm:$0xff pattern:$0x22222301]
    %s174 = scalar_lea.vmem [#allocation1], 32
    %v175 = vld.sshfl [vmem:[%s174] sm:$0xff pattern:$0x23011111]
    %vm176 = vcmask 1047556
    %v177 = vsel %vm176, %v175, %v173
    %178 = vrot.lane.b32.xlu0 %v177, 94
    %v179 = vpop.permute.xlu0 %178
    %vm180 = vcmask 146432
    %s181 = scalar_lea.vmem [#allocation0], 33
    %182 = vst.msk [vmem:[%s181] ss:$-24 sm:$0x3] %vm180, %v179
    %s183 = scalar_lea.vmem [#allocation0], 129
    %184 = vst.msk [vmem:[%s183] ss:$-24 sm:$0xc] %vm180, %v179
    %s185 = scalar_lea.vmem [#allocation0], 225
    %186 = vst.msk [vmem:[%s185] ss:$-24 sm:$0x30] %vm180, %v179
    %s187 = scalar_lea.vmem [#allocation0], 321
    %188 = vst.msk [vmem:[%s187] ss:$-24 sm:$0xc0] %vm180, %v179
    %v189 = vld.sshfl [vmem:[#allocation1] sm:$0xff pattern:$0x11111230]
    %s190 = scalar_lea.vmem [#allocation1], 24
    %v191 = vld.sshfl [vmem:[%s190] sm:$0xff pattern:$0x12300000]
    %vm192 = vcmask 1047556
    %v193 = vsel %vm192, %v191, %v189
    %194 = vrot.lane.b32.xlu0 %v193, 92
    %v195 = vpop.permute.xlu0 %194
    %vm196 = vcmask 146432
    %s197 = scalar_lea.vmem [#allocation0], 2
    %198 = vst.msk [vmem:[%s197] ss:$72 sm:$0x3] %vm196, %v195
    %s199 = scalar_lea.vmem [#allocation0], 98
    %200 = vst.msk [vmem:[%s199] ss:$-24 sm:$0xc] %vm196, %v195
    %s201 = scalar_lea.vmem [#allocation0], 4294967106
    %202 = vst.msk [vmem:[%s201] ss:$72 sm:$0x30] %vm196, %v195
    %s203 = scalar_lea.vmem [#allocation0], 290
    %204 = vst.msk [vmem:[%s203] ss:$-24 sm:$0xc0] %vm196, %v195
    %s205 = scalar_lea.vmem [#allocation1], 16
    %v206 = vld.sshfl [vmem:[%s205] sm:$0xff pattern:$0x33333012]
    %s207 = scalar_lea.vmem [#allocation1], 40
    %v208 = vld.sshfl [vmem:[%s207] sm:$0xff pattern:$0x30122222]
    %vm209 = vcmask 1047556
    %v210 = vsel %vm209, %v208, %v206
    %211 = vrot.lane.b32.xlu0 %v210, 78
    %v212 = vpop.permute.xlu0 %211
    %vm213 = vcmask 146432
    %s214 = scalar_lea.vmem [#allocation0], 65
    %215 = vst.msk [vmem:[%s214] ss:$-24 sm:$0x7] %vm213, %v212
    %s216 = scalar_lea.vmem [#allocation0], 4294967169
    %217 = vst.msk [vmem:[%s216] ss:$72 sm:$0x18] %vm213, %v212
    %s218 = scalar_lea.vmem [#allocation0], 257
    %219 = vst.msk [vmem:[%s218] ss:$-24 sm:$0x60] %vm213, %v212
    %s220 = scalar_lea.vmem [#allocation0], 178
    %221 = vst.msk [vmem:[%s220] sm:$0x80] %vm213, %v212
    %s222 = scalar_lea.vmem [#allocation1], 8
    %v223 = vld.sshfl [vmem:[%s222] sm:$0xff pattern:$0x22222301]
    %s224 = scalar_lea.vmem [#allocation1], 32
    %v225 = vld.sshfl [vmem:[%s224] sm:$0xff pattern:$0x23011111]
    %vm226 = vcmask 1047556
    %v227 = vsel %vm226, %v225, %v223
    %228 = vrot.lane.b32.xlu0 %v227, 76
    %v229 = vpop.permute.xlu0 %228
    %vm230 = vcmask 146432
    %s231 = scalar_lea.vmem [#allocation0], 34
    %232 = vst.msk [vmem:[%s231] ss:$-24 sm:$0x3] %vm230, %v229
    %s233 = scalar_lea.vmem [#allocation0], 130
    %234 = vst.msk [vmem:[%s233] ss:$-24 sm:$0xc] %vm230, %v229
    %s235 = scalar_lea.vmem [#allocation0], 226
    %236 = vst.msk [vmem:[%s235] ss:$-24 sm:$0x30] %vm230, %v229
    %s237 = scalar_lea.vmem [#allocation0], 322
    %238 = vst.msk [vmem:[%s237] ss:$-24 sm:$0xc0] %vm230, %v229
    %v239 = vld.sshfl [vmem:[#allocation1] sm:$0xff pattern:$0x11111230]
    %s240 = scalar_lea.vmem [#allocation1], 24
    %v241 = vld.sshfl [vmem:[%s240] sm:$0xff pattern:$0x12300000]
    %vm242 = vcmask 1047556
    %v243 = vsel %vm242, %v241, %v239
    %244 = vrot.lane.b32.xlu0 %v243, 74
    %v245 = vpop.permute.xlu0 %244
    %vm246 = vcmask 146432
    %s247 = scalar_lea.vmem [#allocation0], 3
    %248 = vst.msk [vmem:[%s247] ss:$72 sm:$0x3] %vm246, %v245
    %s249 = scalar_lea.vmem [#allocation0], 99
    %250 = vst.msk [vmem:[%s249] ss:$-24 sm:$0xc] %vm246, %v245
    %s251 = scalar_lea.vmem [#allocation0], 4294967107
    %252 = vst.msk [vmem:[%s251] ss:$72 sm:$0x30] %vm246, %v245
    %s253 = scalar_lea.vmem [#allocation0], 291
    %254 = vst.msk [vmem:[%s253] ss:$-24 sm:$0xc0] %vm246, %v245
    %s255 = scalar_lea.vmem [#allocation1], 8
    %v256 = vld.sshfl [vmem:[%s255] sm:$0xff pattern:$0x22222301]
    %s257 = scalar_lea.vmem [#allocation1], 32
    %v258 = vld.sshfl [vmem:[%s257] sm:$0xff pattern:$0x23011111]
    %vm259 = vcmask 1047556
    %v260 = vsel %vm259, %v258, %v256
    %261 = vrot.lane.b32.xlu0 %v260, 58
    %v262 = vpop.permute.xlu0 %261
    %vm263 = vcmask 146432
    %s264 = scalar_lea.vmem [#allocation0], 35
    %265 = vst.msk [vmem:[%s264] ss:$-24 sm:$0x3] %vm263, %v262
    %s266 = scalar_lea.vmem [#allocation0], 131
    %267 = vst.msk [vmem:[%s266] ss:$-24 sm:$0xc] %vm263, %v262
    %s268 = scalar_lea.vmem [#allocation0], 227
    %269 = vst.msk [vmem:[%s268] ss:$-24 sm:$0x30] %vm263, %v262
    %s270 = scalar_lea.vmem [#allocation0], 323
    %271 = vst.msk [vmem:[%s270] ss:$-24 sm:$0xc0] %vm263, %v262
    %v272 = vld.sshfl [vmem:[#allocation1] sm:$0xff pattern:$0x11111230]
    %s273 = scalar_lea.vmem [#allocation1], 24
    %v274 = vld.sshfl [vmem:[%s273] sm:$0xff pattern:$0x12300000]
    %vm275 = vcmask 1047556
    %v276 = vsel %vm275, %v274, %v272
    %277 = vrot.lane.b32.xlu0 %v276, 56
    %v278 = vpop.permute.xlu0 %277
    %vm279 = vcmask 146432
    %s280 = scalar_lea.vmem [#allocation0], 4
    %281 = vst.msk [vmem:[%s280] ss:$72 sm:$0x3] %vm279, %v278
    %s282 = scalar_lea.vmem [#allocation0], 100
    %283 = vst.msk [vmem:[%s282] ss:$-24 sm:$0xc] %vm279, %v278
    %s284 = scalar_lea.vmem [#allocation0], 4294967108
    %285 = vst.msk [vmem:[%s284] ss:$72 sm:$0x30] %vm279, %v278
    %s286 = scalar_lea.vmem [#allocation0], 292
    %287 = vst.msk [vmem:[%s286] ss:$-24 sm:$0xc0] %vm279, %v278
    %s288 = scalar_lea.vmem [#allocation1], 8
    %v289 = vld.sshfl [vmem:[%s288] sm:$0xff pattern:$0x22222301]
    %s290 = scalar_lea.vmem [#allocation1], 32
    %v291 = vld.sshfl [vmem:[%s290] sm:$0xff pattern:$0x23011111]
    %vm292 = vcmask 1047556
    %v293 = vsel %vm292, %v291, %v289
    %294 = vrot.lane.b32.xlu0 %v293, 40
    %v295 = vpop.permute.xlu0 %294
    %vm296 = vcmask 146432
    %s297 = scalar_lea.vmem [#allocation0], 36
    %298 = vst.msk [vmem:[%s297] ss:$-24 sm:$0x3] %vm296, %v295
    %s299 = scalar_lea.vmem [#allocation0], 132
    %300 = vst.msk [vmem:[%s299] ss:$-24 sm:$0xc] %vm296, %v295
    %s301 = scalar_lea.vmem [#allocation0], 228
    %302 = vst.msk [vmem:[%s301] ss:$-24 sm:$0x30] %vm296, %v295
    %s303 = scalar_lea.vmem [#allocation0], 324
    %304 = vst.msk [vmem:[%s303] ss:$-24 sm:$0xc0] %vm296, %v295
    %v305 = vld.sshfl [vmem:[#allocation1] sm:$0xff pattern:$0x11111230]
    %s306 = scalar_lea.vmem [#allocation1], 24
    %v307 = vld.sshfl [vmem:[%s306] sm:$0xff pattern:$0x12300000]
    %vm308 = vcmask 1047556
    %v309 = vsel %vm308, %v307, %v305
    %310 = vrot.lane.b32.xlu0 %v309, 38
    %v311 = vpop.permute.xlu0 %310
    %vm312 = vcmask 146432
    %s313 = scalar_lea.vmem [#allocation0], 5
    %314 = vst.msk [vmem:[%s313] ss:$72 sm:$0x3] %vm312, %v311
    %s315 = scalar_lea.vmem [#allocation0], 101
    %316 = vst.msk [vmem:[%s315] ss:$-24 sm:$0xc] %vm312, %v311
    %s317 = scalar_lea.vmem [#allocation0], 4294967109
    %318 = vst.msk [vmem:[%s317] ss:$72 sm:$0x30] %vm312, %v311
    %s319 = scalar_lea.vmem [#allocation0], 293
    %320 = vst.msk [vmem:[%s319] ss:$-24 sm:$0xc0] %vm312, %v311
    %s321 = scalar_lea.vmem [#allocation1], 8
    %v322 = vld.sshfl [vmem:[%s321] sm:$0xff pattern:$0x22222301]
    %s323 = scalar_lea.vmem [#allocation1], 32
    %v324 = vld.sshfl [vmem:[%s323] sm:$0xff pattern:$0x23011111]
    %vm325 = vcmask 1047556
    %v326 = vsel %vm325, %v324, %v322
    %327 = vrot.lane.b32.xlu0 %v326, 22
    %v328 = vpop.permute.xlu0 %327
    %vm329 = vcmask 146432
    %s330 = scalar_lea.vmem [#allocation0], 37
    %331 = vst.msk [vmem:[%s330] ss:$-24 sm:$0x3] %vm329, %v328
    %s332 = scalar_lea.vmem [#allocation0], 133
    %333 = vst.msk [vmem:[%s332] ss:$-24 sm:$0xc] %vm329, %v328
    %s334 = scalar_lea.vmem [#allocation0], 229
    %335 = vst.msk [vmem:[%s334] ss:$-24 sm:$0x30] %vm329, %v328
    %s336 = scalar_lea.vmem [#allocation0], 325
    %337 = vst.msk [vmem:[%s336] ss:$-24 sm:$0xc0] %vm329, %v328
    %v338 = vld.sshfl [vmem:[#allocation1] sm:$0xff pattern:$0x11111230]
    %s339 = scalar_lea.vmem [#allocation1], 24
    %v340 = vld.sshfl [vmem:[%s339] sm:$0xff pattern:$0x12300000]
    %vm341 = vcmask 1047556
    %v342 = vsel %vm341, %v340, %v338
    %343 = vrot.lane.b32.xlu0 %v342, 20
    %v344 = vpop.permute.xlu0 %343
    %vm345 = vcmask 146432
    %s346 = scalar_lea.vmem [#allocation0], 6
    %347 = vst.msk [vmem:[%s346] ss:$72 sm:$0x3] %vm345, %v344
    %s348 = scalar_lea.vmem [#allocation0], 102
    %349 = vst.msk [vmem:[%s348] ss:$-24 sm:$0xc] %vm345, %v344
    %s350 = scalar_lea.vmem [#allocation0], 4294967110
    %351 = vst.msk [vmem:[%s350] ss:$72 sm:$0x30] %vm345, %v344
    %s352 = scalar_lea.vmem [#allocation0], 294
    %353 = vst.msk [vmem:[%s352] ss:$-24 sm:$0xc0] %vm345, %v344
    %s354 = scalar_lea.vmem [#allocation1], 8
    %v355 = vld.sshfl [vmem:[%s354] sm:$0xff pattern:$0x22222301]
    %s356 = scalar_lea.vmem [#allocation1], 32
    %v357 = vld.sshfl [vmem:[%s356] sm:$0xff pattern:$0x23011111]
    %vm358 = vcmask 1047556
    %v359 = vsel %vm358, %v357, %v355
    %s360 = scalar_lea.vmem [#allocation1], 16
    %v361 = vld.sshfl [vmem:[%s360] sm:$0xff pattern:$0x22222301]
    %s362 = scalar_lea.vmem [#allocation1], 40
    %v363 = vld.sshfl [vmem:[%s362] sm:$0xff pattern:$0x23011111]
    %vm364 = vcmask 1047556
    %v365 = vsel %vm364, %v363, %v361
    %vm366 = vcmask 1014784
    %v367 = vsel %vm366, %v365, %v359
    %368 = vrot.lane.b32.xlu0 %v367, 4
    %v369 = vpop.permute.xlu0 %368
    %vm370 = vcmask 31744
    %s371 = scalar_lea.vmem [#allocation0], 38
    %372 = vst.msk [vmem:[%s371] ss:$-24 sm:$0x3] %vm370, %v369
    %s373 = scalar_lea.vmem [#allocation0], 134
    %374 = vst.msk [vmem:[%s373] ss:$-24 sm:$0xc] %vm370, %v369
    %s375 = scalar_lea.vmem [#allocation0], 230
    %376 = vst.msk [vmem:[%s375] ss:$-24 sm:$0x30] %vm370, %v369
    %s377 = scalar_lea.vmem [#allocation0], 326
    %378 = vst.msk [vmem:[%s377] ss:$-24 sm:$0xc0] %vm370, %v369
    %vm379 = vcmask 146464
    %s380 = scalar_lea.vmem [#allocation0], 38
    %381 = vst.msk [vmem:[%s380] ss:$-24 sm:$0x3] %vm379, %v369
    %s382 = scalar_lea.vmem [#allocation0], 134
    %383 = vst.msk [vmem:[%s382] ss:$-24 sm:$0xc] %vm379, %v369
    %s384 = scalar_lea.vmem [#allocation0], 230
    %385 = vst.msk [vmem:[%s384] ss:$-24 sm:$0x30] %vm379, %v369
    %s386 = scalar_lea.vmem [#allocation0], 326
    %387 = vst.msk [vmem:[%s386] ss:$-24 sm:$0xc0] %vm379, %v369
    %v388 = vld.sshfl [vmem:[#allocation1] sm:$0xff pattern:$0x11111230]
    %s389 = scalar_lea.vmem [#allocation1], 24
    %v390 = vld.sshfl [vmem:[%s389] sm:$0xff pattern:$0x12300000]
    %vm391 = vcmask 1047556
    %v392 = vsel %vm391, %v390, %v388
    %s393 = scalar_lea.vmem [#allocation1], 8
    %v394 = vld.sshfl [vmem:[%s393] sm:$0xff pattern:$0x11111230]
    %s395 = scalar_lea.vmem [#allocation1], 32
    %v396 = vld.sshfl [vmem:[%s395] sm:$0xff pattern:$0x12300000]
    %vm397 = vcmask 1047556
    %v398 = vsel %vm397, %v396, %v394
    %vm399 = vcmask 1031168
    %v400 = vsel %vm399, %v398, %v392
    %401 = vrot.lane.b32.xlu0 %v400, 2
    %v402 = vpop.permute.xlu0 %401
    %vm403 = vcmask 15360
    %s404 = scalar_lea.vmem [#allocation0], 7
    %405 = vst.msk [vmem:[%s404] ss:$72 sm:$0x3] %vm403, %v402
    %s406 = scalar_lea.vmem [#allocation0], 103
    %407 = vst.msk [vmem:[%s406] ss:$-24 sm:$0xc] %vm403, %v402
    %s408 = scalar_lea.vmem [#allocation0], 4294967111
    %409 = vst.msk [vmem:[%s408] ss:$72 sm:$0x30] %vm403, %v402
    %s410 = scalar_lea.vmem [#allocation0], 295
    %411 = vst.msk [vmem:[%s410] ss:$-24 sm:$0xc0] %vm403, %v402
    %vm412 = vcmask 146448
    %s413 = scalar_lea.vmem [#allocation0], 7
    %414 = vst.msk [vmem:[%s413] ss:$72 sm:$0x3] %vm412, %v402
    %s415 = scalar_lea.vmem [#allocation0], 103
    %416 = vst.msk [vmem:[%s415] ss:$-24 sm:$0xc] %vm412, %v402
    %s417 = scalar_lea.vmem [#allocation0], 4294967111
    %418 = vst.msk [vmem:[%s417] ss:$72 sm:$0x30] %vm412, %v402
    %s419 = scalar_lea.vmem [#allocation0], 295
    %420 = vst.msk [vmem:[%s419] ss:$-24 sm:$0xc0] %vm412, %v402
    %s422 = smul.u32 4, 2
    %s423 = sshllo.u32 0, %s422
    %s424 = sshrl.u32 %s422, 1
    %v425 = vld [vmem:[#allocation0] sm:%s423]
    %v426 = vpack.c.bf16 0.0, %v425
    %s427 = sshllo.u32 0, %s424
    %428 = vst [vmem:[%s1] sm:%s427] %v426
    %s429 = scalar_lea.vmem [#allocation0], 8
    %v430 = vld [vmem:[%s429] sm:%s423]
    %v431 = vpack.c.bf16 0.0, %v430
    %s432 = sshllo.u32 0, %s424
    %s433 = scalar_lea.vmem %s1, 4
    %434 = vst [vmem:[%s433] sm:%s432] %v431
    %s435 = scalar_lea.vmem [#allocation0], 16
    %v436 = vld [vmem:[%s435] sm:%s423]
    %v437 = vpack.c.bf16 0.0, %v436
    %s438 = sshllo.u32 0, %s424
    %s439 = smul.addr 4, 2
    %s440 = scalar_lea.vmem %s1, %s439
    %441 = vst [vmem:[%s440] sm:%s438] %v437
    %s442 = scalar_lea.vmem [#allocation0], 24
    %v443 = vld [vmem:[%s442] sm:%s423]
    %v444 = vpack.c.bf16 0.0, %v443
    %s445 = sshllo.u32 0, %s424
    %s446 = smul.addr 4, 3
    %s447 = scalar_lea.vmem %s1, %s446
    %448 = vst [vmem:[%s447] sm:%s445] %v444
    %s449 = scalar_lea.vmem [#allocation0], 32
    %v450 = vld [vmem:[%s449] sm:%s423]
    %v451 = vpack.c.bf16 0.0, %v450
    %s452 = sshllo.u32 0, %s424
    %s453 = smul.addr 4, 4
    %s454 = scalar_lea.vmem %s1, %s453
    %455 = vst [vmem:[%s454] sm:%s452] %v451
    %s456 = scalar_lea.vmem [#allocation0], 40
    %v457 = vld [vmem:[%s456] sm:%s423]
    %v458 = vpack.c.bf16 0.0, %v457
    %s459 = sshllo.u32 0, %s424
    %s460 = smul.addr 4, 5
    %s461 = scalar_lea.vmem %s1, %s460
    %462 = vst [vmem:[%s461] sm:%s459] %v458
    %s463 = scalar_lea.vmem [#allocation0], 48
    %v464 = vld [vmem:[%s463] sm:%s423]
    %v465 = vpack.c.bf16 0.0, %v464
    %s466 = sshllo.u32 0, %s424
    %s467 = smul.addr 4, 6
    %s468 = scalar_lea.vmem %s1, %s467
    %469 = vst [vmem:[%s468] sm:%s466] %v465
    %s470 = scalar_lea.vmem [#allocation0], 56
    %v471 = vld [vmem:[%s470] sm:%s423]
    %v472 = vpack.c.bf16 0.0, %v471
    %s473 = sshllo.u32 0, %s424
    %s474 = smul.addr 4, 7
    %s475 = scalar_lea.vmem %s1, %s474
    %476 = vst [vmem:[%s475] sm:%s473] %v472
    %s477 = scalar_lea.vmem [#allocation0], 64
    %v478 = vld [vmem:[%s477] sm:%s423]
    %v479 = vpack.c.bf16 0.0, %v478
    %s480 = sshllo.u32 0, %s424
    %s481 = smul.addr 4, 8
    %s482 = scalar_lea.vmem %s1, %s481
    %483 = vst [vmem:[%s482] sm:%s480] %v479
    %s484 = scalar_lea.vmem [#allocation0], 72
    %v485 = vld [vmem:[%s484] sm:%s423]
    %v486 = vpack.c.bf16 0.0, %v485
    %s487 = sshllo.u32 0, %s424
    %s488 = smul.addr 4, 9
    %s489 = scalar_lea.vmem %s1, %s488
    %490 = vst [vmem:[%s489] sm:%s487] %v486
    %s491 = scalar_lea.vmem [#allocation0], 80
    %v492 = vld [vmem:[%s491] sm:%s423]
    %v493 = vpack.c.bf16 0.0, %v492
    %s494 = sshllo.u32 0, %s424
    %s495 = smul.addr 4, 10
    %s496 = scalar_lea.vmem %s1, %s495
    %497 = vst [vmem:[%s496] sm:%s494] %v493
    %s498 = scalar_lea.vmem [#allocation0], 88
    %v499 = vld [vmem:[%s498] sm:%s423]
    %v500 = vpack.c.bf16 0.0, %v499
    %s501 = sshllo.u32 0, %s424
    %s502 = smul.addr 4, 11
    %s503 = scalar_lea.vmem %s1, %s502
    %504 = vst [vmem:[%s503] sm:%s501] %v500
    %s505 = scalar_lea.vmem [#allocation0], 96
    %v506 = vld [vmem:[%s505] sm:%s423]
    %v507 = vpack.c.bf16 0.0, %v506
    %s508 = sshllo.u32 0, %s424
    %s509 = smul.addr 4, 12
    %s510 = scalar_lea.vmem %s1, %s509
    %511 = vst [vmem:[%s510] sm:%s508] %v507
    %s512 = scalar_lea.vmem [#allocation0], 104
    %v513 = vld [vmem:[%s512] sm:%s423]
    %v514 = vpack.c.bf16 0.0, %v513
    %s515 = sshllo.u32 0, %s424
    %s516 = smul.addr 4, 13
    %s517 = scalar_lea.vmem %s1, %s516
    %518 = vst [vmem:[%s517] sm:%s515] %v514
    %s519 = scalar_lea.vmem [#allocation0], 112
    %v520 = vld [vmem:[%s519] sm:%s423]
    %v521 = vpack.c.bf16 0.0, %v520
    %s522 = sshllo.u32 0, %s424
    %s523 = smul.addr 4, 14
    %s524 = scalar_lea.vmem %s1, %s523
    %525 = vst [vmem:[%s524] sm:%s522] %v521
    %s526 = scalar_lea.vmem [#allocation0], 120
    %v527 = vld [vmem:[%s526] sm:%s423]
    %v528 = vpack.c.bf16 0.0, %v527
    %s529 = sshllo.u32 0, %s424
    %s530 = smul.addr 4, 15
    %s531 = scalar_lea.vmem %s1, %s530
    %532 = vst [vmem:[%s531] sm:%s529] %v528
    %s533 = scalar_lea.vmem [#allocation0], 128
    %v534 = vld [vmem:[%s533] sm:%s423]
    %v535 = vpack.c.bf16 0.0, %v534
    %s536 = sshllo.u32 0, %s424
    %s537 = smul.addr 4, 16
    %s538 = scalar_lea.vmem %s1, %s537
    %539 = vst [vmem:[%s538] sm:%s536] %v535
    %s540 = scalar_lea.vmem [#allocation0], 136
    %v541 = vld [vmem:[%s540] sm:%s423]
    %v542 = vpack.c.bf16 0.0, %v541
    %s543 = sshllo.u32 0, %s424
    %s544 = smul.addr 4, 17
    %s545 = scalar_lea.vmem %s1, %s544
    %546 = vst [vmem:[%s545] sm:%s543] %v542
    %s547 = scalar_lea.vmem [#allocation0], 144
    %v548 = vld [vmem:[%s547] sm:%s423]
    %v549 = vpack.c.bf16 0.0, %v548
    %s550 = sshllo.u32 0, %s424
    %s551 = smul.addr 4, 18
    %s552 = scalar_lea.vmem %s1, %s551
    %553 = vst [vmem:[%s552] sm:%s550] %v549
    %s554 = scalar_lea.vmem [#allocation0], 152
    %v555 = vld [vmem:[%s554] sm:%s423]
    %v556 = vpack.c.bf16 0.0, %v555
    %s557 = sshllo.u32 0, %s424
    %s558 = smul.addr 4, 19
    %s559 = scalar_lea.vmem %s1, %s558
    %560 = vst [vmem:[%s559] sm:%s557] %v556
    %s561 = scalar_lea.vmem [#allocation0], 160
    %v562 = vld [vmem:[%s561] sm:%s423]
    %v563 = vpack.c.bf16 0.0, %v562
    %s564 = sshllo.u32 0, %s424
    %s565 = smul.addr 4, 20
    %s566 = scalar_lea.vmem %s1, %s565
    %567 = vst [vmem:[%s566] sm:%s564] %v563
    %s568 = scalar_lea.vmem [#allocation0], 168
    %v569 = vld [vmem:[%s568] sm:%s423]
    %v570 = vpack.c.bf16 0.0, %v569
    %s571 = sshllo.u32 0, %s424
    %s572 = smul.addr 4, 21
    %s573 = scalar_lea.vmem %s1, %s572
    %574 = vst [vmem:[%s573] sm:%s571] %v570
    %s575 = scalar_lea.vmem [#allocation0], 176
    %v576 = vld [vmem:[%s575] sm:%s423]
    %v577 = vpack.c.bf16 0.0, %v576
    %s578 = sshllo.u32 0, %s424
    %s579 = smul.addr 4, 22
    %s580 = scalar_lea.vmem %s1, %s579
    %581 = vst [vmem:[%s580] sm:%s578] %v577
    %s582 = scalar_lea.vmem [#allocation0], 184
    %v583 = vld [vmem:[%s582] sm:%s423]
    %v584 = vpack.c.bf16 0.0, %v583
    %s585 = sshllo.u32 0, %s424
    %s586 = smul.addr 4, 23
    %s587 = scalar_lea.vmem %s1, %s586
    %588 = vst [vmem:[%s587] sm:%s585] %v584

// kernel: _lambda_.7
$region0: #{_lambda_.7}
  #allocation0 [shape = 'u32[]', space=smem, size = 0x4, offset = 0x4, fixed_abs, tag = 'smem constant byte address 0x4 - core index']
  #allocation1 [shape = 'u32[144,128]{1,0:T(1,128)}', space=vmem, size = 0x12000, scoped, tag = 'internal scratch']
  %s0 = inlined_call_operand.vmem [shape: bf16[2,4,16,16], index: 0, kind: input, shape index: {}]
  %s1 = inlined_call_operand.vmem [shape: bf16[16,16], index: 1, kind: input, shape index: {}]
  %s2 = inlined_call_operand.vmem [shape: bf16[16,16], index: 2, kind: input, shape index: {}]
  %s3 = inlined_call_operand.vmem [shape: f32[4,1,4], index: 3, kind: input, shape index: {}]
  %s4 = inlined_call_operand.hbm [shape: f32[2,4,16,16], index: 4, kind: output, shape index: {}]
  %s5 = sld [smem:[#allocation0]]
  $region49: #{_lambda_.7} parent=0
    _
  %s7 = ssub.s32 1, %s5
  %s8 = scalar_select 0, %s7, %s5
  $region1: #{_lambda_.7} parent=0
    #allocation2 [shape = 'u8[16384]{0}', space=vmem, size = 0x4000, scoped, tag = 'output window, operand 0']
    #allocation3 [shape = 's32[2]{0}', space=sflag, size = 0x8, scoped, tag = 'scoped memory for _lambda_.7']
    %9 = vsyncpa [#allocation3], 0
    %s10 = scalar_lea.sflag [#allocation3], 1
    %11 = vsyncpa %s10, 0
    loop: start=0, step=1, limit=10
    $region2: #{_lambda_.7} parent=1 // loop_pre_header
      _
    $region3: #{_lambda_.7} parent=1 // loop_header
      %s13 = sphi 0, %s17
      %p14 = scmp.ge.s32.totalorder %s13, 10
      %s20 = sphi 0, %s32
      %s21 = sphi 0, %s28
      %s22 = sphi 0, %s20
      %s23 = sphi 0, %s21
      %s24 = sphi 0, %s22
      %s25 = sphi 0, %s23
      %s37 = sphi 0, %s39
      %s40 = sphi 0, %s37
      %s41 = sphi 0, %s40
      %s57 = sphi 0, %s41
      %s61 = sphi 0, %s61
      %s63 = sphi 0, %s61
      %s64 = sphi 0, %s63
      %s78 = sphi 0, %s64
      %s82 = sphi 0, %s82
      %s84 = sphi 0, %s82
      %s85 = sphi 0, %s84
      %s99 = sphi 0, %s85
      %s105 = sphi 0, %s107
      %s108 = sphi 0, %s105
      %s109 = sphi 0, %s108
      %s125 = sphi 0, %s109
      %s133 = sphi 0, %s135
      %s136 = sphi 0, %s133
      %s137 = sphi 0, %s136
      %s153 = sphi 0, %s137
    $region4: #{_lambda_.7} parent=1 // loop_header_branch
      %16 = sbr.rel (%p14) target = $region8
    $region5: #{_lambda_.7} parent=1 // loop_body
      %s18 = ssub.s32 %s13, 1
      %s19 = ssub.s32 %s13, 2
      %s26 = sadd.s32 1, %s21
      %p27 = scmp.ge.s32.totalorder %s26, 4
      %s28 = scalar_select %p27, 0, %s26
      %s29 = sadd.s32 1, %s20
      %s30 = scalar_select %p27, %s29, %s20
      %p31 = scmp.ge.s32.totalorder %s30, 2
      %s32 = scalar_select %p31, 0, %s30
      %s33 = ssub.s32 %s20, %s32
      %s34 = ssub.s32 %s21, %s28
      %s35 = sor.u32 %s33, %s34
      %p36 = scmp.eq.s32.totalorder %s35, 0
      %s38 = sadd.s32 %s37, 1
      %s39 = scalar_select %p36, %s37, %s38
      %p42 = pneg %p36
      %p43 = scmp.eq.s32.totalorder %s13, 7
      %p44 = por %p42, %p43
      %p45 = scmp.ne.s32.totalorder %s37, %s40
      %p46 = scmp.eq.s32.totalorder %s13, 0
      %p47 = por %p45, %p46
      %p48 = scmp.ne.s32.totalorder %s37, %s40
      %p49 = scmp.eq.s32.totalorder %s18, 7
      %p50 = por %p48, %p49
      %p51 = scmp.ne.s32.totalorder %s40, %s41
      %p52 = scmp.eq.s32.totalorder %s18, 0
      %p53 = por %p51, %p52
      %p54 = scmp.ne.s32.totalorder %s40, %s41
      %p55 = scmp.eq.s32.totalorder %s19, 7
      %p56 = por %p54, %p55
      %p58 = scmp.ne.s32.totalorder %s41, %s57
      %p59 = scmp.eq.s32.totalorder %s19, 0
      %p60 = por %p58, %p59
      %s62 = sadd.s32 %s61, 1
      %p65 = scmp.eq.s32.totalorder %s13, 7
      %p66 = scmp.ne.s32.totalorder %s61, %s63
      %p67 = scmp.eq.s32.totalorder %s13, 0
      %p68 = por %p66, %p67
      %p69 = scmp.ne.s32.totalorder %s61, %s63
      %p70 = scmp.eq.s32.totalorder %s18, 7
      %p71 = por %p69, %p70
      %p72 = scmp.ne.s32.totalorder %s63, %s64
      %p73 = scmp.eq.s32.totalorder %s18, 0
      %p74 = por %p72, %p73
      %p75 = scmp.ne.s32.totalorder %s63, %s64
      %p76 = scmp.eq.s32.totalorder %s19, 7
      %p77 = por %p75, %p76
      %p79 = scmp.ne.s32.totalorder %s64, %s78
      %p80 = scmp.eq.s32.totalorder %s19, 0
      %p81 = por %p79, %p80
      %s83 = sadd.s32 %s82, 1
      %p86 = scmp.eq.s32.totalorder %s13, 7
      %p87 = scmp.ne.s32.totalorder %s82, %s84
      %p88 = scmp.eq.s32.totalorder %s13, 0
      %p89 = por %p87, %p88
      %p90 = scmp.ne.s32.totalorder %s82, %s84
      %p91 = scmp.eq.s32.totalorder %s18, 7
      %p92 = por %p90, %p91
      %p93 = scmp.ne.s32.totalorder %s84, %s85
      %p94 = scmp.eq.s32.totalorder %s18, 0
      %p95 = por %p93, %p94
      %p96 = scmp.ne.s32.totalorder %s84, %s85
      %p97 = scmp.eq.s32.totalorder %s19, 7
      %p98 = por %p96, %p97
      %p100 = scmp.ne.s32.totalorder %s85, %s99
      %p101 = scmp.eq.s32.totalorder %s19, 0
      %p102 = por %p100, %p101
      %s103 = ssub.s32 %s21, %s28
      %p104 = scmp.eq.s32.totalorder %s103, 0
      %s106 = sadd.s32 %s105, 1
      %s107 = scalar_select %p104, %s105, %s106
      %p110 = pneg %p104
      %p111 = scmp.eq.s32.totalorder %s13, 7
      %p112 = por %p110, %p111
      %p113 = scmp.ne.s32.totalorder %s105, %s108
      %p114 = scmp.eq.s32.totalorder %s13, 0
      %p115 = por %p113, %p114
      %p116 = scmp.ne.s32.totalorder %s105, %s108
      %p117 = scmp.eq.s32.totalorder %s18, 7
      %p118 = por %p116, %p117
      %p119 = scmp.ne.s32.totalorder %s108, %s109
      %p120 = scmp.eq.s32.totalorder %s18, 0
      %p121 = por %p119, %p120
      %p122 = scmp.ne.s32.totalorder %s108, %s109
      %p123 = scmp.eq.s32.totalorder %s19, 7
      %p124 = por %p122, %p123
      %p126 = scmp.ne.s32.totalorder %s109, %s125
      %p127 = scmp.eq.s32.totalorder %s19, 0
      %p128 = por %p126, %p127
      %s129 = ssub.s32 %s20, %s32
      %s130 = ssub.s32 %s21, %s28
      %s131 = sor.u32 %s129, %s130
      %p132 = scmp.eq.s32.totalorder %s131, 0
      %s134 = sadd.s32 %s133, 1
      %s135 = scalar_select %p132, %s133, %s134
      %p138 = pneg %p132
      %p139 = scmp.eq.s32.totalorder %s13, 7
      %p140 = por %p138, %p139
      %p141 = scmp.ne.s32.totalorder %s133, %s136
      %p142 = scmp.eq.s32.totalorder %s13, 0
      %p143 = por %p141, %p142
      %p144 = scmp.ne.s32.totalorder %s133, %s136
      %p145 = scmp.eq.s32.totalorder %s18, 7
      %p146 = por %p144, %p145
      %p147 = scmp.ne.s32.totalorder %s136, %s137
      %p148 = scmp.eq.s32.totalorder %s18, 0
      %p149 = por %p147, %p148
      %p150 = scmp.ne.s32.totalorder %s136, %s137
      %p151 = scmp.eq.s32.totalorder %s19, 7
      %p152 = por %p150, %p151
      %p154 = scmp.ne.s32.totalorder %s137, %s153
      %p155 = scmp.eq.s32.totalorder %s19, 0
      %p156 = por %p154, %p155
      %p157 = scmp.le.s32.totalorder 1, %s13
      %p158 = scmp.lt.s32.totalorder %s13, 9
      %p159 = pnand %p157, %p158
      %p160 = pneg %p159
      // Predicated region
      $region9: #{_lambda_.7} parent=5 // pred_check
        _
      $region10: #{_lambda_.7} parent=5 // pred_check_branch
        %162 = sbr.rel (%p159) target = $region12
      $region11: #{_lambda_.7} parent=5 // pred_region
        %s163 = ssub.s32 %s13, 1
        // Predicated region
        $region13: #{_lambda_.7} parent=11 // pred_check
          %p164 = pneg %p74
        $region14: #{_lambda_.7} parent=11 // pred_check_branch
          %166 = sbr.rel (%p164) target = $region16
        $region15: #{_lambda_.7} parent=11 // pred_region
          _
        $region16: #{_lambda_.7} parent=11 // pred_fallthru
          _
        // Predicated region
        $region17: #{_lambda_.7} parent=11 // pred_check
          %p167 = pneg %p95
        $region18: #{_lambda_.7} parent=11 // pred_check_branch
          %169 = sbr.rel (%p167) target = $region20
        $region19: #{_lambda_.7} parent=11 // pred_region
          _
        $region20: #{_lambda_.7} parent=11 // pred_fallthru
          _
      $region12: #{_lambda_.7} parent=5 // pred_fallthru
        _
      %p170 = scmp.lt.s32.totalorder %s13, 8
      // Predicated region
      $region21: #{_lambda_.7} parent=5 // pred_check
        %p171 = pneg %p170
      $region22: #{_lambda_.7} parent=5 // pred_check_branch
        %173 = sbr.rel (%p171) target = $region24
      $region23: #{_lambda_.7} parent=5 // pred_region
        // Predicated region
        $region25: #{_lambda_.7} parent=23 // pred_check
          %p174 = pneg %p47
        $region26: #{_lambda_.7} parent=23 // pred_check_branch
          %176 = sbr.rel (%p174) target = $region28
        $region27: #{_lambda_.7} parent=23 // pred_region
          %p177 = scmp.lt.s32.totalorder %s20, 1
          %s178 = scalar_select %p177, %s20, 1
          %p179 = scmp.lt.s32.totalorder %s21, 3
          %s180 = scalar_select %p179, %s21, 3
          %s181 = smul.addr %s180, 2
          %s182 = smul.addr %s178, 8
          %s183 = sadd.s32 %s181, %s182
          %s184 = smul.addr %s183, 4
          %s185 = scalar_lea.vmem %s0, %s184
        $region28: #{_lambda_.7} parent=23 // pred_fallthru
          _
        // Predicated region
        $region29: #{_lambda_.7} parent=23 // pred_check
          %p186 = pneg %p115
        $region30: #{_lambda_.7} parent=23 // pred_check_branch
          %188 = sbr.rel (%p186) target = $region32
        $region31: #{_lambda_.7} parent=23 // pred_region
          %p189 = scmp.lt.s32.totalorder %s21, 3
          %s190 = scalar_select %p189, %s21, 3
          %s191 = scalar_lea.vmem %s3, %s190
        $region32: #{_lambda_.7} parent=23 // pred_fallthru
          _
      $region24: #{_lambda_.7} parent=5 // pred_fallthru
        _
      %p192 = scmp.le.s32.totalorder 1, %s13
      %p193 = scmp.lt.s32.totalorder %s13, 9
      %p194 = pnand %p192, %p193
      %p195 = pneg %p194
      // Predicated region
      $region33: #{_lambda_.7} parent=5 // pred_check
        _
      $region34: #{_lambda_.7} parent=5 // pred_check_branch
        %197 = sbr.rel (%p194) target = $region36
      $region35: #{_lambda_.7} parent=5 // pred_region
        %s198 = ssub.s32 %s13, 1
        %p199 = scmp.lt.s32.totalorder %s22, 1
        %s200 = scalar_select %p199, %s22, 1
        %p201 = scmp.lt.s32.totalorder %s23, 3
        %s202 = scalar_select %p201, %s23, 3
        %s203 = smul.addr %s202, 2
        %s204 = smul.addr %s200, 8
        %s205 = sadd.s32 %s203, %s204
        %s206 = smul.addr %s205, 4
        %s207 = scalar_lea.vmem %s0, %s206
        %p208 = pneg %p53
        %p209 = pneg %p50
        %p210 = pneg %p74
        %p211 = pneg %p71
        %p212 = pneg %p95
        %p213 = pneg %p92
        %p214 = scmp.lt.s32.totalorder %s23, 3
        %s215 = scalar_select %p214, %s23, 3
        %s216 = scalar_lea.vmem %s3, %s215
        %p217 = pneg %p121
        %p218 = pneg %p118
        %p219 = pneg %p149
        %p220 = pneg %p146
        %s221 = sand.u32 %s136, 1
        %s222 = scalar_lea.sflag [#allocation3], %s221
        %s223 = sand.u32 %s136, 1
        %s224 = smul.addr %s223, 16
        %s225 = scalar_lea.vmem [#allocation2], %s224
        %p226 = scmp.lt.s32.totalorder %s22, 1
        %s227 = scalar_select %p226, %s22, 1
        %p228 = scmp.lt.s32.totalorder %s23, 3
        %s229 = scalar_select %p228, %s23, 3
        %s230 = smul.addr %s229, 2
        %s231 = smul.addr %s227, 8
        %s232 = sadd.s32 %s230, %s231
        %s233 = smul.addr %s232, 4
        %s234 = scalar_lea.vmem %s0, %s233
        %p235 = scmp.lt.s32.totalorder %s23, 3
        %s236 = scalar_select %p235, %s23, 3
        %s237 = scalar_lea.vmem %s3, %s236
        %v239 = vld [vmem:[%s234] sm:$0xf]
        %v240 = vld [vmem:[%s234 + $0x4] sm:$0xf]
        %v241 = vld [vmem:[%s237] sm:$0x1]
        %v242 = vld [vmem:[%s1] sm:$0xf]
        %v243 = vld [vmem:[%s1 + $0x4] sm:$0xf]
        %v246 = vunpack.c.l.b16 %v239
        %v247 = vunpack.c.l.b16 %v240
        %v248 = vpack.c.b16 %v247, %v246
        %v251 = vunpack.c.l.b16 %v242
        %v252 = vunpack.c.l.b16 %v243
        %v253 = vpack.c.b16 %v252, %v251
        %vm255 = vcmask 130048
        %v257 = vsel %vm255, %v248, 0
        %259 = vmatprep.subr.bf16.mxu0 0
        %260 = vmatpush1.bf16.msra.mxu0 %v253
        %261 = vmatprep.subr.bf16.mxu0 0
        %262 = vmatpush1.bf16.msra.mxu0 0
        %263 = vmatprep.subr.bf16.mxu0 0
        %264 = vmatpush1.bf16.msra.mxu0 0
        %265 = vmatprep.subr.bf16.mxu0 0
        %266 = vmatpush1.bf16.msra.mxu0 0
        %267 = vmatprep.subr.bf16.mxu0 0
        %268 = vmatpush1.bf16.msra.mxu0 0
        %269 = vmatprep.subr.bf16.mxu0 0
        %270 = vmatpush1.bf16.msra.mxu0 0
        %271 = vmatprep.subr.bf16.mxu0 0
        %272 = vmatpush1.bf16.msra.mxu0 0
        %273 = vmatprep.subr.bf16.mxu0 0
        %274 = vmatpush1.bf16.msra.mxu0 0
        %275 = vmatprep.subr.bf16.mxu0 0
        %276 = vmatpush1.bf16.msra.mxu0 0
        %277 = vmatprep.subr.bf16.mxu0 0
        %278 = vmatpush1.bf16.msra.mxu0 0
        %279 = vmatprep.subr.bf16.mxu0 0
        %280 = vmatpush1.bf16.msra.mxu0 0
        %281 = vmatprep.subr.bf16.mxu0 0
        %282 = vmatpush1.bf16.msra.mxu0 0
        %283 = vmatprep.subr.bf16.mxu0 0
        %284 = vmatpush1.bf16.msra.mxu0 0
        %285 = vmatprep.subr.bf16.mxu0 0
        %286 = vmatpush1.bf16.msra.mxu0 0
        %287 = vmatprep.subr.bf16.mxu0 0
        %288 = vmatpush1.bf16.msra.mxu0 0
        %289 = vmatprep.subr.bf16.mxu0 0
        %290 = vmatpush1.bf16.msra.mxu0 0
        %291 = vmatprep.mubr.bf16.mxu0 0
        %292 = vmatmul.mubr.bf16.gmra.mrb[0].mxu0 %v257
        %v293 = vpop.f32.mrb[0].mxu0
        %v294 = vadd.f32 0.0, %v293
        %v295 = vpop.f32.mrb[0].mxu0
        %v296 = vpop.f32.mrb[0].mxu0
        %v297 = vadd.f32 0.0, %v296
        %v298 = vpop.f32.mrb[0].mxu0
        %299 = vdwg.mxu0
        %v301 = vlaneseq
        %v302 = vshrl.u32 %v301, 7
        %v303 = vsub.s32 0, %v302
        %v304 = vrot.slane %v241, %v303
        %305 = vset.pattern.permute.xlu0 0
        %306 = vperm.xlu0 %305, %v304
        %v307 = vpop.permute.xlu0 %306
        %v309 = vmul.f32 %v294, %v307
        %v310 = vmul.f32 %v297, %v307
        %311 = vset.pattern.permute.xlu0 1
        %312 = vperm.xlu0 %311, %v304
        %v313 = vpop.permute.xlu0 %312
        %v315 = vadd.f32 %v309, %v313
        %v316 = vadd.f32 %v310, %v313
        %v317 = vmax.f32 %v315, 0.0
        %v318 = vmax.f32 %v316, 0.0
        %v319 = vpack.c.bf16 %v318, %v317
        %v320 = vld [vmem:[%s2] sm:$0xf]
        %v321 = vld [vmem:[%s2 + $0x4] sm:$0xf]
        %v324 = vunpack.c.l.b16 %v320
        %v325 = vunpack.c.l.b16 %v321
        %v326 = vpack.c.b16 %v325, %v324
        %v329 = vsel %vm255, %v319, 0
        %331 = vmatprep.subr.bf16.mxu0 0
        %332 = vmatpush1.bf16.msra.mxu0 %v326
        %333 = vmatprep.subr.bf16.mxu0 0
        %334 = vmatpush1.bf16.msra.mxu0 0
        %335 = vmatprep.subr.bf16.mxu0 0
        %336 = vmatpush1.bf16.msra.mxu0 0
        %337 = vmatprep.subr.bf16.mxu0 0
        %338 = vmatpush1.bf16.msra.mxu0 0
        %339 = vmatprep.subr.bf16.mxu0 0
        %340 = vmatpush1.bf16.msra.mxu0 0
        %341 = vmatprep.subr.bf16.mxu0 0
        %342 = vmatpush1.bf16.msra.mxu0 0
        %343 = vmatprep.subr.bf16.mxu0 0
        %344 = vmatpush1.bf16.msra.mxu0 0
        %345 = vmatprep.subr.bf16.mxu0 0
        %346 = vmatpush1.bf16.msra.mxu0 0
        %347 = vmatprep.subr.bf16.mxu0 0
        %348 = vmatpush1.bf16.msra.mxu0 0
        %349 = vmatprep.subr.bf16.mxu0 0
        %350 = vmatpush1.bf16.msra.mxu0 0
        %351 = vmatprep.subr.bf16.mxu0 0
        %352 = vmatpush1.bf16.msra.mxu0 0
        %353 = vmatprep.subr.bf16.mxu0 0
        %354 = vmatpush1.bf16.msra.mxu0 0
        %355 = vmatprep.subr.bf16.mxu0 0
        %356 = vmatpush1.bf16.msra.mxu0 0
        %357 = vmatprep.subr.bf16.mxu0 0
        %358 = vmatpush1.bf16.msra.mxu0 0
        %359 = vmatprep.subr.bf16.mxu0 0
        %360 = vmatpush1.bf16.msra.mxu0 0
        %361 = vmatprep.subr.bf16.mxu0 0
        %362 = vmatpush1.bf16.msra.mxu0 0
        %363 = vmatprep.mubr.bf16.mxu0 0
        %364 = vmatmul.mubr.bf16.gmra.mrb[0].mxu0 %v329
        %v365 = vpop.f32.mrb[0].mxu0
        %v366 = vadd.f32 0.0, %v365
        %v367 = vpop.f32.mrb[0].mxu0
        %v368 = vpop.f32.mrb[0].mxu0
        %v369 = vadd.f32 0.0, %v368
        %v370 = vpop.f32.mrb[0].mxu0
        %371 = vdwg.mxu0
        %372 = vset.pattern.permute.xlu0 2
        %373 = vperm.xlu0 %372, %v304
        %v374 = vpop.permute.xlu0 %373
        %v376 = vmul.f32 %v366, %v374
        %v377 = vmul.f32 %v369, %v374
        %378 = vset.pattern.permute.xlu0 3
        %379 = vperm.xlu0 %378, %v304
        %v380 = vpop.permute.xlu0 %379
        %v382 = vadd.f32 %v376, %v380
        %v383 = vadd.f32 %v377, %v380
        %v384 = vmax.f32 %v382, 0.0
        %v385 = vmax.f32 %v383, 0.0
        %v386 = vunpack.c.l.bf16 %v239
        %v387 = vunpack.c.l.bf16 %v240
        %v388 = vadd.f32 %v386, %v384
        %v389 = vadd.f32 %v387, %v385
        %390 = vst.msk [vmem:[%s225] sm:$0xff] %vm255, %v388
        %391 = vst.msk [vmem:[%s225 + $0x8] sm:$0xff] %vm255, %v389
        %s392 = sand.u32 %s136, 1
        %s393 = scalar_lea.sflag [#allocation3], %s392
        %s394 = sand.u32 %s136, 1
        %s395 = smul.addr %s394, 16
        %s396 = scalar_lea.vmem [#allocation2], %s395
        // Predicated region
        $region37: #{_lambda_.7} parent=35 // pred_check
          %p397 = pneg %p146
        $region38: #{_lambda_.7} parent=35 // pred_check_branch
          %399 = sbr.rel (%p397) target = $region40
        $region39: #{_lambda_.7} parent=35 // pred_region
          %s401 = ssub.s32 256, 256
          %402 = vsyncadd %s393, %s401
          %s403 = smul.addr %s23, 2
          %s404 = smul.addr %s22, 8
          %s405 = sadd.s32 %s403, %s404
          %s406 = smul.addr %s405, 128
          %s407 = scalar_lea.hbm %s4, %s406
          %s408 = sshll.u32 %s396, 4
          %s409 = int_to_ptr.vmem [resolvable:$true] %s408
          %414 = dma.vmem_to_hbm [thread:$0]  %s409, 256, %s407, %s393, 128, 128, 8
        $region40: #{_lambda_.7} parent=35 // pred_fallthru
          _
      $region36: #{_lambda_.7} parent=5 // pred_fallthru
        _
      %p415 = scmp.le.s32.totalorder 2, %s13
      // Predicated region
      $region41: #{_lambda_.7} parent=5 // pred_check
        %p416 = pneg %p415
      $region42: #{_lambda_.7} parent=5 // pred_check_branch
        %418 = sbr.rel (%p416) target = $region44
      $region43: #{_lambda_.7} parent=5 // pred_region
        %s419 = ssub.s32 %s13, 2
        // Predicated region
        $region45: #{_lambda_.7} parent=43 // pred_check
          %p420 = pneg %p152
        $region46: #{_lambda_.7} parent=43 // pred_check_branch
          %422 = sbr.rel (%p420) target = $region48
        $region47: #{_lambda_.7} parent=43 // pred_region
          %s423 = sand.u32 %s137, 1
          %s424 = scalar_lea.sflag [#allocation3], %s423
          %s425 = sand.u32 %s137, 1
          %s426 = smul.addr %s425, 16
          %s427 = scalar_lea.vmem [#allocation2], %s426
          %428 = dma.done %s424, 256
        $region48: #{_lambda_.7} parent=43 // pred_fallthru
          _
      $region44: #{_lambda_.7} parent=5 // pred_fallthru
        _
    $region6: #{_lambda_.7} parent=1 // loop_footer
      %s17 = sadd.s32 1, %s13
    $region7: #{_lambda_.7} parent=1 // loop_footer_branch
      %12 = sbr.rel target = $region3
    $region8: #{_lambda_.7} parent=1 // loop_exit
      _
    %429 = vsyncpa [#allocation3], 1
    %s430 = scalar_lea.sflag [#allocation3], 1
    %431 = vsyncpa %s430, 1

// kernel: _lambda_.4
$region0: #{_lambda_.4}
  #allocation0 [shape = 'u32[]', space=smem, size = 0x4, offset = 0x4, fixed_abs, tag = 'smem constant byte address 0x4 - core index']
  #allocation1 [shape = 'u32[144,128]{1,0:T(1,128)}', space=vmem, size = 0x12000, scoped, tag = 'internal scratch']
  %s0 = inlined_call_operand.vmem [shape: bf16[2,16,1,384], index: 0, kind: input, shape index: {}, may-alias: {0,4}]
  %s1 = inlined_call_operand.vmem [shape: bf16[9,4,4], index: 1, kind: input, shape index: {}]
  %s2 = inlined_call_operand.vmem [shape: f32[4,1], index: 2, kind: input, shape index: {}]
  %s3 = inlined_call_operand.vmem [shape: f32[1,288], index: 3, kind: input, shape index: {}]
  %s4 = inlined_call_operand.vmem [shape: bf16[2,16,1,384], index: 4, kind: output, shape index: {}, may-alias: {0,4}]
  %s5 = sld [smem:[#allocation0]]
  $region49: #{_lambda_.4} parent=0
    _
  %s7 = ssub.s32 1, %s5
  %s8 = scalar_select 0, %s7, %s5
  loop: start=0, step=1, limit=4
  $region2: #{_lambda_.4} parent=0 // loop_pre_header
    _
  $region3: #{_lambda_.4} parent=0 // loop_header
    %s10 = sphi 0, %s14
    %p11 = scmp.ge.s32.totalorder %s10, 4
    %s20 = sphi 0, %s22
    %s23 = sphi 0, %s20
    %s24 = sphi 0, %s23
    %s40 = sphi 0, %s24
    %s44 = sphi 0, %s44
    %s46 = sphi 0, %s44
    %s47 = sphi 0, %s46
    %s61 = sphi 0, %s47
    %s65 = sphi 0, %s65
    %s67 = sphi 0, %s65
    %s68 = sphi 0, %s67
    %s82 = sphi 0, %s68
    %s86 = sphi 0, %s86
    %s88 = sphi 0, %s86
    %s89 = sphi 0, %s88
    %s103 = sphi 0, %s89
    %s109 = sphi 0, %s111
    %s112 = sphi 0, %s109
    %s113 = sphi 0, %s112
    %s129 = sphi 0, %s113
  $region4: #{_lambda_.4} parent=0 // loop_header_branch
    %13 = sbr.rel (%p11) target = $region8
  $region5: #{_lambda_.4} parent=0 // loop_body
    %s15 = ssub.s32 %s10, 1
    %s16 = ssub.s32 %s10, 2
    %s17 = sadd.s32 %s10, 1
    %s18 = ssub.s32 %s10, %s17
    %p19 = scmp.eq.s32.totalorder %s18, 0
    %s21 = sadd.s32 %s20, 1
    %s22 = scalar_select %p19, %s20, %s21
    %p25 = pneg %p19
    %p26 = scmp.eq.s32.totalorder %s10, 1
    %p27 = por %p25, %p26
    %p28 = scmp.ne.s32.totalorder %s20, %s23
    %p29 = scmp.eq.s32.totalorder %s10, 0
    %p30 = por %p28, %p29
    %p31 = scmp.ne.s32.totalorder %s20, %s23
    %p32 = scmp.eq.s32.totalorder %s15, 1
    %p33 = por %p31, %p32
    %p34 = scmp.ne.s32.totalorder %s23, %s24
    %p35 = scmp.eq.s32.totalorder %s15, 0
    %p36 = por %p34, %p35
    %p37 = scmp.ne.s32.totalorder %s23, %s24
    %p38 = scmp.eq.s32.totalorder %s16, 1
    %p39 = por %p37, %p38
    %p41 = scmp.ne.s32.totalorder %s24, %s40
    %p42 = scmp.eq.s32.totalorder %s16, 0
    %p43 = por %p41, %p42
    %s45 = sadd.s32 %s44, 1
    %p48 = scmp.eq.s32.totalorder %s10, 1
    %p49 = scmp.ne.s32.totalorder %s44, %s46
    %p50 = scmp.eq.s32.totalorder %s10, 0
    %p51 = por %p49, %p50
    %p52 = scmp.ne.s32.totalorder %s44, %s46
    %p53 = scmp.eq.s32.totalorder %s15, 1
    %p54 = por %p52, %p53
    %p55 = scmp.ne.s32.totalorder %s46, %s47
    %p56 = scmp.eq.s32.totalorder %s15, 0
    %p57 = por %p55, %p56
    %p58 = scmp.ne.s32.totalorder %s46, %s47
    %p59 = scmp.eq.s32.totalorder %s16, 1
    %p60 = por %p58, %p59
    %p62 = scmp.ne.s32.totalorder %s47, %s61
    %p63 = scmp.eq.s32.totalorder %s16, 0
    %p64 = por %p62, %p63
    %s66 = sadd.s32 %s65, 1
    %p69 = scmp.eq.s32.totalorder %s10, 1
    %p70 = scmp.ne.s32.totalorder %s65, %s67
    %p71 = scmp.eq.s32.totalorder %s10, 0
    %p72 = por %p70, %p71
    %p73 = scmp.ne.s32.totalorder %s65, %s67
    %p74 = scmp.eq.s32.totalorder %s15, 1
    %p75 = por %p73, %p74
    %p76 = scmp.ne.s32.totalorder %s67, %s68
    %p77 = scmp.eq.s32.totalorder %s15, 0
    %p78 = por %p76, %p77
    %p79 = scmp.ne.s32.totalorder %s67, %s68
    %p80 = scmp.eq.s32.totalorder %s16, 1
    %p81 = por %p79, %p80
    %p83 = scmp.ne.s32.totalorder %s68, %s82
    %p84 = scmp.eq.s32.totalorder %s16, 0
    %p85 = por %p83, %p84
    %s87 = sadd.s32 %s86, 1
    %p90 = scmp.eq.s32.totalorder %s10, 1
    %p91 = scmp.ne.s32.totalorder %s86, %s88
    %p92 = scmp.eq.s32.totalorder %s10, 0
    %p93 = por %p91, %p92
    %p94 = scmp.ne.s32.totalorder %s86, %s88
    %p95 = scmp.eq.s32.totalorder %s15, 1
    %p96 = por %p94, %p95
    %p97 = scmp.ne.s32.totalorder %s88, %s89
    %p98 = scmp.eq.s32.totalorder %s15, 0
    %p99 = por %p97, %p98
    %p100 = scmp.ne.s32.totalorder %s88, %s89
    %p101 = scmp.eq.s32.totalorder %s16, 1
    %p102 = por %p100, %p101
    %p104 = scmp.ne.s32.totalorder %s89, %s103
    %p105 = scmp.eq.s32.totalorder %s16, 0
    %p106 = por %p104, %p105
    %s107 = ssub.s32 %s10, %s17
    %p108 = scmp.eq.s32.totalorder %s107, 0
    %s110 = sadd.s32 %s109, 1
    %s111 = scalar_select %p108, %s109, %s110
    %p114 = pneg %p108
    %p115 = scmp.eq.s32.totalorder %s10, 1
    %p116 = por %p114, %p115
    %p117 = scmp.ne.s32.totalorder %s109, %s112
    %p118 = scmp.eq.s32.totalorder %s10, 0
    %p119 = por %p117, %p118
    %p120 = scmp.ne.s32.totalorder %s109, %s112
    %p121 = scmp.eq.s32.totalorder %s15, 1
    %p122 = por %p120, %p121
    %p123 = scmp.ne.s32.totalorder %s112, %s113
    %p124 = scmp.eq.s32.totalorder %s15, 0
    %p125 = por %p123, %p124
    %p126 = scmp.ne.s32.totalorder %s112, %s113
    %p127 = scmp.eq.s32.totalorder %s16, 1
    %p128 = por %p126, %p127
    %p130 = scmp.ne.s32.totalorder %s113, %s129
    %p131 = scmp.eq.s32.totalorder %s16, 0
    %p132 = por %p130, %p131
    %p133 = scmp.le.s32.totalorder 1, %s10
    %p134 = scmp.lt.s32.totalorder %s10, 3
    %p135 = pnand %p133, %p134
    %p136 = pneg %p135
    // Predicated region
    $region9: #{_lambda_.4} parent=5 // pred_check
      _
    $region10: #{_lambda_.4} parent=5 // pred_check_branch
      %138 = sbr.rel (%p135) target = $region12
    $region11: #{_lambda_.4} parent=5 // pred_region
      %s139 = ssub.s32 %s10, 1
      // Predicated region
      $region13: #{_lambda_.4} parent=11 // pred_check
        %p140 = pneg %p57
      $region14: #{_lambda_.4} parent=11 // pred_check_branch
        %142 = sbr.rel (%p140) target = $region16
      $region15: #{_lambda_.4} parent=11 // pred_region
        _
      $region16: #{_lambda_.4} parent=11 // pred_fallthru
        _
      // Predicated region
      $region17: #{_lambda_.4} parent=11 // pred_check
        %p143 = pneg %p78
      $region18: #{_lambda_.4} parent=11 // pred_check_branch
        %145 = sbr.rel (%p143) target = $region20
      $region19: #{_lambda_.4} parent=11 // pred_region
        _
      $region20: #{_lambda_.4} parent=11 // pred_fallthru
        _
      // Predicated region
      $region21: #{_lambda_.4} parent=11 // pred_check
        %p146 = pneg %p99
      $region22: #{_lambda_.4} parent=11 // pred_check_branch
        %148 = sbr.rel (%p146) target = $region24
      $region23: #{_lambda_.4} parent=11 // pred_region
        _
      $region24: #{_lambda_.4} parent=11 // pred_fallthru
        _
    $region12: #{_lambda_.4} parent=5 // pred_fallthru
      _
    %p149 = scmp.lt.s32.totalorder %s10, 2
    // Predicated region
    $region25: #{_lambda_.4} parent=5 // pred_check
      %p150 = pneg %p149
    $region26: #{_lambda_.4} parent=5 // pred_check_branch
      %152 = sbr.rel (%p150) target = $region28
    $region27: #{_lambda_.4} parent=5 // pred_region
      // Predicated region
      $region29: #{_lambda_.4} parent=27 // pred_check
        %p153 = pneg %p30
      $region30: #{_lambda_.4} parent=27 // pred_check_branch
        %155 = sbr.rel (%p153) target = $region32
      $region31: #{_lambda_.4} parent=27 // pred_region
        %p156 = scmp.lt.s32.totalorder %s10, 1
        %s157 = scalar_select %p156, %s10, 1
        %s158 = smul.addr %s157, 48
        %s159 = scalar_lea.vmem %s0, %s158
      $region32: #{_lambda_.4} parent=27 // pred_fallthru
        _
    $region28: #{_lambda_.4} parent=5 // pred_fallthru
      _
    %p160 = scmp.le.s32.totalorder 1, %s10
    %p161 = scmp.lt.s32.totalorder %s10, 3
    %p162 = pnand %p160, %p161
    %p163 = pneg %p162
    // Predicated region
    $region33: #{_lambda_.4} parent=5 // pred_check
      _
    $region34: #{_lambda_.4} parent=5 // pred_check_branch
      %165 = sbr.rel (%p162) target = $region36
    $region35: #{_lambda_.4} parent=5 // pred_region
      %s166 = ssub.s32 %s10, 1
      %p167 = scmp.lt.s32.totalorder %s15, 1
      %s168 = scalar_select %p167, %s15, 1
      %s169 = smul.addr %s168, 48
      %s170 = scalar_lea.vmem %s0, %s169
      %p171 = pneg %p36
      %p172 = pneg %p33
      %p173 = pneg %p57
      %p174 = pneg %p54
      %p175 = pneg %p78
      %p176 = pneg %p75
      %p177 = pneg %p99
      %p178 = pneg %p96
      %p179 = pneg %p125
      %p180 = pneg %p122
      %p181 = scmp.lt.s32.totalorder %s15, 1
      %s182 = scalar_select %p181, %s15, 1
      %s183 = smul.addr %s182, 48
      %s184 = sadd.s32 12, %s183
      %s185 = scalar_lea.vmem %s4, %s184
      %p186 = scmp.lt.s32.totalorder %s15, 1
      %s187 = scalar_select %p186, %s15, 1
      %s188 = smul.addr %s187, 48
      %s189 = scalar_lea.vmem %s0, %s188
      %p190 = scmp.lt.s32.totalorder %s15, 1
      %s191 = scalar_select %p190, %s15, 1
      %s192 = smul.addr %s191, 48
      %s193 = sadd.s32 12, %s192
      %s194 = scalar_lea.vmem %s4, %s193
      %v196 = vld [vmem:[%s189] sm:$0x7]
      %v197 = vld [vmem:[%s189 + $0x3] sm:$0x7]
      %v198 = vld [vmem:[%s189 + $0x6] sm:$0x7]
      %v199 = vld [vmem:[%s189 + $0x9] sm:$0x7]
      %v200 = vld [vmem:[%s1] sm:$0x3]
      %s201 = scalar_lea.vmem %s1, 2
      %v202 = vld [vmem:[%s201] sm:$0x3]
      %v208 = vunpack.c.l.s4 1966171168
      %v209 = vunpack.c.0.s8 %v208
      %v210 = vlaneseq
      %v211 = vshrl.u32 %v210, 7
      %v212 = vsub.s32 %v209, %v211
      %v213 = vrot.slane %v196, %v212
      %v214 = vcombine.high %v213, %v213
      %v216 = vunpack.c.l.s4 1966171168
      %v217 = vunpack.c.0.s8 %v216
      %v218 = vlaneseq
      %v219 = vshrl.u32 %v218, 7
      %v220 = vsub.s32 %v217, %v219
      %v221 = vrot.slane %v213, %v220
      %v223 = vunpack.c.l.s4 1966171168
      %v224 = vunpack.c.0.s8 %v223
      %v225 = vlaneseq
      %v226 = vshrl.u32 %v225, 7
      %v227 = vsub.s32 %v224, %v226
      %v228 = vrot.slane %v214, %v227
      %v229 = vcombine.high %v221, %v221
      %v231 = vunpack.c.l.s4 1966171168
      %v232 = vunpack.c.0.s8 %v231
      %v233 = vlaneseq
      %v234 = vshrl.u32 %v233, 7
      %v235 = vsub.s32 %v232, %v234
      %v236 = vrot.slane %v197, %v235
      %v237 = vcombine.high %v236, %v236
      %v239 = vunpack.c.l.s4 1966171168
      %v240 = vunpack.c.0.s8 %v239
      %v241 = vlaneseq
      %v242 = vshrl.u32 %v241, 7
      %v243 = vsub.s32 %v240, %v242
      %v244 = vrot.slane %v236, %v243
      %v246 = vunpack.c.l.s4 1966171168
      %v247 = vunpack.c.0.s8 %v246
      %v248 = vlaneseq
      %v249 = vshrl.u32 %v248, 7
      %v250 = vsub.s32 %v247, %v249
      %v251 = vrot.slane %v237, %v250
      %v252 = vcombine.high %v244, %v244
      %v254 = vunpack.c.l.s4 1966171168
      %v255 = vunpack.c.0.s8 %v254
      %v256 = vlaneseq
      %v257 = vshrl.u32 %v256, 7
      %v258 = vsub.s32 %v255, %v257
      %v259 = vrot.slane %v198, %v258
      %v260 = vcombine.high %v259, %v259
      %v262 = vunpack.c.l.s4 1966171168
      %v263 = vunpack.c.0.s8 %v262
      %v264 = vlaneseq
      %v265 = vshrl.u32 %v264, 7
      %v266 = vsub.s32 %v263, %v265
      %v267 = vrot.slane %v259, %v266
      %v269 = vunpack.c.l.s4 1966171168
      %v270 = vunpack.c.0.s8 %v269
      %v271 = vlaneseq
      %v272 = vshrl.u32 %v271, 7
      %v273 = vsub.s32 %v270, %v272
      %v274 = vrot.slane %v260, %v273
      %v275 = vcombine.high %v267, %v267
      %v277 = vunpack.c.l.s4 1966171168
      %v278 = vunpack.c.0.s8 %v277
      %v279 = vlaneseq
      %v280 = vshrl.u32 %v279, 7
      %v281 = vsub.s32 %v278, %v280
      %v282 = vrot.slane %v199, %v281
      %v283 = vcombine.high %v282, %v282
      %v285 = vunpack.c.l.s4 1966171168
      %v286 = vunpack.c.0.s8 %v285
      %v287 = vlaneseq
      %v288 = vshrl.u32 %v287, 7
      %v289 = vsub.s32 %v286, %v288
      %v290 = vrot.slane %v282, %v289
      %v292 = vunpack.c.l.s4 1966171168
      %v293 = vunpack.c.0.s8 %v292
      %v294 = vlaneseq
      %v295 = vshrl.u32 %v294, 7
      %v296 = vsub.s32 %v293, %v295
      %v297 = vrot.slane %v283, %v296
      %v298 = vcombine.high %v290, %v290
      %v299 = vunpack.c.l.b16 %v221
      %v300 = vunpack.c.l.b16 %v228
      %v301 = vunpack.c.l.b16 %v229
      %v302 = vunpack.c.l.b16 %v244
      %v303 = vunpack.c.l.b16 %v251
      %v304 = vunpack.c.l.b16 %v252
      %v305 = vunpack.c.l.b16 %v267
      %v306 = vunpack.c.l.b16 %v274
      %v307 = vunpack.c.l.b16 %v275
      %v308 = vunpack.c.l.b16 %v290
      %v309 = vunpack.c.l.b16 %v297
      %v310 = vunpack.c.l.b16 %v298
      %v311 = vrot.slane %v302, 7
      %vm312 = vcmask 1041409
      %v313 = vsel %vm312, %v311, %v299
      %v314 = vrot.slane %v305, 6
      %vm315 = vcmask 1042434
      %v316 = vsel %vm315, %v314, %v313
      %v317 = vrot.slane %v308, 5
      %vm318 = vcmask 1043459
      %v319 = vsel %vm318, %v317, %v316
      %v320 = vrot.slane %v303, 7
      %v321 = vsel %vm312, %v320, %v300
      %v322 = vrot.slane %v306, 6
      %v323 = vsel %vm315, %v322, %v321
      %v324 = vrot.slane %v309, 5
      %v325 = vsel %vm318, %v324, %v323
      %v326 = vrot.slane %v304, 7
      %v327 = vsel %vm312, %v326, %v301
      %v328 = vrot.slane %v307, 6
      %v329 = vsel %vm315, %v328, %v327
      %v330 = vrot.slane %v310, 5
      %v331 = vsel %vm318, %v330, %v329
      %v332 = vpack.c.b16 %v319, %v319
      %v333 = vpack.c.b16 %v325, %v325
      %v334 = vpack.c.b16 %v331, %v331
      %335 = vrot.lane.b32.xlu0 %v332, 127
      %v336 = vpop.permute.xlu0 %335
      %337 = vrot.lane.b32.xlu0 %v333, 127
      %v338 = vpop.permute.xlu0 %337
      %339 = vrot.lane.b32.xlu0 %v334, 127
      %v340 = vpop.permute.xlu0 %339
      %vm341 = vcmask 1039360
      %v342 = vsel %vm341, %v336, %v338
      %v343 = vsel %vm341, %v338, %v340
      %vm344 = vcmask 31744
      %v346 = vsel %vm344, %v202, 0
      %vm348 = vcmask 1041408
      %v350 = vsel %vm348, %v342, 0
      %v353 = vsel %vm348, %v343, 0
      %v356 = vsel %vm348, %v340, 0
      %358 = vmatprep.subr.bf16.mxu0 %v353
      %359 = vmatpush1.bf16.msra.mxu0 %v350
      %360 = vmatprep.subr.bf16.mxu0 0
      %361 = vmatpush1.bf16.msra.mxu0 0
      %362 = vmatprep.subr.bf16.mxu0 0
      %363 = vmatpush1.bf16.msra.mxu0 0
      %364 = vmatprep.subr.bf16.mxu0 0
      %365 = vmatpush1.bf16.msra.mxu0 0
      %366 = vmatprep.subr.bf16.mxu0 0
      %367 = vmatpush1.bf16.msra.mxu0 0
      %368 = vmatprep.subr.bf16.mxu0 0
      %369 = vmatpush1.bf16.msra.mxu0 0
      %370 = vmatprep.subr.bf16.mxu0 0
      %371 = vmatpush1.bf16.msra.mxu0 0
      %372 = vmatprep.subr.bf16.mxu0 0
      %373 = vmatpush1.bf16.msra.mxu0 0
      %374 = vmatprep.subr.bf16.mxu0 0
      %375 = vmatpush1.bf16.msra.mxu0 0
      %376 = vmatprep.subr.bf16.mxu0 0
      %377 = vmatpush1.bf16.msra.mxu0 0
      %378 = vmatprep.subr.bf16.mxu0 0
      %379 = vmatpush1.bf16.msra.mxu0 0
      %380 = vmatprep.subr.bf16.mxu0 0
      %381 = vmatpush1.bf16.msra.mxu0 0
      %382 = vmatprep.subr.bf16.mxu0 0
      %383 = vmatpush1.bf16.msra.mxu0 0
      %384 = vmatprep.subr.bf16.mxu0 0
      %385 = vmatpush1.bf16.msra.mxu0 0
      %386 = vmatprep.subr.bf16.mxu0 0
      %387 = vmatpush1.bf16.msra.mxu0 0
      %388 = vmatprep.subr.bf16.mxu0 0
      %389 = vmatpush1.bf16.msra.mxu0 0
      %390 = vmatprep.mubr.bf16.mxu0 0
      %391 = vmatmul.mubr.bf16.gmra.mrb[0].mxu0 %v346
      %v392 = vpop.f32.mrb[0].mxu0
      %v393 = vadd.f32 0.0, %v392
      %v394 = vpop.f32.mrb[0].mxu0
      %v395 = vadd.f32 0.0, %v394
      %v396 = vpop.f32.mrb[0].mxu0
      %v397 = vpop.f32.mrb[0].mxu0
      %398 = vdwg.mxu0
      %399 = vmatprep.subr.bf16.mxu0 0
      %400 = vmatpush1.bf16.msra.mxu0 %v356
      %401 = vmatprep.subr.bf16.mxu0 0
      %402 = vmatpush1.bf16.msra.mxu0 0
      %403 = vmatprep.subr.bf16.mxu0 0
      %404 = vmatpush1.bf16.msra.mxu0 0
      %405 = vmatprep.subr.bf16.mxu0 0
      %406 = vmatpush1.bf16.msra.mxu0 0
      %407 = vmatprep.subr.bf16.mxu0 0
      %408 = vmatpush1.bf16.msra.mxu0 0
      %409 = vmatprep.subr.bf16.mxu0 0
      %410 = vmatpush1.bf16.msra.mxu0 0
      %411 = vmatprep.subr.bf16.mxu0 0
      %412 = vmatpush1.bf16.msra.mxu0 0
      %413 = vmatprep.subr.bf16.mxu0 0
      %414 = vmatpush1.bf16.msra.mxu0 0
      %415 = vmatprep.subr.bf16.mxu0 0
      %416 = vmatpush1.bf16.msra.mxu0 0
      %417 = vmatprep.subr.bf16.mxu0 0
      %418 = vmatpush1.bf16.msra.mxu0 0
      %419 = vmatprep.subr.bf16.mxu0 0
      %420 = vmatpush1.bf16.msra.mxu0 0
      %421 = vmatprep.subr.bf16.mxu0 0
      %422 = vmatpush1.bf16.msra.mxu0 0
      %423 = vmatprep.subr.bf16.mxu0 0
      %424 = vmatpush1.bf16.msra.mxu0 0
      %425 = vmatprep.subr.bf16.mxu0 0
      %426 = vmatpush1.bf16.msra.mxu0 0
      %427 = vmatprep.subr.bf16.mxu0 0
      %428 = vmatpush1.bf16.msra.mxu0 0
      %429 = vmatprep.subr.bf16.mxu0 0
      %430 = vmatpush1.bf16.msra.mxu0 0
      %431 = vmatprep.mubr.bf16.mxu0 0
      %432 = vmatmul.mubr.bf16.gmra.mrb[0].mxu0 %v346
      %v433 = vpop.f32.mrb[0].mxu0
      %v434 = vadd.f32 0.0, %v433
      %v435 = vpop.f32.mrb[0].mxu0
      %v436 = vpop.f32.mrb[0].mxu0
      %v437 = vpop.f32.mrb[0].mxu0
      %438 = vdwg.mxu0
      %v440 = vsel %vm344, %v200, 0
      %v443 = vsel %vm348, %v332, 0
      %v446 = vsel %vm348, %v333, 0
      %v449 = vsel %vm348, %v334, 0
      %451 = vmatprep.subr.bf16.mxu0 %v446
      %452 = vmatpush1.bf16.msra.mxu0 %v443
      %453 = vmatprep.subr.bf16.mxu0 0
      %454 = vmatpush1.bf16.msra.mxu0 0
      %455 = vmatprep.subr.bf16.mxu0 0
      %456 = vmatpush1.bf16.msra.mxu0 0
      %457 = vmatprep.subr.bf16.mxu0 0
      %458 = vmatpush1.bf16.msra.mxu0 0
      %459 = vmatprep.subr.bf16.mxu0 0
      %460 = vmatpush1.bf16.msra.mxu0 0
      %461 = vmatprep.subr.bf16.mxu0 0
      %462 = vmatpush1.bf16.msra.mxu0 0
      %463 = vmatprep.subr.bf16.mxu0 0
      %464 = vmatpush1.bf16.msra.mxu0 0
      %465 = vmatprep.subr.bf16.mxu0 0
      %466 = vmatpush1.bf16.msra.mxu0 0
      %467 = vmatprep.subr.bf16.mxu0 0
      %468 = vmatpush1.bf16.msra.mxu0 0
      %469 = vmatprep.subr.bf16.mxu0 0
      %470 = vmatpush1.bf16.msra.mxu0 0
      %471 = vmatprep.subr.bf16.mxu0 0
      %472 = vmatpush1.bf16.msra.mxu0 0
      %473 = vmatprep.subr.bf16.mxu0 0
      %474 = vmatpush1.bf16.msra.mxu0 0
      %475 = vmatprep.subr.bf16.mxu0 0
      %476 = vmatpush1.bf16.msra.mxu0 0
      %477 = vmatprep.subr.bf16.mxu0 0
      %478 = vmatpush1.bf16.msra.mxu0 0
      %479 = vmatprep.subr.bf16.mxu0 0
      %480 = vmatpush1.bf16.msra.mxu0 0
      %481 = vmatprep.subr.bf16.mxu0 0
      %482 = vmatpush1.bf16.msra.mxu0 0
      %483 = vmatprep.mubr.bf16.mxu0 0
      %484 = vmatmul.mubr.bf16.gmra.mrb[0].mxu0 %v440
      %v485 = vpop.f32.mrb[0].mxu0
      %v486 = vadd.f32 %v393, %v485
      %v487 = vpop.f32.mrb[0].mxu0
      %v488 = vadd.f32 %v395, %v487
      %v489 = vpop.f32.mrb[0].mxu0
      %v490 = vpop.f32.mrb[0].mxu0
      %491 = vdwg.mxu0
      %492 = vmatprep.subr.bf16.mxu0 0
      %493 = vmatpush1.bf16.msra.mxu0 %v449
      %494 = vmatprep.subr.bf16.mxu0 0
      %495 = vmatpush1.bf16.msra.mxu0 0
      %496 = vmatprep.subr.bf16.mxu0 0
      %497 = vmatpush1.bf16.msra.mxu0 0
      %498 = vmatprep.subr.bf16.mxu0 0
      %499 = vmatpush1.bf16.msra.mxu0 0
      %500 = vmatprep.subr.bf16.mxu0 0
      %501 = vmatpush1.bf16.msra.mxu0 0
      %502 = vmatprep.subr.bf16.mxu0 0
      %503 = vmatpush1.bf16.msra.mxu0 0
      %504 = vmatprep.subr.bf16.mxu0 0
      %505 = vmatpush1.bf16.msra.mxu0 0
      %506 = vmatprep.subr.bf16.mxu0 0
      %507 = vmatpush1.bf16.msra.mxu0 0
      %508 = vmatprep.subr.bf16.mxu0 0
      %509 = vmatpush1.bf16.msra.mxu0 0
      %510 = vmatprep.subr.bf16.mxu0 0
      %511 = vmatpush1.bf16.msra.mxu0 0
      %512 = vmatprep.subr.bf16.mxu0 0
      %513 = vmatpush1.bf16.msra.mxu0 0
      %514 = vmatprep.subr.bf16.mxu0 0
      %515 = vmatpush1.bf16.msra.mxu0 0
      %516 = vmatprep.subr.bf16.mxu0 0
      %517 = vmatpush1.bf16.msra.mxu0 0
      %518 = vmatprep.subr.bf16.mxu0 0
      %519 = vmatpush1.bf16.msra.mxu0 0
      %520 = vmatprep.subr.bf16.mxu0 0
      %521 = vmatpush1.bf16.msra.mxu0 0
      %522 = vmatprep.subr.bf16.mxu0 0
      %523 = vmatpush1.bf16.msra.mxu0 0
      %524 = vmatprep.mubr.bf16.mxu0 0
      %525 = vmatmul.mubr.bf16.gmra.mrb[0].mxu0 %v440
      %v526 = vpop.f32.mrb[0].mxu0
      %v527 = vadd.f32 %v434, %v526
      %v528 = vpop.f32.mrb[0].mxu0
      %v529 = vpop.f32.mrb[0].mxu0
      %v530 = vpop.f32.mrb[0].mxu0
      %531 = vdwg.mxu0
      %v532 = vld [vmem:[%s189] sm:$0x7]
      %v533 = vld [vmem:[%s189 + $0x3] sm:$0x7]
      %v534 = vld [vmem:[%s189 + $0x6] sm:$0x7]
      %v535 = vld [vmem:[%s189 + $0x9] sm:$0x7]
      %s536 = scalar_lea.vmem %s1, 4
      %v537 = vld [vmem:[%s536] sm:$0x3]
      %v543 = vunpack.c.l.s4 1966171168
      %v544 = vunpack.c.0.s8 %v543
      %v545 = vlaneseq
      %v546 = vshrl.u32 %v545, 7
      %v547 = vsub.s32 %v544, %v546
      %v548 = vrot.slane %v532, %v547
      %v549 = vcombine.high %v548, %v548
      %v551 = vunpack.c.l.s4 1966171168
      %v552 = vunpack.c.0.s8 %v551
      %v553 = vlaneseq
      %v554 = vshrl.u32 %v553, 7
      %v555 = vsub.s32 %v552, %v554
      %v556 = vrot.slane %v548, %v555
      %v558 = vunpack.c.l.s4 1966171168
      %v559 = vunpack.c.0.s8 %v558
      %v560 = vlaneseq
      %v561 = vshrl.u32 %v560, 7
      %v562 = vsub.s32 %v559, %v561
      %v563 = vrot.slane %v549, %v562
      %v564 = vcombine.high %v556, %v556
      %v566 = vunpack.c.l.s4 1966171168
      %v567 = vunpack.c.0.s8 %v566
      %v568 = vlaneseq
      %v569 = vshrl.u32 %v568, 7
      %v570 = vsub.s32 %v567, %v569
      %v571 = vrot.slane %v533, %v570
      %v572 = vcombine.high %v571, %v571
      %v574 = vunpack.c.l.s4 1966171168
      %v575 = vunpack.c.0.s8 %v574
      %v576 = vlaneseq
      %v577 = vshrl.u32 %v576, 7
      %v578 = vsub.s32 %v575, %v577
      %v579 = vrot.slane %v571, %v578
      %v581 = vunpack.c.l.s4 1966171168
      %v582 = vunpack.c.0.s8 %v581
      %v583 = vlaneseq
      %v584 = vshrl.u32 %v583, 7
      %v585 = vsub.s32 %v582, %v584
      %v586 = vrot.slane %v572, %v585
      %v587 = vcombine.high %v579, %v579
      %v589 = vunpack.c.l.s4 1966171168
      %v590 = vunpack.c.0.s8 %v589
      %v591 = vlaneseq
      %v592 = vshrl.u32 %v591, 7
      %v593 = vsub.s32 %v590, %v592
      %v594 = vrot.slane %v534, %v593
      %v595 = vcombine.high %v594, %v594
      %v597 = vunpack.c.l.s4 1966171168
      %v598 = vunpack.c.0.s8 %v597
      %v599 = vlaneseq
      %v600 = vshrl.u32 %v599, 7
      %v601 = vsub.s32 %v598, %v600
      %v602 = vrot.slane %v594, %v601
      %v604 = vunpack.c.l.s4 1966171168
      %v605 = vunpack.c.0.s8 %v604
      %v606 = vlaneseq
      %v607 = vshrl.u32 %v606, 7
      %v608 = vsub.s32 %v605, %v607
      %v609 = vrot.slane %v595, %v608
      %v610 = vcombine.high %v602, %v602
      %v612 = vunpack.c.l.s4 1966171168
      %v613 = vunpack.c.0.s8 %v612
      %v614 = vlaneseq
      %v615 = vshrl.u32 %v614, 7
      %v616 = vsub.s32 %v613, %v615
      %v617 = vrot.slane %v535, %v616
      %v618 = vcombine.high %v617, %v617
      %v620 = vunpack.c.l.s4 1966171168
      %v621 = vunpack.c.0.s8 %v620
      %v622 = vlaneseq
      %v623 = vshrl.u32 %v622, 7
      %v624 = vsub.s32 %v621, %v623
      %v625 = vrot.slane %v617, %v624
      %v627 = vunpack.c.l.s4 1966171168
      %v628 = vunpack.c.0.s8 %v627
      %v629 = vlaneseq
      %v630 = vshrl.u32 %v629, 7
      %v631 = vsub.s32 %v628, %v630
      %v632 = vrot.slane %v618, %v631
      %v633 = vcombine.high %v625, %v625
      %v634 = vunpack.c.l.b16 %v556
      %v635 = vunpack.c.l.b16 %v563
      %v636 = vunpack.c.l.b16 %v564
      %v637 = vunpack.c.l.b16 %v579
      %v638 = vunpack.c.l.b16 %v586
      %v639 = vunpack.c.l.b16 %v587
      %v640 = vunpack.c.l.b16 %v602
      %v641 = vunpack.c.l.b16 %v609
      %v642 = vunpack.c.l.b16 %v610
      %v643 = vunpack.c.l.b16 %v625
      %v644 = vunpack.c.l.b16 %v632
      %v645 = vunpack.c.l.b16 %v633
      %v646 = vrot.slane %v637, 7
      %v647 = vsel %vm312, %v646, %v634
      %v648 = vrot.slane %v640, 6
      %v649 = vsel %vm315, %v648, %v647
      %v650 = vrot.slane %v643, 5
      %v651 = vsel %vm318, %v650, %v649
      %v652 = vrot.slane %v638, 7
      %v653 = vsel %vm312, %v652, %v635
      %v654 = vrot.slane %v641, 6
      %v655 = vsel %vm315, %v654, %v653
      %v656 = vrot.slane %v644, 5
      %v657 = vsel %vm318, %v656, %v655
      %v658 = vrot.slane %v639, 7
      %v659 = vsel %vm312, %v658, %v636
      %v660 = vrot.slane %v642, 6
      %v661 = vsel %vm315, %v660, %v659
      %v662 = vrot.slane %v645, 5
      %v663 = vsel %vm318, %v662, %v661
      %v664 = vpack.c.b16 %v651, %v651
      %v665 = vpack.c.b16 %v657, %v657
      %v666 = vpack.c.b16 %v663, %v663
      %667 = vrot.lane.b32.xlu0 %v664, 126
      %v668 = vpop.permute.xlu0 %667
      %669 = vrot.lane.b32.xlu0 %v665, 126
      %v670 = vpop.permute.xlu0 %669
      %671 = vrot.lane.b32.xlu0 %v666, 126
      %v672 = vpop.permute.xlu0 %671
      %vm673 = vcmask 1031168
      %v674 = vsel %vm673, %v668, %v670
      %v675 = vsel %vm673, %v670, %v672
      %v677 = vsel %vm344, %v537, 0
      %v680 = vsel %vm348, %v674, 0
      %v683 = vsel %vm348, %v675, 0
      %v686 = vsel %vm348, %v672, 0
      %688 = vmatprep.subr.bf16.mxu0 %v683
      %689 = vmatpush1.bf16.msra.mxu0 %v680
      %690 = vmatprep.subr.bf16.mxu0 0
      %691 = vmatpush1.bf16.msra.mxu0 0
      %692 = vmatprep.subr.bf16.mxu0 0
      %693 = vmatpush1.bf16.msra.mxu0 0
      %694 = vmatprep.subr.bf16.mxu0 0
      %695 = vmatpush1.bf16.msra.mxu0 0
      %696 = vmatprep.subr.bf16.mxu0 0
      %697 = vmatpush1.bf16.msra.mxu0 0
      %698 = vmatprep.subr.bf16.mxu0 0
      %699 = vmatpush1.bf16.msra.mxu0 0
      %700 = vmatprep.subr.bf16.mxu0 0
      %701 = vmatpush1.bf16.msra.mxu0 0
      %702 = vmatprep.subr.bf16.mxu0 0
      %703 = vmatpush1.bf16.msra.mxu0 0
      %704 = vmatprep.subr.bf16.mxu0 0
      %705 = vmatpush1.bf16.msra.mxu0 0
      %706 = vmatprep.subr.bf16.mxu0 0
      %707 = vmatpush1.bf16.msra.mxu0 0
      %708 = vmatprep.subr.bf16.mxu0 0
      %709 = vmatpush1.bf16.msra.mxu0 0
      %710 = vmatprep.subr.bf16.mxu0 0
      %711 = vmatpush1.bf16.msra.mxu0 0
      %712 = vmatprep.subr.bf16.mxu0 0
      %713 = vmatpush1.bf16.msra.mxu0 0
      %714 = vmatprep.subr.bf16.mxu0 0
      %715 = vmatpush1.bf16.msra.mxu0 0
      %716 = vmatprep.subr.bf16.mxu0 0
      %717 = vmatpush1.bf16.msra.mxu0 0
      %718 = vmatprep.subr.bf16.mxu0 0
      %719 = vmatpush1.bf16.msra.mxu0 0
      %720 = vmatprep.mubr.bf16.mxu0 0
      %721 = vmatmul.mubr.bf16.gmra.mrb[0].mxu0 %v677
      %v722 = vpop.f32.mrb[0].mxu0
      %v723 = vadd.f32 0.0, %v722
      %v724 = vpop.f32.mrb[0].mxu0
      %v725 = vadd.f32 0.0, %v724
      %v726 = vpop.f32.mrb[0].mxu0
      %v727 = vpop.f32.mrb[0].mxu0
      %728 = vdwg.mxu0
      %729 = vmatprep.subr.bf16.mxu0 0
      %730 = vmatpush1.bf16.msra.mxu0 %v686
      %731 = vmatprep.subr.bf16.mxu0 0
      %732 = vmatpush1.bf16.msra.mxu0 0
      %733 = vmatprep.subr.bf16.mxu0 0
      %734 = vmatpush1.bf16.msra.mxu0 0
      %735 = vmatprep.subr.bf16.mxu0 0
      %736 = vmatpush1.bf16.msra.mxu0 0
      %737 = vmatprep.subr.bf16.mxu0 0
      %738 = vmatpush1.bf16.msra.mxu0 0
      %739 = vmatprep.subr.bf16.mxu0 0
      %740 = vmatpush1.bf16.msra.mxu0 0
      %741 = vmatprep.subr.bf16.mxu0 0
      %742 = vmatpush1.bf16.msra.mxu0 0
      %743 = vmatprep.subr.bf16.mxu0 0
      %744 = vmatpush1.bf16.msra.mxu0 0
      %745 = vmatprep.subr.bf16.mxu0 0
      %746 = vmatpush1.bf16.msra.mxu0 0
      %747 = vmatprep.subr.bf16.mxu0 0
      %748 = vmatpush1.bf16.msra.mxu0 0
      %749 = vmatprep.subr.bf16.mxu0 0
      %750 = vmatpush1.bf16.msra.mxu0 0
      %751 = vmatprep.subr.bf16.mxu0 0
      %752 = vmatpush1.bf16.msra.mxu0 0
      %753 = vmatprep.subr.bf16.mxu0 0
      %754 = vmatpush1.bf16.msra.mxu0 0
      %755 = vmatprep.subr.bf16.mxu0 0
      %756 = vmatpush1.bf16.msra.mxu0 0
      %757 = vmatprep.subr.bf16.mxu0 0
      %758 = vmatpush1.bf16.msra.mxu0 0
      %759 = vmatprep.subr.bf16.mxu0 0
      %760 = vmatpush1.bf16.msra.mxu0 0
      %761 = vmatprep.mubr.bf16.mxu0 0
      %762 = vmatmul.mubr.bf16.gmra.mrb[0].mxu0 %v677
      %v763 = vpop.f32.mrb[0].mxu0
      %v764 = vadd.f32 0.0, %v763
      %v765 = vpop.f32.mrb[0].mxu0
      %v766 = vpop.f32.mrb[0].mxu0
      %v767 = vpop.f32.mrb[0].mxu0
      %768 = vdwg.mxu0
      %v769 = vadd.f32 %v486, %v723
      %v770 = vadd.f32 %v488, %v725
      %v771 = vadd.f32 %v527, %v764
      %v772 = vld [vmem:[%s189] sm:$0x7]
      %v773 = vld [vmem:[%s189 + $0x3] sm:$0x7]
      %v774 = vld [vmem:[%s189 + $0x6] sm:$0x7]
      %v775 = vld [vmem:[%s189 + $0x9] sm:$0x7]
      %s776 = scalar_lea.vmem %s1, 6
      %v777 = vld [vmem:[%s776] sm:$0x3]
      %v783 = vunpack.c.l.s4 1966171168
      %v784 = vunpack.c.0.s8 %v783
      %v785 = vlaneseq
      %v786 = vshrl.u32 %v785, 7
      %v787 = vsub.s32 %v784, %v786
      %v788 = vrot.slane %v772, %v787
      %v789 = vcombine.high %v788, %v788
      %v791 = vunpack.c.l.s4 1966171168
      %v792 = vunpack.c.0.s8 %v791
      %v793 = vlaneseq
      %v794 = vshrl.u32 %v793, 7
      %v795 = vsub.s32 %v792, %v794
      %v796 = vrot.slane %v788, %v795
      %v798 = vunpack.c.l.s4 1966171168
      %v799 = vunpack.c.0.s8 %v798
      %v800 = vlaneseq
      %v801 = vshrl.u32 %v800, 7
      %v802 = vsub.s32 %v799, %v801
      %v803 = vrot.slane %v789, %v802
      %v804 = vcombine.high %v796, %v796
      %v806 = vunpack.c.l.s4 1966171168
      %v807 = vunpack.c.0.s8 %v806
      %v808 = vlaneseq
      %v809 = vshrl.u32 %v808, 7
      %v810 = vsub.s32 %v807, %v809
      %v811 = vrot.slane %v773, %v810
      %v812 = vcombine.high %v811, %v811
      %v814 = vunpack.c.l.s4 1966171168
      %v815 = vunpack.c.0.s8 %v814
      %v816 = vlaneseq
      %v817 = vshrl.u32 %v816, 7
      %v818 = vsub.s32 %v815, %v817
      %v819 = vrot.slane %v811, %v818
      %v821 = vunpack.c.l.s4 1966171168
      %v822 = vunpack.c.0.s8 %v821
      %v823 = vlaneseq
      %v824 = vshrl.u32 %v823, 7
      %v825 = vsub.s32 %v822, %v824
      %v826 = vrot.slane %v812, %v825
      %v827 = vcombine.high %v819, %v819
      %v829 = vunpack.c.l.s4 1966171168
      %v830 = vunpack.c.0.s8 %v829
      %v831 = vlaneseq
      %v832 = vshrl.u32 %v831, 7
      %v833 = vsub.s32 %v830, %v832
      %v834 = vrot.slane %v774, %v833
      %v835 = vcombine.high %v834, %v834
      %v837 = vunpack.c.l.s4 1966171168
      %v838 = vunpack.c.0.s8 %v837
      %v839 = vlaneseq
      %v840 = vshrl.u32 %v839, 7
      %v841 = vsub.s32 %v838, %v840
      %v842 = vrot.slane %v834, %v841
      %v844 = vunpack.c.l.s4 1966171168
      %v845 = vunpack.c.0.s8 %v844
      %v846 = vlaneseq
      %v847 = vshrl.u32 %v846, 7
      %v848 = vsub.s32 %v845, %v847
      %v849 = vrot.slane %v835, %v848
      %v850 = vcombine.high %v842, %v842
      %v852 = vunpack.c.l.s4 1966171168
      %v853 = vunpack.c.0.s8 %v852
      %v854 = vlaneseq
      %v855 = vshrl.u32 %v854, 7
      %v856 = vsub.s32 %v853, %v855
      %v857 = vrot.slane %v775, %v856
      %v858 = vcombine.high %v857, %v857
      %v860 = vunpack.c.l.s4 1966171168
      %v861 = vunpack.c.0.s8 %v860
      %v862 = vlaneseq
      %v863 = vshrl.u32 %v862, 7
      %v864 = vsub.s32 %v861, %v863
      %v865 = vrot.slane %v857, %v864
      %v867 = vunpack.c.l.s4 1966171168
      %v868 = vunpack.c.0.s8 %v867
      %v869 = vlaneseq
      %v870 = vshrl.u32 %v869, 7
      %v871 = vsub.s32 %v868, %v870
      %v872 = vrot.slane %v858, %v871
      %v873 = vcombine.high %v865, %v865
      %v874 = vunpack.c.l.b16 %v796
      %v875 = vunpack.c.l.b16 %v803
      %v876 = vunpack.c.l.b16 %v804
      %v877 = vunpack.c.l.b16 %v819
      %v878 = vunpack.c.l.b16 %v826
      %v879 = vunpack.c.l.b16 %v827
      %v880 = vunpack.c.l.b16 %v842
      %v881 = vunpack.c.l.b16 %v849
      %v882 = vunpack.c.l.b16 %v850
      %v883 = vunpack.c.l.b16 %v865
      %v884 = vunpack.c.l.b16 %v872
      %v885 = vunpack.c.l.b16 %v873
      %v886 = vrot.slane %v877, 7
      %v887 = vsel %vm312, %v886, %v874
      %v888 = vrot.slane %v880, 6
      %v889 = vsel %vm315, %v888, %v887
      %v890 = vrot.slane %v883, 5
      %v891 = vsel %vm318, %v890, %v889
      %v892 = vrot.slane %v878, 7
      %v893 = vsel %vm312, %v892, %v875
      %v894 = vrot.slane %v881, 6
      %v895 = vsel %vm315, %v894, %v893
      %v896 = vrot.slane %v884, 5
      %v897 = vsel %vm318, %v896, %v895
      %v898 = vrot.slane %v879, 7
      %v899 = vsel %vm312, %v898, %v876
      %v900 = vrot.slane %v882, 6
      %v901 = vsel %vm315, %v900, %v899
      %v902 = vrot.slane %v885, 5
      %v903 = vsel %vm318, %v902, %v901
      %v904 = vpack.c.b16 %v891, %v891
      %v905 = vpack.c.b16 %v897, %v897
      %v906 = vpack.c.b16 %v903, %v903
      %907 = vrot.lane.b32.xlu0 %v904, 110
      %v908 = vpop.permute.xlu0 %907
      %909 = vrot.lane.b32.xlu0 %v905, 110
      %v910 = vpop.permute.xlu0 %909
      %911 = vrot.lane.b32.xlu0 %v906, 110
      %v912 = vpop.permute.xlu0 %911
      %vm913 = vcmask 900096
      %v914 = vsel %vm913, %v908, %v910
      %v915 = vsel %vm913, %v910, %v912
      %v917 = vsel %vm344, %v777, 0
      %v920 = vsel %vm348, %v914, 0
      %v923 = vsel %vm348, %v915, 0
      %v926 = vsel %vm348, %v912, 0
      %928 = vmatprep.subr.bf16.mxu0 %v923
      %929 = vmatpush1.bf16.msra.mxu0 %v920
      %930 = vmatprep.subr.bf16.mxu0 0
      %931 = vmatpush1.bf16.msra.mxu0 0
      %932 = vmatprep.subr.bf16.mxu0 0
      %933 = vmatpush1.bf16.msra.mxu0 0
      %934 = vmatprep.subr.bf16.mxu0 0
      %935 = vmatpush1.bf16.msra.mxu0 0
      %936 = vmatprep.subr.bf16.mxu0 0
      %937 = vmatpush1.bf16.msra.mxu0 0
      %938 = vmatprep.subr.bf16.mxu0 0
      %939 = vmatpush1.bf16.msra.mxu0 0
      %940 = vmatprep.subr.bf16.mxu0 0
      %941 = vmatpush1.bf16.msra.mxu0 0
      %942 = vmatprep.subr.bf16.mxu0 0
      %943 = vmatpush1.bf16.msra.mxu0 0
      %944 = vmatprep.subr.bf16.mxu0 0
      %945 = vmatpush1.bf16.msra.mxu0 0
      %946 = vmatprep.subr.bf16.mxu0 0
      %947 = vmatpush1.bf16.msra.mxu0 0
      %948 = vmatprep.subr.bf16.mxu0 0
      %949 = vmatpush1.bf16.msra.mxu0 0
      %950 = vmatprep.subr.bf16.mxu0 0
      %951 = vmatpush1.bf16.msra.mxu0 0
      %952 = vmatprep.subr.bf16.mxu0 0
      %953 = vmatpush1.bf16.msra.mxu0 0
      %954 = vmatprep.subr.bf16.mxu0 0
      %955 = vmatpush1.bf16.msra.mxu0 0
      %956 = vmatprep.subr.bf16.mxu0 0
      %957 = vmatpush1.bf16.msra.mxu0 0
      %958 = vmatprep.subr.bf16.mxu0 0
      %959 = vmatpush1.bf16.msra.mxu0 0
      %960 = vmatprep.mubr.bf16.mxu0 0
      %961 = vmatmul.mubr.bf16.gmra.mrb[0].mxu0 %v917
      %v962 = vpop.f32.mrb[0].mxu0
      %v963 = vadd.f32 0.0, %v962
      %v964 = vpop.f32.mrb[0].mxu0
      %v965 = vadd.f32 0.0, %v964
      %v966 = vpop.f32.mrb[0].mxu0
      %v967 = vpop.f32.mrb[0].mxu0
      %968 = vdwg.mxu0
      %969 = vmatprep.subr.bf16.mxu0 0
      %970 = vmatpush1.bf16.msra.mxu0 %v926
      %971 = vmatprep.subr.bf16.mxu0 0
      %972 = vmatpush1.bf16.msra.mxu0 0
      %973 = vmatprep.subr.bf16.mxu0 0
      %974 = vmatpush1.bf16.msra.mxu0 0
      %975 = vmatprep.subr.bf16.mxu0 0
      %976 = vmatpush1.bf16.msra.mxu0 0
      %977 = vmatprep.subr.bf16.mxu0 0
      %978 = vmatpush1.bf16.msra.mxu0 0
      %979 = vmatprep.subr.bf16.mxu0 0
      %980 = vmatpush1.bf16.msra.mxu0 0
      %981 = vmatprep.subr.bf16.mxu0 0
      %982 = vmatpush1.bf16.msra.mxu0 0
      %983 = vmatprep.subr.bf16.mxu0 0
      %984 = vmatpush1.bf16.msra.mxu0 0
      %985 = vmatprep.subr.bf16.mxu0 0
      %986 = vmatpush1.bf16.msra.mxu0 0
      %987 = vmatprep.subr.bf16.mxu0 0
      %988 = vmatpush1.bf16.msra.mxu0 0
      %989 = vmatprep.subr.bf16.mxu0 0
      %990 = vmatpush1.bf16.msra.mxu0 0
      %991 = vmatprep.subr.bf16.mxu0 0
      %992 = vmatpush1.bf16.msra.mxu0 0
      %993 = vmatprep.subr.bf16.mxu0 0
      %994 = vmatpush1.bf16.msra.mxu0 0
      %995 = vmatprep.subr.bf16.mxu0 0
      %996 = vmatpush1.bf16.msra.mxu0 0
      %997 = vmatprep.subr.bf16.mxu0 0
      %998 = vmatpush1.bf16.msra.mxu0 0
      %999 = vmatprep.subr.bf16.mxu0 0
      %1000 = vmatpush1.bf16.msra.mxu0 0
      %1001 = vmatprep.mubr.bf16.mxu0 0
      %1002 = vmatmul.mubr.bf16.gmra.mrb[0].mxu0 %v917
      %v1003 = vpop.f32.mrb[0].mxu0
      %v1004 = vadd.f32 0.0, %v1003
      %v1005 = vpop.f32.mrb[0].mxu0
      %v1006 = vpop.f32.mrb[0].mxu0
      %v1007 = vpop.f32.mrb[0].mxu0
      %1008 = vdwg.mxu0
      %v1009 = vadd.f32 %v769, %v963
      %v1010 = vadd.f32 %v770, %v965
      %v1011 = vadd.f32 %v771, %v1004
      %v1012 = vld [vmem:[%s189] sm:$0x7]
      %v1013 = vld [vmem:[%s189 + $0x3] sm:$0x7]
      %v1014 = vld [vmem:[%s189 + $0x6] sm:$0x7]
      %v1015 = vld [vmem:[%s189 + $0x9] sm:$0x7]
      %s1016 = scalar_lea.vmem %s1, 8
      %v1017 = vld [vmem:[%s1016] sm:$0x3]
      %v1023 = vunpack.c.l.s4 1966171168
      %v1024 = vunpack.c.0.s8 %v1023
      %v1025 = vlaneseq
      %v1026 = vshrl.u32 %v1025, 7
      %v1027 = vsub.s32 %v1024, %v1026
      %v1028 = vrot.slane %v1012, %v1027
      %v1029 = vcombine.high %v1028, %v1028
      %v1031 = vunpack.c.l.s4 1966171168
      %v1032 = vunpack.c.0.s8 %v1031
      %v1033 = vlaneseq
      %v1034 = vshrl.u32 %v1033, 7
      %v1035 = vsub.s32 %v1032, %v1034
      %v1036 = vrot.slane %v1028, %v1035
      %v1038 = vunpack.c.l.s4 1966171168
      %v1039 = vunpack.c.0.s8 %v1038
      %v1040 = vlaneseq
      %v1041 = vshrl.u32 %v1040, 7
      %v1042 = vsub.s32 %v1039, %v1041
      %v1043 = vrot.slane %v1029, %v1042
      %v1044 = vcombine.high %v1036, %v1036
      %v1046 = vunpack.c.l.s4 1966171168
      %v1047 = vunpack.c.0.s8 %v1046
      %v1048 = vlaneseq
      %v1049 = vshrl.u32 %v1048, 7
      %v1050 = vsub.s32 %v1047, %v1049
      %v1051 = vrot.slane %v1013, %v1050
      %v1052 = vcombine.high %v1051, %v1051
      %v1054 = vunpack.c.l.s4 1966171168
      %v1055 = vunpack.c.0.s8 %v1054
      %v1056 = vlaneseq
      %v1057 = vshrl.u32 %v1056, 7
      %v1058 = vsub.s32 %v1055, %v1057
      %v1059 = vrot.slane %v1051, %v1058
      %v1061 = vunpack.c.l.s4 1966171168
      %v1062 = vunpack.c.0.s8 %v1061
      %v1063 = vlaneseq
      %v1064 = vshrl.u32 %v1063, 7
      %v1065 = vsub.s32 %v1062, %v1064
      %v1066 = vrot.slane %v1052, %v1065
      %v1067 = vcombine.high %v1059, %v1059
      %v1069 = vunpack.c.l.s4 1966171168
      %v1070 = vunpack.c.0.s8 %v1069
      %v1071 = vlaneseq
      %v1072 = vshrl.u32 %v1071, 7
      %v1073 = vsub.s32 %v1070, %v1072
      %v1074 = vrot.slane %v1014, %v1073
      %v1075 = vcombine.high %v1074, %v1074
      %v1077 = vunpack.c.l.s4 1966171168
      %v1078 = vunpack.c.0.s8 %v1077
      %v1079 = vlaneseq
      %v1080 = vshrl.u32 %v1079, 7
      %v1081 = vsub.s32 %v1078, %v1080
      %v1082 = vrot.slane %v1074, %v1081
      %v1084 = vunpack.c.l.s4 1966171168
      %v1085 = vunpack.c.0.s8 %v1084
      %v1086 = vlaneseq
      %v1087 = vshrl.u32 %v1086, 7
      %v1088 = vsub.s32 %v1085, %v1087
      %v1089 = vrot.slane %v1075, %v1088
      %v1090 = vcombine.high %v1082, %v1082
      %v1092 = vunpack.c.l.s4 1966171168
      %v1093 = vunpack.c.0.s8 %v1092
      %v1094 = vlaneseq
      %v1095 = vshrl.u32 %v1094, 7
      %v1096 = vsub.s32 %v1093, %v1095
      %v1097 = vrot.slane %v1015, %v1096
      %v1098 = vcombine.high %v1097, %v1097
      %v1100 = vunpack.c.l.s4 1966171168
      %v1101 = vunpack.c.0.s8 %v1100
      %v1102 = vlaneseq
      %v1103 = vshrl.u32 %v1102, 7
      %v1104 = vsub.s32 %v1101, %v1103
      %v1105 = vrot.slane %v1097, %v1104
      %v1107 = vunpack.c.l.s4 1966171168
      %v1108 = vunpack.c.0.s8 %v1107
      %v1109 = vlaneseq
      %v1110 = vshrl.u32 %v1109, 7
      %v1111 = vsub.s32 %v1108, %v1110
      %v1112 = vrot.slane %v1098, %v1111
      %v1113 = vcombine.high %v1105, %v1105
      %v1114 = vunpack.c.l.b16 %v1036
      %v1115 = vunpack.c.l.b16 %v1043
      %v1116 = vunpack.c.l.b16 %v1044
      %v1117 = vunpack.c.l.b16 %v1059
      %v1118 = vunpack.c.l.b16 %v1066
      %v1119 = vunpack.c.l.b16 %v1067
      %v1120 = vunpack.c.l.b16 %v1082
      %v1121 = vunpack.c.l.b16 %v1089
      %v1122 = vunpack.c.l.b16 %v1090
      %v1123 = vunpack.c.l.b16 %v1105
      %v1124 = vunpack.c.l.b16 %v1112
      %v1125 = vunpack.c.l.b16 %v1113
      %v1126 = vrot.slane %v1117, 7
      %v1127 = vsel %vm312, %v1126, %v1114
      %v1128 = vrot.slane %v1120, 6
      %v1129 = vsel %vm315, %v1128, %v1127
      %v1130 = vrot.slane %v1123, 5
      %v1131 = vsel %vm318, %v1130, %v1129
      %v1132 = vrot.slane %v1118, 7
      %v1133 = vsel %vm312, %v1132, %v1115
      %v1134 = vrot.slane %v1121, 6
      %v1135 = vsel %vm315, %v1134, %v1133
      %v1136 = vrot.slane %v1124, 5
      %v1137 = vsel %vm318, %v1136, %v1135
      %v1138 = vrot.slane %v1119, 7
      %v1139 = vsel %vm312, %v1138, %v1116
      %v1140 = vrot.slane %v1122, 6
      %v1141 = vsel %vm315, %v1140, %v1139
      %v1142 = vrot.slane %v1125, 5
      %v1143 = vsel %vm318, %v1142, %v1141
      %v1144 = vpack.c.b16 %v1131, %v1131
      %v1145 = vpack.c.b16 %v1137, %v1137
      %v1146 = vpack.c.b16 %v1143, %v1143
      %1147 = vrot.lane.b32.xlu0 %v1144, 109
      %v1148 = vpop.permute.xlu0 %1147
      %1149 = vrot.lane.b32.xlu0 %v1145, 109
      %v1150 = vpop.permute.xlu0 %1149
      %1151 = vrot.lane.b32.xlu0 %v1146, 109
      %v1152 = vpop.permute.xlu0 %1151
      %vm1153 = vcmask 891904
      %v1154 = vsel %vm1153, %v1148, %v1150
      %v1155 = vsel %vm1153, %v1150, %v1152
      %v1157 = vsel %vm344, %v1017, 0
      %v1160 = vsel %vm348, %v1154, 0
      %v1163 = vsel %vm348, %v1155, 0
      %v1166 = vsel %vm348, %v1152, 0
      %1168 = vmatprep.subr.bf16.mxu0 %v1163
      %1169 = vmatpush1.bf16.msra.mxu0 %v1160
      %1170 = vmatprep.subr.bf16.mxu0 0
      %1171 = vmatpush1.bf16.msra.mxu0 0
      %1172 = vmatprep.subr.bf16.mxu0 0
      %1173 = vmatpush1.bf16.msra.mxu0 0
      %1174 = vmatprep.subr.bf16.mxu0 0
      %1175 = vmatpush1.bf16.msra.mxu0 0
      %1176 = vmatprep.subr.bf16.mxu0 0
      %1177 = vmatpush1.bf16.msra.mxu0 0
      %1178 = vmatprep.subr.bf16.mxu0 0
      %1179 = vmatpush1.bf16.msra.mxu0 0
      %1180 = vmatprep.subr.bf16.mxu0 0
      %1181 = vmatpush1.bf16.msra.mxu0 0
      %1182 = vmatprep.subr.bf16.mxu0 0
      %1183 = vmatpush1.bf16.msra.mxu0 0
      %1184 = vmatprep.subr.bf16.mxu0 0
      %1185 = vmatpush1.bf16.msra.mxu0 0
      %1186 = vmatprep.subr.bf16.mxu0 0
      %1187 = vmatpush1.bf16.msra.mxu0 0
      %1188 = vmatprep.subr.bf16.mxu0 0
      %1189 = vmatpush1.bf16.msra.mxu0 0
      %1190 = vmatprep.subr.bf16.mxu0 0
      %1191 = vmatpush1.bf16.msra.mxu0 0
      %1192 = vmatprep.subr.bf16.mxu0 0
      %1193 = vmatpush1.bf16.msra.mxu0 0
      %1194 = vmatprep.subr.bf16.mxu0 0
      %1195 = vmatpush1.bf16.msra.mxu0 0
      %1196 = vmatprep.subr.bf16.mxu0 0
      %1197 = vmatpush1.bf16.msra.mxu0 0
      %1198 = vmatprep.subr.bf16.mxu0 0
      %1199 = vmatpush1.bf16.msra.mxu0 0
      %1200 = vmatprep.mubr.bf16.mxu0 0
      %1201 = vmatmul.mubr.bf16.gmra.mrb[0].mxu0 %v1157
      %v1202 = vpop.f32.mrb[0].mxu0
      %v1203 = vadd.f32 0.0, %v1202
      %v1204 = vpop.f32.mrb[0].mxu0
      %v1205 = vadd.f32 0.0, %v1204
      %v1206 = vpop.f32.mrb[0].mxu0
      %v1207 = vpop.f32.mrb[0].mxu0
      %1208 = vdwg.mxu0
      %1209 = vmatprep.subr.bf16.mxu0 0
      %1210 = vmatpush1.bf16.msra.mxu0 %v1166
      %1211 = vmatprep.subr.bf16.mxu0 0
      %1212 = vmatpush1.bf16.msra.mxu0 0
      %1213 = vmatprep.subr.bf16.mxu0 0
      %1214 = vmatpush1.bf16.msra.mxu0 0
      %1215 = vmatprep.subr.bf16.mxu0 0
      %1216 = vmatpush1.bf16.msra.mxu0 0
      %1217 = vmatprep.subr.bf16.mxu0 0
      %1218 = vmatpush1.bf16.msra.mxu0 0
      %1219 = vmatprep.subr.bf16.mxu0 0
      %1220 = vmatpush1.bf16.msra.mxu0 0
      %1221 = vmatprep.subr.bf16.mxu0 0
      %1222 = vmatpush1.bf16.msra.mxu0 0
      %1223 = vmatprep.subr.bf16.mxu0 0
      %1224 = vmatpush1.bf16.msra.mxu0 0
      %1225 = vmatprep.subr.bf16.mxu0 0
      %1226 = vmatpush1.bf16.msra.mxu0 0
      %1227 = vmatprep.subr.bf16.mxu0 0
      %1228 = vmatpush1.bf16.msra.mxu0 0
      %1229 = vmatprep.subr.bf16.mxu0 0
      %1230 = vmatpush1.bf16.msra.mxu0 0
      %1231 = vmatprep.subr.bf16.mxu0 0
      %1232 = vmatpush1.bf16.msra.mxu0 0
      %1233 = vmatprep.subr.bf16.mxu0 0
      %1234 = vmatpush1.bf16.msra.mxu0 0
      %1235 = vmatprep.subr.bf16.mxu0 0
      %1236 = vmatpush1.bf16.msra.mxu0 0
      %1237 = vmatprep.subr.bf16.mxu0 0
      %1238 = vmatpush1.bf16.msra.mxu0 0
      %1239 = vmatprep.subr.bf16.mxu0 0
      %1240 = vmatpush1.bf16.msra.mxu0 0
      %1241 = vmatprep.mubr.bf16.mxu0 0
      %1242 = vmatmul.mubr.bf16.gmra.mrb[0].mxu0 %v1157
      %v1243 = vpop.f32.mrb[0].mxu0
      %v1244 = vadd.f32 0.0, %v1243
      %v1245 = vpop.f32.mrb[0].mxu0
      %v1246 = vpop.f32.mrb[0].mxu0
      %v1247 = vpop.f32.mrb[0].mxu0
      %1248 = vdwg.mxu0
      %v1249 = vadd.f32 %v1009, %v1203
      %v1250 = vadd.f32 %v1010, %v1205
      %v1251 = vadd.f32 %v1011, %v1244
      %v1252 = vld [vmem:[%s189] sm:$0x7]
      %v1253 = vld [vmem:[%s189 + $0x3] sm:$0x7]
      %v1254 = vld [vmem:[%s189 + $0x6] sm:$0x7]
      %v1255 = vld [vmem:[%s189 + $0x9] sm:$0x7]
      %s1256 = scalar_lea.vmem %s1, 10
      %v1257 = vld [vmem:[%s1256] sm:$0x3]
      %v1263 = vunpack.c.l.s4 1966171168
      %v1264 = vunpack.c.0.s8 %v1263
      %v1265 = vlaneseq
      %v1266 = vshrl.u32 %v1265, 7
      %v1267 = vsub.s32 %v1264, %v1266
      %v1268 = vrot.slane %v1252, %v1267
      %v1269 = vcombine.high %v1268, %v1268
      %v1271 = vunpack.c.l.s4 1966171168
      %v1272 = vunpack.c.0.s8 %v1271
      %v1273 = vlaneseq
      %v1274 = vshrl.u32 %v1273, 7
      %v1275 = vsub.s32 %v1272, %v1274
      %v1276 = vrot.slane %v1268, %v1275
      %v1278 = vunpack.c.l.s4 1966171168
      %v1279 = vunpack.c.0.s8 %v1278
      %v1280 = vlaneseq
      %v1281 = vshrl.u32 %v1280, 7
      %v1282 = vsub.s32 %v1279, %v1281
      %v1283 = vrot.slane %v1269, %v1282
      %v1284 = vcombine.high %v1276, %v1276
      %v1286 = vunpack.c.l.s4 1966171168
      %v1287 = vunpack.c.0.s8 %v1286
      %v1288 = vlaneseq
      %v1289 = vshrl.u32 %v1288, 7
      %v1290 = vsub.s32 %v1287, %v1289
      %v1291 = vrot.slane %v1253, %v1290
      %v1292 = vcombine.high %v1291, %v1291
      %v1294 = vunpack.c.l.s4 1966171168
      %v1295 = vunpack.c.0.s8 %v1294
      %v1296 = vlaneseq
      %v1297 = vshrl.u32 %v1296, 7
      %v1298 = vsub.s32 %v1295, %v1297
      %v1299 = vrot.slane %v1291, %v1298
      %v1301 = vunpack.c.l.s4 1966171168
      %v1302 = vunpack.c.0.s8 %v1301
      %v1303 = vlaneseq
      %v1304 = vshrl.u32 %v1303, 7
      %v1305 = vsub.s32 %v1302, %v1304
      %v1306 = vrot.slane %v1292, %v1305
      %v1307 = vcombine.high %v1299, %v1299
      %v1309 = vunpack.c.l.s4 1966171168
      %v1310 = vunpack.c.0.s8 %v1309
      %v1311 = vlaneseq
      %v1312 = vshrl.u32 %v1311, 7
      %v1313 = vsub.s32 %v1310, %v1312
      %v1314 = vrot.slane %v1254, %v1313
      %v1315 = vcombine.high %v1314, %v1314
      %v1317 = vunpack.c.l.s4 1966171168
      %v1318 = vunpack.c.0.s8 %v1317
      %v1319 = vlaneseq
      %v1320 = vshrl.u32 %v1319, 7
      %v1321 = vsub.s32 %v1318, %v1320
      %v1322 = vrot.slane %v1314, %v1321
      %v1324 = vunpack.c.l.s4 1966171168
      %v1325 = vunpack.c.0.s8 %v1324
      %v1326 = vlaneseq
      %v1327 = vshrl.u32 %v1326, 7
      %v1328 = vsub.s32 %v1325, %v1327
      %v1329 = vrot.slane %v1315, %v1328
      %v1330 = vcombine.high %v1322, %v1322
      %v1332 = vunpack.c.l.s4 1966171168
      %v1333 = vunpack.c.0.s8 %v1332
      %v1334 = vlaneseq
      %v1335 = vshrl.u32 %v1334, 7
      %v1336 = vsub.s32 %v1333, %v1335
      %v1337 = vrot.slane %v1255, %v1336
      %v1338 = vcombine.high %v1337, %v1337
      %v1340 = vunpack.c.l.s4 1966171168
      %v1341 = vunpack.c.0.s8 %v1340
      %v1342 = vlaneseq
      %v1343 = vshrl.u32 %v1342, 7
      %v1344 = vsub.s32 %v1341, %v1343
      %v1345 = vrot.slane %v1337, %v1344
      %v1347 = vunpack.c.l.s4 1966171168
      %v1348 = vunpack.c.0.s8 %v1347
      %v1349 = vlaneseq
      %v1350 = vshrl.u32 %v1349, 7
      %v1351 = vsub.s32 %v1348, %v1350
      %v1352 = vrot.slane %v1338, %v1351
      %v1353 = vcombine.high %v1345, %v1345
      %v1354 = vunpack.c.l.b16 %v1276
      %v1355 = vunpack.c.l.b16 %v1283
      %v1356 = vunpack.c.l.b16 %v1284
      %v1357 = vunpack.c.l.b16 %v1299
      %v1358 = vunpack.c.l.b16 %v1306
      %v1359 = vunpack.c.l.b16 %v1307
      %v1360 = vunpack.c.l.b16 %v1322
      %v1361 = vunpack.c.l.b16 %v1329
      %v1362 = vunpack.c.l.b16 %v1330
      %v1363 = vunpack.c.l.b16 %v1345
      %v1364 = vunpack.c.l.b16 %v1352
      %v1365 = vunpack.c.l.b16 %v1353
      %v1366 = vrot.slane %v1357, 7
      %v1367 = vsel %vm312, %v1366, %v1354
      %v1368 = vrot.slane %v1360, 6
      %v1369 = vsel %vm315, %v1368, %v1367
      %v1370 = vrot.slane %v1363, 5
      %v1371 = vsel %vm318, %v1370, %v1369
      %v1372 = vrot.slane %v1358, 7
      %v1373 = vsel %vm312, %v1372, %v1355
      %v1374 = vrot.slane %v1361, 6
      %v1375 = vsel %vm315, %v1374, %v1373
      %v1376 = vrot.slane %v1364, 5
      %v1377 = vsel %vm318, %v1376, %v1375
      %v1378 = vrot.slane %v1359, 7
      %v1379 = vsel %vm312, %v1378, %v1356
      %v1380 = vrot.slane %v1362, 6
      %v1381 = vsel %vm315, %v1380, %v1379
      %v1382 = vrot.slane %v1365, 5
      %v1383 = vsel %vm318, %v1382, %v1381
      %v1384 = vpack.c.b16 %v1371, %v1371
      %v1385 = vpack.c.b16 %v1377, %v1377
      %v1386 = vpack.c.b16 %v1383, %v1383
      %1387 = vrot.lane.b32.xlu0 %v1384, 108
      %v1388 = vpop.permute.xlu0 %1387
      %1389 = vrot.lane.b32.xlu0 %v1385, 108
      %v1390 = vpop.permute.xlu0 %1389
      %1391 = vrot.lane.b32.xlu0 %v1386, 108
      %v1392 = vpop.permute.xlu0 %1391
      %vm1393 = vcmask 883712
      %v1394 = vsel %vm1393, %v1388, %v1390
      %v1395 = vsel %vm1393, %v1390, %v1392
      %v1397 = vsel %vm344, %v1257, 0
      %v1400 = vsel %vm348, %v1394, 0
      %v1403 = vsel %vm348, %v1395, 0
      %v1406 = vsel %vm348, %v1392, 0
      %1408 = vmatprep.subr.bf16.mxu0 %v1403
      %1409 = vmatpush1.bf16.msra.mxu0 %v1400
      %1410 = vmatprep.subr.bf16.mxu0 0
      %1411 = vmatpush1.bf16.msra.mxu0 0
      %1412 = vmatprep.subr.bf16.mxu0 0
      %1413 = vmatpush1.bf16.msra.mxu0 0
      %1414 = vmatprep.subr.bf16.mxu0 0
      %1415 = vmatpush1.bf16.msra.mxu0 0
      %1416 = vmatprep.subr.bf16.mxu0 0
      %1417 = vmatpush1.bf16.msra.mxu0 0
      %1418 = vmatprep.subr.bf16.mxu0 0
      %1419 = vmatpush1.bf16.msra.mxu0 0
      %1420 = vmatprep.subr.bf16.mxu0 0
      %1421 = vmatpush1.bf16.msra.mxu0 0
      %1422 = vmatprep.subr.bf16.mxu0 0
      %1423 = vmatpush1.bf16.msra.mxu0 0
      %1424 = vmatprep.subr.bf16.mxu0 0
      %1425 = vmatpush1.bf16.msra.mxu0 0
      %1426 = vmatprep.subr.bf16.mxu0 0
      %1427 = vmatpush1.bf16.msra.mxu0 0
      %1428 = vmatprep.subr.bf16.mxu0 0
      %1429 = vmatpush1.bf16.msra.mxu0 0
      %1430 = vmatprep.subr.bf16.mxu0 0
      %1431 = vmatpush1.bf16.msra.mxu0 0
      %1432 = vmatprep.subr.bf16.mxu0 0
      %1433 = vmatpush1.bf16.msra.mxu0 0
      %1434 = vmatprep.subr.bf16.mxu0 0
      %1435 = vmatpush1.bf16.msra.mxu0 0
      %1436 = vmatprep.subr.bf16.mxu0 0
      %1437 = vmatpush1.bf16.msra.mxu0 0
      %1438 = vmatprep.subr.bf16.mxu0 0
      %1439 = vmatpush1.bf16.msra.mxu0 0
      %1440 = vmatprep.mubr.bf16.mxu0 0
      %1441 = vmatmul.mubr.bf16.gmra.mrb[0].mxu0 %v1397
      %v1442 = vpop.f32.mrb[0].mxu0
      %v1443 = vadd.f32 0.0, %v1442
      %v1444 = vpop.f32.mrb[0].mxu0
      %v1445 = vadd.f32 0.0, %v1444
      %v1446 = vpop.f32.mrb[0].mxu0
      %v1447 = vpop.f32.mrb[0].mxu0
      %1448 = vdwg.mxu0
      %1449 = vmatprep.subr.bf16.mxu0 0
      %1450 = vmatpush1.bf16.msra.mxu0 %v1406
      %1451 = vmatprep.subr.bf16.mxu0 0
      %1452 = vmatpush1.bf16.msra.mxu0 0
      %1453 = vmatprep.subr.bf16.mxu0 0
      %1454 = vmatpush1.bf16.msra.mxu0 0
      %1455 = vmatprep.subr.bf16.mxu0 0
      %1456 = vmatpush1.bf16.msra.mxu0 0
      %1457 = vmatprep.subr.bf16.mxu0 0
      %1458 = vmatpush1.bf16.msra.mxu0 0
      %1459 = vmatprep.subr.bf16.mxu0 0
      %1460 = vmatpush1.bf16.msra.mxu0 0
      %1461 = vmatprep.subr.bf16.mxu0 0
      %1462 = vmatpush1.bf16.msra.mxu0 0
      %1463 = vmatprep.subr.bf16.mxu0 0
      %1464 = vmatpush1.bf16.msra.mxu0 0
      %1465 = vmatprep.subr.bf16.mxu0 0
      %1466 = vmatpush1.bf16.msra.mxu0 0
      %1467 = vmatprep.subr.bf16.mxu0 0
      %1468 = vmatpush1.bf16.msra.mxu0 0
      %1469 = vmatprep.subr.bf16.mxu0 0
      %1470 = vmatpush1.bf16.msra.mxu0 0
      %1471 = vmatprep.subr.bf16.mxu0 0
      %1472 = vmatpush1.bf16.msra.mxu0 0
      %1473 = vmatprep.subr.bf16.mxu0 0
      %1474 = vmatpush1.bf16.msra.mxu0 0
      %1475 = vmatprep.subr.bf16.mxu0 0
      %1476 = vmatpush1.bf16.msra.mxu0 0
      %1477 = vmatprep.subr.bf16.mxu0 0
      %1478 = vmatpush1.bf16.msra.mxu0 0
      %1479 = vmatprep.subr.bf16.mxu0 0
      %1480 = vmatpush1.bf16.msra.mxu0 0
      %1481 = vmatprep.mubr.bf16.mxu0 0
      %1482 = vmatmul.mubr.bf16.gmra.mrb[0].mxu0 %v1397
      %v1483 = vpop.f32.mrb[0].mxu0
      %v1484 = vadd.f32 0.0, %v1483
      %v1485 = vpop.f32.mrb[0].mxu0
      %v1486 = vpop.f32.mrb[0].mxu0
      %v1487 = vpop.f32.mrb[0].mxu0
      %1488 = vdwg.mxu0
      %v1489 = vadd.f32 %v1249, %v1443
      %v1490 = vadd.f32 %v1250, %v1445
      %v1491 = vadd.f32 %v1251, %v1484
      %v1492 = vld [vmem:[%s189] sm:$0x7]
      %v1493 = vld [vmem:[%s189 + $0x3] sm:$0x7]
      %v1494 = vld [vmem:[%s189 + $0x6] sm:$0x7]
      %v1495 = vld [vmem:[%s189 + $0x9] sm:$0x7]
      %s1496 = scalar_lea.vmem %s1, 12
      %v1497 = vld [vmem:[%s1496] sm:$0x3]
      %v1503 = vunpack.c.l.s4 1966171168
      %v1504 = vunpack.c.0.s8 %v1503
      %v1505 = vlaneseq
      %v1506 = vshrl.u32 %v1505, 7
      %v1507 = vsub.s32 %v1504, %v1506
      %v1508 = vrot.slane %v1492, %v1507
      %v1509 = vcombine.high %v1508, %v1508
      %v1511 = vunpack.c.l.s4 1966171168
      %v1512 = vunpack.c.0.s8 %v1511
      %v1513 = vlaneseq
      %v1514 = vshrl.u32 %v1513, 7
      %v1515 = vsub.s32 %v1512, %v1514
      %v1516 = vrot.slane %v1508, %v1515
      %v1518 = vunpack.c.l.s4 1966171168
      %v1519 = vunpack.c.0.s8 %v1518
      %v1520 = vlaneseq
      %v1521 = vshrl.u32 %v1520, 7
      %v1522 = vsub.s32 %v1519, %v1521
      %v1523 = vrot.slane %v1509, %v1522
      %v1524 = vcombine.high %v1516, %v1516
      %v1526 = vunpack.c.l.s4 1966171168
      %v1527 = vunpack.c.0.s8 %v1526
      %v1528 = vlaneseq
      %v1529 = vshrl.u32 %v1528, 7
      %v1530 = vsub.s32 %v1527, %v1529
      %v1531 = vrot.slane %v1493, %v1530
      %v1532 = vcombine.high %v1531, %v1531
      %v1534 = vunpack.c.l.s4 1966171168
      %v1535 = vunpack.c.0.s8 %v1534
      %v1536 = vlaneseq
      %v1537 = vshrl.u32 %v1536, 7
      %v1538 = vsub.s32 %v1535, %v1537
      %v1539 = vrot.slane %v1531, %v1538
      %v1541 = vunpack.c.l.s4 1966171168
      %v1542 = vunpack.c.0.s8 %v1541
      %v1543 = vlaneseq
      %v1544 = vshrl.u32 %v1543, 7
      %v1545 = vsub.s32 %v1542, %v1544
      %v1546 = vrot.slane %v1532, %v1545
      %v1547 = vcombine.high %v1539, %v1539
      %v1549 = vunpack.c.l.s4 1966171168
      %v1550 = vunpack.c.0.s8 %v1549
      %v1551 = vlaneseq
      %v1552 = vshrl.u32 %v1551, 7
      %v1553 = vsub.s32 %v1550, %v1552
      %v1554 = vrot.slane %v1494, %v1553
      %v1555 = vcombine.high %v1554, %v1554
      %v1557 = vunpack.c.l.s4 1966171168
      %v1558 = vunpack.c.0.s8 %v1557
      %v1559 = vlaneseq
      %v1560 = vshrl.u32 %v1559, 7
      %v1561 = vsub.s32 %v1558, %v1560
      %v1562 = vrot.slane %v1554, %v1561
      %v1564 = vunpack.c.l.s4 1966171168
      %v1565 = vunpack.c.0.s8 %v1564
      %v1566 = vlaneseq
      %v1567 = vshrl.u32 %v1566, 7
      %v1568 = vsub.s32 %v1565, %v1567
      %v1569 = vrot.slane %v1555, %v1568
      %v1570 = vcombine.high %v1562, %v1562
      %v1572 = vunpack.c.l.s4 1966171168
      %v1573 = vunpack.c.0.s8 %v1572
      %v1574 = vlaneseq
      %v1575 = vshrl.u32 %v1574, 7
      %v1576 = vsub.s32 %v1573, %v1575
      %v1577 = vrot.slane %v1495, %v1576
      %v1578 = vcombine.high %v1577, %v1577
      %v1580 = vunpack.c.l.s4 1966171168
      %v1581 = vunpack.c.0.s8 %v1580
      %v1582 = vlaneseq
      %v1583 = vshrl.u32 %v1582, 7
      %v1584 = vsub.s32 %v1581, %v1583
      %v1585 = vrot.slane %v1577, %v1584
      %v1587 = vunpack.c.l.s4 1966171168
      %v1588 = vunpack.c.0.s8 %v1587
      %v1589 = vlaneseq
      %v1590 = vshrl.u32 %v1589, 7
      %v1591 = vsub.s32 %v1588, %v1590
      %v1592 = vrot.slane %v1578, %v1591
      %v1593 = vcombine.high %v1585, %v1585
      %v1594 = vunpack.c.l.b16 %v1516
      %v1595 = vunpack.c.l.b16 %v1523
      %v1596 = vunpack.c.l.b16 %v1524
      %v1597 = vunpack.c.l.b16 %v1539
      %v1598 = vunpack.c.l.b16 %v1546
      %v1599 = vunpack.c.l.b16 %v1547
      %v1600 = vunpack.c.l.b16 %v1562
      %v1601 = vunpack.c.l.b16 %v1569
      %v1602 = vunpack.c.l.b16 %v1570
      %v1603 = vunpack.c.l.b16 %v1585
      %v1604 = vunpack.c.l.b16 %v1592
      %v1605 = vunpack.c.l.b16 %v1593
      %v1606 = vrot.slane %v1597, 7
      %v1607 = vsel %vm312, %v1606, %v1594
      %v1608 = vrot.slane %v1600, 6
      %v1609 = vsel %vm315, %v1608, %v1607
      %v1610 = vrot.slane %v1603, 5
      %v1611 = vsel %vm318, %v1610, %v1609
      %v1612 = vrot.slane %v1598, 7
      %v1613 = vsel %vm312, %v1612, %v1595
      %v1614 = vrot.slane %v1601, 6
      %v1615 = vsel %vm315, %v1614, %v1613
      %v1616 = vrot.slane %v1604, 5
      %v1617 = vsel %vm318, %v1616, %v1615
      %v1618 = vrot.slane %v1599, 7
      %v1619 = vsel %vm312, %v1618, %v1596
      %v1620 = vrot.slane %v1602, 6
      %v1621 = vsel %vm315, %v1620, %v1619
      %v1622 = vrot.slane %v1605, 5
      %v1623 = vsel %vm318, %v1622, %v1621
      %v1624 = vpack.c.b16 %v1611, %v1611
      %v1625 = vpack.c.b16 %v1617, %v1617
      %v1626 = vpack.c.b16 %v1623, %v1623
      %1627 = vrot.lane.b32.xlu0 %v1624, 92
      %v1628 = vpop.permute.xlu0 %1627
      %1629 = vrot.lane.b32.xlu0 %v1625, 92
      %v1630 = vpop.permute.xlu0 %1629
      %1631 = vrot.lane.b32.xlu0 %v1626, 92
      %v1632 = vpop.permute.xlu0 %1631
      %vm1633 = vcmask 752640
      %v1634 = vsel %vm1633, %v1628, %v1630
      %v1635 = vsel %vm1633, %v1630, %v1632
      %v1637 = vsel %vm344, %v1497, 0
      %v1640 = vsel %vm348, %v1634, 0
      %v1643 = vsel %vm348, %v1635, 0
      %v1646 = vsel %vm348, %v1632, 0
      %1648 = vmatprep.subr.bf16.mxu0 %v1643
      %1649 = vmatpush1.bf16.msra.mxu0 %v1640
      %1650 = vmatprep.subr.bf16.mxu0 0
      %1651 = vmatpush1.bf16.msra.mxu0 0
      %1652 = vmatprep.subr.bf16.mxu0 0
      %1653 = vmatpush1.bf16.msra.mxu0 0
      %1654 = vmatprep.subr.bf16.mxu0 0
      %1655 = vmatpush1.bf16.msra.mxu0 0
      %1656 = vmatprep.subr.bf16.mxu0 0
      %1657 = vmatpush1.bf16.msra.mxu0 0
      %1658 = vmatprep.subr.bf16.mxu0 0
      %1659 = vmatpush1.bf16.msra.mxu0 0
      %1660 = vmatprep.subr.bf16.mxu0 0
      %1661 = vmatpush1.bf16.msra.mxu0 0
      %1662 = vmatprep.subr.bf16.mxu0 0
      %1663 = vmatpush1.bf16.msra.mxu0 0
      %1664 = vmatprep.subr.bf16.mxu0 0
      %1665 = vmatpush1.bf16.msra.mxu0 0
      %1666 = vmatprep.subr.bf16.mxu0 0
      %1667 = vmatpush1.bf16.msra.mxu0 0
      %1668 = vmatprep.subr.bf16.mxu0 0
      %1669 = vmatpush1.bf16.msra.mxu0 0
      %1670 = vmatprep.subr.bf16.mxu0 0
      %1671 = vmatpush1.bf16.msra.mxu0 0
      %1672 = vmatprep.subr.bf16.mxu0 0
      %1673 = vmatpush1.bf16.msra.mxu0 0
      %1674 = vmatprep.subr.bf16.mxu0 0
      %1675 = vmatpush1.bf16.msra.mxu0 0
      %1676 = vmatprep.subr.bf16.mxu0 0
      %1677 = vmatpush1.bf16.msra.mxu0 0
      %1678 = vmatprep.subr.bf16.mxu0 0
      %1679 = vmatpush1.bf16.msra.mxu0 0
      %1680 = vmatprep.mubr.bf16.mxu0 0
      %1681 = vmatmul.mubr.bf16.gmra.mrb[0].mxu0 %v1637
      %v1682 = vpop.f32.mrb[0].mxu0
      %v1683 = vadd.f32 0.0, %v1682
      %v1684 = vpop.f32.mrb[0].mxu0
      %v1685 = vadd.f32 0.0, %v1684
      %v1686 = vpop.f32.mrb[0].mxu0
      %v1687 = vpop.f32.mrb[0].mxu0
      %1688 = vdwg.mxu0
      %1689 = vmatprep.subr.bf16.mxu0 0
      %1690 = vmatpush1.bf16.msra.mxu0 %v1646
      %1691 = vmatprep.subr.bf16.mxu0 0
      %1692 = vmatpush1.bf16.msra.mxu0 0
      %1693 = vmatprep.subr.bf16.mxu0 0
      %1694 = vmatpush1.bf16.msra.mxu0 0
      %1695 = vmatprep.subr.bf16.mxu0 0
      %1696 = vmatpush1.bf16.msra.mxu0 0
      %1697 = vmatprep.subr.bf16.mxu0 0
      %1698 = vmatpush1.bf16.msra.mxu0 0
      %1699 = vmatprep.subr.bf16.mxu0 0
      %1700 = vmatpush1.bf16.msra.mxu0 0
      %1701 = vmatprep.subr.bf16.mxu0 0
      %1702 = vmatpush1.bf16.msra.mxu0 0
      %1703 = vmatprep.subr.bf16.mxu0 0
      %1704 = vmatpush1.bf16.msra.mxu0 0
      %1705 = vmatprep.subr.bf16.mxu0 0
      %1706 = vmatpush1.bf16.msra.mxu0 0
      %1707 = vmatprep.subr.bf16.mxu0 0
      %1708 = vmatpush1.bf16.msra.mxu0 0
      %1709 = vmatprep.subr.bf16.mxu0 0
      %1710 = vmatpush1.bf16.msra.mxu0 0
      %1711 = vmatprep.subr.bf16.mxu0 0
      %1712 = vmatpush1.bf16.msra.mxu0 0
      %1713 = vmatprep.subr.bf16.mxu0 0
      %1714 = vmatpush1.bf16.msra.mxu0 0
      %1715 = vmatprep.subr.bf16.mxu0 0
      %1716 = vmatpush1.bf16.msra.mxu0 0
      %1717 = vmatprep.subr.bf16.mxu0 0
      %1718 = vmatpush1.bf16.msra.mxu0 0
      %1719 = vmatprep.subr.bf16.mxu0 0
      %1720 = vmatpush1.bf16.msra.mxu0 0
      %1721 = vmatprep.mubr.bf16.mxu0 0
      %1722 = vmatmul.mubr.bf16.gmra.mrb[0].mxu0 %v1637
      %v1723 = vpop.f32.mrb[0].mxu0
      %v1724 = vadd.f32 0.0, %v1723
      %v1725 = vpop.f32.mrb[0].mxu0
      %v1726 = vpop.f32.mrb[0].mxu0
      %v1727 = vpop.f32.mrb[0].mxu0
      %1728 = vdwg.mxu0
      %v1729 = vadd.f32 %v1489, %v1683
      %v1730 = vadd.f32 %v1490, %v1685
      %v1731 = vadd.f32 %v1491, %v1724
      %v1732 = vld [vmem:[%s189] sm:$0x7]
      %v1733 = vld [vmem:[%s189 + $0x3] sm:$0x7]
      %v1734 = vld [vmem:[%s189 + $0x6] sm:$0x7]
      %v1735 = vld [vmem:[%s189 + $0x9] sm:$0x7]
      %s1736 = scalar_lea.vmem %s1, 14
      %v1737 = vld [vmem:[%s1736] sm:$0x3]
      %v1743 = vunpack.c.l.s4 1966171168
      %v1744 = vunpack.c.0.s8 %v1743
      %v1745 = vlaneseq
      %v1746 = vshrl.u32 %v1745, 7
      %v1747 = vsub.s32 %v1744, %v1746
      %v1748 = vrot.slane %v1732, %v1747
      %v1749 = vcombine.high %v1748, %v1748
      %v1751 = vunpack.c.l.s4 1966171168
      %v1752 = vunpack.c.0.s8 %v1751
      %v1753 = vlaneseq
      %v1754 = vshrl.u32 %v1753, 7
      %v1755 = vsub.s32 %v1752, %v1754
      %v1756 = vrot.slane %v1748, %v1755
      %v1758 = vunpack.c.l.s4 1966171168
      %v1759 = vunpack.c.0.s8 %v1758
      %v1760 = vlaneseq
      %v1761 = vshrl.u32 %v1760, 7
      %v1762 = vsub.s32 %v1759, %v1761
      %v1763 = vrot.slane %v1749, %v1762
      %v1764 = vcombine.high %v1756, %v1756
      %v1766 = vunpack.c.l.s4 1966171168
      %v1767 = vunpack.c.0.s8 %v1766
      %v1768 = vlaneseq
      %v1769 = vshrl.u32 %v1768, 7
      %v1770 = vsub.s32 %v1767, %v1769
      %v1771 = vrot.slane %v1733, %v1770
      %v1772 = vcombine.high %v1771, %v1771
      %v1774 = vunpack.c.l.s4 1966171168
      %v1775 = vunpack.c.0.s8 %v1774
      %v1776 = vlaneseq
      %v1777 = vshrl.u32 %v1776, 7
      %v1778 = vsub.s32 %v1775, %v1777
      %v1779 = vrot.slane %v1771, %v1778
      %v1781 = vunpack.c.l.s4 1966171168
      %v1782 = vunpack.c.0.s8 %v1781
      %v1783 = vlaneseq
      %v1784 = vshrl.u32 %v1783, 7
      %v1785 = vsub.s32 %v1782, %v1784
      %v1786 = vrot.slane %v1772, %v1785
      %v1787 = vcombine.high %v1779, %v1779
      %v1789 = vunpack.c.l.s4 1966171168
      %v1790 = vunpack.c.0.s8 %v1789
      %v1791 = vlaneseq
      %v1792 = vshrl.u32 %v1791, 7
      %v1793 = vsub.s32 %v1790, %v1792
      %v1794 = vrot.slane %v1734, %v1793
      %v1795 = vcombine.high %v1794, %v1794
      %v1797 = vunpack.c.l.s4 1966171168
      %v1798 = vunpack.c.0.s8 %v1797
      %v1799 = vlaneseq
      %v1800 = vshrl.u32 %v1799, 7
      %v1801 = vsub.s32 %v1798, %v1800
      %v1802 = vrot.slane %v1794, %v1801
      %v1804 = vunpack.c.l.s4 1966171168
      %v1805 = vunpack.c.0.s8 %v1804
      %v1806 = vlaneseq
      %v1807 = vshrl.u32 %v1806, 7
      %v1808 = vsub.s32 %v1805, %v1807
      %v1809 = vrot.slane %v1795, %v1808
      %v1810 = vcombine.high %v1802, %v1802
      %v1812 = vunpack.c.l.s4 1966171168
      %v1813 = vunpack.c.0.s8 %v1812
      %v1814 = vlaneseq
      %v1815 = vshrl.u32 %v1814, 7
      %v1816 = vsub.s32 %v1813, %v1815
      %v1817 = vrot.slane %v1735, %v1816
      %v1818 = vcombine.high %v1817, %v1817
      %v1820 = vunpack.c.l.s4 1966171168
      %v1821 = vunpack.c.0.s8 %v1820
      %v1822 = vlaneseq
      %v1823 = vshrl.u32 %v1822, 7
      %v1824 = vsub.s32 %v1821, %v1823
      %v1825 = vrot.slane %v1817, %v1824
      %v1827 = vunpack.c.l.s4 1966171168
      %v1828 = vunpack.c.0.s8 %v1827
      %v1829 = vlaneseq
      %v1830 = vshrl.u32 %v1829, 7
      %v1831 = vsub.s32 %v1828, %v1830
      %v1832 = vrot.slane %v1818, %v1831
      %v1833 = vcombine.high %v1825, %v1825
      %v1834 = vunpack.c.l.b16 %v1756
      %v1835 = vunpack.c.l.b16 %v1763
      %v1836 = vunpack.c.l.b16 %v1764
      %v1837 = vunpack.c.l.b16 %v1779
      %v1838 = vunpack.c.l.b16 %v1786
      %v1839 = vunpack.c.l.b16 %v1787
      %v1840 = vunpack.c.l.b16 %v1802
      %v1841 = vunpack.c.l.b16 %v1809
      %v1842 = vunpack.c.l.b16 %v1810
      %v1843 = vunpack.c.l.b16 %v1825
      %v1844 = vunpack.c.l.b16 %v1832
      %v1845 = vunpack.c.l.b16 %v1833
      %v1846 = vrot.slane %v1837, 7
      %v1847 = vsel %vm312, %v1846, %v1834
      %v1848 = vrot.slane %v1840, 6
      %v1849 = vsel %vm315, %v1848, %v1847
      %v1850 = vrot.slane %v1843, 5
      %v1851 = vsel %vm318, %v1850, %v1849
      %v1852 = vrot.slane %v1838, 7
      %v1853 = vsel %vm312, %v1852, %v1835
      %v1854 = vrot.slane %v1841, 6
      %v1855 = vsel %vm315, %v1854, %v1853
      %v1856 = vrot.slane %v1844, 5
      %v1857 = vsel %vm318, %v1856, %v1855
      %v1858 = vrot.slane %v1839, 7
      %v1859 = vsel %vm312, %v1858, %v1836
      %v1860 = vrot.slane %v1842, 6
      %v1861 = vsel %vm315, %v1860, %v1859
      %v1862 = vrot.slane %v1845, 5
      %v1863 = vsel %vm318, %v1862, %v1861
      %v1864 = vpack.c.b16 %v1851, %v1851
      %v1865 = vpack.c.b16 %v1857, %v1857
      %v1866 = vpack.c.b16 %v1863, %v1863
      %1867 = vrot.lane.b32.xlu0 %v1864, 91
      %v1868 = vpop.permute.xlu0 %1867
      %1869 = vrot.lane.b32.xlu0 %v1865, 91
      %v1870 = vpop.permute.xlu0 %1869
      %1871 = vrot.lane.b32.xlu0 %v1866, 91
      %v1872 = vpop.permute.xlu0 %1871
      %vm1873 = vcmask 744448
      %v1874 = vsel %vm1873, %v1868, %v1870
      %v1875 = vsel %vm1873, %v1870, %v1872
      %v1877 = vsel %vm344, %v1737, 0
      %v1880 = vsel %vm348, %v1874, 0
      %v1883 = vsel %vm348, %v1875, 0
      %v1886 = vsel %vm348, %v1872, 0
      %1888 = vmatprep.subr.bf16.mxu0 %v1883
      %1889 = vmatpush1.bf16.msra.mxu0 %v1880
      %1890 = vmatprep.subr.bf16.mxu0 0
      %1891 = vmatpush1.bf16.msra.mxu0 0
      %1892 = vmatprep.subr.bf16.mxu0 0
      %1893 = vmatpush1.bf16.msra.mxu0 0
      %1894 = vmatprep.subr.bf16.mxu0 0
      %1895 = vmatpush1.bf16.msra.mxu0 0
      %1896 = vmatprep.subr.bf16.mxu0 0
      %1897 = vmatpush1.bf16.msra.mxu0 0
      %1898 = vmatprep.subr.bf16.mxu0 0
      %1899 = vmatpush1.bf16.msra.mxu0 0
      %1900 = vmatprep.subr.bf16.mxu0 0
      %1901 = vmatpush1.bf16.msra.mxu0 0
      %1902 = vmatprep.subr.bf16.mxu0 0
      %1903 = vmatpush1.bf16.msra.mxu0 0
      %1904 = vmatprep.subr.bf16.mxu0 0
      %1905 = vmatpush1.bf16.msra.mxu0 0
      %1906 = vmatprep.subr.bf16.mxu0 0
      %1907 = vmatpush1.bf16.msra.mxu0 0
      %1908 = vmatprep.subr.bf16.mxu0 0
      %1909 = vmatpush1.bf16.msra.mxu0 0
      %1910 = vmatprep.subr.bf16.mxu0 0
      %1911 = vmatpush1.bf16.msra.mxu0 0
      %1912 = vmatprep.subr.bf16.mxu0 0
      %1913 = vmatpush1.bf16.msra.mxu0 0
      %1914 = vmatprep.subr.bf16.mxu0 0
      %1915 = vmatpush1.bf16.msra.mxu0 0
      %1916 = vmatprep.subr.bf16.mxu0 0
      %1917 = vmatpush1.bf16.msra.mxu0 0
      %1918 = vmatprep.subr.bf16.mxu0 0
      %1919 = vmatpush1.bf16.msra.mxu0 0
      %1920 = vmatprep.mubr.bf16.mxu0 0
      %1921 = vmatmul.mubr.bf16.gmra.mrb[0].mxu0 %v1877
      %v1922 = vpop.f32.mrb[0].mxu0
      %v1923 = vadd.f32 0.0, %v1922
      %v1924 = vpop.f32.mrb[0].mxu0
      %v1925 = vadd.f32 0.0, %v1924
      %v1926 = vpop.f32.mrb[0].mxu0
      %v1927 = vpop.f32.mrb[0].mxu0
      %1928 = vdwg.mxu0
      %1929 = vmatprep.subr.bf16.mxu0 0
      %1930 = vmatpush1.bf16.msra.mxu0 %v1886
      %1931 = vmatprep.subr.bf16.mxu0 0
      %1932 = vmatpush1.bf16.msra.mxu0 0
      %1933 = vmatprep.subr.bf16.mxu0 0
      %1934 = vmatpush1.bf16.msra.mxu0 0
      %1935 = vmatprep.subr.bf16.mxu0 0
      %1936 = vmatpush1.bf16.msra.mxu0 0
      %1937 = vmatprep.subr.bf16.mxu0 0
      %1938 = vmatpush1.bf16.msra.mxu0 0
      %1939 = vmatprep.subr.bf16.mxu0 0
      %1940 = vmatpush1.bf16.msra.mxu0 0
      %1941 = vmatprep.subr.bf16.mxu0 0
      %1942 = vmatpush1.bf16.msra.mxu0 0
      %1943 = vmatprep.subr.bf16.mxu0 0
      %1944 = vmatpush1.bf16.msra.mxu0 0
      %1945 = vmatprep.subr.bf16.mxu0 0
      %1946 = vmatpush1.bf16.msra.mxu0 0
      %1947 = vmatprep.subr.bf16.mxu0 0
      %1948 = vmatpush1.bf16.msra.mxu0 0
      %1949 = vmatprep.subr.bf16.mxu0 0
      %1950 = vmatpush1.bf16.msra.mxu0 0
      %1951 = vmatprep.subr.bf16.mxu0 0
      %1952 = vmatpush1.bf16.msra.mxu0 0
      %1953 = vmatprep.subr.bf16.mxu0 0
      %1954 = vmatpush1.bf16.msra.mxu0 0
      %1955 = vmatprep.subr.bf16.mxu0 0
      %1956 = vmatpush1.bf16.msra.mxu0 0
      %1957 = vmatprep.subr.bf16.mxu0 0
      %1958 = vmatpush1.bf16.msra.mxu0 0
      %1959 = vmatprep.subr.bf16.mxu0 0
      %1960 = vmatpush1.bf16.msra.mxu0 0
      %1961 = vmatprep.mubr.bf16.mxu0 0
      %1962 = vmatmul.mubr.bf16.gmra.mrb[0].mxu0 %v1877
      %v1963 = vpop.f32.mrb[0].mxu0
      %v1964 = vadd.f32 0.0, %v1963
      %v1965 = vpop.f32.mrb[0].mxu0
      %v1966 = vpop.f32.mrb[0].mxu0
      %v1967 = vpop.f32.mrb[0].mxu0
      %1968 = vdwg.mxu0
      %v1969 = vadd.f32 %v1729, %v1923
      %v1970 = vadd.f32 %v1730, %v1925
      %v1971 = vadd.f32 %v1731, %v1964
      %v1972 = vld [vmem:[%s189] sm:$0x7]
      %v1973 = vld [vmem:[%s189 + $0x3] sm:$0x7]
      %v1974 = vld [vmem:[%s189 + $0x6] sm:$0x7]
      %v1975 = vld [vmem:[%s189 + $0x9] sm:$0x7]
      %s1976 = scalar_lea.vmem %s1, 16
      %v1977 = vld [vmem:[%s1976] sm:$0x3]
      %v1983 = vunpack.c.l.s4 1966171168
      %v1984 = vunpack.c.0.s8 %v1983
      %v1985 = vlaneseq
      %v1986 = vshrl.u32 %v1985, 7
      %v1987 = vsub.s32 %v1984, %v1986
      %v1988 = vrot.slane %v1972, %v1987
      %v1989 = vcombine.high %v1988, %v1988
      %v1991 = vunpack.c.l.s4 1966171168
      %v1992 = vunpack.c.0.s8 %v1991
      %v1993 = vlaneseq
      %v1994 = vshrl.u32 %v1993, 7
      %v1995 = vsub.s32 %v1992, %v1994
      %v1996 = vrot.slane %v1988, %v1995
      %v1998 = vunpack.c.l.s4 1966171168
      %v1999 = vunpack.c.0.s8 %v1998
      %v2000 = vlaneseq
      %v2001 = vshrl.u32 %v2000, 7
      %v2002 = vsub.s32 %v1999, %v2001
      %v2003 = vrot.slane %v1989, %v2002
      %v2004 = vcombine.high %v1996, %v1996
      %v2006 = vunpack.c.l.s4 1966171168
      %v2007 = vunpack.c.0.s8 %v2006
      %v2008 = vlaneseq
      %v2009 = vshrl.u32 %v2008, 7
      %v2010 = vsub.s32 %v2007, %v2009
      %v2011 = vrot.slane %v1973, %v2010
      %v2012 = vcombine.high %v2011, %v2011
      %v2014 = vunpack.c.l.s4 1966171168
      %v2015 = vunpack.c.0.s8 %v2014
      %v2016 = vlaneseq
      %v2017 = vshrl.u32 %v2016, 7
      %v2018 = vsub.s32 %v2015, %v2017
      %v2019 = vrot.slane %v2011, %v2018
      %v2021 = vunpack.c.l.s4 1966171168
      %v2022 = vunpack.c.0.s8 %v2021
      %v2023 = vlaneseq
      %v2024 = vshrl.u32 %v2023, 7
      %v2025 = vsub.s32 %v2022, %v2024
      %v2026 = vrot.slane %v2012, %v2025
      %v2027 = vcombine.high %v2019, %v2019
      %v2029 = vunpack.c.l.s4 1966171168
      %v2030 = vunpack.c.0.s8 %v2029
      %v2031 = vlaneseq
      %v2032 = vshrl.u32 %v2031, 7
      %v2033 = vsub.s32 %v2030, %v2032
      %v2034 = vrot.slane %v1974, %v2033
      %v2035 = vcombine.high %v2034, %v2034
      %v2037 = vunpack.c.l.s4 1966171168
      %v2038 = vunpack.c.0.s8 %v2037
      %v2039 = vlaneseq
      %v2040 = vshrl.u32 %v2039, 7
      %v2041 = vsub.s32 %v2038, %v2040
      %v2042 = vrot.slane %v2034, %v2041
      %v2044 = vunpack.c.l.s4 1966171168
      %v2045 = vunpack.c.0.s8 %v2044
      %v2046 = vlaneseq
      %v2047 = vshrl.u32 %v2046, 7
      %v2048 = vsub.s32 %v2045, %v2047
      %v2049 = vrot.slane %v2035, %v2048
      %v2050 = vcombine.high %v2042, %v2042
      %v2052 = vunpack.c.l.s4 1966171168
      %v2053 = vunpack.c.0.s8 %v2052
      %v2054 = vlaneseq
      %v2055 = vshrl.u32 %v2054, 7
      %v2056 = vsub.s32 %v2053, %v2055
      %v2057 = vrot.slane %v1975, %v2056
      %v2058 = vcombine.high %v2057, %v2057
      %v2060 = vunpack.c.l.s4 1966171168
      %v2061 = vunpack.c.0.s8 %v2060
      %v2062 = vlaneseq
      %v2063 = vshrl.u32 %v2062, 7
      %v2064 = vsub.s32 %v2061, %v2063
      %v2065 = vrot.slane %v2057, %v2064
      %v2067 = vunpack.c.l.s4 1966171168
      %v2068 = vunpack.c.0.s8 %v2067
      %v2069 = vlaneseq
      %v2070 = vshrl.u32 %v2069, 7
      %v2071 = vsub.s32 %v2068, %v2070
      %v2072 = vrot.slane %v2058, %v2071
      %v2073 = vcombine.high %v2065, %v2065
      %v2074 = vunpack.c.l.b16 %v1996
      %v2075 = vunpack.c.l.b16 %v2003
      %v2076 = vunpack.c.l.b16 %v2004
      %v2077 = vunpack.c.l.b16 %v2019
      %v2078 = vunpack.c.l.b16 %v2026
      %v2079 = vunpack.c.l.b16 %v2027
      %v2080 = vunpack.c.l.b16 %v2042
      %v2081 = vunpack.c.l.b16 %v2049
      %v2082 = vunpack.c.l.b16 %v2050
      %v2083 = vunpack.c.l.b16 %v2065
      %v2084 = vunpack.c.l.b16 %v2072
      %v2085 = vunpack.c.l.b16 %v2073
      %v2086 = vrot.slane %v2077, 7
      %v2087 = vsel %vm312, %v2086, %v2074
      %v2088 = vrot.slane %v2080, 6
      %v2089 = vsel %vm315, %v2088, %v2087
      %v2090 = vrot.slane %v2083, 5
      %v2091 = vsel %vm318, %v2090, %v2089
      %v2092 = vrot.slane %v2078, 7
      %v2093 = vsel %vm312, %v2092, %v2075
      %v2094 = vrot.slane %v2081, 6
      %v2095 = vsel %vm315, %v2094, %v2093
      %v2096 = vrot.slane %v2084, 5
      %v2097 = vsel %vm318, %v2096, %v2095
      %v2098 = vrot.slane %v2079, 7
      %v2099 = vsel %vm312, %v2098, %v2076
      %v2100 = vrot.slane %v2082, 6
      %v2101 = vsel %vm315, %v2100, %v2099
      %v2102 = vrot.slane %v2085, 5
      %v2103 = vsel %vm318, %v2102, %v2101
      %v2104 = vpack.c.b16 %v2091, %v2091
      %v2105 = vpack.c.b16 %v2097, %v2097
      %v2106 = vpack.c.b16 %v2103, %v2103
      %2107 = vrot.lane.b32.xlu0 %v2104, 90
      %v2108 = vpop.permute.xlu0 %2107
      %2109 = vrot.lane.b32.xlu0 %v2105, 90
      %v2110 = vpop.permute.xlu0 %2109
      %2111 = vrot.lane.b32.xlu0 %v2106, 90
      %v2112 = vpop.permute.xlu0 %2111
      %vm2113 = vcmask 736256
      %v2114 = vsel %vm2113, %v2108, %v2110
      %v2115 = vsel %vm2113, %v2110, %v2112
      %v2117 = vsel %vm344, %v1977, 0
      %v2120 = vsel %vm348, %v2114, 0
      %v2123 = vsel %vm348, %v2115, 0
      %v2126 = vsel %vm348, %v2112, 0
      %2128 = vmatprep.subr.bf16.mxu0 %v2123
      %2129 = vmatpush1.bf16.msra.mxu0 %v2120
      %2130 = vmatprep.subr.bf16.mxu0 0
      %2131 = vmatpush1.bf16.msra.mxu0 0
      %2132 = vmatprep.subr.bf16.mxu0 0
      %2133 = vmatpush1.bf16.msra.mxu0 0
      %2134 = vmatprep.subr.bf16.mxu0 0
      %2135 = vmatpush1.bf16.msra.mxu0 0
      %2136 = vmatprep.subr.bf16.mxu0 0
      %2137 = vmatpush1.bf16.msra.mxu0 0
      %2138 = vmatprep.subr.bf16.mxu0 0
      %2139 = vmatpush1.bf16.msra.mxu0 0
      %2140 = vmatprep.subr.bf16.mxu0 0
      %2141 = vmatpush1.bf16.msra.mxu0 0
      %2142 = vmatprep.subr.bf16.mxu0 0
      %2143 = vmatpush1.bf16.msra.mxu0 0
      %2144 = vmatprep.subr.bf16.mxu0 0
      %2145 = vmatpush1.bf16.msra.mxu0 0
      %2146 = vmatprep.subr.bf16.mxu0 0
      %2147 = vmatpush1.bf16.msra.mxu0 0
      %2148 = vmatprep.subr.bf16.mxu0 0
      %2149 = vmatpush1.bf16.msra.mxu0 0
      %2150 = vmatprep.subr.bf16.mxu0 0
      %2151 = vmatpush1.bf16.msra.mxu0 0
      %2152 = vmatprep.subr.bf16.mxu0 0
      %2153 = vmatpush1.bf16.msra.mxu0 0
      %2154 = vmatprep.subr.bf16.mxu0 0
      %2155 = vmatpush1.bf16.msra.mxu0 0
      %2156 = vmatprep.subr.bf16.mxu0 0
      %2157 = vmatpush1.bf16.msra.mxu0 0
      %2158 = vmatprep.subr.bf16.mxu0 0
      %2159 = vmatpush1.bf16.msra.mxu0 0
      %2160 = vmatprep.mubr.bf16.mxu0 0
      %2161 = vmatmul.mubr.bf16.gmra.mrb[0].mxu0 %v2117
      %v2162 = vpop.f32.mrb[0].mxu0
      %v2163 = vadd.f32 0.0, %v2162
      %v2164 = vpop.f32.mrb[0].mxu0
      %v2165 = vadd.f32 0.0, %v2164
      %v2166 = vpop.f32.mrb[0].mxu0
      %v2167 = vpop.f32.mrb[0].mxu0
      %2168 = vdwg.mxu0
      %2169 = vmatprep.subr.bf16.mxu0 0
      %2170 = vmatpush1.bf16.msra.mxu0 %v2126
      %2171 = vmatprep.subr.bf16.mxu0 0
      %2172 = vmatpush1.bf16.msra.mxu0 0
      %2173 = vmatprep.subr.bf16.mxu0 0
      %2174 = vmatpush1.bf16.msra.mxu0 0
      %2175 = vmatprep.subr.bf16.mxu0 0
      %2176 = vmatpush1.bf16.msra.mxu0 0
      %2177 = vmatprep.subr.bf16.mxu0 0
      %2178 = vmatpush1.bf16.msra.mxu0 0
      %2179 = vmatprep.subr.bf16.mxu0 0
      %2180 = vmatpush1.bf16.msra.mxu0 0
      %2181 = vmatprep.subr.bf16.mxu0 0
      %2182 = vmatpush1.bf16.msra.mxu0 0
      %2183 = vmatprep.subr.bf16.mxu0 0
      %2184 = vmatpush1.bf16.msra.mxu0 0
      %2185 = vmatprep.subr.bf16.mxu0 0
      %2186 = vmatpush1.bf16.msra.mxu0 0
      %2187 = vmatprep.subr.bf16.mxu0 0
      %2188 = vmatpush1.bf16.msra.mxu0 0
      %2189 = vmatprep.subr.bf16.mxu0 0
      %2190 = vmatpush1.bf16.msra.mxu0 0
      %2191 = vmatprep.subr.bf16.mxu0 0
      %2192 = vmatpush1.bf16.msra.mxu0 0
      %2193 = vmatprep.subr.bf16.mxu0 0
      %2194 = vmatpush1.bf16.msra.mxu0 0
      %2195 = vmatprep.subr.bf16.mxu0 0
      %2196 = vmatpush1.bf16.msra.mxu0 0
      %2197 = vmatprep.subr.bf16.mxu0 0
      %2198 = vmatpush1.bf16.msra.mxu0 0
      %2199 = vmatprep.subr.bf16.mxu0 0
      %2200 = vmatpush1.bf16.msra.mxu0 0
      %2201 = vmatprep.mubr.bf16.mxu0 0
      %2202 = vmatmul.mubr.bf16.gmra.mrb[0].mxu0 %v2117
      %v2203 = vpop.f32.mrb[0].mxu0
      %v2204 = vadd.f32 0.0, %v2203
      %v2205 = vpop.f32.mrb[0].mxu0
      %v2206 = vpop.f32.mrb[0].mxu0
      %v2207 = vpop.f32.mrb[0].mxu0
      %2208 = vdwg.mxu0
      %v2209 = vadd.f32 %v1969, %v2163
      %v2210 = vadd.f32 %v1970, %v2165
      %v2211 = vadd.f32 %v1971, %v2204
      %v2212 = vld [vmem:[%s2] sm:$0xf]
      %2214 = vset.pattern.permute.xlu0 0
      %2215 = vperm.xlu0 %2214, %v2212
      %v2216 = vpop.permute.xlu0 %2215
      %v2218 = vadd.f32 %v2209, %v2216
      %v2219 = vadd.f32 %v2210, %v2216
      %v2220 = vadd.f32 %v2211, %v2216
      %v2221 = vmax.f32 %v2218, 0.0
      %v2222 = vmax.f32 %v2219, 0.0
      %v2223 = vmax.f32 %v2220, 0.0
      %v2224 = vld [vmem:[%s3] sm:$0x7]
      %v2226 = vlaneseq
      %v2227 = vshrl.u32 %v2226, 7
      %v2228 = vsub.s32 0, %v2227
      %v2229 = vrot.slane %v2224, %v2228
      %v2230 = vlaneseq
      %v2231 = vshrl.u32 %v2230, 7
      %v2232 = vsub.s32 1, %v2231
      %v2233 = vrot.slane %v2224, %v2232
      %v2234 = vlaneseq
      %v2235 = vshrl.u32 %v2234, 7
      %v2236 = vsub.s32 2, %v2235
      %v2237 = vrot.slane %v2224, %v2236
      %v2241 = vmul.f32 %v2221, %v2229
      %v2242 = vmul.f32 %v2222, %v2233
      %v2243 = vmul.f32 %v2223, %v2237
      %vm2244 = vcmask 1040384
      %vm2245 = vsmask.f32 256
      %vm2246 = vmand %vm2244, %vm2245
      %vm2247 = vcmask 1041409
      %vm2248 = vsmask.f32 1280
      %vm2249 = vmand %vm2247, %vm2248
      %vm2250 = vmor %vm2249, %vm2246
      %vm2251 = vcmask 1042434
      %vm2252 = vsmask.f32 2304
      %vm2253 = vmand %vm2251, %vm2252
      %vm2254 = vmor %vm2253, %vm2250
      %v2255 = vld [vmem:[%s194] sm:$0x7]
      %v2256 = vsel %vm2254, 0, %v2255
      %2257 = vst [vmem:[%s194] sm:$0x7] %v2256
      %v2258 = vld [vmem:[%s194 + $0x3] sm:$0x7]
      %v2259 = vsel %vm2254, 0, %v2258
      %2260 = vst [vmem:[%s194 + $0x3] sm:$0x7] %v2259
      %v2261 = vld [vmem:[%s194 + $0x6] sm:$0x7]
      %v2262 = vsel %vm2254, 0, %v2261
      %2263 = vst [vmem:[%s194 + $0x6] sm:$0x7] %v2262
      %v2264 = vld [vmem:[%s194 + $0x9] sm:$0x7]
      %v2265 = vsel %vm2254, 0, %v2264
      %2266 = vst [vmem:[%s194 + $0x9] sm:$0x7] %v2265
      %v2267 = vpack.c.bf16 %v2241, %v2241
      %v2268 = vpack.c.bf16 %v2242, %v2242
      %v2269 = vpack.c.bf16 %v2243, %v2243
      %v2273 = vcombine.low %v2267, %v2268
      %v2275 = vunpack.c.l.s4 1966171168
      %v2276 = vunpack.c.0.s8 %v2275
      %v2277 = vlaneseq
      %v2278 = vshrl.u32 %v2277, 7
      %v2279 = vsub.s32 %v2276, %v2278
      %v2280 = vrot.slane %v2273, %v2279
      %v2282 = vunpack.c.l.s4 1966171168
      %v2283 = vunpack.c.0.s8 %v2282
      %v2284 = vlaneseq
      %v2285 = vshrl.u32 %v2284, 7
      %v2286 = vsub.s32 %v2283, %v2285
      %v2287 = vrot.slane %v2269, %v2286
      %v2288 = vcombine.low %v2280, %v2287
      %v2289 = vcombine.high %v2280, %v2287
      %v2291 = vunpack.c.l.s4 1966171168
      %v2292 = vunpack.c.0.s8 %v2291
      %v2293 = vlaneseq
      %v2294 = vshrl.u32 %v2293, 7
      %v2295 = vsub.s32 %v2292, %v2294
      %v2296 = vrot.slane %v2288, %v2295
      %v2298 = vunpack.c.l.s4 1966171168
      %v2299 = vunpack.c.0.s8 %v2298
      %v2300 = vlaneseq
      %v2301 = vshrl.u32 %v2300, 7
      %v2302 = vsub.s32 %v2299, %v2301
      %v2303 = vrot.slane %v2289, %v2302
      %v2304 = vunpack.i.l.s16 %v2296
      %v2305 = vunpack.i.h.s16 %v2296
      %v2306 = vunpack.i.l.s16 %v2303
      %v2307 = vunpack.i.h.s16 %v2303
      %v2308 = vpack.i.b16 %v2304, %v2304
      %v2309 = vpack.i.b16 %v2305, %v2305
      %v2310 = vpack.i.b16 %v2306, %v2306
      %v2311 = vpack.i.b16 %v2307, %v2307
      %2312 = vrot.lane.b32.xlu0 %v2308, 19
      %v2313 = vpop.permute.xlu0 %2312
      %2314 = vrot.lane.b32.xlu0 %v2309, 19
      %v2315 = vpop.permute.xlu0 %2314
      %2316 = vrot.lane.b32.xlu0 %v2310, 19
      %v2317 = vpop.permute.xlu0 %2316
      %2318 = vrot.lane.b32.xlu0 %v2311, 19
      %v2319 = vpop.permute.xlu0 %2318
      %v2320 = vrot.slane %v2313, 7
      %v2321 = vrot.slane %v2315, 7
      %v2322 = vrot.slane %v2317, 7
      %v2323 = vrot.slane %v2319, 7
      %vm2324 = vcmask 154624
      %v2325 = vsel %vm2324, %v2320, %v2313
      %v2326 = vsel %vm2324, %v2321, %v2315
      %v2327 = vsel %vm2324, %v2322, %v2317
      %v2328 = vsel %vm2324, %v2323, %v2319
      %vm2333 = vcmask 1040536
      %vm2334 = vmand %vm2333, %vm2245
      %vm2335 = vmor %vm2249, %vm2334
      %vm2336 = vcmask 411650
      %vm2337 = vmand %vm2336, %vm2252
      %vm2338 = vmor %vm2337, %vm2335
      %v2339 = vld [vmem:[%s194] sm:$0x7]
      %v2340 = vsel %vm2338, %v2325, %v2339
      %2341 = vst [vmem:[%s194] sm:$0x7] %v2340
      %v2342 = vld [vmem:[%s194 + $0x3] sm:$0x7]
      %v2343 = vsel %vm2338, %v2326, %v2342
      %2344 = vst [vmem:[%s194 + $0x3] sm:$0x7] %v2343
      %v2345 = vld [vmem:[%s194 + $0x6] sm:$0x7]
      %v2346 = vsel %vm2338, %v2327, %v2345
      %2347 = vst [vmem:[%s194 + $0x6] sm:$0x7] %v2346
      %v2348 = vld [vmem:[%s194 + $0x9] sm:$0x7]
      %v2349 = vsel %vm2338, %v2328, %v2348
      %2350 = vst [vmem:[%s194 + $0x9] sm:$0x7] %v2349
      %p2351 = scmp.lt.s32.totalorder %s15, 1
      %s2352 = scalar_select %p2351, %s15, 1
      %s2353 = smul.addr %s2352, 48
      %s2354 = sadd.s32 12, %s2353
      %s2355 = scalar_lea.vmem %s4, %s2354
      // Predicated region
      $region37: #{_lambda_.4} parent=35 // pred_check
        %p2356 = pneg %p122
      $region38: #{_lambda_.4} parent=35 // pred_check_branch
        %2358 = sbr.rel (%p2356) target = $region40
      $region39: #{_lambda_.4} parent=35 // pred_region
        _
      $region40: #{_lambda_.4} parent=35 // pred_fallthru
        _
    $region36: #{_lambda_.4} parent=5 // pred_fallthru
      _
    %p2359 = scmp.le.s32.totalorder 2, %s10
    // Predicated region
    $region41: #{_lambda_.4} parent=5 // pred_check
      %p2360 = pneg %p2359
    $region42: #{_lambda_.4} parent=5 // pred_check_branch
      %2362 = sbr.rel (%p2360) target = $region44
    $region43: #{_lambda_.4} parent=5 // pred_region
      %s2363 = ssub.s32 %s10, 2
      // Predicated region
      $region45: #{_lambda_.4} parent=43 // pred_check
        %p2364 = pneg %p128
      $region46: #{_lambda_.4} parent=43 // pred_check_branch
        %2366 = sbr.rel (%p2364) target = $region48
      $region47: #{_lambda_.4} parent=43 // pred_region
        %p2367 = scmp.lt.s32.totalorder %s16, 1
        %s2368 = scalar_select %p2367, %s16, 1
        %s2369 = smul.addr %s2368, 48
        %s2370 = sadd.s32 12, %s2369
        %s2371 = scalar_lea.vmem %s4, %s2370
      $region48: #{_lambda_.4} parent=43 // pred_fallthru
        _
    $region44: #{_lambda_.4} parent=5 // pred_fallthru
      _
  $region6: #{_lambda_.4} parent=0 // loop_footer
    %s14 = sadd.s32 1, %s10
  $region7: #{_lambda_.4} parent=0 // loop_footer_branch
    %9 = sbr.rel target = $region3
  $region8: #{_lambda_.4} parent=0 // loop_exit
    _

// kernel: _lambda_.5
$region0: #{_lambda_.5}
  #allocation0 [shape = 'u32[]', space=smem, size = 0x4, offset = 0x4, fixed_abs, tag = 'smem constant byte address 0x4 - core index']
  #allocation1 [shape = 'u32[144,128]{1,0:T(1,128)}', space=vmem, size = 0x12000, scoped, tag = 'internal scratch']
  %s0 = inlined_call_operand.vmem [shape: bf16[2,16,1,384], index: 0, kind: input, shape index: {}, may-alias: {0,4}]
  %s1 = inlined_call_operand.vmem [shape: bf16[9,4,8], index: 1, kind: input, shape index: {}]
  %s2 = inlined_call_operand.vmem [shape: f32[4,1], index: 2, kind: input, shape index: {}]
  %s3 = inlined_call_operand.vmem [shape: f32[1,288], index: 3, kind: input, shape index: {}]
  %s4 = inlined_call_operand.vmem [shape: bf16[2,16,1,384], index: 4, kind: output, shape index: {}, may-alias: {0,4}]
  %s5 = sld [smem:[#allocation0]]
  $region49: #{_lambda_.5} parent=0
    _
  %s7 = ssub.s32 1, %s5
  %s8 = scalar_select 0, %s7, %s5
  loop: start=0, step=1, limit=4
  $region2: #{_lambda_.5} parent=0 // loop_pre_header
    _
  $region3: #{_lambda_.5} parent=0 // loop_header
    %s10 = sphi 0, %s14
    %p11 = scmp.ge.s32.totalorder %s10, 4
    %s20 = sphi 0, %s22
    %s23 = sphi 0, %s20
    %s24 = sphi 0, %s23
    %s40 = sphi 0, %s24
    %s44 = sphi 0, %s44
    %s46 = sphi 0, %s44
    %s47 = sphi 0, %s46
    %s61 = sphi 0, %s47
    %s65 = sphi 0, %s65
    %s67 = sphi 0, %s65
    %s68 = sphi 0, %s67
    %s82 = sphi 0, %s68
    %s86 = sphi 0, %s86
    %s88 = sphi 0, %s86
    %s89 = sphi 0, %s88
    %s103 = sphi 0, %s89
    %s109 = sphi 0, %s111
    %s112 = sphi 0, %s109
    %s113 = sphi 0, %s112
    %s129 = sphi 0, %s113
  $region4: #{_lambda_.5} parent=0 // loop_header_branch
    %13 = sbr.rel (%p11) target = $region8
  $region5: #{_lambda_.5} parent=0 // loop_body
    %s15 = ssub.s32 %s10, 1
    %s16 = ssub.s32 %s10, 2
    %s17 = sadd.s32 %s10, 1
    %s18 = ssub.s32 %s10, %s17
    %p19 = scmp.eq.s32.totalorder %s18, 0
    %s21 = sadd.s32 %s20, 1
    %s22 = scalar_select %p19, %s20, %s21
    %p25 = pneg %p19
    %p26 = scmp.eq.s32.totalorder %s10, 1
    %p27 = por %p25, %p26
    %p28 = scmp.ne.s32.totalorder %s20, %s23
    %p29 = scmp.eq.s32.totalorder %s10, 0
    %p30 = por %p28, %p29
    %p31 = scmp.ne.s32.totalorder %s20, %s23
    %p32 = scmp.eq.s32.totalorder %s15, 1
    %p33 = por %p31, %p32
    %p34 = scmp.ne.s32.totalorder %s23, %s24
    %p35 = scmp.eq.s32.totalorder %s15, 0
    %p36 = por %p34, %p35
    %p37 = scmp.ne.s32.totalorder %s23, %s24
    %p38 = scmp.eq.s32.totalorder %s16, 1
    %p39 = por %p37, %p38
    %p41 = scmp.ne.s32.totalorder %s24, %s40
    %p42 = scmp.eq.s32.totalorder %s16, 0
    %p43 = por %p41, %p42
    %s45 = sadd.s32 %s44, 1
    %p48 = scmp.eq.s32.totalorder %s10, 1
    %p49 = scmp.ne.s32.totalorder %s44, %s46
    %p50 = scmp.eq.s32.totalorder %s10, 0
    %p51 = por %p49, %p50
    %p52 = scmp.ne.s32.totalorder %s44, %s46
    %p53 = scmp.eq.s32.totalorder %s15, 1
    %p54 = por %p52, %p53
    %p55 = scmp.ne.s32.totalorder %s46, %s47
    %p56 = scmp.eq.s32.totalorder %s15, 0
    %p57 = por %p55, %p56
    %p58 = scmp.ne.s32.totalorder %s46, %s47
    %p59 = scmp.eq.s32.totalorder %s16, 1
    %p60 = por %p58, %p59
    %p62 = scmp.ne.s32.totalorder %s47, %s61
    %p63 = scmp.eq.s32.totalorder %s16, 0
    %p64 = por %p62, %p63
    %s66 = sadd.s32 %s65, 1
    %p69 = scmp.eq.s32.totalorder %s10, 1
    %p70 = scmp.ne.s32.totalorder %s65, %s67
    %p71 = scmp.eq.s32.totalorder %s10, 0
    %p72 = por %p70, %p71
    %p73 = scmp.ne.s32.totalorder %s65, %s67
    %p74 = scmp.eq.s32.totalorder %s15, 1
    %p75 = por %p73, %p74
    %p76 = scmp.ne.s32.totalorder %s67, %s68
    %p77 = scmp.eq.s32.totalorder %s15, 0
    %p78 = por %p76, %p77
    %p79 = scmp.ne.s32.totalorder %s67, %s68
    %p80 = scmp.eq.s32.totalorder %s16, 1
    %p81 = por %p79, %p80
    %p83 = scmp.ne.s32.totalorder %s68, %s82
    %p84 = scmp.eq.s32.totalorder %s16, 0
    %p85 = por %p83, %p84
    %s87 = sadd.s32 %s86, 1
    %p90 = scmp.eq.s32.totalorder %s10, 1
    %p91 = scmp.ne.s32.totalorder %s86, %s88
    %p92 = scmp.eq.s32.totalorder %s10, 0
    %p93 = por %p91, %p92
    %p94 = scmp.ne.s32.totalorder %s86, %s88
    %p95 = scmp.eq.s32.totalorder %s15, 1
    %p96 = por %p94, %p95
    %p97 = scmp.ne.s32.totalorder %s88, %s89
    %p98 = scmp.eq.s32.totalorder %s15, 0
    %p99 = por %p97, %p98
    %p100 = scmp.ne.s32.totalorder %s88, %s89
    %p101 = scmp.eq.s32.totalorder %s16, 1
    %p102 = por %p100, %p101
    %p104 = scmp.ne.s32.totalorder %s89, %s103
    %p105 = scmp.eq.s32.totalorder %s16, 0
    %p106 = por %p104, %p105
    %s107 = ssub.s32 %s10, %s17
    %p108 = scmp.eq.s32.totalorder %s107, 0
    %s110 = sadd.s32 %s109, 1
    %s111 = scalar_select %p108, %s109, %s110
    %p114 = pneg %p108
    %p115 = scmp.eq.s32.totalorder %s10, 1
    %p116 = por %p114, %p115
    %p117 = scmp.ne.s32.totalorder %s109, %s112
    %p118 = scmp.eq.s32.totalorder %s10, 0
    %p119 = por %p117, %p118
    %p120 = scmp.ne.s32.totalorder %s109, %s112
    %p121 = scmp.eq.s32.totalorder %s15, 1
    %p122 = por %p120, %p121
    %p123 = scmp.ne.s32.totalorder %s112, %s113
    %p124 = scmp.eq.s32.totalorder %s15, 0
    %p125 = por %p123, %p124
    %p126 = scmp.ne.s32.totalorder %s112, %s113
    %p127 = scmp.eq.s32.totalorder %s16, 1
    %p128 = por %p126, %p127
    %p130 = scmp.ne.s32.totalorder %s113, %s129
    %p131 = scmp.eq.s32.totalorder %s16, 0
    %p132 = por %p130, %p131
    %p133 = scmp.le.s32.totalorder 1, %s10
    %p134 = scmp.lt.s32.totalorder %s10, 3
    %p135 = pnand %p133, %p134
    %p136 = pneg %p135
    // Predicated region
    $region9: #{_lambda_.5} parent=5 // pred_check
      _
    $region10: #{_lambda_.5} parent=5 // pred_check_branch
      %138 = sbr.rel (%p135) target = $region12
    $region11: #{_lambda_.5} parent=5 // pred_region
      %s139 = ssub.s32 %s10, 1
      // Predicated region
      $region13: #{_lambda_.5} parent=11 // pred_check
        %p140 = pneg %p57
      $region14: #{_lambda_.5} parent=11 // pred_check_branch
        %142 = sbr.rel (%p140) target = $region16
      $region15: #{_lambda_.5} parent=11 // pred_region
        _
      $region16: #{_lambda_.5} parent=11 // pred_fallthru
        _
      // Predicated region
      $region17: #{_lambda_.5} parent=11 // pred_check
        %p143 = pneg %p78
      $region18: #{_lambda_.5} parent=11 // pred_check_branch
        %145 = sbr.rel (%p143) target = $region20
      $region19: #{_lambda_.5} parent=11 // pred_region
        _
      $region20: #{_lambda_.5} parent=11 // pred_fallthru
        _
      // Predicated region
      $region21: #{_lambda_.5} parent=11 // pred_check
        %p146 = pneg %p99
      $region22: #{_lambda_.5} parent=11 // pred_check_branch
        %148 = sbr.rel (%p146) target = $region24
      $region23: #{_lambda_.5} parent=11 // pred_region
        _
      $region24: #{_lambda_.5} parent=11 // pred_fallthru
        _
    $region12: #{_lambda_.5} parent=5 // pred_fallthru
      _
    %p149 = scmp.lt.s32.totalorder %s10, 2
    // Predicated region
    $region25: #{_lambda_.5} parent=5 // pred_check
      %p150 = pneg %p149
    $region26: #{_lambda_.5} parent=5 // pred_check_branch
      %152 = sbr.rel (%p150) target = $region28
    $region27: #{_lambda_.5} parent=5 // pred_region
      // Predicated region
      $region29: #{_lambda_.5} parent=27 // pred_check
        %p153 = pneg %p30
      $region30: #{_lambda_.5} parent=27 // pred_check_branch
        %155 = sbr.rel (%p153) target = $region32
      $region31: #{_lambda_.5} parent=27 // pred_region
        %p156 = scmp.lt.s32.totalorder %s10, 1
        %s157 = scalar_select %p156, %s10, 1
        %s158 = smul.addr %s157, 48
        %s159 = scalar_lea.vmem %s0, %s158
      $region32: #{_lambda_.5} parent=27 // pred_fallthru
        _
    $region28: #{_lambda_.5} parent=5 // pred_fallthru
      _
    %p160 = scmp.le.s32.totalorder 1, %s10
    %p161 = scmp.lt.s32.totalorder %s10, 3
    %p162 = pnand %p160, %p161
    %p163 = pneg %p162
    // Predicated region
    $region33: #{_lambda_.5} parent=5 // pred_check
      _
    $region34: #{_lambda_.5} parent=5 // pred_check_branch
      %165 = sbr.rel (%p162) target = $region36
    $region35: #{_lambda_.5} parent=5 // pred_region
      %s166 = ssub.s32 %s10, 1
      %p167 = scmp.lt.s32.totalorder %s15, 1
      %s168 = scalar_select %p167, %s15, 1
      %s169 = smul.addr %s168, 48
      %s170 = scalar_lea.vmem %s0, %s169
      %p171 = pneg %p36
      %p172 = pneg %p33
      %p173 = pneg %p57
      %p174 = pneg %p54
      %p175 = pneg %p78
      %p176 = pneg %p75
      %p177 = pneg %p99
      %p178 = pneg %p96
      %p179 = pneg %p125
      %p180 = pneg %p122
      %p181 = scmp.lt.s32.totalorder %s15, 1
      %s182 = scalar_select %p181, %s15, 1
      %s183 = smul.addr %s182, 48
      %s184 = sadd.s32 24, %s183
      %s185 = scalar_lea.vmem %s4, %s184
      %p186 = scmp.lt.s32.totalorder %s15, 1
      %s187 = scalar_select %p186, %s15, 1
      %s188 = smul.addr %s187, 48
      %s189 = scalar_lea.vmem %s0, %s188
      %p190 = scmp.lt.s32.totalorder %s15, 1
      %s191 = scalar_select %p190, %s15, 1
      %s192 = smul.addr %s191, 48
      %s193 = sadd.s32 24, %s192
      %s194 = scalar_lea.vmem %s4, %s193
      %v196 = vld [vmem:[%s189] sm:$0x7]
      %v197 = vld [vmem:[%s189 + $0x3] sm:$0x7]
      %v198 = vld [vmem:[%s189 + $0x6] sm:$0x7]
      %v199 = vld [vmem:[%s189 + $0x9] sm:$0x7]
      %v200 = vld [vmem:[%s189 + $0xc] sm:$0x7]
      %v201 = vld [vmem:[%s189 + $0xf] sm:$0x7]
      %v202 = vld [vmem:[%s189 + $0x12] sm:$0x7]
      %v203 = vld [vmem:[%s189 + $0x15] sm:$0x7]
      %v204 = vld [vmem:[%s1] sm:$0x3]
      %s205 = scalar_lea.vmem %s1, 2
      %v206 = vld [vmem:[%s205] sm:$0x3]
      %v216 = vunpack.c.l.s4 1966171168
      %v217 = vunpack.c.0.s8 %v216
      %v218 = vlaneseq
      %v219 = vshrl.u32 %v218, 7
      %v220 = vsub.s32 %v217, %v219
      %v221 = vrot.slane %v196, %v220
      %v222 = vcombine.high %v221, %v221
      %v224 = vunpack.c.l.s4 1966171168
      %v225 = vunpack.c.0.s8 %v224
      %v226 = vlaneseq
      %v227 = vshrl.u32 %v226, 7
      %v228 = vsub.s32 %v225, %v227
      %v229 = vrot.slane %v221, %v228
      %v231 = vunpack.c.l.s4 1966171168
      %v232 = vunpack.c.0.s8 %v231
      %v233 = vlaneseq
      %v234 = vshrl.u32 %v233, 7
      %v235 = vsub.s32 %v232, %v234
      %v236 = vrot.slane %v222, %v235
      %v237 = vcombine.high %v229, %v229
      %v239 = vunpack.c.l.s4 1966171168
      %v240 = vunpack.c.0.s8 %v239
      %v241 = vlaneseq
      %v242 = vshrl.u32 %v241, 7
      %v243 = vsub.s32 %v240, %v242
      %v244 = vrot.slane %v197, %v243
      %v245 = vcombine.high %v244, %v244
      %v247 = vunpack.c.l.s4 1966171168
      %v248 = vunpack.c.0.s8 %v247
      %v249 = vlaneseq
      %v250 = vshrl.u32 %v249, 7
      %v251 = vsub.s32 %v248, %v250
      %v252 = vrot.slane %v244, %v251
      %v254 = vunpack.c.l.s4 1966171168
      %v255 = vunpack.c.0.s8 %v254
      %v256 = vlaneseq
      %v257 = vshrl.u32 %v256, 7
      %v258 = vsub.s32 %v255, %v257
      %v259 = vrot.slane %v245, %v258
      %v260 = vcombine.high %v252, %v252
      %v262 = vunpack.c.l.s4 1966171168
      %v263 = vunpack.c.0.s8 %v262
      %v264 = vlaneseq
      %v265 = vshrl.u32 %v264, 7
      %v266 = vsub.s32 %v263, %v265
      %v267 = vrot.slane %v198, %v266
      %v268 = vcombine.high %v267, %v267
      %v270 = vunpack.c.l.s4 1966171168
      %v271 = vunpack.c.0.s8 %v270
      %v272 = vlaneseq
      %v273 = vshrl.u32 %v272, 7
      %v274 = vsub.s32 %v271, %v273
      %v275 = vrot.slane %v267, %v274
      %v277 = vunpack.c.l.s4 1966171168
      %v278 = vunpack.c.0.s8 %v277
      %v279 = vlaneseq
      %v280 = vshrl.u32 %v279, 7
      %v281 = vsub.s32 %v278, %v280
      %v282 = vrot.slane %v268, %v281
      %v283 = vcombine.high %v275, %v275
      %v285 = vunpack.c.l.s4 1966171168
      %v286 = vunpack.c.0.s8 %v285
      %v287 = vlaneseq
      %v288 = vshrl.u32 %v287, 7
      %v289 = vsub.s32 %v286, %v288
      %v290 = vrot.slane %v199, %v289
      %v291 = vcombine.high %v290, %v290
      %v293 = vunpack.c.l.s4 1966171168
      %v294 = vunpack.c.0.s8 %v293
      %v295 = vlaneseq
      %v296 = vshrl.u32 %v295, 7
      %v297 = vsub.s32 %v294, %v296
      %v298 = vrot.slane %v290, %v297
      %v300 = vunpack.c.l.s4 1966171168
      %v301 = vunpack.c.0.s8 %v300
      %v302 = vlaneseq
      %v303 = vshrl.u32 %v302, 7
      %v304 = vsub.s32 %v301, %v303
      %v305 = vrot.slane %v291, %v304
      %v306 = vcombine.high %v298, %v298
      %v308 = vunpack.c.l.s4 1966171168
      %v309 = vunpack.c.0.s8 %v308
      %v310 = vlaneseq
      %v311 = vshrl.u32 %v310, 7
      %v312 = vsub.s32 %v309, %v311
      %v313 = vrot.slane %v200, %v312
      %v314 = vcombine.high %v313, %v313
      %v316 = vunpack.c.l.s4 1966171168
      %v317 = vunpack.c.0.s8 %v316
      %v318 = vlaneseq
      %v319 = vshrl.u32 %v318, 7
      %v320 = vsub.s32 %v317, %v319
      %v321 = vrot.slane %v313, %v320
      %v323 = vunpack.c.l.s4 1966171168
      %v324 = vunpack.c.0.s8 %v323
      %v325 = vlaneseq
      %v326 = vshrl.u32 %v325, 7
      %v327 = vsub.s32 %v324, %v326
      %v328 = vrot.slane %v314, %v327
      %v329 = vcombine.high %v321, %v321
      %v331 = vunpack.c.l.s4 1966171168
      %v332 = vunpack.c.0.s8 %v331
      %v333 = vlaneseq
      %v334 = vshrl.u32 %v333, 7
      %v335 = vsub.s32 %v332, %v334
      %v336 = vrot.slane %v201, %v335
      %v337 = vcombine.high %v336, %v336
      %v339 = vunpack.c.l.s4 1966171168
      %v340 = vunpack.c.0.s8 %v339
      %v341 = vlaneseq
      %v342 = vshrl.u32 %v341, 7
      %v343 = vsub.s32 %v340, %v342
      %v344 = vrot.slane %v336, %v343
      %v346 = vunpack.c.l.s4 1966171168
      %v347 = vunpack.c.0.s8 %v346
      %v348 = vlaneseq
      %v349 = vshrl.u32 %v348, 7
      %v350 = vsub.s32 %v347, %v349
      %v351 = vrot.slane %v337, %v350
      %v352 = vcombine.high %v344, %v344
      %v354 = vunpack.c.l.s4 1966171168
      %v355 = vunpack.c.0.s8 %v354
      %v356 = vlaneseq
      %v357 = vshrl.u32 %v356, 7
      %v358 = vsub.s32 %v355, %v357
      %v359 = vrot.slane %v202, %v358
      %v360 = vcombine.high %v359, %v359
      %v362 = vunpack.c.l.s4 1966171168
      %v363 = vunpack.c.0.s8 %v362
      %v364 = vlaneseq
      %v365 = vshrl.u32 %v364, 7
      %v366 = vsub.s32 %v363, %v365
      %v367 = vrot.slane %v359, %v366
      %v369 = vunpack.c.l.s4 1966171168
      %v370 = vunpack.c.0.s8 %v369
      %v371 = vlaneseq
      %v372 = vshrl.u32 %v371, 7
      %v373 = vsub.s32 %v370, %v372
      %v374 = vrot.slane %v360, %v373
      %v375 = vcombine.high %v367, %v367
      %v377 = vunpack.c.l.s4 1966171168
      %v378 = vunpack.c.0.s8 %v377
      %v379 = vlaneseq
      %v380 = vshrl.u32 %v379, 7
      %v381 = vsub.s32 %v378, %v380
      %v382 = vrot.slane %v203, %v381
      %v383 = vcombine.high %v382, %v382
      %v385 = vunpack.c.l.s4 1966171168
      %v386 = vunpack.c.0.s8 %v385
      %v387 = vlaneseq
      %v388 = vshrl.u32 %v387, 7
      %v389 = vsub.s32 %v386, %v388
      %v390 = vrot.slane %v382, %v389
      %v392 = vunpack.c.l.s4 1966171168
      %v393 = vunpack.c.0.s8 %v392
      %v394 = vlaneseq
      %v395 = vshrl.u32 %v394, 7
      %v396 = vsub.s32 %v393, %v395
      %v397 = vrot.slane %v383, %v396
      %v398 = vcombine.high %v390, %v390
      %v399 = vunpack.c.l.b16 %v229
      %v400 = vunpack.c.l.b16 %v236
      %v401 = vunpack.c.l.b16 %v237
      %v402 = vunpack.c.l.b16 %v252
      %v403 = vunpack.c.l.b16 %v259
      %v404 = vunpack.c.l.b16 %v260
      %v405 = vunpack.c.l.b16 %v275
      %v406 = vunpack.c.l.b16 %v282
      %v407 = vunpack.c.l.b16 %v283
      %v408 = vunpack.c.l.b16 %v298
      %v409 = vunpack.c.l.b16 %v305
      %v410 = vunpack.c.l.b16 %v306
      %v411 = vunpack.c.l.b16 %v321
      %v412 = vunpack.c.l.b16 %v328
      %v413 = vunpack.c.l.b16 %v329
      %v414 = vunpack.c.l.b16 %v344
      %v415 = vunpack.c.l.b16 %v351
      %v416 = vunpack.c.l.b16 %v352
      %v417 = vunpack.c.l.b16 %v367
      %v418 = vunpack.c.l.b16 %v374
      %v419 = vunpack.c.l.b16 %v375
      %v420 = vunpack.c.l.b16 %v390
      %v421 = vunpack.c.l.b16 %v397
      %v422 = vunpack.c.l.b16 %v398
      %v423 = vrot.slane %v402, 7
      %vm424 = vcmask 1041409
      %v425 = vsel %vm424, %v423, %v399
      %v426 = vrot.slane %v405, 6
      %vm427 = vcmask 1042434
      %v428 = vsel %vm427, %v426, %v425
      %v429 = vrot.slane %v408, 5
      %vm430 = vcmask 1043459
      %v431 = vsel %vm430, %v429, %v428
      %v432 = vrot.slane %v411, 4
      %vm433 = vcmask 1044484
      %v434 = vsel %vm433, %v432, %v431
      %v435 = vrot.slane %v414, 3
      %vm436 = vcmask 1045509
      %v437 = vsel %vm436, %v435, %v434
      %v438 = vrot.slane %v417, 2
      %vm439 = vcmask 1046534
      %v440 = vsel %vm439, %v438, %v437
      %v441 = vrot.slane %v420, 1
      %vm442 = vcmask 1047559
      %v443 = vsel %vm442, %v441, %v440
      %v444 = vrot.slane %v403, 7
      %v445 = vsel %vm424, %v444, %v400
      %v446 = vrot.slane %v406, 6
      %v447 = vsel %vm427, %v446, %v445
      %v448 = vrot.slane %v409, 5
      %v449 = vsel %vm430, %v448, %v447
      %v450 = vrot.slane %v412, 4
      %v451 = vsel %vm433, %v450, %v449
      %v452 = vrot.slane %v415, 3
      %v453 = vsel %vm436, %v452, %v451
      %v454 = vrot.slane %v418, 2
      %v455 = vsel %vm439, %v454, %v453
      %v456 = vrot.slane %v421, 1
      %v457 = vsel %vm442, %v456, %v455
      %v458 = vrot.slane %v404, 7
      %v459 = vsel %vm424, %v458, %v401
      %v460 = vrot.slane %v407, 6
      %v461 = vsel %vm427, %v460, %v459
      %v462 = vrot.slane %v410, 5
      %v463 = vsel %vm430, %v462, %v461
      %v464 = vrot.slane %v413, 4
      %v465 = vsel %vm433, %v464, %v463
      %v466 = vrot.slane %v416, 3
      %v467 = vsel %vm436, %v466, %v465
      %v468 = vrot.slane %v419, 2
      %v469 = vsel %vm439, %v468, %v467
      %v470 = vrot.slane %v422, 1
      %v471 = vsel %vm442, %v470, %v469
      %v472 = vpack.c.b16 %v443, %v443
      %v473 = vpack.c.b16 %v457, %v457
      %v474 = vpack.c.b16 %v471, %v471
      %475 = vrot.lane.b32.xlu0 %v472, 127
      %v476 = vpop.permute.xlu0 %475
      %477 = vrot.lane.b32.xlu0 %v473, 127
      %v478 = vpop.permute.xlu0 %477
      %479 = vrot.lane.b32.xlu0 %v474, 127
      %v480 = vpop.permute.xlu0 %479
      %vm481 = vcmask 1039360
      %v482 = vsel %vm481, %v476, %v478
      %v483 = vsel %vm481, %v478, %v480
      %vm484 = vcmask 64512
      %v486 = vsel %vm484, %v206, 0
      %vm488 = vcmask 1043456
      %v490 = vsel %vm488, %v482, 0
      %v493 = vsel %vm488, %v483, 0
      %v496 = vsel %vm488, %v480, 0
      %498 = vmatprep.subr.bf16.mxu0 %v493
      %499 = vmatpush1.bf16.msra.mxu0 %v490
      %500 = vmatprep.subr.bf16.mxu0 0
      %501 = vmatpush1.bf16.msra.mxu0 0
      %502 = vmatprep.subr.bf16.mxu0 0
      %503 = vmatpush1.bf16.msra.mxu0 0
      %504 = vmatprep.subr.bf16.mxu0 0
      %505 = vmatpush1.bf16.msra.mxu0 0
      %506 = vmatprep.subr.bf16.mxu0 0
      %507 = vmatpush1.bf16.msra.mxu0 0
      %508 = vmatprep.subr.bf16.mxu0 0
      %509 = vmatpush1.bf16.msra.mxu0 0
      %510 = vmatprep.subr.bf16.mxu0 0
      %511 = vmatpush1.bf16.msra.mxu0 0
      %512 = vmatprep.subr.bf16.mxu0 0
      %513 = vmatpush1.bf16.msra.mxu0 0
      %514 = vmatprep.subr.bf16.mxu0 0
      %515 = vmatpush1.bf16.msra.mxu0 0
      %516 = vmatprep.subr.bf16.mxu0 0
      %517 = vmatpush1.bf16.msra.mxu0 0
      %518 = vmatprep.subr.bf16.mxu0 0
      %519 = vmatpush1.bf16.msra.mxu0 0
      %520 = vmatprep.subr.bf16.mxu0 0
      %521 = vmatpush1.bf16.msra.mxu0 0
      %522 = vmatprep.subr.bf16.mxu0 0
      %523 = vmatpush1.bf16.msra.mxu0 0
      %524 = vmatprep.subr.bf16.mxu0 0
      %525 = vmatpush1.bf16.msra.mxu0 0
      %526 = vmatprep.subr.bf16.mxu0 0
      %527 = vmatpush1.bf16.msra.mxu0 0
      %528 = vmatprep.subr.bf16.mxu0 0
      %529 = vmatpush1.bf16.msra.mxu0 0
      %530 = vmatprep.mubr.bf16.mxu0 0
      %531 = vmatmul.mubr.bf16.gmra.mrb[0].mxu0 %v486
      %v532 = vpop.f32.mrb[0].mxu0
      %v533 = vadd.f32 0.0, %v532
      %v534 = vpop.f32.mrb[0].mxu0
      %v535 = vadd.f32 0.0, %v534
      %v536 = vpop.f32.mrb[0].mxu0
      %v537 = vpop.f32.mrb[0].mxu0
      %538 = vdwg.mxu0
      %539 = vmatprep.subr.bf16.mxu0 0
      %540 = vmatpush1.bf16.msra.mxu0 %v496
      %541 = vmatprep.subr.bf16.mxu0 0
      %542 = vmatpush1.bf16.msra.mxu0 0
      %543 = vmatprep.subr.bf16.mxu0 0
      %544 = vmatpush1.bf16.msra.mxu0 0
      %545 = vmatprep.subr.bf16.mxu0 0
      %546 = vmatpush1.bf16.msra.mxu0 0
      %547 = vmatprep.subr.bf16.mxu0 0
      %548 = vmatpush1.bf16.msra.mxu0 0
      %549 = vmatprep.subr.bf16.mxu0 0
      %550 = vmatpush1.bf16.msra.mxu0 0
      %551 = vmatprep.subr.bf16.mxu0 0
      %552 = vmatpush1.bf16.msra.mxu0 0
      %553 = vmatprep.subr.bf16.mxu0 0
      %554 = vmatpush1.bf16.msra.mxu0 0
      %555 = vmatprep.subr.bf16.mxu0 0
      %556 = vmatpush1.bf16.msra.mxu0 0
      %557 = vmatprep.subr.bf16.mxu0 0
      %558 = vmatpush1.bf16.msra.mxu0 0
      %559 = vmatprep.subr.bf16.mxu0 0
      %560 = vmatpush1.bf16.msra.mxu0 0
      %561 = vmatprep.subr.bf16.mxu0 0
      %562 = vmatpush1.bf16.msra.mxu0 0
      %563 = vmatprep.subr.bf16.mxu0 0
      %564 = vmatpush1.bf16.msra.mxu0 0
      %565 = vmatprep.subr.bf16.mxu0 0
      %566 = vmatpush1.bf16.msra.mxu0 0
      %567 = vmatprep.subr.bf16.mxu0 0
      %568 = vmatpush1.bf16.msra.mxu0 0
      %569 = vmatprep.subr.bf16.mxu0 0
      %570 = vmatpush1.bf16.msra.mxu0 0
      %571 = vmatprep.mubr.bf16.mxu0 0
      %572 = vmatmul.mubr.bf16.gmra.mrb[0].mxu0 %v486
      %v573 = vpop.f32.mrb[0].mxu0
      %v574 = vadd.f32 0.0, %v573
      %v575 = vpop.f32.mrb[0].mxu0
      %v576 = vpop.f32.mrb[0].mxu0
      %v577 = vpop.f32.mrb[0].mxu0
      %578 = vdwg.mxu0
      %v580 = vsel %vm484, %v204, 0
      %v583 = vsel %vm488, %v472, 0
      %v586 = vsel %vm488, %v473, 0
      %v589 = vsel %vm488, %v474, 0
      %591 = vmatprep.subr.bf16.mxu0 %v586
      %592 = vmatpush1.bf16.msra.mxu0 %v583
      %593 = vmatprep.subr.bf16.mxu0 0
      %594 = vmatpush1.bf16.msra.mxu0 0
      %595 = vmatprep.subr.bf16.mxu0 0
      %596 = vmatpush1.bf16.msra.mxu0 0
      %597 = vmatprep.subr.bf16.mxu0 0
      %598 = vmatpush1.bf16.msra.mxu0 0
      %599 = vmatprep.subr.bf16.mxu0 0
      %600 = vmatpush1.bf16.msra.mxu0 0
      %601 = vmatprep.subr.bf16.mxu0 0
      %602 = vmatpush1.bf16.msra.mxu0 0
      %603 = vmatprep.subr.bf16.mxu0 0
      %604 = vmatpush1.bf16.msra.mxu0 0
      %605 = vmatprep.subr.bf16.mxu0 0
      %606 = vmatpush1.bf16.msra.mxu0 0
      %607 = vmatprep.subr.bf16.mxu0 0
      %608 = vmatpush1.bf16.msra.mxu0 0
      %609 = vmatprep.subr.bf16.mxu0 0
      %610 = vmatpush1.bf16.msra.mxu0 0
      %611 = vmatprep.subr.bf16.mxu0 0
      %612 = vmatpush1.bf16.msra.mxu0 0
      %613 = vmatprep.subr.bf16.mxu0 0
      %614 = vmatpush1.bf16.msra.mxu0 0
      %615 = vmatprep.subr.bf16.mxu0 0
      %616 = vmatpush1.bf16.msra.mxu0 0
      %617 = vmatprep.subr.bf16.mxu0 0
      %618 = vmatpush1.bf16.msra.mxu0 0
      %619 = vmatprep.subr.bf16.mxu0 0
      %620 = vmatpush1.bf16.msra.mxu0 0
      %621 = vmatprep.subr.bf16.mxu0 0
      %622 = vmatpush1.bf16.msra.mxu0 0
      %623 = vmatprep.mubr.bf16.mxu0 0
      %624 = vmatmul.mubr.bf16.gmra.mrb[0].mxu0 %v580
      %v625 = vpop.f32.mrb[0].mxu0
      %v626 = vadd.f32 %v533, %v625
      %v627 = vpop.f32.mrb[0].mxu0
      %v628 = vadd.f32 %v535, %v627
      %v629 = vpop.f32.mrb[0].mxu0
      %v630 = vpop.f32.mrb[0].mxu0
      %631 = vdwg.mxu0
      %632 = vmatprep.subr.bf16.mxu0 0
      %633 = vmatpush1.bf16.msra.mxu0 %v589
      %634 = vmatprep.subr.bf16.mxu0 0
      %635 = vmatpush1.bf16.msra.mxu0 0
      %636 = vmatprep.subr.bf16.mxu0 0
      %637 = vmatpush1.bf16.msra.mxu0 0
      %638 = vmatprep.subr.bf16.mxu0 0
      %639 = vmatpush1.bf16.msra.mxu0 0
      %640 = vmatprep.subr.bf16.mxu0 0
      %641 = vmatpush1.bf16.msra.mxu0 0
      %642 = vmatprep.subr.bf16.mxu0 0
      %643 = vmatpush1.bf16.msra.mxu0 0
      %644 = vmatprep.subr.bf16.mxu0 0
      %645 = vmatpush1.bf16.msra.mxu0 0
      %646 = vmatprep.subr.bf16.mxu0 0
      %647 = vmatpush1.bf16.msra.mxu0 0
      %648 = vmatprep.subr.bf16.mxu0 0
      %649 = vmatpush1.bf16.msra.mxu0 0
      %650 = vmatprep.subr.bf16.mxu0 0
      %651 = vmatpush1.bf16.msra.mxu0 0
      %652 = vmatprep.subr.bf16.mxu0 0
      %653 = vmatpush1.bf16.msra.mxu0 0
      %654 = vmatprep.subr.bf16.mxu0 0
      %655 = vmatpush1.bf16.msra.mxu0 0
      %656 = vmatprep.subr.bf16.mxu0 0
      %657 = vmatpush1.bf16.msra.mxu0 0
      %658 = vmatprep.subr.bf16.mxu0 0
      %659 = vmatpush1.bf16.msra.mxu0 0
      %660 = vmatprep.subr.bf16.mxu0 0
      %661 = vmatpush1.bf16.msra.mxu0 0
      %662 = vmatprep.subr.bf16.mxu0 0
      %663 = vmatpush1.bf16.msra.mxu0 0
      %664 = vmatprep.mubr.bf16.mxu0 0
      %665 = vmatmul.mubr.bf16.gmra.mrb[0].mxu0 %v580
      %v666 = vpop.f32.mrb[0].mxu0
      %v667 = vadd.f32 %v574, %v666
      %v668 = vpop.f32.mrb[0].mxu0
      %v669 = vpop.f32.mrb[0].mxu0
      %v670 = vpop.f32.mrb[0].mxu0
      %671 = vdwg.mxu0
      %v672 = vld [vmem:[%s189] sm:$0x7]
      %v673 = vld [vmem:[%s189 + $0x3] sm:$0x7]
      %v674 = vld [vmem:[%s189 + $0x6] sm:$0x7]
      %v675 = vld [vmem:[%s189 + $0x9] sm:$0x7]
      %v676 = vld [vmem:[%s189 + $0xc] sm:$0x7]
      %v677 = vld [vmem:[%s189 + $0xf] sm:$0x7]
      %v678 = vld [vmem:[%s189 + $0x12] sm:$0x7]
      %v679 = vld [vmem:[%s189 + $0x15] sm:$0x7]
      %s680 = scalar_lea.vmem %s1, 4
      %v681 = vld [vmem:[%s680] sm:$0x3]
      %v691 = vunpack.c.l.s4 1966171168
      %v692 = vunpack.c.0.s8 %v691
      %v693 = vlaneseq
      %v694 = vshrl.u32 %v693, 7
      %v695 = vsub.s32 %v692, %v694
      %v696 = vrot.slane %v672, %v695
      %v697 = vcombine.high %v696, %v696
      %v699 = vunpack.c.l.s4 1966171168
      %v700 = vunpack.c.0.s8 %v699
      %v701 = vlaneseq
      %v702 = vshrl.u32 %v701, 7
      %v703 = vsub.s32 %v700, %v702
      %v704 = vrot.slane %v696, %v703
      %v706 = vunpack.c.l.s4 1966171168
      %v707 = vunpack.c.0.s8 %v706
      %v708 = vlaneseq
      %v709 = vshrl.u32 %v708, 7
      %v710 = vsub.s32 %v707, %v709
      %v711 = vrot.slane %v697, %v710
      %v712 = vcombine.high %v704, %v704
      %v714 = vunpack.c.l.s4 1966171168
      %v715 = vunpack.c.0.s8 %v714
      %v716 = vlaneseq
      %v717 = vshrl.u32 %v716, 7
      %v718 = vsub.s32 %v715, %v717
      %v719 = vrot.slane %v673, %v718
      %v720 = vcombine.high %v719, %v719
      %v722 = vunpack.c.l.s4 1966171168
      %v723 = vunpack.c.0.s8 %v722
      %v724 = vlaneseq
      %v725 = vshrl.u32 %v724, 7
      %v726 = vsub.s32 %v723, %v725
      %v727 = vrot.slane %v719, %v726
      %v729 = vunpack.c.l.s4 1966171168
      %v730 = vunpack.c.0.s8 %v729
      %v731 = vlaneseq
      %v732 = vshrl.u32 %v731, 7
      %v733 = vsub.s32 %v730, %v732
      %v734 = vrot.slane %v720, %v733
      %v735 = vcombine.high %v727, %v727
      %v737 = vunpack.c.l.s4 1966171168
      %v738 = vunpack.c.0.s8 %v737
      %v739 = vlaneseq
      %v740 = vshrl.u32 %v739, 7
      %v741 = vsub.s32 %v738, %v740
      %v742 = vrot.slane %v674, %v741
      %v743 = vcombine.high %v742, %v742
      %v745 = vunpack.c.l.s4 1966171168
      %v746 = vunpack.c.0.s8 %v745
      %v747 = vlaneseq
      %v748 = vshrl.u32 %v747, 7
      %v749 = vsub.s32 %v746, %v748
      %v750 = vrot.slane %v742, %v749
      %v752 = vunpack.c.l.s4 1966171168
      %v753 = vunpack.c.0.s8 %v752
      %v754 = vlaneseq
      %v755 = vshrl.u32 %v754, 7
      %v756 = vsub.s32 %v753, %v755
      %v757 = vrot.slane %v743, %v756
      %v758 = vcombine.high %v750, %v750
      %v760 = vunpack.c.l.s4 1966171168
      %v761 = vunpack.c.0.s8 %v760
      %v762 = vlaneseq
      %v763 = vshrl.u32 %v762, 7
      %v764 = vsub.s32 %v761, %v763
      %v765 = vrot.slane %v675, %v764
      %v766 = vcombine.high %v765, %v765
      %v768 = vunpack.c.l.s4 1966171168
      %v769 = vunpack.c.0.s8 %v768
      %v770 = vlaneseq
      %v771 = vshrl.u32 %v770, 7
      %v772 = vsub.s32 %v769, %v771
      %v773 = vrot.slane %v765, %v772
      %v775 = vunpack.c.l.s4 1966171168
      %v776 = vunpack.c.0.s8 %v775
      %v777 = vlaneseq
      %v778 = vshrl.u32 %v777, 7
      %v779 = vsub.s32 %v776, %v778
      %v780 = vrot.slane %v766, %v779
      %v781 = vcombine.high %v773, %v773
      %v783 = vunpack.c.l.s4 1966171168
      %v784 = vunpack.c.0.s8 %v783
      %v785 = vlaneseq
      %v786 = vshrl.u32 %v785, 7
      %v787 = vsub.s32 %v784, %v786
      %v788 = vrot.slane %v676, %v787
      %v789 = vcombine.high %v788, %v788
      %v791 = vunpack.c.l.s4 1966171168
      %v792 = vunpack.c.0.s8 %v791
      %v793 = vlaneseq
      %v794 = vshrl.u32 %v793, 7
      %v795 = vsub.s32 %v792, %v794
      %v796 = vrot.slane %v788, %v795
      %v798 = vunpack.c.l.s4 1966171168
      %v799 = vunpack.c.0.s8 %v798
      %v800 = vlaneseq
      %v801 = vshrl.u32 %v800, 7
      %v802 = vsub.s32 %v799, %v801
      %v803 = vrot.slane %v789, %v802
      %v804 = vcombine.high %v796, %v796
      %v806 = vunpack.c.l.s4 1966171168
      %v807 = vunpack.c.0.s8 %v806
      %v808 = vlaneseq
      %v809 = vshrl.u32 %v808, 7
      %v810 = vsub.s32 %v807, %v809
      %v811 = vrot.slane %v677, %v810
      %v812 = vcombine.high %v811, %v811
      %v814 = vunpack.c.l.s4 1966171168
      %v815 = vunpack.c.0.s8 %v814
      %v816 = vlaneseq
      %v817 = vshrl.u32 %v816, 7
      %v818 = vsub.s32 %v815, %v817
      %v819 = vrot.slane %v811, %v818
      %v821 = vunpack.c.l.s4 1966171168
      %v822 = vunpack.c.0.s8 %v821
      %v823 = vlaneseq
      %v824 = vshrl.u32 %v823, 7
      %v825 = vsub.s32 %v822, %v824
      %v826 = vrot.slane %v812, %v825
      %v827 = vcombine.high %v819, %v819
      %v829 = vunpack.c.l.s4 1966171168
      %v830 = vunpack.c.0.s8 %v829
      %v831 = vlaneseq
      %v832 = vshrl.u32 %v831, 7
      %v833 = vsub.s32 %v830, %v832
      %v834 = vrot.slane %v678, %v833
      %v835 = vcombine.high %v834, %v834
      %v837 = vunpack.c.l.s4 1966171168
      %v838 = vunpack.c.0.s8 %v837
      %v839 = vlaneseq
      %v840 = vshrl.u32 %v839, 7
      %v841 = vsub.s32 %v838, %v840
      %v842 = vrot.slane %v834, %v841
      %v844 = vunpack.c.l.s4 1966171168
      %v845 = vunpack.c.0.s8 %v844
      %v846 = vlaneseq
      %v847 = vshrl.u32 %v846, 7
      %v848 = vsub.s32 %v845, %v847
      %v849 = vrot.slane %v835, %v848
      %v850 = vcombine.high %v842, %v842
      %v852 = vunpack.c.l.s4 1966171168
      %v853 = vunpack.c.0.s8 %v852
      %v854 = vlaneseq
      %v855 = vshrl.u32 %v854, 7
      %v856 = vsub.s32 %v853, %v855
      %v857 = vrot.slane %v679, %v856
      %v858 = vcombine.high %v857, %v857
      %v860 = vunpack.c.l.s4 1966171168
      %v861 = vunpack.c.0.s8 %v860
      %v862 = vlaneseq
      %v863 = vshrl.u32 %v862, 7
      %v864 = vsub.s32 %v861, %v863
      %v865 = vrot.slane %v857, %v864
      %v867 = vunpack.c.l.s4 1966171168
      %v868 = vunpack.c.0.s8 %v867
      %v869 = vlaneseq
      %v870 = vshrl.u32 %v869, 7
      %v871 = vsub.s32 %v868, %v870
      %v872 = vrot.slane %v858, %v871
      %v873 = vcombine.high %v865, %v865
      %v874 = vunpack.c.l.b16 %v704
      %v875 = vunpack.c.l.b16 %v711
      %v876 = vunpack.c.l.b16 %v712
      %v877 = vunpack.c.l.b16 %v727
      %v878 = vunpack.c.l.b16 %v734
      %v879 = vunpack.c.l.b16 %v735
      %v880 = vunpack.c.l.b16 %v750
      %v881 = vunpack.c.l.b16 %v757
      %v882 = vunpack.c.l.b16 %v758
      %v883 = vunpack.c.l.b16 %v773
      %v884 = vunpack.c.l.b16 %v780
      %v885 = vunpack.c.l.b16 %v781
      %v886 = vunpack.c.l.b16 %v796
      %v887 = vunpack.c.l.b16 %v803
      %v888 = vunpack.c.l.b16 %v804
      %v889 = vunpack.c.l.b16 %v819
      %v890 = vunpack.c.l.b16 %v826
      %v891 = vunpack.c.l.b16 %v827
      %v892 = vunpack.c.l.b16 %v842
      %v893 = vunpack.c.l.b16 %v849
      %v894 = vunpack.c.l.b16 %v850
      %v895 = vunpack.c.l.b16 %v865
      %v896 = vunpack.c.l.b16 %v872
      %v897 = vunpack.c.l.b16 %v873
      %v898 = vrot.slane %v877, 7
      %v899 = vsel %vm424, %v898, %v874
      %v900 = vrot.slane %v880, 6
      %v901 = vsel %vm427, %v900, %v899
      %v902 = vrot.slane %v883, 5
      %v903 = vsel %vm430, %v902, %v901
      %v904 = vrot.slane %v886, 4
      %v905 = vsel %vm433, %v904, %v903
      %v906 = vrot.slane %v889, 3
      %v907 = vsel %vm436, %v906, %v905
      %v908 = vrot.slane %v892, 2
      %v909 = vsel %vm439, %v908, %v907
      %v910 = vrot.slane %v895, 1
      %v911 = vsel %vm442, %v910, %v909
      %v912 = vrot.slane %v878, 7
      %v913 = vsel %vm424, %v912, %v875
      %v914 = vrot.slane %v881, 6
      %v915 = vsel %vm427, %v914, %v913
      %v916 = vrot.slane %v884, 5
      %v917 = vsel %vm430, %v916, %v915
      %v918 = vrot.slane %v887, 4
      %v919 = vsel %vm433, %v918, %v917
      %v920 = vrot.slane %v890, 3
      %v921 = vsel %vm436, %v920, %v919
      %v922 = vrot.slane %v893, 2
      %v923 = vsel %vm439, %v922, %v921
      %v924 = vrot.slane %v896, 1
      %v925 = vsel %vm442, %v924, %v923
      %v926 = vrot.slane %v879, 7
      %v927 = vsel %vm424, %v926, %v876
      %v928 = vrot.slane %v882, 6
      %v929 = vsel %vm427, %v928, %v927
      %v930 = vrot.slane %v885, 5
      %v931 = vsel %vm430, %v930, %v929
      %v932 = vrot.slane %v888, 4
      %v933 = vsel %vm433, %v932, %v931
      %v934 = vrot.slane %v891, 3
      %v935 = vsel %vm436, %v934, %v933
      %v936 = vrot.slane %v894, 2
      %v937 = vsel %vm439, %v936, %v935
      %v938 = vrot.slane %v897, 1
      %v939 = vsel %vm442, %v938, %v937
      %v940 = vpack.c.b16 %v911, %v911
      %v941 = vpack.c.b16 %v925, %v925
      %v942 = vpack.c.b16 %v939, %v939
      %943 = vrot.lane.b32.xlu0 %v940, 126
      %v944 = vpop.permute.xlu0 %943
      %945 = vrot.lane.b32.xlu0 %v941, 126
      %v946 = vpop.permute.xlu0 %945
      %947 = vrot.lane.b32.xlu0 %v942, 126
      %v948 = vpop.permute.xlu0 %947
      %vm949 = vcmask 1031168
      %v950 = vsel %vm949, %v944, %v946
      %v951 = vsel %vm949, %v946, %v948
      %v953 = vsel %vm484, %v681, 0
      %v956 = vsel %vm488, %v950, 0
      %v959 = vsel %vm488, %v951, 0
      %v962 = vsel %vm488, %v948, 0
      %964 = vmatprep.subr.bf16.mxu0 %v959
      %965 = vmatpush1.bf16.msra.mxu0 %v956
      %966 = vmatprep.subr.bf16.mxu0 0
      %967 = vmatpush1.bf16.msra.mxu0 0
      %968 = vmatprep.subr.bf16.mxu0 0
      %969 = vmatpush1.bf16.msra.mxu0 0
      %970 = vmatprep.subr.bf16.mxu0 0
      %971 = vmatpush1.bf16.msra.mxu0 0
      %972 = vmatprep.subr.bf16.mxu0 0
      %973 = vmatpush1.bf16.msra.mxu0 0
      %974 = vmatprep.subr.bf16.mxu0 0
      %975 = vmatpush1.bf16.msra.mxu0 0
      %976 = vmatprep.subr.bf16.mxu0 0
      %977 = vmatpush1.bf16.msra.mxu0 0
      %978 = vmatprep.subr.bf16.mxu0 0
      %979 = vmatpush1.bf16.msra.mxu0 0
      %980 = vmatprep.subr.bf16.mxu0 0
      %981 = vmatpush1.bf16.msra.mxu0 0
      %982 = vmatprep.subr.bf16.mxu0 0
      %983 = vmatpush1.bf16.msra.mxu0 0
      %984 = vmatprep.subr.bf16.mxu0 0
      %985 = vmatpush1.bf16.msra.mxu0 0
      %986 = vmatprep.subr.bf16.mxu0 0
      %987 = vmatpush1.bf16.msra.mxu0 0
      %988 = vmatprep.subr.bf16.mxu0 0
      %989 = vmatpush1.bf16.msra.mxu0 0
      %990 = vmatprep.subr.bf16.mxu0 0
      %991 = vmatpush1.bf16.msra.mxu0 0
      %992 = vmatprep.subr.bf16.mxu0 0
      %993 = vmatpush1.bf16.msra.mxu0 0
      %994 = vmatprep.subr.bf16.mxu0 0
      %995 = vmatpush1.bf16.msra.mxu0 0
      %996 = vmatprep.mubr.bf16.mxu0 0
      %997 = vmatmul.mubr.bf16.gmra.mrb[0].mxu0 %v953
      %v998 = vpop.f32.mrb[0].mxu0
      %v999 = vadd.f32 0.0, %v998
      %v1000 = vpop.f32.mrb[0].mxu0
      %v1001 = vadd.f32 0.0, %v1000
      %v1002 = vpop.f32.mrb[0].mxu0
      %v1003 = vpop.f32.mrb[0].mxu0
      %1004 = vdwg.mxu0
      %1005 = vmatprep.subr.bf16.mxu0 0
      %1006 = vmatpush1.bf16.msra.mxu0 %v962
      %1007 = vmatprep.subr.bf16.mxu0 0
      %1008 = vmatpush1.bf16.msra.mxu0 0
      %1009 = vmatprep.subr.bf16.mxu0 0
      %1010 = vmatpush1.bf16.msra.mxu0 0
      %1011 = vmatprep.subr.bf16.mxu0 0
      %1012 = vmatpush1.bf16.msra.mxu0 0
      %1013 = vmatprep.subr.bf16.mxu0 0
      %1014 = vmatpush1.bf16.msra.mxu0 0
      %1015 = vmatprep.subr.bf16.mxu0 0
      %1016 = vmatpush1.bf16.msra.mxu0 0
      %1017 = vmatprep.subr.bf16.mxu0 0
      %1018 = vmatpush1.bf16.msra.mxu0 0
      %1019 = vmatprep.subr.bf16.mxu0 0
      %1020 = vmatpush1.bf16.msra.mxu0 0
      %1021 = vmatprep.subr.bf16.mxu0 0
      %1022 = vmatpush1.bf16.msra.mxu0 0
      %1023 = vmatprep.subr.bf16.mxu0 0
      %1024 = vmatpush1.bf16.msra.mxu0 0
      %1025 = vmatprep.subr.bf16.mxu0 0
      %1026 = vmatpush1.bf16.msra.mxu0 0
      %1027 = vmatprep.subr.bf16.mxu0 0
      %1028 = vmatpush1.bf16.msra.mxu0 0
      %1029 = vmatprep.subr.bf16.mxu0 0
      %1030 = vmatpush1.bf16.msra.mxu0 0
      %1031 = vmatprep.subr.bf16.mxu0 0
      %1032 = vmatpush1.bf16.msra.mxu0 0
      %1033 = vmatprep.subr.bf16.mxu0 0
      %1034 = vmatpush1.bf16.msra.mxu0 0
      %1035 = vmatprep.subr.bf16.mxu0 0
      %1036 = vmatpush1.bf16.msra.mxu0 0
      %1037 = vmatprep.mubr.bf16.mxu0 0
      %1038 = vmatmul.mubr.bf16.gmra.mrb[0].mxu0 %v953
      %v1039 = vpop.f32.mrb[0].mxu0
      %v1040 = vadd.f32 0.0, %v1039
      %v1041 = vpop.f32.mrb[0].mxu0
      %v1042 = vpop.f32.mrb[0].mxu0
      %v1043 = vpop.f32.mrb[0].mxu0
      %1044 = vdwg.mxu0
      %v1045 = vadd.f32 %v626, %v999
      %v1046 = vadd.f32 %v628, %v1001
      %v1047 = vadd.f32 %v667, %v1040
      %v1048 = vld [vmem:[%s189] sm:$0x7]
      %v1049 = vld [vmem:[%s189 + $0x3] sm:$0x7]
      %v1050 = vld [vmem:[%s189 + $0x6] sm:$0x7]
      %v1051 = vld [vmem:[%s189 + $0x9] sm:$0x7]
      %v1052 = vld [vmem:[%s189 + $0xc] sm:$0x7]
      %v1053 = vld [vmem:[%s189 + $0xf] sm:$0x7]
      %v1054 = vld [vmem:[%s189 + $0x12] sm:$0x7]
      %v1055 = vld [vmem:[%s189 + $0x15] sm:$0x7]
      %s1056 = scalar_lea.vmem %s1, 6
      %v1057 = vld [vmem:[%s1056] sm:$0x3]
      %v1067 = vunpack.c.l.s4 1966171168
      %v1068 = vunpack.c.0.s8 %v1067
      %v1069 = vlaneseq
      %v1070 = vshrl.u32 %v1069, 7
      %v1071 = vsub.s32 %v1068, %v1070
      %v1072 = vrot.slane %v1048, %v1071
      %v1073 = vcombine.high %v1072, %v1072
      %v1075 = vunpack.c.l.s4 1966171168
      %v1076 = vunpack.c.0.s8 %v1075
      %v1077 = vlaneseq
      %v1078 = vshrl.u32 %v1077, 7
      %v1079 = vsub.s32 %v1076, %v1078
      %v1080 = vrot.slane %v1072, %v1079
      %v1082 = vunpack.c.l.s4 1966171168
      %v1083 = vunpack.c.0.s8 %v1082
      %v1084 = vlaneseq
      %v1085 = vshrl.u32 %v1084, 7
      %v1086 = vsub.s32 %v1083, %v1085
      %v1087 = vrot.slane %v1073, %v1086
      %v1088 = vcombine.high %v1080, %v1080
      %v1090 = vunpack.c.l.s4 1966171168
      %v1091 = vunpack.c.0.s8 %v1090
      %v1092 = vlaneseq
      %v1093 = vshrl.u32 %v1092, 7
      %v1094 = vsub.s32 %v1091, %v1093
      %v1095 = vrot.slane %v1049, %v1094
      %v1096 = vcombine.high %v1095, %v1095
      %v1098 = vunpack.c.l.s4 1966171168
      %v1099 = vunpack.c.0.s8 %v1098
      %v1100 = vlaneseq
      %v1101 = vshrl.u32 %v1100, 7
      %v1102 = vsub.s32 %v1099, %v1101
      %v1103 = vrot.slane %v1095, %v1102
      %v1105 = vunpack.c.l.s4 1966171168
      %v1106 = vunpack.c.0.s8 %v1105
      %v1107 = vlaneseq
      %v1108 = vshrl.u32 %v1107, 7
      %v1109 = vsub.s32 %v1106, %v1108
      %v1110 = vrot.slane %v1096, %v1109
      %v1111 = vcombine.high %v1103, %v1103
      %v1113 = vunpack.c.l.s4 1966171168
      %v1114 = vunpack.c.0.s8 %v1113
      %v1115 = vlaneseq
      %v1116 = vshrl.u32 %v1115, 7
      %v1117 = vsub.s32 %v1114, %v1116
      %v1118 = vrot.slane %v1050, %v1117
      %v1119 = vcombine.high %v1118, %v1118
      %v1121 = vunpack.c.l.s4 1966171168
      %v1122 = vunpack.c.0.s8 %v1121
      %v1123 = vlaneseq
      %v1124 = vshrl.u32 %v1123, 7
      %v1125 = vsub.s32 %v1122, %v1124
      %v1126 = vrot.slane %v1118, %v1125
      %v1128 = vunpack.c.l.s4 1966171168
      %v1129 = vunpack.c.0.s8 %v1128
      %v1130 = vlaneseq
      %v1131 = vshrl.u32 %v1130, 7
      %v1132 = vsub.s32 %v1129, %v1131
      %v1133 = vrot.slane %v1119, %v1132
      %v1134 = vcombine.high %v1126, %v1126
      %v1136 = vunpack.c.l.s4 1966171168
      %v1137 = vunpack.c.0.s8 %v1136
      %v1138 = vlaneseq
      %v1139 = vshrl.u32 %v1138, 7
      %v1140 = vsub.s32 %v1137, %v1139
      %v1141 = vrot.slane %v1051, %v1140
      %v1142 = vcombine.high %v1141, %v1141
      %v1144 = vunpack.c.l.s4 1966171168
      %v1145 = vunpack.c.0.s8 %v1144
      %v1146 = vlaneseq
      %v1147 = vshrl.u32 %v1146, 7
      %v1148 = vsub.s32 %v1145, %v1147
      %v1149 = vrot.slane %v1141, %v1148
      %v1151 = vunpack.c.l.s4 1966171168
      %v1152 = vunpack.c.0.s8 %v1151
      %v1153 = vlaneseq
      %v1154 = vshrl.u32 %v1153, 7
      %v1155 = vsub.s32 %v1152, %v1154
      %v1156 = vrot.slane %v1142, %v1155
      %v1157 = vcombine.high %v1149, %v1149
      %v1159 = vunpack.c.l.s4 1966171168
      %v1160 = vunpack.c.0.s8 %v1159
      %v1161 = vlaneseq
      %v1162 = vshrl.u32 %v1161, 7
      %v1163 = vsub.s32 %v1160, %v1162
      %v1164 = vrot.slane %v1052, %v1163
      %v1165 = vcombine.high %v1164, %v1164
      %v1167 = vunpack.c.l.s4 1966171168
      %v1168 = vunpack.c.0.s8 %v1167
      %v1169 = vlaneseq
      %v1170 = vshrl.u32 %v1169, 7
      %v1171 = vsub.s32 %v1168, %v1170
      %v1172 = vrot.slane %v1164, %v1171
      %v1174 = vunpack.c.l.s4 1966171168
      %v1175 = vunpack.c.0.s8 %v1174
      %v1176 = vlaneseq
      %v1177 = vshrl.u32 %v1176, 7
      %v1178 = vsub.s32 %v1175, %v1177
      %v1179 = vrot.slane %v1165, %v1178
      %v1180 = vcombine.high %v1172, %v1172
      %v1182 = vunpack.c.l.s4 1966171168
      %v1183 = vunpack.c.0.s8 %v1182
      %v1184 = vlaneseq
      %v1185 = vshrl.u32 %v1184, 7
      %v1186 = vsub.s32 %v1183, %v1185
      %v1187 = vrot.slane %v1053, %v1186
      %v1188 = vcombine.high %v1187, %v1187
      %v1190 = vunpack.c.l.s4 1966171168
      %v1191 = vunpack.c.0.s8 %v1190
      %v1192 = vlaneseq
      %v1193 = vshrl.u32 %v1192, 7
      %v1194 = vsub.s32 %v1191, %v1193
      %v1195 = vrot.slane %v1187, %v1194
      %v1197 = vunpack.c.l.s4 1966171168
      %v1198 = vunpack.c.0.s8 %v1197
      %v1199 = vlaneseq
      %v1200 = vshrl.u32 %v1199, 7
      %v1201 = vsub.s32 %v1198, %v1200
      %v1202 = vrot.slane %v1188, %v1201
      %v1203 = vcombine.high %v1195, %v1195
      %v1205 = vunpack.c.l.s4 1966171168
      %v1206 = vunpack.c.0.s8 %v1205
      %v1207 = vlaneseq
      %v1208 = vshrl.u32 %v1207, 7
      %v1209 = vsub.s32 %v1206, %v1208
      %v1210 = vrot.slane %v1054, %v1209
      %v1211 = vcombine.high %v1210, %v1210
      %v1213 = vunpack.c.l.s4 1966171168
      %v1214 = vunpack.c.0.s8 %v1213
      %v1215 = vlaneseq
      %v1216 = vshrl.u32 %v1215, 7
      %v1217 = vsub.s32 %v1214, %v1216
      %v1218 = vrot.slane %v1210, %v1217
      %v1220 = vunpack.c.l.s4 1966171168
      %v1221 = vunpack.c.0.s8 %v1220
      %v1222 = vlaneseq
      %v1223 = vshrl.u32 %v1222, 7
      %v1224 = vsub.s32 %v1221, %v1223
      %v1225 = vrot.slane %v1211, %v1224
      %v1226 = vcombine.high %v1218, %v1218
      %v1228 = vunpack.c.l.s4 1966171168
      %v1229 = vunpack.c.0.s8 %v1228
      %v1230 = vlaneseq
      %v1231 = vshrl.u32 %v1230, 7
      %v1232 = vsub.s32 %v1229, %v1231
      %v1233 = vrot.slane %v1055, %v1232
      %v1234 = vcombine.high %v1233, %v1233
      %v1236 = vunpack.c.l.s4 1966171168
      %v1237 = vunpack.c.0.s8 %v1236
      %v1238 = vlaneseq
      %v1239 = vshrl.u32 %v1238, 7
      %v1240 = vsub.s32 %v1237, %v1239
      %v1241 = vrot.slane %v1233, %v1240
      %v1243 = vunpack.c.l.s4 1966171168
      %v1244 = vunpack.c.0.s8 %v1243
      %v1245 = vlaneseq
      %v1246 = vshrl.u32 %v1245, 7
      %v1247 = vsub.s32 %v1244, %v1246
      %v1248 = vrot.slane %v1234, %v1247
      %v1249 = vcombine.high %v1241, %v1241
      %v1250 = vunpack.c.l.b16 %v1080
      %v1251 = vunpack.c.l.b16 %v1087
      %v1252 = vunpack.c.l.b16 %v1088
      %v1253 = vunpack.c.l.b16 %v1103
      %v1254 = vunpack.c.l.b16 %v1110
      %v1255 = vunpack.c.l.b16 %v1111
      %v1256 = vunpack.c.l.b16 %v1126
      %v1257 = vunpack.c.l.b16 %v1133
      %v1258 = vunpack.c.l.b16 %v1134
      %v1259 = vunpack.c.l.b16 %v1149
      %v1260 = vunpack.c.l.b16 %v1156
      %v1261 = vunpack.c.l.b16 %v1157
      %v1262 = vunpack.c.l.b16 %v1172
      %v1263 = vunpack.c.l.b16 %v1179
      %v1264 = vunpack.c.l.b16 %v1180
      %v1265 = vunpack.c.l.b16 %v1195
      %v1266 = vunpack.c.l.b16 %v1202
      %v1267 = vunpack.c.l.b16 %v1203
      %v1268 = vunpack.c.l.b16 %v1218
      %v1269 = vunpack.c.l.b16 %v1225
      %v1270 = vunpack.c.l.b16 %v1226
      %v1271 = vunpack.c.l.b16 %v1241
      %v1272 = vunpack.c.l.b16 %v1248
      %v1273 = vunpack.c.l.b16 %v1249
      %v1274 = vrot.slane %v1253, 7
      %v1275 = vsel %vm424, %v1274, %v1250
      %v1276 = vrot.slane %v1256, 6
      %v1277 = vsel %vm427, %v1276, %v1275
      %v1278 = vrot.slane %v1259, 5
      %v1279 = vsel %vm430, %v1278, %v1277
      %v1280 = vrot.slane %v1262, 4
      %v1281 = vsel %vm433, %v1280, %v1279
      %v1282 = vrot.slane %v1265, 3
      %v1283 = vsel %vm436, %v1282, %v1281
      %v1284 = vrot.slane %v1268, 2
      %v1285 = vsel %vm439, %v1284, %v1283
      %v1286 = vrot.slane %v1271, 1
      %v1287 = vsel %vm442, %v1286, %v1285
      %v1288 = vrot.slane %v1254, 7
      %v1289 = vsel %vm424, %v1288, %v1251
      %v1290 = vrot.slane %v1257, 6
      %v1291 = vsel %vm427, %v1290, %v1289
      %v1292 = vrot.slane %v1260, 5
      %v1293 = vsel %vm430, %v1292, %v1291
      %v1294 = vrot.slane %v1263, 4
      %v1295 = vsel %vm433, %v1294, %v1293
      %v1296 = vrot.slane %v1266, 3
      %v1297 = vsel %vm436, %v1296, %v1295
      %v1298 = vrot.slane %v1269, 2
      %v1299 = vsel %vm439, %v1298, %v1297
      %v1300 = vrot.slane %v1272, 1
      %v1301 = vsel %vm442, %v1300, %v1299
      %v1302 = vrot.slane %v1255, 7
      %v1303 = vsel %vm424, %v1302, %v1252
      %v1304 = vrot.slane %v1258, 6
      %v1305 = vsel %vm427, %v1304, %v1303
      %v1306 = vrot.slane %v1261, 5
      %v1307 = vsel %vm430, %v1306, %v1305
      %v1308 = vrot.slane %v1264, 4
      %v1309 = vsel %vm433, %v1308, %v1307
      %v1310 = vrot.slane %v1267, 3
      %v1311 = vsel %vm436, %v1310, %v1309
      %v1312 = vrot.slane %v1270, 2
      %v1313 = vsel %vm439, %v1312, %v1311
      %v1314 = vrot.slane %v1273, 1
      %v1315 = vsel %vm442, %v1314, %v1313
      %v1316 = vpack.c.b16 %v1287, %v1287
      %v1317 = vpack.c.b16 %v1301, %v1301
      %v1318 = vpack.c.b16 %v1315, %v1315
      %1319 = vrot.lane.b32.xlu0 %v1316, 110
      %v1320 = vpop.permute.xlu0 %1319
      %1321 = vrot.lane.b32.xlu0 %v1317, 110
      %v1322 = vpop.permute.xlu0 %1321
      %1323 = vrot.lane.b32.xlu0 %v1318, 110
      %v1324 = vpop.permute.xlu0 %1323
      %vm1325 = vcmask 900096
      %v1326 = vsel %vm1325, %v1320, %v1322
      %v1327 = vsel %vm1325, %v1322, %v1324
      %v1329 = vsel %vm484, %v1057, 0
      %v1332 = vsel %vm488, %v1326, 0
      %v1335 = vsel %vm488, %v1327, 0
      %v1338 = vsel %vm488, %v1324, 0
      %1340 = vmatprep.subr.bf16.mxu0 %v1335
      %1341 = vmatpush1.bf16.msra.mxu0 %v1332
      %1342 = vmatprep.subr.bf16.mxu0 0
      %1343 = vmatpush1.bf16.msra.mxu0 0
      %1344 = vmatprep.subr.bf16.mxu0 0
      %1345 = vmatpush1.bf16.msra.mxu0 0
      %1346 = vmatprep.subr.bf16.mxu0 0
      %1347 = vmatpush1.bf16.msra.mxu0 0
      %1348 = vmatprep.subr.bf16.mxu0 0
      %1349 = vmatpush1.bf16.msra.mxu0 0
      %1350 = vmatprep.subr.bf16.mxu0 0
      %1351 = vmatpush1.bf16.msra.mxu0 0
      %1352 = vmatprep.subr.bf16.mxu0 0
      %1353 = vmatpush1.bf16.msra.mxu0 0
      %1354 = vmatprep.subr.bf16.mxu0 0
      %1355 = vmatpush1.bf16.msra.mxu0 0
      %1356 = vmatprep.subr.bf16.mxu0 0
      %1357 = vmatpush1.bf16.msra.mxu0 0
      %1358 = vmatprep.subr.bf16.mxu0 0
      %1359 = vmatpush1.bf16.msra.mxu0 0
      %1360 = vmatprep.subr.bf16.mxu0 0
      %1361 = vmatpush1.bf16.msra.mxu0 0
      %1362 = vmatprep.subr.bf16.mxu0 0
      %1363 = vmatpush1.bf16.msra.mxu0 0
      %1364 = vmatprep.subr.bf16.mxu0 0
      %1365 = vmatpush1.bf16.msra.mxu0 0
      %1366 = vmatprep.subr.bf16.mxu0 0
      %1367 = vmatpush1.bf16.msra.mxu0 0
      %1368 = vmatprep.subr.bf16.mxu0 0
      %1369 = vmatpush1.bf16.msra.mxu0 0
      %1370 = vmatprep.subr.bf16.mxu0 0
      %1371 = vmatpush1.bf16.msra.mxu0 0
      %1372 = vmatprep.mubr.bf16.mxu0 0
      %1373 = vmatmul.mubr.bf16.gmra.mrb[0].mxu0 %v1329
      %v1374 = vpop.f32.mrb[0].mxu0
      %v1375 = vadd.f32 0.0, %v1374
      %v1376 = vpop.f32.mrb[0].mxu0
      %v1377 = vadd.f32 0.0, %v1376
      %v1378 = vpop.f32.mrb[0].mxu0
      %v1379 = vpop.f32.mrb[0].mxu0
      %1380 = vdwg.mxu0
      %1381 = vmatprep.subr.bf16.mxu0 0
      %1382 = vmatpush1.bf16.msra.mxu0 %v1338
      %1383 = vmatprep.subr.bf16.mxu0 0
      %1384 = vmatpush1.bf16.msra.mxu0 0
      %1385 = vmatprep.subr.bf16.mxu0 0
      %1386 = vmatpush1.bf16.msra.mxu0 0
      %1387 = vmatprep.subr.bf16.mxu0 0
      %1388 = vmatpush1.bf16.msra.mxu0 0
      %1389 = vmatprep.subr.bf16.mxu0 0
      %1390 = vmatpush1.bf16.msra.mxu0 0
      %1391 = vmatprep.subr.bf16.mxu0 0
      %1392 = vmatpush1.bf16.msra.mxu0 0
      %1393 = vmatprep.subr.bf16.mxu0 0
      %1394 = vmatpush1.bf16.msra.mxu0 0
      %1395 = vmatprep.subr.bf16.mxu0 0
      %1396 = vmatpush1.bf16.msra.mxu0 0
      %1397 = vmatprep.subr.bf16.mxu0 0
      %1398 = vmatpush1.bf16.msra.mxu0 0
      %1399 = vmatprep.subr.bf16.mxu0 0
      %1400 = vmatpush1.bf16.msra.mxu0 0
      %1401 = vmatprep.subr.bf16.mxu0 0
      %1402 = vmatpush1.bf16.msra.mxu0 0
      %1403 = vmatprep.subr.bf16.mxu0 0
      %1404 = vmatpush1.bf16.msra.mxu0 0
      %1405 = vmatprep.subr.bf16.mxu0 0
      %1406 = vmatpush1.bf16.msra.mxu0 0
      %1407 = vmatprep.subr.bf16.mxu0 0
      %1408 = vmatpush1.bf16.msra.mxu0 0
      %1409 = vmatprep.subr.bf16.mxu0 0
      %1410 = vmatpush1.bf16.msra.mxu0 0
      %1411 = vmatprep.subr.bf16.mxu0 0
      %1412 = vmatpush1.bf16.msra.mxu0 0
      %1413 = vmatprep.mubr.bf16.mxu0 0
      %1414 = vmatmul.mubr.bf16.gmra.mrb[0].mxu0 %v1329
      %v1415 = vpop.f32.mrb[0].mxu0
      %v1416 = vadd.f32 0.0, %v1415
      %v1417 = vpop.f32.mrb[0].mxu0
      %v1418 = vpop.f32.mrb[0].mxu0
      %v1419 = vpop.f32.mrb[0].mxu0
      %1420 = vdwg.mxu0
      %v1421 = vadd.f32 %v1045, %v1375
      %v1422 = vadd.f32 %v1046, %v1377
      %v1423 = vadd.f32 %v1047, %v1416
      %v1424 = vld [vmem:[%s189] sm:$0x7]
      %v1425 = vld [vmem:[%s189 + $0x3] sm:$0x7]
      %v1426 = vld [vmem:[%s189 + $0x6] sm:$0x7]
      %v1427 = vld [vmem:[%s189 + $0x9] sm:$0x7]
      %v1428 = vld [vmem:[%s189 + $0xc] sm:$0x7]
      %v1429 = vld [vmem:[%s189 + $0xf] sm:$0x7]
      %v1430 = vld [vmem:[%s189 + $0x12] sm:$0x7]
      %v1431 = vld [vmem:[%s189 + $0x15] sm:$0x7]
      %s1432 = scalar_lea.vmem %s1, 8
      %v1433 = vld [vmem:[%s1432] sm:$0x3]
      %v1443 = vunpack.c.l.s4 1966171168
      %v1444 = vunpack.c.0.s8 %v1443
      %v1445 = vlaneseq
      %v1446 = vshrl.u32 %v1445, 7
      %v1447 = vsub.s32 %v1444, %v1446
      %v1448 = vrot.slane %v1424, %v1447
      %v1449 = vcombine.high %v1448, %v1448
      %v1451 = vunpack.c.l.s4 1966171168
      %v1452 = vunpack.c.0.s8 %v1451
      %v1453 = vlaneseq
      %v1454 = vshrl.u32 %v1453, 7
      %v1455 = vsub.s32 %v1452, %v1454
      %v1456 = vrot.slane %v1448, %v1455
      %v1458 = vunpack.c.l.s4 1966171168
      %v1459 = vunpack.c.0.s8 %v1458
      %v1460 = vlaneseq
      %v1461 = vshrl.u32 %v1460, 7
      %v1462 = vsub.s32 %v1459, %v1461
      %v1463 = vrot.slane %v1449, %v1462
      %v1464 = vcombine.high %v1456, %v1456
      %v1466 = vunpack.c.l.s4 1966171168
      %v1467 = vunpack.c.0.s8 %v1466
      %v1468 = vlaneseq
      %v1469 = vshrl.u32 %v1468, 7
      %v1470 = vsub.s32 %v1467, %v1469
      %v1471 = vrot.slane %v1425, %v1470
      %v1472 = vcombine.high %v1471, %v1471
      %v1474 = vunpack.c.l.s4 1966171168
      %v1475 = vunpack.c.0.s8 %v1474
      %v1476 = vlaneseq
      %v1477 = vshrl.u32 %v1476, 7
      %v1478 = vsub.s32 %v1475, %v1477
      %v1479 = vrot.slane %v1471, %v1478
      %v1481 = vunpack.c.l.s4 1966171168
      %v1482 = vunpack.c.0.s8 %v1481
      %v1483 = vlaneseq
      %v1484 = vshrl.u32 %v1483, 7
      %v1485 = vsub.s32 %v1482, %v1484
      %v1486 = vrot.slane %v1472, %v1485
      %v1487 = vcombine.high %v1479, %v1479
      %v1489 = vunpack.c.l.s4 1966171168
      %v1490 = vunpack.c.0.s8 %v1489
      %v1491 = vlaneseq
      %v1492 = vshrl.u32 %v1491, 7
      %v1493 = vsub.s32 %v1490, %v1492
      %v1494 = vrot.slane %v1426, %v1493
      %v1495 = vcombine.high %v1494, %v1494
      %v1497 = vunpack.c.l.s4 1966171168
      %v1498 = vunpack.c.0.s8 %v1497
      %v1499 = vlaneseq
      %v1500 = vshrl.u32 %v1499, 7
      %v1501 = vsub.s32 %v1498, %v1500
      %v1502 = vrot.slane %v1494, %v1501
      %v1504 = vunpack.c.l.s4 1966171168
      %v1505 = vunpack.c.0.s8 %v1504
      %v1506 = vlaneseq
      %v1507 = vshrl.u32 %v1506, 7
      %v1508 = vsub.s32 %v1505, %v1507
      %v1509 = vrot.slane %v1495, %v1508
      %v1510 = vcombine.high %v1502, %v1502
      %v1512 = vunpack.c.l.s4 1966171168
      %v1513 = vunpack.c.0.s8 %v1512
      %v1514 = vlaneseq
      %v1515 = vshrl.u32 %v1514, 7
      %v1516 = vsub.s32 %v1513, %v1515
      %v1517 = vrot.slane %v1427, %v1516
      %v1518 = vcombine.high %v1517, %v1517
      %v1520 = vunpack.c.l.s4 1966171168
      %v1521 = vunpack.c.0.s8 %v1520
      %v1522 = vlaneseq
      %v1523 = vshrl.u32 %v1522, 7
      %v1524 = vsub.s32 %v1521, %v1523
      %v1525 = vrot.slane %v1517, %v1524
      %v1527 = vunpack.c.l.s4 1966171168
      %v1528 = vunpack.c.0.s8 %v1527
      %v1529 = vlaneseq
      %v1530 = vshrl.u32 %v1529, 7
      %v1531 = vsub.s32 %v1528, %v1530
      %v1532 = vrot.slane %v1518, %v1531
      %v1533 = vcombine.high %v1525, %v1525
      %v1535 = vunpack.c.l.s4 1966171168
      %v1536 = vunpack.c.0.s8 %v1535
      %v1537 = vlaneseq
      %v1538 = vshrl.u32 %v1537, 7
      %v1539 = vsub.s32 %v1536, %v1538
      %v1540 = vrot.slane %v1428, %v1539
      %v1541 = vcombine.high %v1540, %v1540
      %v1543 = vunpack.c.l.s4 1966171168
      %v1544 = vunpack.c.0.s8 %v1543
      %v1545 = vlaneseq
      %v1546 = vshrl.u32 %v1545, 7
      %v1547 = vsub.s32 %v1544, %v1546
      %v1548 = vrot.slane %v1540, %v1547
      %v1550 = vunpack.c.l.s4 1966171168
      %v1551 = vunpack.c.0.s8 %v1550
      %v1552 = vlaneseq
      %v1553 = vshrl.u32 %v1552, 7
      %v1554 = vsub.s32 %v1551, %v1553
      %v1555 = vrot.slane %v1541, %v1554
      %v1556 = vcombine.high %v1548, %v1548
      %v1558 = vunpack.c.l.s4 1966171168
      %v1559 = vunpack.c.0.s8 %v1558
      %v1560 = vlaneseq
      %v1561 = vshrl.u32 %v1560, 7
      %v1562 = vsub.s32 %v1559, %v1561
      %v1563 = vrot.slane %v1429, %v1562
      %v1564 = vcombine.high %v1563, %v1563
      %v1566 = vunpack.c.l.s4 1966171168
      %v1567 = vunpack.c.0.s8 %v1566
      %v1568 = vlaneseq
      %v1569 = vshrl.u32 %v1568, 7
      %v1570 = vsub.s32 %v1567, %v1569
      %v1571 = vrot.slane %v1563, %v1570
      %v1573 = vunpack.c.l.s4 1966171168
      %v1574 = vunpack.c.0.s8 %v1573
      %v1575 = vlaneseq
      %v1576 = vshrl.u32 %v1575, 7
      %v1577 = vsub.s32 %v1574, %v1576
      %v1578 = vrot.slane %v1564, %v1577
      %v1579 = vcombine.high %v1571, %v1571
      %v1581 = vunpack.c.l.s4 1966171168
      %v1582 = vunpack.c.0.s8 %v1581
      %v1583 = vlaneseq
      %v1584 = vshrl.u32 %v1583, 7
      %v1585 = vsub.s32 %v1582, %v1584
      %v1586 = vrot.slane %v1430, %v1585
      %v1587 = vcombine.high %v1586, %v1586
      %v1589 = vunpack.c.l.s4 1966171168
      %v1590 = vunpack.c.0.s8 %v1589
      %v1591 = vlaneseq
      %v1592 = vshrl.u32 %v1591, 7
      %v1593 = vsub.s32 %v1590, %v1592
      %v1594 = vrot.slane %v1586, %v1593
      %v1596 = vunpack.c.l.s4 1966171168
      %v1597 = vunpack.c.0.s8 %v1596
      %v1598 = vlaneseq
      %v1599 = vshrl.u32 %v1598, 7
      %v1600 = vsub.s32 %v1597, %v1599
      %v1601 = vrot.slane %v1587, %v1600
      %v1602 = vcombine.high %v1594, %v1594
      %v1604 = vunpack.c.l.s4 1966171168
      %v1605 = vunpack.c.0.s8 %v1604
      %v1606 = vlaneseq
      %v1607 = vshrl.u32 %v1606, 7
      %v1608 = vsub.s32 %v1605, %v1607
      %v1609 = vrot.slane %v1431, %v1608
      %v1610 = vcombine.high %v1609, %v1609
      %v1612 = vunpack.c.l.s4 1966171168
      %v1613 = vunpack.c.0.s8 %v1612
      %v1614 = vlaneseq
      %v1615 = vshrl.u32 %v1614, 7
      %v1616 = vsub.s32 %v1613, %v1615
      %v1617 = vrot.slane %v1609, %v1616
      %v1619 = vunpack.c.l.s4 1966171168
      %v1620 = vunpack.c.0.s8 %v1619
      %v1621 = vlaneseq
      %v1622 = vshrl.u32 %v1621, 7
      %v1623 = vsub.s32 %v1620, %v1622
      %v1624 = vrot.slane %v1610, %v1623
      %v1625 = vcombine.high %v1617, %v1617
      %v1626 = vunpack.c.l.b16 %v1456
      %v1627 = vunpack.c.l.b16 %v1463
      %v1628 = vunpack.c.l.b16 %v1464
      %v1629 = vunpack.c.l.b16 %v1479
      %v1630 = vunpack.c.l.b16 %v1486
      %v1631 = vunpack.c.l.b16 %v1487
      %v1632 = vunpack.c.l.b16 %v1502
      %v1633 = vunpack.c.l.b16 %v1509
      %v1634 = vunpack.c.l.b16 %v1510
      %v1635 = vunpack.c.l.b16 %v1525
      %v1636 = vunpack.c.l.b16 %v1532
      %v1637 = vunpack.c.l.b16 %v1533
      %v1638 = vunpack.c.l.b16 %v1548
      %v1639 = vunpack.c.l.b16 %v1555
      %v1640 = vunpack.c.l.b16 %v1556
      %v1641 = vunpack.c.l.b16 %v1571
      %v1642 = vunpack.c.l.b16 %v1578
      %v1643 = vunpack.c.l.b16 %v1579
      %v1644 = vunpack.c.l.b16 %v1594
      %v1645 = vunpack.c.l.b16 %v1601
      %v1646 = vunpack.c.l.b16 %v1602
      %v1647 = vunpack.c.l.b16 %v1617
      %v1648 = vunpack.c.l.b16 %v1624
      %v1649 = vunpack.c.l.b16 %v1625
      %v1650 = vrot.slane %v1629, 7
      %v1651 = vsel %vm424, %v1650, %v1626
      %v1652 = vrot.slane %v1632, 6
      %v1653 = vsel %vm427, %v1652, %v1651
      %v1654 = vrot.slane %v1635, 5
      %v1655 = vsel %vm430, %v1654, %v1653
      %v1656 = vrot.slane %v1638, 4
      %v1657 = vsel %vm433, %v1656, %v1655
      %v1658 = vrot.slane %v1641, 3
      %v1659 = vsel %vm436, %v1658, %v1657
      %v1660 = vrot.slane %v1644, 2
      %v1661 = vsel %vm439, %v1660, %v1659
      %v1662 = vrot.slane %v1647, 1
      %v1663 = vsel %vm442, %v1662, %v1661
      %v1664 = vrot.slane %v1630, 7
      %v1665 = vsel %vm424, %v1664, %v1627
      %v1666 = vrot.slane %v1633, 6
      %v1667 = vsel %vm427, %v1666, %v1665
      %v1668 = vrot.slane %v1636, 5
      %v1669 = vsel %vm430, %v1668, %v1667
      %v1670 = vrot.slane %v1639, 4
      %v1671 = vsel %vm433, %v1670, %v1669
      %v1672 = vrot.slane %v1642, 3
      %v1673 = vsel %vm436, %v1672, %v1671
      %v1674 = vrot.slane %v1645, 2
      %v1675 = vsel %vm439, %v1674, %v1673
      %v1676 = vrot.slane %v1648, 1
      %v1677 = vsel %vm442, %v1676, %v1675
      %v1678 = vrot.slane %v1631, 7
      %v1679 = vsel %vm424, %v1678, %v1628
      %v1680 = vrot.slane %v1634, 6
      %v1681 = vsel %vm427, %v1680, %v1679
      %v1682 = vrot.slane %v1637, 5
      %v1683 = vsel %vm430, %v1682, %v1681
      %v1684 = vrot.slane %v1640, 4
      %v1685 = vsel %vm433, %v1684, %v1683
      %v1686 = vrot.slane %v1643, 3
      %v1687 = vsel %vm436, %v1686, %v1685
      %v1688 = vrot.slane %v1646, 2
      %v1689 = vsel %vm439, %v1688, %v1687
      %v1690 = vrot.slane %v1649, 1
      %v1691 = vsel %vm442, %v1690, %v1689
      %v1692 = vpack.c.b16 %v1663, %v1663
      %v1693 = vpack.c.b16 %v1677, %v1677
      %v1694 = vpack.c.b16 %v1691, %v1691
      %1695 = vrot.lane.b32.xlu0 %v1692, 109
      %v1696 = vpop.permute.xlu0 %1695
      %1697 = vrot.lane.b32.xlu0 %v1693, 109
      %v1698 = vpop.permute.xlu0 %1697
      %1699 = vrot.lane.b32.xlu0 %v1694, 109
      %v1700 = vpop.permute.xlu0 %1699
      %vm1701 = vcmask 891904
      %v1702 = vsel %vm1701, %v1696, %v1698
      %v1703 = vsel %vm1701, %v1698, %v1700
      %v1705 = vsel %vm484, %v1433, 0
      %v1708 = vsel %vm488, %v1702, 0
      %v1711 = vsel %vm488, %v1703, 0
      %v1714 = vsel %vm488, %v1700, 0
      %1716 = vmatprep.subr.bf16.mxu0 %v1711
      %1717 = vmatpush1.bf16.msra.mxu0 %v1708
      %1718 = vmatprep.subr.bf16.mxu0 0
      %1719 = vmatpush1.bf16.msra.mxu0 0
      %1720 = vmatprep.subr.bf16.mxu0 0
      %1721 = vmatpush1.bf16.msra.mxu0 0
      %1722 = vmatprep.subr.bf16.mxu0 0
      %1723 = vmatpush1.bf16.msra.mxu0 0
      %1724 = vmatprep.subr.bf16.mxu0 0
      %1725 = vmatpush1.bf16.msra.mxu0 0
      %1726 = vmatprep.subr.bf16.mxu0 0
      %1727 = vmatpush1.bf16.msra.mxu0 0
      %1728 = vmatprep.subr.bf16.mxu0 0
      %1729 = vmatpush1.bf16.msra.mxu0 0
      %1730 = vmatprep.subr.bf16.mxu0 0
      %1731 = vmatpush1.bf16.msra.mxu0 0
      %1732 = vmatprep.subr.bf16.mxu0 0
      %1733 = vmatpush1.bf16.msra.mxu0 0
      %1734 = vmatprep.subr.bf16.mxu0 0
      %1735 = vmatpush1.bf16.msra.mxu0 0
      %1736 = vmatprep.subr.bf16.mxu0 0
      %1737 = vmatpush1.bf16.msra.mxu0 0
      %1738 = vmatprep.subr.bf16.mxu0 0
      %1739 = vmatpush1.bf16.msra.mxu0 0
      %1740 = vmatprep.subr.bf16.mxu0 0
      %1741 = vmatpush1.bf16.msra.mxu0 0
      %1742 = vmatprep.subr.bf16.mxu0 0
      %1743 = vmatpush1.bf16.msra.mxu0 0
      %1744 = vmatprep.subr.bf16.mxu0 0
      %1745 = vmatpush1.bf16.msra.mxu0 0
      %1746 = vmatprep.subr.bf16.mxu0 0
      %1747 = vmatpush1.bf16.msra.mxu0 0
      %1748 = vmatprep.mubr.bf16.mxu0 0
      %1749 = vmatmul.mubr.bf16.gmra.mrb[0].mxu0 %v1705
      %v1750 = vpop.f32.mrb[0].mxu0
      %v1751 = vadd.f32 0.0, %v1750
      %v1752 = vpop.f32.mrb[0].mxu0
      %v1753 = vadd.f32 0.0, %v1752
      %v1754 = vpop.f32.mrb[0].mxu0
      %v1755 = vpop.f32.mrb[0].mxu0
      %1756 = vdwg.mxu0
      %1757 = vmatprep.subr.bf16.mxu0 0
      %1758 = vmatpush1.bf16.msra.mxu0 %v1714
      %1759 = vmatprep.subr.bf16.mxu0 0
      %1760 = vmatpush1.bf16.msra.mxu0 0
      %1761 = vmatprep.subr.bf16.mxu0 0
      %1762 = vmatpush1.bf16.msra.mxu0 0
      %1763 = vmatprep.subr.bf16.mxu0 0
      %1764 = vmatpush1.bf16.msra.mxu0 0
      %1765 = vmatprep.subr.bf16.mxu0 0
      %1766 = vmatpush1.bf16.msra.mxu0 0
      %1767 = vmatprep.subr.bf16.mxu0 0
      %1768 = vmatpush1.bf16.msra.mxu0 0
      %1769 = vmatprep.subr.bf16.mxu0 0
      %1770 = vmatpush1.bf16.msra.mxu0 0
      %1771 = vmatprep.subr.bf16.mxu0 0
      %1772 = vmatpush1.bf16.msra.mxu0 0
      %1773 = vmatprep.subr.bf16.mxu0 0
      %1774 = vmatpush1.bf16.msra.mxu0 0
      %1775 = vmatprep.subr.bf16.mxu0 0
      %1776 = vmatpush1.bf16.msra.mxu0 0
      %1777 = vmatprep.subr.bf16.mxu0 0
      %1778 = vmatpush1.bf16.msra.mxu0 0
      %1779 = vmatprep.subr.bf16.mxu0 0
      %1780 = vmatpush1.bf16.msra.mxu0 0
      %1781 = vmatprep.subr.bf16.mxu0 0
      %1782 = vmatpush1.bf16.msra.mxu0 0
      %1783 = vmatprep.subr.bf16.mxu0 0
      %1784 = vmatpush1.bf16.msra.mxu0 0
      %1785 = vmatprep.subr.bf16.mxu0 0
      %1786 = vmatpush1.bf16.msra.mxu0 0
      %1787 = vmatprep.subr.bf16.mxu0 0
      %1788 = vmatpush1.bf16.msra.mxu0 0
      %1789 = vmatprep.mubr.bf16.mxu0 0
      %1790 = vmatmul.mubr.bf16.gmra.mrb[0].mxu0 %v1705
      %v1791 = vpop.f32.mrb[0].mxu0
      %v1792 = vadd.f32 0.0, %v1791
      %v1793 = vpop.f32.mrb[0].mxu0
      %v1794 = vpop.f32.mrb[0].mxu0
      %v1795 = vpop.f32.mrb[0].mxu0
      %1796 = vdwg.mxu0
      %v1797 = vadd.f32 %v1421, %v1751
      %v1798 = vadd.f32 %v1422, %v1753
      %v1799 = vadd.f32 %v1423, %v1792
      %v1800 = vld [vmem:[%s189] sm:$0x7]
      %v1801 = vld [vmem:[%s189 + $0x3] sm:$0x7]
      %v1802 = vld [vmem:[%s189 + $0x6] sm:$0x7]
      %v1803 = vld [vmem:[%s189 + $0x9] sm:$0x7]
      %v1804 = vld [vmem:[%s189 + $0xc] sm:$0x7]
      %v1805 = vld [vmem:[%s189 + $0xf] sm:$0x7]
      %v1806 = vld [vmem:[%s189 + $0x12] sm:$0x7]
      %v1807 = vld [vmem:[%s189 + $0x15] sm:$0x7]
      %s1808 = scalar_lea.vmem %s1, 10
      %v1809 = vld [vmem:[%s1808] sm:$0x3]
      %v1819 = vunpack.c.l.s4 1966171168
      %v1820 = vunpack.c.0.s8 %v1819
      %v1821 = vlaneseq
      %v1822 = vshrl.u32 %v1821, 7
      %v1823 = vsub.s32 %v1820, %v1822
      %v1824 = vrot.slane %v1800, %v1823
      %v1825 = vcombine.high %v1824, %v1824
      %v1827 = vunpack.c.l.s4 1966171168
      %v1828 = vunpack.c.0.s8 %v1827
      %v1829 = vlaneseq
      %v1830 = vshrl.u32 %v1829, 7
      %v1831 = vsub.s32 %v1828, %v1830
      %v1832 = vrot.slane %v1824, %v1831
      %v1834 = vunpack.c.l.s4 1966171168
      %v1835 = vunpack.c.0.s8 %v1834
      %v1836 = vlaneseq
      %v1837 = vshrl.u32 %v1836, 7
      %v1838 = vsub.s32 %v1835, %v1837
      %v1839 = vrot.slane %v1825, %v1838
      %v1840 = vcombine.high %v1832, %v1832
      %v1842 = vunpack.c.l.s4 1966171168
      %v1843 = vunpack.c.0.s8 %v1842
      %v1844 = vlaneseq
      %v1845 = vshrl.u32 %v1844, 7
      %v1846 = vsub.s32 %v1843, %v1845
      %v1847 = vrot.slane %v1801, %v1846
      %v1848 = vcombine.high %v1847, %v1847
      %v1850 = vunpack.c.l.s4 1966171168
      %v1851 = vunpack.c.0.s8 %v1850
      %v1852 = vlaneseq
      %v1853 = vshrl.u32 %v1852, 7
      %v1854 = vsub.s32 %v1851, %v1853
      %v1855 = vrot.slane %v1847, %v1854
      %v1857 = vunpack.c.l.s4 1966171168
      %v1858 = vunpack.c.0.s8 %v1857
      %v1859 = vlaneseq
      %v1860 = vshrl.u32 %v1859, 7
      %v1861 = vsub.s32 %v1858, %v1860
      %v1862 = vrot.slane %v1848, %v1861
      %v1863 = vcombine.high %v1855, %v1855
      %v1865 = vunpack.c.l.s4 1966171168
      %v1866 = vunpack.c.0.s8 %v1865
      %v1867 = vlaneseq
      %v1868 = vshrl.u32 %v1867, 7
      %v1869 = vsub.s32 %v1866, %v1868
      %v1870 = vrot.slane %v1802, %v1869
      %v1871 = vcombine.high %v1870, %v1870
      %v1873 = vunpack.c.l.s4 1966171168
      %v1874 = vunpack.c.0.s8 %v1873
      %v1875 = vlaneseq
      %v1876 = vshrl.u32 %v1875, 7
      %v1877 = vsub.s32 %v1874, %v1876
      %v1878 = vrot.slane %v1870, %v1877
      %v1880 = vunpack.c.l.s4 1966171168
      %v1881 = vunpack.c.0.s8 %v1880
      %v1882 = vlaneseq
      %v1883 = vshrl.u32 %v1882, 7
      %v1884 = vsub.s32 %v1881, %v1883
      %v1885 = vrot.slane %v1871, %v1884
      %v1886 = vcombine.high %v1878, %v1878
      %v1888 = vunpack.c.l.s4 1966171168
      %v1889 = vunpack.c.0.s8 %v1888
      %v1890 = vlaneseq
      %v1891 = vshrl.u32 %v1890, 7
      %v1892 = vsub.s32 %v1889, %v1891
      %v1893 = vrot.slane %v1803, %v1892
      %v1894 = vcombine.high %v1893, %v1893
      %v1896 = vunpack.c.l.s4 1966171168
      %v1897 = vunpack.c.0.s8 %v1896
      %v1898 = vlaneseq
      %v1899 = vshrl.u32 %v1898, 7
      %v1900 = vsub.s32 %v1897, %v1899
      %v1901 = vrot.slane %v1893, %v1900
      %v1903 = vunpack.c.l.s4 1966171168
      %v1904 = vunpack.c.0.s8 %v1903
      %v1905 = vlaneseq
      %v1906 = vshrl.u32 %v1905, 7
      %v1907 = vsub.s32 %v1904, %v1906
      %v1908 = vrot.slane %v1894, %v1907
      %v1909 = vcombine.high %v1901, %v1901
      %v1911 = vunpack.c.l.s4 1966171168
      %v1912 = vunpack.c.0.s8 %v1911
      %v1913 = vlaneseq
      %v1914 = vshrl.u32 %v1913, 7
      %v1915 = vsub.s32 %v1912, %v1914
      %v1916 = vrot.slane %v1804, %v1915
      %v1917 = vcombine.high %v1916, %v1916
      %v1919 = vunpack.c.l.s4 1966171168
      %v1920 = vunpack.c.0.s8 %v1919
      %v1921 = vlaneseq
      %v1922 = vshrl.u32 %v1921, 7
      %v1923 = vsub.s32 %v1920, %v1922
      %v1924 = vrot.slane %v1916, %v1923
      %v1926 = vunpack.c.l.s4 1966171168
      %v1927 = vunpack.c.0.s8 %v1926
      %v1928 = vlaneseq
      %v1929 = vshrl.u32 %v1928, 7
      %v1930 = vsub.s32 %v1927, %v1929
      %v1931 = vrot.slane %v1917, %v1930
      %v1932 = vcombine.high %v1924, %v1924
      %v1934 = vunpack.c.l.s4 1966171168
      %v1935 = vunpack.c.0.s8 %v1934
      %v1936 = vlaneseq
      %v1937 = vshrl.u32 %v1936, 7
      %v1938 = vsub.s32 %v1935, %v1937
      %v1939 = vrot.slane %v1805, %v1938
      %v1940 = vcombine.high %v1939, %v1939
      %v1942 = vunpack.c.l.s4 1966171168
      %v1943 = vunpack.c.0.s8 %v1942
      %v1944 = vlaneseq
      %v1945 = vshrl.u32 %v1944, 7
      %v1946 = vsub.s32 %v1943, %v1945
      %v1947 = vrot.slane %v1939, %v1946
      %v1949 = vunpack.c.l.s4 1966171168
      %v1950 = vunpack.c.0.s8 %v1949
      %v1951 = vlaneseq
      %v1952 = vshrl.u32 %v1951, 7
      %v1953 = vsub.s32 %v1950, %v1952
      %v1954 = vrot.slane %v1940, %v1953
      %v1955 = vcombine.high %v1947, %v1947
      %v1957 = vunpack.c.l.s4 1966171168
      %v1958 = vunpack.c.0.s8 %v1957
      %v1959 = vlaneseq
      %v1960 = vshrl.u32 %v1959, 7
      %v1961 = vsub.s32 %v1958, %v1960
      %v1962 = vrot.slane %v1806, %v1961
      %v1963 = vcombine.high %v1962, %v1962
      %v1965 = vunpack.c.l.s4 1966171168
      %v1966 = vunpack.c.0.s8 %v1965
      %v1967 = vlaneseq
      %v1968 = vshrl.u32 %v1967, 7
      %v1969 = vsub.s32 %v1966, %v1968
      %v1970 = vrot.slane %v1962, %v1969
      %v1972 = vunpack.c.l.s4 1966171168
      %v1973 = vunpack.c.0.s8 %v1972
      %v1974 = vlaneseq
      %v1975 = vshrl.u32 %v1974, 7
      %v1976 = vsub.s32 %v1973, %v1975
      %v1977 = vrot.slane %v1963, %v1976
      %v1978 = vcombine.high %v1970, %v1970
      %v1980 = vunpack.c.l.s4 1966171168
      %v1981 = vunpack.c.0.s8 %v1980
      %v1982 = vlaneseq
      %v1983 = vshrl.u32 %v1982, 7
      %v1984 = vsub.s32 %v1981, %v1983
      %v1985 = vrot.slane %v1807, %v1984
      %v1986 = vcombine.high %v1985, %v1985
      %v1988 = vunpack.c.l.s4 1966171168
      %v1989 = vunpack.c.0.s8 %v1988
      %v1990 = vlaneseq
      %v1991 = vshrl.u32 %v1990, 7
      %v1992 = vsub.s32 %v1989, %v1991
      %v1993 = vrot.slane %v1985, %v1992
      %v1995 = vunpack.c.l.s4 1966171168
      %v1996 = vunpack.c.0.s8 %v1995
      %v1997 = vlaneseq
      %v1998 = vshrl.u32 %v1997, 7
      %v1999 = vsub.s32 %v1996, %v1998
      %v2000 = vrot.slane %v1986, %v1999
      %v2001 = vcombine.high %v1993, %v1993
      %v2002 = vunpack.c.l.b16 %v1832
      %v2003 = vunpack.c.l.b16 %v1839
      %v2004 = vunpack.c.l.b16 %v1840
      %v2005 = vunpack.c.l.b16 %v1855
      %v2006 = vunpack.c.l.b16 %v1862
      %v2007 = vunpack.c.l.b16 %v1863
      %v2008 = vunpack.c.l.b16 %v1878
      %v2009 = vunpack.c.l.b16 %v1885
      %v2010 = vunpack.c.l.b16 %v1886
      %v2011 = vunpack.c.l.b16 %v1901
      %v2012 = vunpack.c.l.b16 %v1908
      %v2013 = vunpack.c.l.b16 %v1909
      %v2014 = vunpack.c.l.b16 %v1924
      %v2015 = vunpack.c.l.b16 %v1931
      %v2016 = vunpack.c.l.b16 %v1932
      %v2017 = vunpack.c.l.b16 %v1947
      %v2018 = vunpack.c.l.b16 %v1954
      %v2019 = vunpack.c.l.b16 %v1955
      %v2020 = vunpack.c.l.b16 %v1970
      %v2021 = vunpack.c.l.b16 %v1977
      %v2022 = vunpack.c.l.b16 %v1978
      %v2023 = vunpack.c.l.b16 %v1993
      %v2024 = vunpack.c.l.b16 %v2000
      %v2025 = vunpack.c.l.b16 %v2001
      %v2026 = vrot.slane %v2005, 7
      %v2027 = vsel %vm424, %v2026, %v2002
      %v2028 = vrot.slane %v2008, 6
      %v2029 = vsel %vm427, %v2028, %v2027
      %v2030 = vrot.slane %v2011, 5
      %v2031 = vsel %vm430, %v2030, %v2029
      %v2032 = vrot.slane %v2014, 4
      %v2033 = vsel %vm433, %v2032, %v2031
      %v2034 = vrot.slane %v2017, 3
      %v2035 = vsel %vm436, %v2034, %v2033
      %v2036 = vrot.slane %v2020, 2
      %v2037 = vsel %vm439, %v2036, %v2035
      %v2038 = vrot.slane %v2023, 1
      %v2039 = vsel %vm442, %v2038, %v2037
      %v2040 = vrot.slane %v2006, 7
      %v2041 = vsel %vm424, %v2040, %v2003
      %v2042 = vrot.slane %v2009, 6
      %v2043 = vsel %vm427, %v2042, %v2041
      %v2044 = vrot.slane %v2012, 5
      %v2045 = vsel %vm430, %v2044, %v2043
      %v2046 = vrot.slane %v2015, 4
      %v2047 = vsel %vm433, %v2046, %v2045
      %v2048 = vrot.slane %v2018, 3
      %v2049 = vsel %vm436, %v2048, %v2047
      %v2050 = vrot.slane %v2021, 2
      %v2051 = vsel %vm439, %v2050, %v2049
      %v2052 = vrot.slane %v2024, 1
      %v2053 = vsel %vm442, %v2052, %v2051
      %v2054 = vrot.slane %v2007, 7
      %v2055 = vsel %vm424, %v2054, %v2004
      %v2056 = vrot.slane %v2010, 6
      %v2057 = vsel %vm427, %v2056, %v2055
      %v2058 = vrot.slane %v2013, 5
      %v2059 = vsel %vm430, %v2058, %v2057
      %v2060 = vrot.slane %v2016, 4
      %v2061 = vsel %vm433, %v2060, %v2059
      %v2062 = vrot.slane %v2019, 3
      %v2063 = vsel %vm436, %v2062, %v2061
      %v2064 = vrot.slane %v2022, 2
      %v2065 = vsel %vm439, %v2064, %v2063
      %v2066 = vrot.slane %v2025, 1
      %v2067 = vsel %vm442, %v2066, %v2065
      %v2068 = vpack.c.b16 %v2039, %v2039
      %v2069 = vpack.c.b16 %v2053, %v2053
      %v2070 = vpack.c.b16 %v2067, %v2067
      %2071 = vrot.lane.b32.xlu0 %v2068, 108
      %v2072 = vpop.permute.xlu0 %2071
      %2073 = vrot.lane.b32.xlu0 %v2069, 108
      %v2074 = vpop.permute.xlu0 %2073
      %2075 = vrot.lane.b32.xlu0 %v2070, 108
      %v2076 = vpop.permute.xlu0 %2075
      %vm2077 = vcmask 883712
      %v2078 = vsel %vm2077, %v2072, %v2074
      %v2079 = vsel %vm2077, %v2074, %v2076
      %v2081 = vsel %vm484, %v1809, 0
      %v2084 = vsel %vm488, %v2078, 0
      %v2087 = vsel %vm488, %v2079, 0
      %v2090 = vsel %vm488, %v2076, 0
      %2092 = vmatprep.subr.bf16.mxu0 %v2087
      %2093 = vmatpush1.bf16.msra.mxu0 %v2084
      %2094 = vmatprep.subr.bf16.mxu0 0
      %2095 = vmatpush1.bf16.msra.mxu0 0
      %2096 = vmatprep.subr.bf16.mxu0 0
      %2097 = vmatpush1.bf16.msra.mxu0 0
      %2098 = vmatprep.subr.bf16.mxu0 0
      %2099 = vmatpush1.bf16.msra.mxu0 0
      %2100 = vmatprep.subr.bf16.mxu0 0
      %2101 = vmatpush1.bf16.msra.mxu0 0
      %2102 = vmatprep.subr.bf16.mxu0 0
      %2103 = vmatpush1.bf16.msra.mxu0 0
      %2104 = vmatprep.subr.bf16.mxu0 0
      %2105 = vmatpush1.bf16.msra.mxu0 0
      %2106 = vmatprep.subr.bf16.mxu0 0
      %2107 = vmatpush1.bf16.msra.mxu0 0
      %2108 = vmatprep.subr.bf16.mxu0 0
      %2109 = vmatpush1.bf16.msra.mxu0 0
      %2110 = vmatprep.subr.bf16.mxu0 0
      %2111 = vmatpush1.bf16.msra.mxu0 0
      %2112 = vmatprep.subr.bf16.mxu0 0
      %2113 = vmatpush1.bf16.msra.mxu0 0
      %2114 = vmatprep.subr.bf16.mxu0 0
      %2115 = vmatpush1.bf16.msra.mxu0 0
      %2116 = vmatprep.subr.bf16.mxu0 0
      %2117 = vmatpush1.bf16.msra.mxu0 0
      %2118 = vmatprep.subr.bf16.mxu0 0
      %2119 = vmatpush1.bf16.msra.mxu0 0
      %2120 = vmatprep.subr.bf16.mxu0 0
      %2121 = vmatpush1.bf16.msra.mxu0 0
      %2122 = vmatprep.subr.bf16.mxu0 0
      %2123 = vmatpush1.bf16.msra.mxu0 0
      %2124 = vmatprep.mubr.bf16.mxu0 0
      %2125 = vmatmul.mubr.bf16.gmra.mrb[0].mxu0 %v2081
      %v2126 = vpop.f32.mrb[0].mxu0
      %v2127 = vadd.f32 0.0, %v2126
      %v2128 = vpop.f32.mrb[0].mxu0
      %v2129 = vadd.f32 0.0, %v2128
      %v2130 = vpop.f32.mrb[0].mxu0
      %v2131 = vpop.f32.mrb[0].mxu0
      %2132 = vdwg.mxu0
      %2133 = vmatprep.subr.bf16.mxu0 0
      %2134 = vmatpush1.bf16.msra.mxu0 %v2090
      %2135 = vmatprep.subr.bf16.mxu0 0
      %2136 = vmatpush1.bf16.msra.mxu0 0
      %2137 = vmatprep.subr.bf16.mxu0 0
      %2138 = vmatpush1.bf16.msra.mxu0 0
      %2139 = vmatprep.subr.bf16.mxu0 0
      %2140 = vmatpush1.bf16.msra.mxu0 0
      %2141 = vmatprep.subr.bf16.mxu0 0
      %2142 = vmatpush1.bf16.msra.mxu0 0
      %2143 = vmatprep.subr.bf16.mxu0 0
      %2144 = vmatpush1.bf16.msra.mxu0 0
      %2145 = vmatprep.subr.bf16.mxu0 0
      %2146 = vmatpush1.bf16.msra.mxu0 0
      %2147 = vmatprep.subr.bf16.mxu0 0
      %2148 = vmatpush1.bf16.msra.mxu0 0
      %2149 = vmatprep.subr.bf16.mxu0 0
      %2150 = vmatpush1.bf16.msra.mxu0 0
      %2151 = vmatprep.subr.bf16.mxu0 0
      %2152 = vmatpush1.bf16.msra.mxu0 0
      %2153 = vmatprep.subr.bf16.mxu0 0
      %2154 = vmatpush1.bf16.msra.mxu0 0
      %2155 = vmatprep.subr.bf16.mxu0 0
      %2156 = vmatpush1.bf16.msra.mxu0 0
      %2157 = vmatprep.subr.bf16.mxu0 0
      %2158 = vmatpush1.bf16.msra.mxu0 0
      %2159 = vmatprep.subr.bf16.mxu0 0
      %2160 = vmatpush1.bf16.msra.mxu0 0
      %2161 = vmatprep.subr.bf16.mxu0 0
      %2162 = vmatpush1.bf16.msra.mxu0 0
      %2163 = vmatprep.subr.bf16.mxu0 0
      %2164 = vmatpush1.bf16.msra.mxu0 0
      %2165 = vmatprep.mubr.bf16.mxu0 0
      %2166 = vmatmul.mubr.bf16.gmra.mrb[0].mxu0 %v2081
      %v2167 = vpop.f32.mrb[0].mxu0
      %v2168 = vadd.f32 0.0, %v2167
      %v2169 = vpop.f32.mrb[0].mxu0
      %v2170 = vpop.f32.mrb[0].mxu0
      %v2171 = vpop.f32.mrb[0].mxu0
      %2172 = vdwg.mxu0
      %v2173 = vadd.f32 %v1797, %v2127
      %v2174 = vadd.f32 %v1798, %v2129
      %v2175 = vadd.f32 %v1799, %v2168
      %v2176 = vld [vmem:[%s189] sm:$0x7]
      %v2177 = vld [vmem:[%s189 + $0x3] sm:$0x7]
      %v2178 = vld [vmem:[%s189 + $0x6] sm:$0x7]
      %v2179 = vld [vmem:[%s189 + $0x9] sm:$0x7]
      %v2180 = vld [vmem:[%s189 + $0xc] sm:$0x7]
      %v2181 = vld [vmem:[%s189 + $0xf] sm:$0x7]
      %v2182 = vld [vmem:[%s189 + $0x12] sm:$0x7]
      %v2183 = vld [vmem:[%s189 + $0x15] sm:$0x7]
      %s2184 = scalar_lea.vmem %s1, 12
      %v2185 = vld [vmem:[%s2184] sm:$0x3]
      %v2195 = vunpack.c.l.s4 1966171168
      %v2196 = vunpack.c.0.s8 %v2195
      %v2197 = vlaneseq
      %v2198 = vshrl.u32 %v2197, 7
      %v2199 = vsub.s32 %v2196, %v2198
      %v2200 = vrot.slane %v2176, %v2199
      %v2201 = vcombine.high %v2200, %v2200
      %v2203 = vunpack.c.l.s4 1966171168
      %v2204 = vunpack.c.0.s8 %v2203
      %v2205 = vlaneseq
      %v2206 = vshrl.u32 %v2205, 7
      %v2207 = vsub.s32 %v2204, %v2206
      %v2208 = vrot.slane %v2200, %v2207
      %v2210 = vunpack.c.l.s4 1966171168
      %v2211 = vunpack.c.0.s8 %v2210
      %v2212 = vlaneseq
      %v2213 = vshrl.u32 %v2212, 7
      %v2214 = vsub.s32 %v2211, %v2213
      %v2215 = vrot.slane %v2201, %v2214
      %v2216 = vcombine.high %v2208, %v2208
      %v2218 = vunpack.c.l.s4 1966171168
      %v2219 = vunpack.c.0.s8 %v2218
      %v2220 = vlaneseq
      %v2221 = vshrl.u32 %v2220, 7
      %v2222 = vsub.s32 %v2219, %v2221
      %v2223 = vrot.slane %v2177, %v2222
      %v2224 = vcombine.high %v2223, %v2223
      %v2226 = vunpack.c.l.s4 1966171168
      %v2227 = vunpack.c.0.s8 %v2226
      %v2228 = vlaneseq
      %v2229 = vshrl.u32 %v2228, 7
      %v2230 = vsub.s32 %v2227, %v2229
      %v2231 = vrot.slane %v2223, %v2230
      %v2233 = vunpack.c.l.s4 1966171168
      %v2234 = vunpack.c.0.s8 %v2233
      %v2235 = vlaneseq
      %v2236 = vshrl.u32 %v2235, 7
      %v2237 = vsub.s32 %v2234, %v2236
      %v2238 = vrot.slane %v2224, %v2237
      %v2239 = vcombine.high %v2231, %v2231
      %v2241 = vunpack.c.l.s4 1966171168
      %v2242 = vunpack.c.0.s8 %v2241
      %v2243 = vlaneseq
      %v2244 = vshrl.u32 %v2243, 7
      %v2245 = vsub.s32 %v2242, %v2244
      %v2246 = vrot.slane %v2178, %v2245
      %v2247 = vcombine.high %v2246, %v2246
      %v2249 = vunpack.c.l.s4 1966171168
      %v2250 = vunpack.c.0.s8 %v2249
      %v2251 = vlaneseq
      %v2252 = vshrl.u32 %v2251, 7
      %v2253 = vsub.s32 %v2250, %v2252
      %v2254 = vrot.slane %v2246, %v2253
      %v2256 = vunpack.c.l.s4 1966171168
      %v2257 = vunpack.c.0.s8 %v2256
      %v2258 = vlaneseq
      %v2259 = vshrl.u32 %v2258, 7
      %v2260 = vsub.s32 %v2257, %v2259
      %v2261 = vrot.slane %v2247, %v2260
      %v2262 = vcombine.high %v2254, %v2254
      %v2264 = vunpack.c.l.s4 1966171168
      %v2265 = vunpack.c.0.s8 %v2264
      %v2266 = vlaneseq
      %v2267 = vshrl.u32 %v2266, 7
      %v2268 = vsub.s32 %v2265, %v2267
      %v2269 = vrot.slane %v2179, %v2268
      %v2270 = vcombine.high %v2269, %v2269
      %v2272 = vunpack.c.l.s4 1966171168
      %v2273 = vunpack.c.0.s8 %v2272
      %v2274 = vlaneseq
      %v2275 = vshrl.u32 %v2274, 7
      %v2276 = vsub.s32 %v2273, %v2275
      %v2277 = vrot.slane %v2269, %v2276
      %v2279 = vunpack.c.l.s4 1966171168
      %v2280 = vunpack.c.0.s8 %v2279
      %v2281 = vlaneseq
      %v2282 = vshrl.u32 %v2281, 7
      %v2283 = vsub.s32 %v2280, %v2282
      %v2284 = vrot.slane %v2270, %v2283
      %v2285 = vcombine.high %v2277, %v2277
      %v2287 = vunpack.c.l.s4 1966171168
      %v2288 = vunpack.c.0.s8 %v2287
      %v2289 = vlaneseq
      %v2290 = vshrl.u32 %v2289, 7
      %v2291 = vsub.s32 %v2288, %v2290
      %v2292 = vrot.slane %v2180, %v2291
      %v2293 = vcombine.high %v2292, %v2292
      %v2295 = vunpack.c.l.s4 1966171168
      %v2296 = vunpack.c.0.s8 %v2295
      %v2297 = vlaneseq
      %v2298 = vshrl.u32 %v2297, 7
      %v2299 = vsub.s32 %v2296, %v2298
      %v2300 = vrot.slane %v2292, %v2299
      %v2302 = vunpack.c.l.s4 1966171168
      %v2303 = vunpack.c.0.s8 %v2302
      %v2304 = vlaneseq
      %v2305 = vshrl.u32 %v2304, 7
      %v2306 = vsub.s32 %v2303, %v2305
      %v2307 = vrot.slane %v2293, %v2306
      %v2308 = vcombine.high %v2300, %v2300
      %v2310 = vunpack.c.l.s4 1966171168
      %v2311 = vunpack.c.0.s8 %v2310
      %v2312 = vlaneseq
      %v2313 = vshrl.u32 %v2312, 7
      %v2314 = vsub.s32 %v2311, %v2313
      %v2315 = vrot.slane %v2181, %v2314
      %v2316 = vcombine.high %v2315, %v2315
      %v2318 = vunpack.c.l.s4 1966171168
      %v2319 = vunpack.c.0.s8 %v2318
      %v2320 = vlaneseq
      %v2321 = vshrl.u32 %v2320, 7
      %v2322 = vsub.s32 %v2319, %v2321
      %v2323 = vrot.slane %v2315, %v2322
      %v2325 = vunpack.c.l.s4 1966171168
      %v2326 = vunpack.c.0.s8 %v2325
      %v2327 = vlaneseq
      %v2328 = vshrl.u32 %v2327, 7
      %v2329 = vsub.s32 %v2326, %v2328
      %v2330 = vrot.slane %v2316, %v2329
      %v2331 = vcombine.high %v2323, %v2323
      %v2333 = vunpack.c.l.s4 1966171168
      %v2334 = vunpack.c.0.s8 %v2333
      %v2335 = vlaneseq
      %v2336 = vshrl.u32 %v2335, 7
      %v2337 = vsub.s32 %v2334, %v2336
      %v2338 = vrot.slane %v2182, %v2337
      %v2339 = vcombine.high %v2338, %v2338
      %v2341 = vunpack.c.l.s4 1966171168
      %v2342 = vunpack.c.0.s8 %v2341
      %v2343 = vlaneseq
      %v2344 = vshrl.u32 %v2343, 7
      %v2345 = vsub.s32 %v2342, %v2344
      %v2346 = vrot.slane %v2338, %v2345
      %v2348 = vunpack.c.l.s4 1966171168
      %v2349 = vunpack.c.0.s8 %v2348
      %v2350 = vlaneseq
      %v2351 = vshrl.u32 %v2350, 7
      %v2352 = vsub.s32 %v2349, %v2351
      %v2353 = vrot.slane %v2339, %v2352
      %v2354 = vcombine.high %v2346, %v2346
      %v2356 = vunpack.c.l.s4 1966171168
      %v2357 = vunpack.c.0.s8 %v2356
      %v2358 = vlaneseq
      %v2359 = vshrl.u32 %v2358, 7
      %v2360 = vsub.s32 %v2357, %v2359
      %v2361 = vrot.slane %v2183, %v2360
      %v2362 = vcombine.high %v2361, %v2361
      %v2364 = vunpack.c.l.s4 1966171168
      %v2365 = vunpack.c.0.s8 %v2364
      %v2366 = vlaneseq
      %v2367 = vshrl.u32 %v2366, 7
      %v2368 = vsub.s32 %v2365, %v2367
      %v2369 = vrot.slane %v2361, %v2368
      %v2371 = vunpack.c.l.s4 1966171168
      %v2372 = vunpack.c.0.s8 %v2371
      %v2373 = vlaneseq
      %v2374 = vshrl.u32 %v2373, 7
      %v2375 = vsub.s32 %v2372, %v2374
      %v2376 = vrot.slane %v2362, %v2375
      %v2377 = vcombine.high %v2369, %v2369
      %v2378 = vunpack.c.l.b16 %v2208
      %v2379 = vunpack.c.l.b16 %v2215
      %v2380 = vunpack.c.l.b16 %v2216
      %v2381 = vunpack.c.l.b16 %v2231
      %v2382 = vunpack.c.l.b16 %v2238
      %v2383 = vunpack.c.l.b16 %v2239
      %v2384 = vunpack.c.l.b16 %v2254
      %v2385 = vunpack.c.l.b16 %v2261
      %v2386 = vunpack.c.l.b16 %v2262
      %v2387 = vunpack.c.l.b16 %v2277
      %v2388 = vunpack.c.l.b16 %v2284
      %v2389 = vunpack.c.l.b16 %v2285
      %v2390 = vunpack.c.l.b16 %v2300
      %v2391 = vunpack.c.l.b16 %v2307
      %v2392 = vunpack.c.l.b16 %v2308
      %v2393 = vunpack.c.l.b16 %v2323
      %v2394 = vunpack.c.l.b16 %v2330
      %v2395 = vunpack.c.l.b16 %v2331
      %v2396 = vunpack.c.l.b16 %v2346
      %v2397 = vunpack.c.l.b16 %v2353
      %v2398 = vunpack.c.l.b16 %v2354
      %v2399 = vunpack.c.l.b16 %v2369
      %v2400 = vunpack.c.l.b16 %v2376
      %v2401 = vunpack.c.l.b16 %v2377
      %v2402 = vrot.slane %v2381, 7
      %v2403 = vsel %vm424, %v2402, %v2378
      %v2404 = vrot.slane %v2384, 6
      %v2405 = vsel %vm427, %v2404, %v2403
      %v2406 = vrot.slane %v2387, 5
      %v2407 = vsel %vm430, %v2406, %v2405
      %v2408 = vrot.slane %v2390, 4
      %v2409 = vsel %vm433, %v2408, %v2407
      %v2410 = vrot.slane %v2393, 3
      %v2411 = vsel %vm436, %v2410, %v2409
      %v2412 = vrot.slane %v2396, 2
      %v2413 = vsel %vm439, %v2412, %v2411
      %v2414 = vrot.slane %v2399, 1
      %v2415 = vsel %vm442, %v2414, %v2413
      %v2416 = vrot.slane %v2382, 7
      %v2417 = vsel %vm424, %v2416, %v2379
      %v2418 = vrot.slane %v2385, 6
      %v2419 = vsel %vm427, %v2418, %v2417
      %v2420 = vrot.slane %v2388, 5
      %v2421 = vsel %vm430, %v2420, %v2419
      %v2422 = vrot.slane %v2391, 4
      %v2423 = vsel %vm433, %v2422, %v2421
      %v2424 = vrot.slane %v2394, 3
      %v2425 = vsel %vm436, %v2424, %v2423
      %v2426 = vrot.slane %v2397, 2
      %v2427 = vsel %vm439, %v2426, %v2425
      %v2428 = vrot.slane %v2400, 1
      %v2429 = vsel %vm442, %v2428, %v2427
      %v2430 = vrot.slane %v2383, 7
      %v2431 = vsel %vm424, %v2430, %v2380
      %v2432 = vrot.slane %v2386, 6
      %v2433 = vsel %vm427, %v2432, %v2431
      %v2434 = vrot.slane %v2389, 5
      %v2435 = vsel %vm430, %v2434, %v2433
      %v2436 = vrot.slane %v2392, 4
      %v2437 = vsel %vm433, %v2436, %v2435
      %v2438 = vrot.slane %v2395, 3
      %v2439 = vsel %vm436, %v2438, %v2437
      %v2440 = vrot.slane %v2398, 2
      %v2441 = vsel %vm439, %v2440, %v2439
      %v2442 = vrot.slane %v2401, 1
      %v2443 = vsel %vm442, %v2442, %v2441
      %v2444 = vpack.c.b16 %v2415, %v2415
      %v2445 = vpack.c.b16 %v2429, %v2429
      %v2446 = vpack.c.b16 %v2443, %v2443
      %2447 = vrot.lane.b32.xlu0 %v2444, 92
      %v2448 = vpop.permute.xlu0 %2447
      %2449 = vrot.lane.b32.xlu0 %v2445, 92
      %v2450 = vpop.permute.xlu0 %2449
      %2451 = vrot.lane.b32.xlu0 %v2446, 92
      %v2452 = vpop.permute.xlu0 %2451
      %vm2453 = vcmask 752640
      %v2454 = vsel %vm2453, %v2448, %v2450
      %v2455 = vsel %vm2453, %v2450, %v2452
      %v2457 = vsel %vm484, %v2185, 0
      %v2460 = vsel %vm488, %v2454, 0
      %v2463 = vsel %vm488, %v2455, 0
      %v2466 = vsel %vm488, %v2452, 0
      %2468 = vmatprep.subr.bf16.mxu0 %v2463
      %2469 = vmatpush1.bf16.msra.mxu0 %v2460
      %2470 = vmatprep.subr.bf16.mxu0 0
      %2471 = vmatpush1.bf16.msra.mxu0 0
      %2472 = vmatprep.subr.bf16.mxu0 0
      %2473 = vmatpush1.bf16.msra.mxu0 0
      %2474 = vmatprep.subr.bf16.mxu0 0
      %2475 = vmatpush1.bf16.msra.mxu0 0
      %2476 = vmatprep.subr.bf16.mxu0 0
      %2477 = vmatpush1.bf16.msra.mxu0 0
      %2478 = vmatprep.subr.bf16.mxu0 0
      %2479 = vmatpush1.bf16.msra.mxu0 0
      %2480 = vmatprep.subr.bf16.mxu0 0
      %2481 = vmatpush1.bf16.msra.mxu0 0
      %2482 = vmatprep.subr.bf16.mxu0 0
      %2483 = vmatpush1.bf16.msra.mxu0 0
      %2484 = vmatprep.subr.bf16.mxu0 0
      %2485 = vmatpush1.bf16.msra.mxu0 0
      %2486 = vmatprep.subr.bf16.mxu0 0
      %2487 = vmatpush1.bf16.msra.mxu0 0
      %2488 = vmatprep.subr.bf16.mxu0 0
      %2489 = vmatpush1.bf16.msra.mxu0 0
      %2490 = vmatprep.subr.bf16.mxu0 0
      %2491 = vmatpush1.bf16.msra.mxu0 0
      %2492 = vmatprep.subr.bf16.mxu0 0
      %2493 = vmatpush1.bf16.msra.mxu0 0
      %2494 = vmatprep.subr.bf16.mxu0 0
      %2495 = vmatpush1.bf16.msra.mxu0 0
      %2496 = vmatprep.subr.bf16.mxu0 0
      %2497 = vmatpush1.bf16.msra.mxu0 0
      %2498 = vmatprep.subr.bf16.mxu0 0
      %2499 = vmatpush1.bf16.msra.mxu0 0
      %2500 = vmatprep.mubr.bf16.mxu0 0
      %2501 = vmatmul.mubr.bf16.gmra.mrb[0].mxu0 %v2457
      %v2502 = vpop.f32.mrb[0].mxu0
      %v2503 = vadd.f32 0.0, %v2502
      %v2504 = vpop.f32.mrb[0].mxu0
      %v2505 = vadd.f32 0.0, %v2504
      %v2506 = vpop.f32.mrb[0].mxu0
      %v2507 = vpop.f32.mrb[0].mxu0
      %2508 = vdwg.mxu0
      %2509 = vmatprep.subr.bf16.mxu0 0
      %2510 = vmatpush1.bf16.msra.mxu0 %v2466
      %2511 = vmatprep.subr.bf16.mxu0 0
      %2512 = vmatpush1.bf16.msra.mxu0 0
      %2513 = vmatprep.subr.bf16.mxu0 0
      %2514 = vmatpush1.bf16.msra.mxu0 0
      %2515 = vmatprep.subr.bf16.mxu0 0
      %2516 = vmatpush1.bf16.msra.mxu0 0
      %2517 = vmatprep.subr.bf16.mxu0 0
      %2518 = vmatpush1.bf16.msra.mxu0 0
      %2519 = vmatprep.subr.bf16.mxu0 0
      %2520 = vmatpush1.bf16.msra.mxu0 0
      %2521 = vmatprep.subr.bf16.mxu0 0
      %2522 = vmatpush1.bf16.msra.mxu0 0
      %2523 = vmatprep.subr.bf16.mxu0 0
      %2524 = vmatpush1.bf16.msra.mxu0 0
      %2525 = vmatprep.subr.bf16.mxu0 0
      %2526 = vmatpush1.bf16.msra.mxu0 0
      %2527 = vmatprep.subr.bf16.mxu0 0
      %2528 = vmatpush1.bf16.msra.mxu0 0
      %2529 = vmatprep.subr.bf16.mxu0 0
      %2530 = vmatpush1.bf16.msra.mxu0 0
      %2531 = vmatprep.subr.bf16.mxu0 0
      %2532 = vmatpush1.bf16.msra.mxu0 0
      %2533 = vmatprep.subr.bf16.mxu0 0
      %2534 = vmatpush1.bf16.msra.mxu0 0
      %2535 = vmatprep.subr.bf16.mxu0 0
      %2536 = vmatpush1.bf16.msra.mxu0 0
      %2537 = vmatprep.subr.bf16.mxu0 0
      %2538 = vmatpush1.bf16.msra.mxu0 0
      %2539 = vmatprep.subr.bf16.mxu0 0
      %2540 = vmatpush1.bf16.msra.mxu0 0
      %2541 = vmatprep.mubr.bf16.mxu0 0
      %2542 = vmatmul.mubr.bf16.gmra.mrb[0].mxu0 %v2457
      %v2543 = vpop.f32.mrb[0].mxu0
      %v2544 = vadd.f32 0.0, %v2543
      %v2545 = vpop.f32.mrb[0].mxu0
      %v2546 = vpop.f32.mrb[0].mxu0
      %v2547 = vpop.f32.mrb[0].mxu0
      %2548 = vdwg.mxu0
      %v2549 = vadd.f32 %v2173, %v2503
      %v2550 = vadd.f32 %v2174, %v2505
      %v2551 = vadd.f32 %v2175, %v2544
      %v2552 = vld [vmem:[%s189] sm:$0x7]
      %v2553 = vld [vmem:[%s189 + $0x3] sm:$0x7]
      %v2554 = vld [vmem:[%s189 + $0x6] sm:$0x7]
      %v2555 = vld [vmem:[%s189 + $0x9] sm:$0x7]
      %v2556 = vld [vmem:[%s189 + $0xc] sm:$0x7]
      %v2557 = vld [vmem:[%s189 + $0xf] sm:$0x7]
      %v2558 = vld [vmem:[%s189 + $0x12] sm:$0x7]
      %v2559 = vld [vmem:[%s189 + $0x15] sm:$0x7]
      %s2560 = scalar_lea.vmem %s1, 14
      %v2561 = vld [vmem:[%s2560] sm:$0x3]
      %v2571 = vunpack.c.l.s4 1966171168
      %v2572 = vunpack.c.0.s8 %v2571
      %v2573 = vlaneseq
      %v2574 = vshrl.u32 %v2573, 7
      %v2575 = vsub.s32 %v2572, %v2574
      %v2576 = vrot.slane %v2552, %v2575
      %v2577 = vcombine.high %v2576, %v2576
      %v2579 = vunpack.c.l.s4 1966171168
      %v2580 = vunpack.c.0.s8 %v2579
      %v2581 = vlaneseq
      %v2582 = vshrl.u32 %v2581, 7
      %v2583 = vsub.s32 %v2580, %v2582
      %v2584 = vrot.slane %v2576, %v2583
      %v2586 = vunpack.c.l.s4 1966171168
      %v2587 = vunpack.c.0.s8 %v2586
      %v2588 = vlaneseq
      %v2589 = vshrl.u32 %v2588, 7
      %v2590 = vsub.s32 %v2587, %v2589
      %v2591 = vrot.slane %v2577, %v2590
      %v2592 = vcombine.high %v2584, %v2584
      %v2594 = vunpack.c.l.s4 1966171168
      %v2595 = vunpack.c.0.s8 %v2594
      %v2596 = vlaneseq
      %v2597 = vshrl.u32 %v2596, 7
      %v2598 = vsub.s32 %v2595, %v2597
      %v2599 = vrot.slane %v2553, %v2598
      %v2600 = vcombine.high %v2599, %v2599
      %v2602 = vunpack.c.l.s4 1966171168
      %v2603 = vunpack.c.0.s8 %v2602
      %v2604 = vlaneseq
      %v2605 = vshrl.u32 %v2604, 7
      %v2606 = vsub.s32 %v2603, %v2605
      %v2607 = vrot.slane %v2599, %v2606
      %v2609 = vunpack.c.l.s4 1966171168
      %v2610 = vunpack.c.0.s8 %v2609
      %v2611 = vlaneseq
      %v2612 = vshrl.u32 %v2611, 7
      %v2613 = vsub.s32 %v2610, %v2612
      %v2614 = vrot.slane %v2600, %v2613
      %v2615 = vcombine.high %v2607, %v2607
      %v2617 = vunpack.c.l.s4 1966171168
      %v2618 = vunpack.c.0.s8 %v2617
      %v2619 = vlaneseq
      %v2620 = vshrl.u32 %v2619, 7
      %v2621 = vsub.s32 %v2618, %v2620
      %v2622 = vrot.slane %v2554, %v2621
      %v2623 = vcombine.high %v2622, %v2622
      %v2625 = vunpack.c.l.s4 1966171168
      %v2626 = vunpack.c.0.s8 %v2625
      %v2627 = vlaneseq
      %v2628 = vshrl.u32 %v2627, 7
      %v2629 = vsub.s32 %v2626, %v2628
      %v2630 = vrot.slane %v2622, %v2629
      %v2632 = vunpack.c.l.s4 1966171168
      %v2633 = vunpack.c.0.s8 %v2632
      %v2634 = vlaneseq
      %v2635 = vshrl.u32 %v2634, 7
      %v2636 = vsub.s32 %v2633, %v2635
      %v2637 = vrot.slane %v2623, %v2636
      %v2638 = vcombine.high %v2630, %v2630
      %v2640 = vunpack.c.l.s4 1966171168
      %v2641 = vunpack.c.0.s8 %v2640
      %v2642 = vlaneseq
      %v2643 = vshrl.u32 %v2642, 7
      %v2644 = vsub.s32 %v2641, %v2643
      %v2645 = vrot.slane %v2555, %v2644
      %v2646 = vcombine.high %v2645, %v2645
      %v2648 = vunpack.c.l.s4 1966171168
      %v2649 = vunpack.c.0.s8 %v2648
      %v2650 = vlaneseq
      %v2651 = vshrl.u32 %v2650, 7
      %v2652 = vsub.s32 %v2649, %v2651
      %v2653 = vrot.slane %v2645, %v2652
      %v2655 = vunpack.c.l.s4 1966171168
      %v2656 = vunpack.c.0.s8 %v2655
      %v2657 = vlaneseq
      %v2658 = vshrl.u32 %v2657, 7
      %v2659 = vsub.s32 %v2656, %v2658
      %v2660 = vrot.slane %v2646, %v2659
      %v2661 = vcombine.high %v2653, %v2653
      %v2663 = vunpack.c.l.s4 1966171168
      %v2664 = vunpack.c.0.s8 %v2663
      %v2665 = vlaneseq
      %v2666 = vshrl.u32 %v2665, 7
      %v2667 = vsub.s32 %v2664, %v2666
      %v2668 = vrot.slane %v2556, %v2667
      %v2669 = vcombine.high %v2668, %v2668
      %v2671 = vunpack.c.l.s4 1966171168
      %v2672 = vunpack.c.0.s8 %v2671
      %v2673 = vlaneseq
      %v2674 = vshrl.u32 %v2673, 7
      %v2675 = vsub.s32 %v2672, %v2674
      %v2676 = vrot.slane %v2668, %v2675
      %v2678 = vunpack.c.l.s4 1966171168
      %v2679 = vunpack.c.0.s8 %v2678
      %v2680 = vlaneseq
      %v2681 = vshrl.u32 %v2680, 7
      %v2682 = vsub.s32 %v2679, %v2681
      %v2683 = vrot.slane %v2669, %v2682
      %v2684 = vcombine.high %v2676, %v2676
      %v2686 = vunpack.c.l.s4 1966171168
      %v2687 = vunpack.c.0.s8 %v2686
      %v2688 = vlaneseq
      %v2689 = vshrl.u32 %v2688, 7
      %v2690 = vsub.s32 %v2687, %v2689
      %v2691 = vrot.slane %v2557, %v2690
      %v2692 = vcombine.high %v2691, %v2691
      %v2694 = vunpack.c.l.s4 1966171168
      %v2695 = vunpack.c.0.s8 %v2694
      %v2696 = vlaneseq
      %v2697 = vshrl.u32 %v2696, 7
      %v2698 = vsub.s32 %v2695, %v2697
      %v2699 = vrot.slane %v2691, %v2698
      %v2701 = vunpack.c.l.s4 1966171168
      %v2702 = vunpack.c.0.s8 %v2701
      %v2703 = vlaneseq
      %v2704 = vshrl.u32 %v2703, 7
      %v2705 = vsub.s32 %v2702, %v2704
      %v2706 = vrot.slane %v2692, %v2705
      %v2707 = vcombine.high %v2699, %v2699
      %v2709 = vunpack.c.l.s4 1966171168
      %v2710 = vunpack.c.0.s8 %v2709
      %v2711 = vlaneseq
      %v2712 = vshrl.u32 %v2711, 7
      %v2713 = vsub.s32 %v2710, %v2712
      %v2714 = vrot.slane %v2558, %v2713
      %v2715 = vcombine.high %v2714, %v2714
      %v2717 = vunpack.c.l.s4 1966171168
      %v2718 = vunpack.c.0.s8 %v2717
      %v2719 = vlaneseq
      %v2720 = vshrl.u32 %v2719, 7
      %v2721 = vsub.s32 %v2718, %v2720
      %v2722 = vrot.slane %v2714, %v2721
      %v2724 = vunpack.c.l.s4 1966171168
      %v2725 = vunpack.c.0.s8 %v2724
      %v2726 = vlaneseq
      %v2727 = vshrl.u32 %v2726, 7
      %v2728 = vsub.s32 %v2725, %v2727
      %v2729 = vrot.slane %v2715, %v2728
      %v2730 = vcombine.high %v2722, %v2722
      %v2732 = vunpack.c.l.s4 1966171168
      %v2733 = vunpack.c.0.s8 %v2732
      %v2734 = vlaneseq
      %v2735 = vshrl.u32 %v2734, 7
      %v2736 = vsub.s32 %v2733, %v2735
      %v2737 = vrot.slane %v2559, %v2736
      %v2738 = vcombine.high %v2737, %v2737
      %v2740 = vunpack.c.l.s4 1966171168
      %v2741 = vunpack.c.0.s8 %v2740
      %v2742 = vlaneseq
      %v2743 = vshrl.u32 %v2742, 7
      %v2744 = vsub.s32 %v2741, %v2743
      %v2745 = vrot.slane %v2737, %v2744
      %v2747 = vunpack.c.l.s4 1966171168
      %v2748 = vunpack.c.0.s8 %v2747
      %v2749 = vlaneseq
      %v2750 = vshrl.u32 %v2749, 7
      %v2751 = vsub.s32 %v2748, %v2750
      %v2752 = vrot.slane %v2738, %v2751
      %v2753 = vcombine.high %v2745, %v2745
      %v2754 = vunpack.c.l.b16 %v2584
      %v2755 = vunpack.c.l.b16 %v2591
      %v2756 = vunpack.c.l.b16 %v2592
      %v2757 = vunpack.c.l.b16 %v2607
      %v2758 = vunpack.c.l.b16 %v2614
      %v2759 = vunpack.c.l.b16 %v2615
      %v2760 = vunpack.c.l.b16 %v2630
      %v2761 = vunpack.c.l.b16 %v2637
      %v2762 = vunpack.c.l.b16 %v2638
      %v2763 = vunpack.c.l.b16 %v2653
      %v2764 = vunpack.c.l.b16 %v2660
      %v2765 = vunpack.c.l.b16 %v2661
      %v2766 = vunpack.c.l.b16 %v2676
      %v2767 = vunpack.c.l.b16 %v2683
      %v2768 = vunpack.c.l.b16 %v2684
      %v2769 = vunpack.c.l.b16 %v2699
      %v2770 = vunpack.c.l.b16 %v2706
      %v2771 = vunpack.c.l.b16 %v2707
      %v2772 = vunpack.c.l.b16 %v2722
      %v2773 = vunpack.c.l.b16 %v2729
      %v2774 = vunpack.c.l.b16 %v2730
      %v2775 = vunpack.c.l.b16 %v2745
      %v2776 = vunpack.c.l.b16 %v2752
      %v2777 = vunpack.c.l.b16 %v2753
      %v2778 = vrot.slane %v2757, 7
      %v2779 = vsel %vm424, %v2778, %v2754
      %v2780 = vrot.slane %v2760, 6
      %v2781 = vsel %vm427, %v2780, %v2779
      %v2782 = vrot.slane %v2763, 5
      %v2783 = vsel %vm430, %v2782, %v2781
      %v2784 = vrot.slane %v2766, 4
      %v2785 = vsel %vm433, %v2784, %v2783
      %v2786 = vrot.slane %v2769, 3
      %v2787 = vsel %vm436, %v2786, %v2785
      %v2788 = vrot.slane %v2772, 2
      %v2789 = vsel %vm439, %v2788, %v2787
      %v2790 = vrot.slane %v2775, 1
      %v2791 = vsel %vm442, %v2790, %v2789
      %v2792 = vrot.slane %v2758, 7
      %v2793 = vsel %vm424, %v2792, %v2755
      %v2794 = vrot.slane %v2761, 6
      %v2795 = vsel %vm427, %v2794, %v2793
      %v2796 = vrot.slane %v2764, 5
      %v2797 = vsel %vm430, %v2796, %v2795
      %v2798 = vrot.slane %v2767, 4
      %v2799 = vsel %vm433, %v2798, %v2797
      %v2800 = vrot.slane %v2770, 3
      %v2801 = vsel %vm436, %v2800, %v2799
      %v2802 = vrot.slane %v2773, 2
      %v2803 = vsel %vm439, %v2802, %v2801
      %v2804 = vrot.slane %v2776, 1
      %v2805 = vsel %vm442, %v2804, %v2803
      %v2806 = vrot.slane %v2759, 7
      %v2807 = vsel %vm424, %v2806, %v2756
      %v2808 = vrot.slane %v2762, 6
      %v2809 = vsel %vm427, %v2808, %v2807
      %v2810 = vrot.slane %v2765, 5
      %v2811 = vsel %vm430, %v2810, %v2809
      %v2812 = vrot.slane %v2768, 4
      %v2813 = vsel %vm433, %v2812, %v2811
      %v2814 = vrot.slane %v2771, 3
      %v2815 = vsel %vm436, %v2814, %v2813
      %v2816 = vrot.slane %v2774, 2
      %v2817 = vsel %vm439, %v2816, %v2815
      %v2818 = vrot.slane %v2777, 1
      %v2819 = vsel %vm442, %v2818, %v2817
      %v2820 = vpack.c.b16 %v2791, %v2791
      %v2821 = vpack.c.b16 %v2805, %v2805
      %v2822 = vpack.c.b16 %v2819, %v2819
      %2823 = vrot.lane.b32.xlu0 %v2820, 91
      %v2824 = vpop.permute.xlu0 %2823
      %2825 = vrot.lane.b32.xlu0 %v2821, 91
      %v2826 = vpop.permute.xlu0 %2825
      %2827 = vrot.lane.b32.xlu0 %v2822, 91
      %v2828 = vpop.permute.xlu0 %2827
      %vm2829 = vcmask 744448
      %v2830 = vsel %vm2829, %v2824, %v2826
      %v2831 = vsel %vm2829, %v2826, %v2828
      %v2833 = vsel %vm484, %v2561, 0
      %v2836 = vsel %vm488, %v2830, 0
      %v2839 = vsel %vm488, %v2831, 0
      %v2842 = vsel %vm488, %v2828, 0
      %2844 = vmatprep.subr.bf16.mxu0 %v2839
      %2845 = vmatpush1.bf16.msra.mxu0 %v2836
      %2846 = vmatprep.subr.bf16.mxu0 0
      %2847 = vmatpush1.bf16.msra.mxu0 0
      %2848 = vmatprep.subr.bf16.mxu0 0
      %2849 = vmatpush1.bf16.msra.mxu0 0
      %2850 = vmatprep.subr.bf16.mxu0 0
      %2851 = vmatpush1.bf16.msra.mxu0 0
      %2852 = vmatprep.subr.bf16.mxu0 0
      %2853 = vmatpush1.bf16.msra.mxu0 0
      %2854 = vmatprep.subr.bf16.mxu0 0
      %2855 = vmatpush1.bf16.msra.mxu0 0
      %2856 = vmatprep.subr.bf16.mxu0 0
      %2857 = vmatpush1.bf16.msra.mxu0 0
      %2858 = vmatprep.subr.bf16.mxu0 0
      %2859 = vmatpush1.bf16.msra.mxu0 0
      %2860 = vmatprep.subr.bf16.mxu0 0
      %2861 = vmatpush1.bf16.msra.mxu0 0
      %2862 = vmatprep.subr.bf16.mxu0 0
      %2863 = vmatpush1.bf16.msra.mxu0 0
      %2864 = vmatprep.subr.bf16.mxu0 0
      %2865 = vmatpush1.bf16.msra.mxu0 0
      %2866 = vmatprep.subr.bf16.mxu0 0
      %2867 = vmatpush1.bf16.msra.mxu0 0
      %2868 = vmatprep.subr.bf16.mxu0 0
      %2869 = vmatpush1.bf16.msra.mxu0 0
      %2870 = vmatprep.subr.bf16.mxu0 0
      %2871 = vmatpush1.bf16.msra.mxu0 0
      %2872 = vmatprep.subr.bf16.mxu0 0
      %2873 = vmatpush1.bf16.msra.mxu0 0
      %2874 = vmatprep.subr.bf16.mxu0 0
      %2875 = vmatpush1.bf16.msra.mxu0 0
      %2876 = vmatprep.mubr.bf16.mxu0 0
      %2877 = vmatmul.mubr.bf16.gmra.mrb[0].mxu0 %v2833
      %v2878 = vpop.f32.mrb[0].mxu0
      %v2879 = vadd.f32 0.0, %v2878
      %v2880 = vpop.f32.mrb[0].mxu0
      %v2881 = vadd.f32 0.0, %v2880
      %v2882 = vpop.f32.mrb[0].mxu0
      %v2883 = vpop.f32.mrb[0].mxu0
      %2884 = vdwg.mxu0
      %2885 = vmatprep.subr.bf16.mxu0 0
      %2886 = vmatpush1.bf16.msra.mxu0 %v2842
      %2887 = vmatprep.subr.bf16.mxu0 0
      %2888 = vmatpush1.bf16.msra.mxu0 0
      %2889 = vmatprep.subr.bf16.mxu0 0
      %2890 = vmatpush1.bf16.msra.mxu0 0
      %2891 = vmatprep.subr.bf16.mxu0 0
      %2892 = vmatpush1.bf16.msra.mxu0 0
      %2893 = vmatprep.subr.bf16.mxu0 0
      %2894 = vmatpush1.bf16.msra.mxu0 0
      %2895 = vmatprep.subr.bf16.mxu0 0
      %2896 = vmatpush1.bf16.msra.mxu0 0
      %2897 = vmatprep.subr.bf16.mxu0 0
      %2898 = vmatpush1.bf16.msra.mxu0 0
      %2899 = vmatprep.subr.bf16.mxu0 0
      %2900 = vmatpush1.bf16.msra.mxu0 0
      %2901 = vmatprep.subr.bf16.mxu0 0
      %2902 = vmatpush1.bf16.msra.mxu0 0
      %2903 = vmatprep.subr.bf16.mxu0 0
      %2904 = vmatpush1.bf16.msra.mxu0 0
      %2905 = vmatprep.subr.bf16.mxu0 0
      %2906 = vmatpush1.bf16.msra.mxu0 0
      %2907 = vmatprep.subr.bf16.mxu0 0
      %2908 = vmatpush1.bf16.msra.mxu0 0
      %2909 = vmatprep.subr.bf16.mxu0 0
      %2910 = vmatpush1.bf16.msra.mxu0 0
      %2911 = vmatprep.subr.bf16.mxu0 0
      %2912 = vmatpush1.bf16.msra.mxu0 0
      %2913 = vmatprep.subr.bf16.mxu0 0
      %2914 = vmatpush1.bf16.msra.mxu0 0
      %2915 = vmatprep.subr.bf16.mxu0 0
      %2916 = vmatpush1.bf16.msra.mxu0 0
      %2917 = vmatprep.mubr.bf16.mxu0 0
      %2918 = vmatmul.mubr.bf16.gmra.mrb[0].mxu0 %v2833
      %v2919 = vpop.f32.mrb[0].mxu0
      %v2920 = vadd.f32 0.0, %v2919
      %v2921 = vpop.f32.mrb[0].mxu0
      %v2922 = vpop.f32.mrb[0].mxu0
      %v2923 = vpop.f32.mrb[0].mxu0
      %2924 = vdwg.mxu0
      %v2925 = vadd.f32 %v2549, %v2879
      %v2926 = vadd.f32 %v2550, %v2881
      %v2927 = vadd.f32 %v2551, %v2920
      %v2928 = vld [vmem:[%s189] sm:$0x7]
      %v2929 = vld [vmem:[%s189 + $0x3] sm:$0x7]
      %v2930 = vld [vmem:[%s189 + $0x6] sm:$0x7]
      %v2931 = vld [vmem:[%s189 + $0x9] sm:$0x7]
      %v2932 = vld [vmem:[%s189 + $0xc] sm:$0x7]
      %v2933 = vld [vmem:[%s189 + $0xf] sm:$0x7]
      %v2934 = vld [vmem:[%s189 + $0x12] sm:$0x7]
      %v2935 = vld [vmem:[%s189 + $0x15] sm:$0x7]
      %s2936 = scalar_lea.vmem %s1, 16
      %v2937 = vld [vmem:[%s2936] sm:$0x3]
      %v2947 = vunpack.c.l.s4 1966171168
      %v2948 = vunpack.c.0.s8 %v2947
      %v2949 = vlaneseq
      %v2950 = vshrl.u32 %v2949, 7
      %v2951 = vsub.s32 %v2948, %v2950
      %v2952 = vrot.slane %v2928, %v2951
      %v2953 = vcombine.high %v2952, %v2952
      %v2955 = vunpack.c.l.s4 1966171168
      %v2956 = vunpack.c.0.s8 %v2955
      %v2957 = vlaneseq
      %v2958 = vshrl.u32 %v2957, 7
      %v2959 = vsub.s32 %v2956, %v2958
      %v2960 = vrot.slane %v2952, %v2959
      %v2962 = vunpack.c.l.s4 1966171168
      %v2963 = vunpack.c.0.s8 %v2962
      %v2964 = vlaneseq
      %v2965 = vshrl.u32 %v2964, 7
      %v2966 = vsub.s32 %v2963, %v2965
      %v2967 = vrot.slane %v2953, %v2966
      %v2968 = vcombine.high %v2960, %v2960
      %v2970 = vunpack.c.l.s4 1966171168
      %v2971 = vunpack.c.0.s8 %v2970
      %v2972 = vlaneseq
      %v2973 = vshrl.u32 %v2972, 7
      %v2974 = vsub.s32 %v2971, %v2973
      %v2975 = vrot.slane %v2929, %v2974
      %v2976 = vcombine.high %v2975, %v2975
      %v2978 = vunpack.c.l.s4 1966171168
      %v2979 = vunpack.c.0.s8 %v2978
      %v2980 = vlaneseq
      %v2981 = vshrl.u32 %v2980, 7
      %v2982 = vsub.s32 %v2979, %v2981
      %v2983 = vrot.slane %v2975, %v2982
      %v2985 = vunpack.c.l.s4 1966171168
      %v2986 = vunpack.c.0.s8 %v2985
      %v2987 = vlaneseq
      %v2988 = vshrl.u32 %v2987, 7
      %v2989 = vsub.s32 %v2986, %v2988
      %v2990 = vrot.slane %v2976, %v2989
      %v2991 = vcombine.high %v2983, %v2983
      %v2993 = vunpack.c.l.s4 1966171168
      %v2994 = vunpack.c.0.s8 %v2993
      %v2995 = vlaneseq
      %v2996 = vshrl.u32 %v2995, 7
      %v2997 = vsub.s32 %v2994, %v2996
      %v2998 = vrot.slane %v2930, %v2997
      %v2999 = vcombine.high %v2998, %v2998
      %v3001 = vunpack.c.l.s4 1966171168
      %v3002 = vunpack.c.0.s8 %v3001
      %v3003 = vlaneseq
      %v3004 = vshrl.u32 %v3003, 7
      %v3005 = vsub.s32 %v3002, %v3004
      %v3006 = vrot.slane %v2998, %v3005
      %v3008 = vunpack.c.l.s4 1966171168
      %v3009 = vunpack.c.0.s8 %v3008
      %v3010 = vlaneseq
      %v3011 = vshrl.u32 %v3010, 7
      %v3012 = vsub.s32 %v3009, %v3011
      %v3013 = vrot.slane %v2999, %v3012
      %v3014 = vcombine.high %v3006, %v3006
      %v3016 = vunpack.c.l.s4 1966171168
      %v3017 = vunpack.c.0.s8 %v3016
      %v3018 = vlaneseq
      %v3019 = vshrl.u32 %v3018, 7
      %v3020 = vsub.s32 %v3017, %v3019
      %v3021 = vrot.slane %v2931, %v3020
      %v3022 = vcombine.high %v3021, %v3021
      %v3024 = vunpack.c.l.s4 1966171168
      %v3025 = vunpack.c.0.s8 %v3024
      %v3026 = vlaneseq
      %v3027 = vshrl.u32 %v3026, 7
      %v3028 = vsub.s32 %v3025, %v3027
      %v3029 = vrot.slane %v3021, %v3028
      %v3031 = vunpack.c.l.s4 1966171168
      %v3032 = vunpack.c.0.s8 %v3031
      %v3033 = vlaneseq
      %v3034 = vshrl.u32 %v3033, 7
      %v3035 = vsub.s32 %v3032, %v3034
      %v3036 = vrot.slane %v3022, %v3035
      %v3037 = vcombine.high %v3029, %v3029
      %v3039 = vunpack.c.l.s4 1966171168
      %v3040 = vunpack.c.0.s8 %v3039
      %v3041 = vlaneseq
      %v3042 = vshrl.u32 %v3041, 7
      %v3043 = vsub.s32 %v3040, %v3042
      %v3044 = vrot.slane %v2932, %v3043
      %v3045 = vcombine.high %v3044, %v3044
      %v3047 = vunpack.c.l.s4 1966171168
      %v3048 = vunpack.c.0.s8 %v3047
      %v3049 = vlaneseq
      %v3050 = vshrl.u32 %v3049, 7
      %v3051 = vsub.s32 %v3048, %v3050
      %v3052 = vrot.slane %v3044, %v3051
      %v3054 = vunpack.c.l.s4 1966171168
      %v3055 = vunpack.c.0.s8 %v3054
      %v3056 = vlaneseq
      %v3057 = vshrl.u32 %v3056, 7
      %v3058 = vsub.s32 %v3055, %v3057
      %v3059 = vrot.slane %v3045, %v3058
      %v3060 = vcombine.high %v3052, %v3052
      %v3062 = vunpack.c.l.s4 1966171168
      %v3063 = vunpack.c.0.s8 %v3062
      %v3064 = vlaneseq
      %v3065 = vshrl.u32 %v3064, 7
      %v3066 = vsub.s32 %v3063, %v3065
      %v3067 = vrot.slane %v2933, %v3066
      %v3068 = vcombine.high %v3067, %v3067
      %v3070 = vunpack.c.l.s4 1966171168
      %v3071 = vunpack.c.0.s8 %v3070
      %v3072 = vlaneseq
      %v3073 = vshrl.u32 %v3072, 7
      %v3074 = vsub.s32 %v3071, %v3073
      %v3075 = vrot.slane %v3067, %v3074
      %v3077 = vunpack.c.l.s4 1966171168
      %v3078 = vunpack.c.0.s8 %v3077
      %v3079 = vlaneseq
      %v3080 = vshrl.u32 %v3079, 7
      %v3081 = vsub.s32 %v3078, %v3080
      %v3082 = vrot.slane %v3068, %v3081
      %v3083 = vcombine.high %v3075, %v3075
      %v3085 = vunpack.c.l.s4 1966171168
      %v3086 = vunpack.c.0.s8 %v3085
      %v3087 = vlaneseq
      %v3088 = vshrl.u32 %v3087, 7
      %v3089 = vsub.s32 %v3086, %v3088
      %v3090 = vrot.slane %v2934, %v3089
      %v3091 = vcombine.high %v3090, %v3090
      %v3093 = vunpack.c.l.s4 1966171168
      %v3094 = vunpack.c.0.s8 %v3093
      %v3095 = vlaneseq
      %v3096 = vshrl.u32 %v3095, 7
      %v3097 = vsub.s32 %v3094, %v3096
      %v3098 = vrot.slane %v3090, %v3097
      %v3100 = vunpack.c.l.s4 1966171168
      %v3101 = vunpack.c.0.s8 %v3100
      %v3102 = vlaneseq
      %v3103 = vshrl.u32 %v3102, 7
      %v3104 = vsub.s32 %v3101, %v3103
      %v3105 = vrot.slane %v3091, %v3104
      %v3106 = vcombine.high %v3098, %v3098
      %v3108 = vunpack.c.l.s4 1966171168
      %v3109 = vunpack.c.0.s8 %v3108
      %v3110 = vlaneseq
      %v3111 = vshrl.u32 %v3110, 7
      %v3112 = vsub.s32 %v3109, %v3111
      %v3113 = vrot.slane %v2935, %v3112
      %v3114 = vcombine.high %v3113, %v3113
      %v3116 = vunpack.c.l.s4 1966171168
      %v3117 = vunpack.c.0.s8 %v3116
      %v3118 = vlaneseq
      %v3119 = vshrl.u32 %v3118, 7
      %v3120 = vsub.s32 %v3117, %v3119
      %v3121 = vrot.slane %v3113, %v3120
      %v3123 = vunpack.c.l.s4 1966171168
      %v3124 = vunpack.c.0.s8 %v3123
      %v3125 = vlaneseq
      %v3126 = vshrl.u32 %v3125, 7
      %v3127 = vsub.s32 %v3124, %v3126
      %v3128 = vrot.slane %v3114, %v3127
      %v3129 = vcombine.high %v3121, %v3121
      %v3130 = vunpack.c.l.b16 %v2960
      %v3131 = vunpack.c.l.b16 %v2967
      %v3132 = vunpack.c.l.b16 %v2968
      %v3133 = vunpack.c.l.b16 %v2983
      %v3134 = vunpack.c.l.b16 %v2990
      %v3135 = vunpack.c.l.b16 %v2991
      %v3136 = vunpack.c.l.b16 %v3006
      %v3137 = vunpack.c.l.b16 %v3013
      %v3138 = vunpack.c.l.b16 %v3014
      %v3139 = vunpack.c.l.b16 %v3029
      %v3140 = vunpack.c.l.b16 %v3036
      %v3141 = vunpack.c.l.b16 %v3037
      %v3142 = vunpack.c.l.b16 %v3052
      %v3143 = vunpack.c.l.b16 %v3059
      %v3144 = vunpack.c.l.b16 %v3060
      %v3145 = vunpack.c.l.b16 %v3075
      %v3146 = vunpack.c.l.b16 %v3082
      %v3147 = vunpack.c.l.b16 %v3083
      %v3148 = vunpack.c.l.b16 %v3098
      %v3149 = vunpack.c.l.b16 %v3105
      %v3150 = vunpack.c.l.b16 %v3106
      %v3151 = vunpack.c.l.b16 %v3121
      %v3152 = vunpack.c.l.b16 %v3128
      %v3153 = vunpack.c.l.b16 %v3129
      %v3154 = vrot.slane %v3133, 7
      %v3155 = vsel %vm424, %v3154, %v3130
      %v3156 = vrot.slane %v3136, 6
      %v3157 = vsel %vm427, %v3156, %v3155
      %v3158 = vrot.slane %v3139, 5
      %v3159 = vsel %vm430, %v3158, %v3157
      %v3160 = vrot.slane %v3142, 4
      %v3161 = vsel %vm433, %v3160, %v3159
      %v3162 = vrot.slane %v3145, 3
      %v3163 = vsel %vm436, %v3162, %v3161
      %v3164 = vrot.slane %v3148, 2
      %v3165 = vsel %vm439, %v3164, %v3163
      %v3166 = vrot.slane %v3151, 1
      %v3167 = vsel %vm442, %v3166, %v3165
      %v3168 = vrot.slane %v3134, 7
      %v3169 = vsel %vm424, %v3168, %v3131
      %v3170 = vrot.slane %v3137, 6
      %v3171 = vsel %vm427, %v3170, %v3169
      %v3172 = vrot.slane %v3140, 5
      %v3173 = vsel %vm430, %v3172, %v3171
      %v3174 = vrot.slane %v3143, 4
      %v3175 = vsel %vm433, %v3174, %v3173
      %v3176 = vrot.slane %v3146, 3
      %v3177 = vsel %vm436, %v3176, %v3175
      %v3178 = vrot.slane %v3149, 2
      %v3179 = vsel %vm439, %v3178, %v3177
      %v3180 = vrot.slane %v3152, 1
      %v3181 = vsel %vm442, %v3180, %v3179
      %v3182 = vrot.slane %v3135, 7
      %v3183 = vsel %vm424, %v3182, %v3132
      %v3184 = vrot.slane %v3138, 6
      %v3185 = vsel %vm427, %v3184, %v3183
      %v3186 = vrot.slane %v3141, 5
      %v3187 = vsel %vm430, %v3186, %v3185
      %v3188 = vrot.slane %v3144, 4
      %v3189 = vsel %vm433, %v3188, %v3187
      %v3190 = vrot.slane %v3147, 3
      %v3191 = vsel %vm436, %v3190, %v3189
      %v3192 = vrot.slane %v3150, 2
      %v3193 = vsel %vm439, %v3192, %v3191
      %v3194 = vrot.slane %v3153, 1
      %v3195 = vsel %vm442, %v3194, %v3193
      %v3196 = vpack.c.b16 %v3167, %v3167
      %v3197 = vpack.c.b16 %v3181, %v3181
      %v3198 = vpack.c.b16 %v3195, %v3195
      %3199 = vrot.lane.b32.xlu0 %v3196, 90
      %v3200 = vpop.permute.xlu0 %3199
      %3201 = vrot.lane.b32.xlu0 %v3197, 90
      %v3202 = vpop.permute.xlu0 %3201
      %3203 = vrot.lane.b32.xlu0 %v3198, 90
      %v3204 = vpop.permute.xlu0 %3203
      %vm3205 = vcmask 736256
      %v3206 = vsel %vm3205, %v3200, %v3202
      %v3207 = vsel %vm3205, %v3202, %v3204
      %v3209 = vsel %vm484, %v2937, 0
      %v3212 = vsel %vm488, %v3206, 0
      %v3215 = vsel %vm488, %v3207, 0
      %v3218 = vsel %vm488, %v3204, 0
      %3220 = vmatprep.subr.bf16.mxu0 %v3215
      %3221 = vmatpush1.bf16.msra.mxu0 %v3212
      %3222 = vmatprep.subr.bf16.mxu0 0
      %3223 = vmatpush1.bf16.msra.mxu0 0
      %3224 = vmatprep.subr.bf16.mxu0 0
      %3225 = vmatpush1.bf16.msra.mxu0 0
      %3226 = vmatprep.subr.bf16.mxu0 0
      %3227 = vmatpush1.bf16.msra.mxu0 0
      %3228 = vmatprep.subr.bf16.mxu0 0
      %3229 = vmatpush1.bf16.msra.mxu0 0
      %3230 = vmatprep.subr.bf16.mxu0 0
      %3231 = vmatpush1.bf16.msra.mxu0 0
      %3232 = vmatprep.subr.bf16.mxu0 0
      %3233 = vmatpush1.bf16.msra.mxu0 0
      %3234 = vmatprep.subr.bf16.mxu0 0
      %3235 = vmatpush1.bf16.msra.mxu0 0
      %3236 = vmatprep.subr.bf16.mxu0 0
      %3237 = vmatpush1.bf16.msra.mxu0 0
      %3238 = vmatprep.subr.bf16.mxu0 0
      %3239 = vmatpush1.bf16.msra.mxu0 0
      %3240 = vmatprep.subr.bf16.mxu0 0
      %3241 = vmatpush1.bf16.msra.mxu0 0
      %3242 = vmatprep.subr.bf16.mxu0 0
      %3243 = vmatpush1.bf16.msra.mxu0 0
      %3244 = vmatprep.subr.bf16.mxu0 0
      %3245 = vmatpush1.bf16.msra.mxu0 0
      %3246 = vmatprep.subr.bf16.mxu0 0
      %3247 = vmatpush1.bf16.msra.mxu0 0
      %3248 = vmatprep.subr.bf16.mxu0 0
      %3249 = vmatpush1.bf16.msra.mxu0 0
      %3250 = vmatprep.subr.bf16.mxu0 0
      %3251 = vmatpush1.bf16.msra.mxu0 0
      %3252 = vmatprep.mubr.bf16.mxu0 0
      %3253 = vmatmul.mubr.bf16.gmra.mrb[0].mxu0 %v3209
      %v3254 = vpop.f32.mrb[0].mxu0
      %v3255 = vadd.f32 0.0, %v3254
      %v3256 = vpop.f32.mrb[0].mxu0
      %v3257 = vadd.f32 0.0, %v3256
      %v3258 = vpop.f32.mrb[0].mxu0
      %v3259 = vpop.f32.mrb[0].mxu0
      %3260 = vdwg.mxu0
      %3261 = vmatprep.subr.bf16.mxu0 0
      %3262 = vmatpush1.bf16.msra.mxu0 %v3218
      %3263 = vmatprep.subr.bf16.mxu0 0
      %3264 = vmatpush1.bf16.msra.mxu0 0
      %3265 = vmatprep.subr.bf16.mxu0 0
      %3266 = vmatpush1.bf16.msra.mxu0 0
      %3267 = vmatprep.subr.bf16.mxu0 0
      %3268 = vmatpush1.bf16.msra.mxu0 0
      %3269 = vmatprep.subr.bf16.mxu0 0
      %3270 = vmatpush1.bf16.msra.mxu0 0
      %3271 = vmatprep.subr.bf16.mxu0 0
      %3272 = vmatpush1.bf16.msra.mxu0 0
      %3273 = vmatprep.subr.bf16.mxu0 0
      %3274 = vmatpush1.bf16.msra.mxu0 0
      %3275 = vmatprep.subr.bf16.mxu0 0
      %3276 = vmatpush1.bf16.msra.mxu0 0
      %3277 = vmatprep.subr.bf16.mxu0 0
      %3278 = vmatpush1.bf16.msra.mxu0 0
      %3279 = vmatprep.subr.bf16.mxu0 0
      %3280 = vmatpush1.bf16.msra.mxu0 0
      %3281 = vmatprep.subr.bf16.mxu0 0
      %3282 = vmatpush1.bf16.msra.mxu0 0
      %3283 = vmatprep.subr.bf16.mxu0 0
      %3284 = vmatpush1.bf16.msra.mxu0 0
      %3285 = vmatprep.subr.bf16.mxu0 0
      %3286 = vmatpush1.bf16.msra.mxu0 0
      %3287 = vmatprep.subr.bf16.mxu0 0
      %3288 = vmatpush1.bf16.msra.mxu0 0
      %3289 = vmatprep.subr.bf16.mxu0 0
      %3290 = vmatpush1.bf16.msra.mxu0 0
      %3291 = vmatprep.subr.bf16.mxu0 0
      %3292 = vmatpush1.bf16.msra.mxu0 0
      %3293 = vmatprep.mubr.bf16.mxu0 0
      %3294 = vmatmul.mubr.bf16.gmra.mrb[0].mxu0 %v3209
      %v3295 = vpop.f32.mrb[0].mxu0
      %v3296 = vadd.f32 0.0, %v3295
      %v3297 = vpop.f32.mrb[0].mxu0
      %v3298 = vpop.f32.mrb[0].mxu0
      %v3299 = vpop.f32.mrb[0].mxu0
      %3300 = vdwg.mxu0
      %v3301 = vadd.f32 %v2925, %v3255
      %v3302 = vadd.f32 %v2926, %v3257
      %v3303 = vadd.f32 %v2927, %v3296
      %v3304 = vld [vmem:[%s2] sm:$0xf]
      %3306 = vset.pattern.permute.xlu0 0
      %3307 = vperm.xlu0 %3306, %v3304
      %v3308 = vpop.permute.xlu0 %3307
      %v3310 = vadd.f32 %v3301, %v3308
      %v3311 = vadd.f32 %v3302, %v3308
      %v3312 = vadd.f32 %v3303, %v3308
      %v3313 = vmax.f32 %v3310, 0.0
      %v3314 = vmax.f32 %v3311, 0.0
      %v3315 = vmax.f32 %v3312, 0.0
      %v3316 = vld [vmem:[%s3] sm:$0x7]
      %v3318 = vlaneseq
      %v3319 = vshrl.u32 %v3318, 7
      %v3320 = vsub.s32 0, %v3319
      %v3321 = vrot.slane %v3316, %v3320
      %v3322 = vlaneseq
      %v3323 = vshrl.u32 %v3322, 7
      %v3324 = vsub.s32 1, %v3323
      %v3325 = vrot.slane %v3316, %v3324
      %v3326 = vlaneseq
      %v3327 = vshrl.u32 %v3326, 7
      %v3328 = vsub.s32 2, %v3327
      %v3329 = vrot.slane %v3316, %v3328
      %v3333 = vmul.f32 %v3313, %v3321
      %v3334 = vmul.f32 %v3314, %v3325
      %v3335 = vmul.f32 %v3315, %v3329
      %vm3336 = vcmask 1040384
      %vm3337 = vsmask.f32 256
      %vm3338 = vmand %vm3336, %vm3337
      %vm3339 = vcmask 1041409
      %vm3340 = vsmask.f32 1280
      %vm3341 = vmand %vm3339, %vm3340
      %vm3342 = vmor %vm3341, %vm3338
      %vm3343 = vcmask 1042434
      %vm3344 = vsmask.f32 2304
      %vm3345 = vmand %vm3343, %vm3344
      %vm3346 = vmor %vm3345, %vm3342
      %v3347 = vld [vmem:[%s194] sm:$0x7]
      %v3348 = vsel %vm3346, 0, %v3347
      %3349 = vst [vmem:[%s194] sm:$0x7] %v3348
      %v3350 = vld [vmem:[%s194 + $0x3] sm:$0x7]
      %v3351 = vsel %vm3346, 0, %v3350
      %3352 = vst [vmem:[%s194 + $0x3] sm:$0x7] %v3351
      %v3353 = vld [vmem:[%s194 + $0x6] sm:$0x7]
      %v3354 = vsel %vm3346, 0, %v3353
      %3355 = vst [vmem:[%s194 + $0x6] sm:$0x7] %v3354
      %v3356 = vld [vmem:[%s194 + $0x9] sm:$0x7]
      %v3357 = vsel %vm3346, 0, %v3356
      %3358 = vst [vmem:[%s194 + $0x9] sm:$0x7] %v3357
      %v3359 = vpack.c.bf16 %v3333, %v3333
      %v3360 = vpack.c.bf16 %v3334, %v3334
      %v3361 = vpack.c.bf16 %v3335, %v3335
      %v3365 = vcombine.low %v3359, %v3360
      %v3367 = vunpack.c.l.s4 1966171168
      %v3368 = vunpack.c.0.s8 %v3367
      %v3369 = vlaneseq
      %v3370 = vshrl.u32 %v3369, 7
      %v3371 = vsub.s32 %v3368, %v3370
      %v3372 = vrot.slane %v3365, %v3371
      %v3374 = vunpack.c.l.s4 1966171168
      %v3375 = vunpack.c.0.s8 %v3374
      %v3376 = vlaneseq
      %v3377 = vshrl.u32 %v3376, 7
      %v3378 = vsub.s32 %v3375, %v3377
      %v3379 = vrot.slane %v3361, %v3378
      %v3380 = vcombine.low %v3372, %v3379
      %v3381 = vcombine.high %v3372, %v3379
      %v3383 = vunpack.c.l.s4 1966171168
      %v3384 = vunpack.c.0.s8 %v3383
      %v3385 = vlaneseq
      %v3386 = vshrl.u32 %v3385, 7
      %v3387 = vsub.s32 %v3384, %v3386
      %v3388 = vrot.slane %v3380, %v3387
      %v3390 = vunpack.c.l.s4 1966171168
      %v3391 = vunpack.c.0.s8 %v3390
      %v3392 = vlaneseq
      %v3393 = vshrl.u32 %v3392, 7
      %v3394 = vsub.s32 %v3391, %v3393
      %v3395 = vrot.slane %v3381, %v3394
      %v3396 = vunpack.i.l.s16 %v3388
      %v3397 = vunpack.i.h.s16 %v3388
      %v3398 = vunpack.i.l.s16 %v3395
      %v3399 = vunpack.i.h.s16 %v3395
      %v3400 = vpack.i.b16 %v3396, %v3396
      %v3401 = vpack.i.b16 %v3397, %v3397
      %v3402 = vpack.i.b16 %v3398, %v3398
      %v3403 = vpack.i.b16 %v3399, %v3399
      %3404 = vrot.lane.b32.xlu0 %v3400, 19
      %v3405 = vpop.permute.xlu0 %3404
      %3406 = vrot.lane.b32.xlu0 %v3401, 19
      %v3407 = vpop.permute.xlu0 %3406
      %3408 = vrot.lane.b32.xlu0 %v3402, 19
      %v3409 = vpop.permute.xlu0 %3408
      %3410 = vrot.lane.b32.xlu0 %v3403, 19
      %v3411 = vpop.permute.xlu0 %3410
      %v3412 = vrot.slane %v3405, 7
      %v3413 = vrot.slane %v3407, 7
      %v3414 = vrot.slane %v3409, 7
      %v3415 = vrot.slane %v3411, 7
      %vm3416 = vcmask 154624
      %v3417 = vsel %vm3416, %v3412, %v3405
      %v3418 = vsel %vm3416, %v3413, %v3407
      %v3419 = vsel %vm3416, %v3414, %v3409
      %v3420 = vsel %vm3416, %v3415, %v3411
      %vm3425 = vcmask 1040536
      %vm3426 = vmand %vm3425, %vm3337
      %vm3427 = vmor %vm3341, %vm3426
      %vm3428 = vcmask 411650
      %vm3429 = vmand %vm3428, %vm3344
      %vm3430 = vmor %vm3429, %vm3427
      %v3431 = vld [vmem:[%s194] sm:$0x7]
      %v3432 = vsel %vm3430, %v3417, %v3431
      %3433 = vst [vmem:[%s194] sm:$0x7] %v3432
      %v3434 = vld [vmem:[%s194 + $0x3] sm:$0x7]
      %v3435 = vsel %vm3430, %v3418, %v3434
      %3436 = vst [vmem:[%s194 + $0x3] sm:$0x7] %v3435
      %v3437 = vld [vmem:[%s194 + $0x6] sm:$0x7]
      %v3438 = vsel %vm3430, %v3419, %v3437
      %3439 = vst [vmem:[%s194 + $0x6] sm:$0x7] %v3438
      %v3440 = vld [vmem:[%s194 + $0x9] sm:$0x7]
      %v3441 = vsel %vm3430, %v3420, %v3440
      %3442 = vst [vmem:[%s194 + $0x9] sm:$0x7] %v3441
      %p3443 = scmp.lt.s32.totalorder %s15, 1
      %s3444 = scalar_select %p3443, %s15, 1
      %s3445 = smul.addr %s3444, 48
      %s3446 = sadd.s32 24, %s3445
      %s3447 = scalar_lea.vmem %s4, %s3446
      // Predicated region
      $region37: #{_lambda_.5} parent=35 // pred_check
        %p3448 = pneg %p122
      $region38: #{_lambda_.5} parent=35 // pred_check_branch
        %3450 = sbr.rel (%p3448) target = $region40
      $region39: #{_lambda_.5} parent=35 // pred_region
        _
      $region40: #{_lambda_.5} parent=35 // pred_fallthru
        _
    $region36: #{_lambda_.5} parent=5 // pred_fallthru
      _
    %p3451 = scmp.le.s32.totalorder 2, %s10
    // Predicated region
    $region41: #{_lambda_.5} parent=5 // pred_check
      %p3452 = pneg %p3451
    $region42: #{_lambda_.5} parent=5 // pred_check_branch
      %3454 = sbr.rel (%p3452) target = $region44
    $region43: #{_lambda_.5} parent=5 // pred_region
      %s3455 = ssub.s32 %s10, 2
      // Predicated region
      $region45: #{_lambda_.5} parent=43 // pred_check
        %p3456 = pneg %p128
      $region46: #{_lambda_.5} parent=43 // pred_check_branch
        %3458 = sbr.rel (%p3456) target = $region48
      $region47: #{_lambda_.5} parent=43 // pred_region
        %p3459 = scmp.lt.s32.totalorder %s16, 1
        %s3460 = scalar_select %p3459, %s16, 1
        %s3461 = smul.addr %s3460, 48
        %s3462 = sadd.s32 24, %s3461
        %s3463 = scalar_lea.vmem %s4, %s3462
      $region48: #{_lambda_.5} parent=43 // pred_fallthru
        _
    $region44: #{_lambda_.5} parent=5 // pred_fallthru
      _
  $region6: #{_lambda_.5} parent=0 // loop_footer
    %s14 = sadd.s32 1, %s10
  $region7: #{_lambda_.5} parent=0 // loop_footer_branch
    %9 = sbr.rel target = $region3
  $region8: #{_lambda_.5} parent=0 // loop_exit
    _

// kernel: _lambda_.6
$region0: #{_lambda_.6}
  #allocation0 [shape = 'u32[]', space=smem, size = 0x4, offset = 0x4, fixed_abs, tag = 'smem constant byte address 0x4 - core index']
  #allocation1 [shape = 'u32[144,128]{1,0:T(1,128)}', space=vmem, size = 0x12000, scoped, tag = 'internal scratch']
  %s0 = inlined_call_operand.vmem [shape: bf16[2,16,1,384], index: 0, kind: input, shape index: {}, may-alias: {0,4}]
  %s1 = inlined_call_operand.vmem [shape: bf16[9,4,12], index: 1, kind: input, shape index: {}]
  %s2 = inlined_call_operand.vmem [shape: f32[4,1], index: 2, kind: input, shape index: {}]
  %s3 = inlined_call_operand.vmem [shape: f32[1,288], index: 3, kind: input, shape index: {}]
  %s4 = inlined_call_operand.vmem [shape: bf16[2,16,1,384], index: 4, kind: output, shape index: {}, may-alias: {0,4}]
  %s5 = sld [smem:[#allocation0]]
  $region49: #{_lambda_.6} parent=0
    _
  %s7 = ssub.s32 1, %s5
  %s8 = scalar_select 0, %s7, %s5
  loop: start=0, step=1, limit=4
  $region2: #{_lambda_.6} parent=0 // loop_pre_header
    _
  $region3: #{_lambda_.6} parent=0 // loop_header
    %s10 = sphi 0, %s14
    %p11 = scmp.ge.s32.totalorder %s10, 4
    %s20 = sphi 0, %s22
    %s23 = sphi 0, %s20
    %s24 = sphi 0, %s23
    %s40 = sphi 0, %s24
    %s44 = sphi 0, %s44
    %s46 = sphi 0, %s44
    %s47 = sphi 0, %s46
    %s61 = sphi 0, %s47
    %s65 = sphi 0, %s65
    %s67 = sphi 0, %s65
    %s68 = sphi 0, %s67
    %s82 = sphi 0, %s68
    %s86 = sphi 0, %s86
    %s88 = sphi 0, %s86
    %s89 = sphi 0, %s88
    %s103 = sphi 0, %s89
    %s109 = sphi 0, %s111
    %s112 = sphi 0, %s109
    %s113 = sphi 0, %s112
    %s129 = sphi 0, %s113
  $region4: #{_lambda_.6} parent=0 // loop_header_branch
    %13 = sbr.rel (%p11) target = $region8
  $region5: #{_lambda_.6} parent=0 // loop_body
    %s15 = ssub.s32 %s10, 1
    %s16 = ssub.s32 %s10, 2
    %s17 = sadd.s32 %s10, 1
    %s18 = ssub.s32 %s10, %s17
    %p19 = scmp.eq.s32.totalorder %s18, 0
    %s21 = sadd.s32 %s20, 1
    %s22 = scalar_select %p19, %s20, %s21
    %p25 = pneg %p19
    %p26 = scmp.eq.s32.totalorder %s10, 1
    %p27 = por %p25, %p26
    %p28 = scmp.ne.s32.totalorder %s20, %s23
    %p29 = scmp.eq.s32.totalorder %s10, 0
    %p30 = por %p28, %p29
    %p31 = scmp.ne.s32.totalorder %s20, %s23
    %p32 = scmp.eq.s32.totalorder %s15, 1
    %p33 = por %p31, %p32
    %p34 = scmp.ne.s32.totalorder %s23, %s24
    %p35 = scmp.eq.s32.totalorder %s15, 0
    %p36 = por %p34, %p35
    %p37 = scmp.ne.s32.totalorder %s23, %s24
    %p38 = scmp.eq.s32.totalorder %s16, 1
    %p39 = por %p37, %p38
    %p41 = scmp.ne.s32.totalorder %s24, %s40
    %p42 = scmp.eq.s32.totalorder %s16, 0
    %p43 = por %p41, %p42
    %s45 = sadd.s32 %s44, 1
    %p48 = scmp.eq.s32.totalorder %s10, 1
    %p49 = scmp.ne.s32.totalorder %s44, %s46
    %p50 = scmp.eq.s32.totalorder %s10, 0
    %p51 = por %p49, %p50
    %p52 = scmp.ne.s32.totalorder %s44, %s46
    %p53 = scmp.eq.s32.totalorder %s15, 1
    %p54 = por %p52, %p53
    %p55 = scmp.ne.s32.totalorder %s46, %s47
    %p56 = scmp.eq.s32.totalorder %s15, 0
    %p57 = por %p55, %p56
    %p58 = scmp.ne.s32.totalorder %s46, %s47
    %p59 = scmp.eq.s32.totalorder %s16, 1
    %p60 = por %p58, %p59
    %p62 = scmp.ne.s32.totalorder %s47, %s61
    %p63 = scmp.eq.s32.totalorder %s16, 0
    %p64 = por %p62, %p63
    %s66 = sadd.s32 %s65, 1
    %p69 = scmp.eq.s32.totalorder %s10, 1
    %p70 = scmp.ne.s32.totalorder %s65, %s67
    %p71 = scmp.eq.s32.totalorder %s10, 0
    %p72 = por %p70, %p71
    %p73 = scmp.ne.s32.totalorder %s65, %s67
    %p74 = scmp.eq.s32.totalorder %s15, 1
    %p75 = por %p73, %p74
    %p76 = scmp.ne.s32.totalorder %s67, %s68
    %p77 = scmp.eq.s32.totalorder %s15, 0
    %p78 = por %p76, %p77
    %p79 = scmp.ne.s32.totalorder %s67, %s68
    %p80 = scmp.eq.s32.totalorder %s16, 1
    %p81 = por %p79, %p80
    %p83 = scmp.ne.s32.totalorder %s68, %s82
    %p84 = scmp.eq.s32.totalorder %s16, 0
    %p85 = por %p83, %p84
    %s87 = sadd.s32 %s86, 1
    %p90 = scmp.eq.s32.totalorder %s10, 1
    %p91 = scmp.ne.s32.totalorder %s86, %s88
    %p92 = scmp.eq.s32.totalorder %s10, 0
    %p93 = por %p91, %p92
    %p94 = scmp.ne.s32.totalorder %s86, %s88
    %p95 = scmp.eq.s32.totalorder %s15, 1
    %p96 = por %p94, %p95
    %p97 = scmp.ne.s32.totalorder %s88, %s89
    %p98 = scmp.eq.s32.totalorder %s15, 0
    %p99 = por %p97, %p98
    %p100 = scmp.ne.s32.totalorder %s88, %s89
    %p101 = scmp.eq.s32.totalorder %s16, 1
    %p102 = por %p100, %p101
    %p104 = scmp.ne.s32.totalorder %s89, %s103
    %p105 = scmp.eq.s32.totalorder %s16, 0
    %p106 = por %p104, %p105
    %s107 = ssub.s32 %s10, %s17
    %p108 = scmp.eq.s32.totalorder %s107, 0
    %s110 = sadd.s32 %s109, 1
    %s111 = scalar_select %p108, %s109, %s110
    %p114 = pneg %p108
    %p115 = scmp.eq.s32.totalorder %s10, 1
    %p116 = por %p114, %p115
    %p117 = scmp.ne.s32.totalorder %s109, %s112
    %p118 = scmp.eq.s32.totalorder %s10, 0
    %p119 = por %p117, %p118
    %p120 = scmp.ne.s32.totalorder %s109, %s112
    %p121 = scmp.eq.s32.totalorder %s15, 1
    %p122 = por %p120, %p121
    %p123 = scmp.ne.s32.totalorder %s112, %s113
    %p124 = scmp.eq.s32.totalorder %s15, 0
    %p125 = por %p123, %p124
    %p126 = scmp.ne.s32.totalorder %s112, %s113
    %p127 = scmp.eq.s32.totalorder %s16, 1
    %p128 = por %p126, %p127
    %p130 = scmp.ne.s32.totalorder %s113, %s129
    %p131 = scmp.eq.s32.totalorder %s16, 0
    %p132 = por %p130, %p131
    %p133 = scmp.le.s32.totalorder 1, %s10
    %p134 = scmp.lt.s32.totalorder %s10, 3
    %p135 = pnand %p133, %p134
    %p136 = pneg %p135
    // Predicated region
    $region9: #{_lambda_.6} parent=5 // pred_check
      _
    $region10: #{_lambda_.6} parent=5 // pred_check_branch
      %138 = sbr.rel (%p135) target = $region12
    $region11: #{_lambda_.6} parent=5 // pred_region
      %s139 = ssub.s32 %s10, 1
      // Predicated region
      $region13: #{_lambda_.6} parent=11 // pred_check
        %p140 = pneg %p57
      $region14: #{_lambda_.6} parent=11 // pred_check_branch
        %142 = sbr.rel (%p140) target = $region16
      $region15: #{_lambda_.6} parent=11 // pred_region
        _
      $region16: #{_lambda_.6} parent=11 // pred_fallthru
        _
      // Predicated region
      $region17: #{_lambda_.6} parent=11 // pred_check
        %p143 = pneg %p78
      $region18: #{_lambda_.6} parent=11 // pred_check_branch
        %145 = sbr.rel (%p143) target = $region20
      $region19: #{_lambda_.6} parent=11 // pred_region
        _
      $region20: #{_lambda_.6} parent=11 // pred_fallthru
        _
      // Predicated region
      $region21: #{_lambda_.6} parent=11 // pred_check
        %p146 = pneg %p99
      $region22: #{_lambda_.6} parent=11 // pred_check_branch
        %148 = sbr.rel (%p146) target = $region24
      $region23: #{_lambda_.6} parent=11 // pred_region
        _
      $region24: #{_lambda_.6} parent=11 // pred_fallthru
        _
    $region12: #{_lambda_.6} parent=5 // pred_fallthru
      _
    %p149 = scmp.lt.s32.totalorder %s10, 2
    // Predicated region
    $region25: #{_lambda_.6} parent=5 // pred_check
      %p150 = pneg %p149
    $region26: #{_lambda_.6} parent=5 // pred_check_branch
      %152 = sbr.rel (%p150) target = $region28
    $region27: #{_lambda_.6} parent=5 // pred_region
      // Predicated region
      $region29: #{_lambda_.6} parent=27 // pred_check
        %p153 = pneg %p30
      $region30: #{_lambda_.6} parent=27 // pred_check_branch
        %155 = sbr.rel (%p153) target = $region32
      $region31: #{_lambda_.6} parent=27 // pred_region
        %p156 = scmp.lt.s32.totalorder %s10, 1
        %s157 = scalar_select %p156, %s10, 1
        %s158 = smul.addr %s157, 48
        %s159 = scalar_lea.vmem %s0, %s158
      $region32: #{_lambda_.6} parent=27 // pred_fallthru
        _
    $region28: #{_lambda_.6} parent=5 // pred_fallthru
      _
    %p160 = scmp.le.s32.totalorder 1, %s10
    %p161 = scmp.lt.s32.totalorder %s10, 3
    %p162 = pnand %p160, %p161
    %p163 = pneg %p162
    // Predicated region
    $region33: #{_lambda_.6} parent=5 // pred_check
      _
    $region34: #{_lambda_.6} parent=5 // pred_check_branch
      %165 = sbr.rel (%p162) target = $region36
    $region35: #{_lambda_.6} parent=5 // pred_region
      %s166 = ssub.s32 %s10, 1
      %p167 = scmp.lt.s32.totalorder %s15, 1
      %s168 = scalar_select %p167, %s15, 1
      %s169 = smul.addr %s168, 48
      %s170 = scalar_lea.vmem %s0, %s169
      %p171 = pneg %p36
      %p172 = pneg %p33
      %p173 = pneg %p57
      %p174 = pneg %p54
      %p175 = pneg %p78
      %p176 = pneg %p75
      %p177 = pneg %p99
      %p178 = pneg %p96
      %p179 = pneg %p125
      %p180 = pneg %p122
      %p181 = scmp.lt.s32.totalorder %s15, 1
      %s182 = scalar_select %p181, %s15, 1
      %s183 = smul.addr %s182, 48
      %s184 = sadd.s32 36, %s183
      %s185 = scalar_lea.vmem %s4, %s184
      %p186 = scmp.lt.s32.totalorder %s15, 1
      %s187 = scalar_select %p186, %s15, 1
      %s188 = smul.addr %s187, 48
      %s189 = scalar_lea.vmem %s0, %s188
      %p190 = scmp.lt.s32.totalorder %s15, 1
      %s191 = scalar_select %p190, %s15, 1
      %s192 = smul.addr %s191, 48
      %s193 = sadd.s32 36, %s192
      %s194 = scalar_lea.vmem %s4, %s193
      %v196 = vld [vmem:[%s189] sm:$0x7]
      %v197 = vld [vmem:[%s189 + $0x3] sm:$0x7]
      %v198 = vld [vmem:[%s189 + $0x6] sm:$0x7]
      %v199 = vld [vmem:[%s189 + $0x9] sm:$0x7]
      %v200 = vld [vmem:[%s189 + $0xc] sm:$0x7]
      %v201 = vld [vmem:[%s189 + $0xf] sm:$0x7]
      %v202 = vld [vmem:[%s189 + $0x12] sm:$0x7]
      %v203 = vld [vmem:[%s189 + $0x15] sm:$0x7]
      %v204 = vld [vmem:[%s189 + $0x18] sm:$0x7]
      %v205 = vld [vmem:[%s189 + $0x1b] sm:$0x7]
      %v206 = vld [vmem:[%s189 + $0x1e] sm:$0x7]
      %v207 = vld [vmem:[%s189 + $0x21] sm:$0x7]
      %v208 = vld [vmem:[%s1] sm:$0x3]
      %s209 = scalar_lea.vmem %s1, 2
      %v210 = vld [vmem:[%s209] sm:$0x3]
      %v224 = vunpack.c.l.s4 1966171168
      %v225 = vunpack.c.0.s8 %v224
      %v226 = vlaneseq
      %v227 = vshrl.u32 %v226, 7
      %v228 = vsub.s32 %v225, %v227
      %v229 = vrot.slane %v196, %v228
      %v230 = vcombine.high %v229, %v229
      %v232 = vunpack.c.l.s4 1966171168
      %v233 = vunpack.c.0.s8 %v232
      %v234 = vlaneseq
      %v235 = vshrl.u32 %v234, 7
      %v236 = vsub.s32 %v233, %v235
      %v237 = vrot.slane %v229, %v236
      %v239 = vunpack.c.l.s4 1966171168
      %v240 = vunpack.c.0.s8 %v239
      %v241 = vlaneseq
      %v242 = vshrl.u32 %v241, 7
      %v243 = vsub.s32 %v240, %v242
      %v244 = vrot.slane %v230, %v243
      %v245 = vcombine.high %v237, %v237
      %v247 = vunpack.c.l.s4 1966171168
      %v248 = vunpack.c.0.s8 %v247
      %v249 = vlaneseq
      %v250 = vshrl.u32 %v249, 7
      %v251 = vsub.s32 %v248, %v250
      %v252 = vrot.slane %v197, %v251
      %v253 = vcombine.high %v252, %v252
      %v255 = vunpack.c.l.s4 1966171168
      %v256 = vunpack.c.0.s8 %v255
      %v257 = vlaneseq
      %v258 = vshrl.u32 %v257, 7
      %v259 = vsub.s32 %v256, %v258
      %v260 = vrot.slane %v252, %v259
      %v262 = vunpack.c.l.s4 1966171168
      %v263 = vunpack.c.0.s8 %v262
      %v264 = vlaneseq
      %v265 = vshrl.u32 %v264, 7
      %v266 = vsub.s32 %v263, %v265
      %v267 = vrot.slane %v253, %v266
      %v268 = vcombine.high %v260, %v260
      %v270 = vunpack.c.l.s4 1966171168
      %v271 = vunpack.c.0.s8 %v270
      %v272 = vlaneseq
      %v273 = vshrl.u32 %v272, 7
      %v274 = vsub.s32 %v271, %v273
      %v275 = vrot.slane %v198, %v274
      %v276 = vcombine.high %v275, %v275
      %v278 = vunpack.c.l.s4 1966171168
      %v279 = vunpack.c.0.s8 %v278
      %v280 = vlaneseq
      %v281 = vshrl.u32 %v280, 7
      %v282 = vsub.s32 %v279, %v281
      %v283 = vrot.slane %v275, %v282
      %v285 = vunpack.c.l.s4 1966171168
      %v286 = vunpack.c.0.s8 %v285
      %v287 = vlaneseq
      %v288 = vshrl.u32 %v287, 7
      %v289 = vsub.s32 %v286, %v288
      %v290 = vrot.slane %v276, %v289
      %v291 = vcombine.high %v283, %v283
      %v293 = vunpack.c.l.s4 1966171168
      %v294 = vunpack.c.0.s8 %v293
      %v295 = vlaneseq
      %v296 = vshrl.u32 %v295, 7
      %v297 = vsub.s32 %v294, %v296
      %v298 = vrot.slane %v199, %v297
      %v299 = vcombine.high %v298, %v298
      %v301 = vunpack.c.l.s4 1966171168
      %v302 = vunpack.c.0.s8 %v301
      %v303 = vlaneseq
      %v304 = vshrl.u32 %v303, 7
      %v305 = vsub.s32 %v302, %v304
      %v306 = vrot.slane %v298, %v305
      %v308 = vunpack.c.l.s4 1966171168
      %v309 = vunpack.c.0.s8 %v308
      %v310 = vlaneseq
      %v311 = vshrl.u32 %v310, 7
      %v312 = vsub.s32 %v309, %v311
      %v313 = vrot.slane %v299, %v312
      %v314 = vcombine.high %v306, %v306
      %v316 = vunpack.c.l.s4 1966171168
      %v317 = vunpack.c.0.s8 %v316
      %v318 = vlaneseq
      %v319 = vshrl.u32 %v318, 7
      %v320 = vsub.s32 %v317, %v319
      %v321 = vrot.slane %v200, %v320
      %v322 = vcombine.high %v321, %v321
      %v324 = vunpack.c.l.s4 1966171168
      %v325 = vunpack.c.0.s8 %v324
      %v326 = vlaneseq
      %v327 = vshrl.u32 %v326, 7
      %v328 = vsub.s32 %v325, %v327
      %v329 = vrot.slane %v321, %v328
      %v331 = vunpack.c.l.s4 1966171168
      %v332 = vunpack.c.0.s8 %v331
      %v333 = vlaneseq
      %v334 = vshrl.u32 %v333, 7
      %v335 = vsub.s32 %v332, %v334
      %v336 = vrot.slane %v322, %v335
      %v337 = vcombine.high %v329, %v329
      %v339 = vunpack.c.l.s4 1966171168
      %v340 = vunpack.c.0.s8 %v339
      %v341 = vlaneseq
      %v342 = vshrl.u32 %v341, 7
      %v343 = vsub.s32 %v340, %v342
      %v344 = vrot.slane %v201, %v343
      %v345 = vcombine.high %v344, %v344
      %v347 = vunpack.c.l.s4 1966171168
      %v348 = vunpack.c.0.s8 %v347
      %v349 = vlaneseq
      %v350 = vshrl.u32 %v349, 7
      %v351 = vsub.s32 %v348, %v350
      %v352 = vrot.slane %v344, %v351
      %v354 = vunpack.c.l.s4 1966171168
      %v355 = vunpack.c.0.s8 %v354
      %v356 = vlaneseq
      %v357 = vshrl.u32 %v356, 7
      %v358 = vsub.s32 %v355, %v357
      %v359 = vrot.slane %v345, %v358
      %v360 = vcombine.high %v352, %v352
      %v362 = vunpack.c.l.s4 1966171168
      %v363 = vunpack.c.0.s8 %v362
      %v364 = vlaneseq
      %v365 = vshrl.u32 %v364, 7
      %v366 = vsub.s32 %v363, %v365
      %v367 = vrot.slane %v202, %v366
      %v368 = vcombine.high %v367, %v367
      %v370 = vunpack.c.l.s4 1966171168
      %v371 = vunpack.c.0.s8 %v370
      %v372 = vlaneseq
      %v373 = vshrl.u32 %v372, 7
      %v374 = vsub.s32 %v371, %v373
      %v375 = vrot.slane %v367, %v374
      %v377 = vunpack.c.l.s4 1966171168
      %v378 = vunpack.c.0.s8 %v377
      %v379 = vlaneseq
      %v380 = vshrl.u32 %v379, 7
      %v381 = vsub.s32 %v378, %v380
      %v382 = vrot.slane %v368, %v381
      %v383 = vcombine.high %v375, %v375
      %v385 = vunpack.c.l.s4 1966171168
      %v386 = vunpack.c.0.s8 %v385
      %v387 = vlaneseq
      %v388 = vshrl.u32 %v387, 7
      %v389 = vsub.s32 %v386, %v388
      %v390 = vrot.slane %v203, %v389
      %v391 = vcombine.high %v390, %v390
      %v393 = vunpack.c.l.s4 1966171168
      %v394 = vunpack.c.0.s8 %v393
      %v395 = vlaneseq
      %v396 = vshrl.u32 %v395, 7
      %v397 = vsub.s32 %v394, %v396
      %v398 = vrot.slane %v390, %v397
      %v400 = vunpack.c.l.s4 1966171168
      %v401 = vunpack.c.0.s8 %v400
      %v402 = vlaneseq
      %v403 = vshrl.u32 %v402, 7
      %v404 = vsub.s32 %v401, %v403
      %v405 = vrot.slane %v391, %v404
      %v406 = vcombine.high %v398, %v398
      %v408 = vunpack.c.l.s4 1966171168
      %v409 = vunpack.c.0.s8 %v408
      %v410 = vlaneseq
      %v411 = vshrl.u32 %v410, 7
      %v412 = vsub.s32 %v409, %v411
      %v413 = vrot.slane %v204, %v412
      %v414 = vcombine.high %v413, %v413
      %v416 = vunpack.c.l.s4 1966171168
      %v417 = vunpack.c.0.s8 %v416
      %v418 = vlaneseq
      %v419 = vshrl.u32 %v418, 7
      %v420 = vsub.s32 %v417, %v419
      %v421 = vrot.slane %v413, %v420
      %v423 = vunpack.c.l.s4 1966171168
      %v424 = vunpack.c.0.s8 %v423
      %v425 = vlaneseq
      %v426 = vshrl.u32 %v425, 7
      %v427 = vsub.s32 %v424, %v426
      %v428 = vrot.slane %v414, %v427
      %v429 = vcombine.high %v421, %v421
      %v431 = vunpack.c.l.s4 1966171168
      %v432 = vunpack.c.0.s8 %v431
      %v433 = vlaneseq
      %v434 = vshrl.u32 %v433, 7
      %v435 = vsub.s32 %v432, %v434
      %v436 = vrot.slane %v205, %v435
      %v437 = vcombine.high %v436, %v436
      %v439 = vunpack.c.l.s4 1966171168
      %v440 = vunpack.c.0.s8 %v439
      %v441 = vlaneseq
      %v442 = vshrl.u32 %v441, 7
      %v443 = vsub.s32 %v440, %v442
      %v444 = vrot.slane %v436, %v443
      %v446 = vunpack.c.l.s4 1966171168
      %v447 = vunpack.c.0.s8 %v446
      %v448 = vlaneseq
      %v449 = vshrl.u32 %v448, 7
      %v450 = vsub.s32 %v447, %v449
      %v451 = vrot.slane %v437, %v450
      %v452 = vcombine.high %v444, %v444
      %v454 = vunpack.c.l.s4 1966171168
      %v455 = vunpack.c.0.s8 %v454
      %v456 = vlaneseq
      %v457 = vshrl.u32 %v456, 7
      %v458 = vsub.s32 %v455, %v457
      %v459 = vrot.slane %v206, %v458
      %v460 = vcombine.high %v459, %v459
      %v462 = vunpack.c.l.s4 1966171168
      %v463 = vunpack.c.0.s8 %v462
      %v464 = vlaneseq
      %v465 = vshrl.u32 %v464, 7
      %v466 = vsub.s32 %v463, %v465
      %v467 = vrot.slane %v459, %v466
      %v469 = vunpack.c.l.s4 1966171168
      %v470 = vunpack.c.0.s8 %v469
      %v471 = vlaneseq
      %v472 = vshrl.u32 %v471, 7
      %v473 = vsub.s32 %v470, %v472
      %v474 = vrot.slane %v460, %v473
      %v475 = vcombine.high %v467, %v467
      %v477 = vunpack.c.l.s4 1966171168
      %v478 = vunpack.c.0.s8 %v477
      %v479 = vlaneseq
      %v480 = vshrl.u32 %v479, 7
      %v481 = vsub.s32 %v478, %v480
      %v482 = vrot.slane %v207, %v481
      %v483 = vcombine.high %v482, %v482
      %v485 = vunpack.c.l.s4 1966171168
      %v486 = vunpack.c.0.s8 %v485
      %v487 = vlaneseq
      %v488 = vshrl.u32 %v487, 7
      %v489 = vsub.s32 %v486, %v488
      %v490 = vrot.slane %v482, %v489
      %v492 = vunpack.c.l.s4 1966171168
      %v493 = vunpack.c.0.s8 %v492
      %v494 = vlaneseq
      %v495 = vshrl.u32 %v494, 7
      %v496 = vsub.s32 %v493, %v495
      %v497 = vrot.slane %v483, %v496
      %v498 = vcombine.high %v490, %v490
      %v499 = vunpack.c.l.b16 %v237
      %v500 = vunpack.c.l.b16 %v244
      %v501 = vunpack.c.l.b16 %v245
      %v502 = vunpack.c.l.b16 %v260
      %v503 = vunpack.c.l.b16 %v267
      %v504 = vunpack.c.l.b16 %v268
      %v505 = vunpack.c.l.b16 %v283
      %v506 = vunpack.c.l.b16 %v290
      %v507 = vunpack.c.l.b16 %v291
      %v508 = vunpack.c.l.b16 %v306
      %v509 = vunpack.c.l.b16 %v313
      %v510 = vunpack.c.l.b16 %v314
      %v511 = vunpack.c.l.b16 %v329
      %v512 = vunpack.c.l.b16 %v336
      %v513 = vunpack.c.l.b16 %v337
      %v514 = vunpack.c.l.b16 %v352
      %v515 = vunpack.c.l.b16 %v359
      %v516 = vunpack.c.l.b16 %v360
      %v517 = vunpack.c.l.b16 %v375
      %v518 = vunpack.c.l.b16 %v382
      %v519 = vunpack.c.l.b16 %v383
      %v520 = vunpack.c.l.b16 %v398
      %v521 = vunpack.c.l.b16 %v405
      %v522 = vunpack.c.l.b16 %v406
      %v523 = vunpack.c.l.b16 %v421
      %v524 = vunpack.c.l.b16 %v428
      %v525 = vunpack.c.l.b16 %v429
      %v526 = vunpack.c.l.b16 %v444
      %v527 = vunpack.c.l.b16 %v451
      %v528 = vunpack.c.l.b16 %v452
      %v529 = vunpack.c.l.b16 %v467
      %v530 = vunpack.c.l.b16 %v474
      %v531 = vunpack.c.l.b16 %v475
      %v532 = vunpack.c.l.b16 %v490
      %v533 = vunpack.c.l.b16 %v497
      %v534 = vunpack.c.l.b16 %v498
      %v535 = vrot.slane %v502, 7
      %vm536 = vcmask 1041409
      %v537 = vsel %vm536, %v535, %v499
      %v538 = vrot.slane %v505, 6
      %vm539 = vcmask 1042434
      %v540 = vsel %vm539, %v538, %v537
      %v541 = vrot.slane %v508, 5
      %vm542 = vcmask 1043459
      %v543 = vsel %vm542, %v541, %v540
      %v544 = vrot.slane %v511, 4
      %vm545 = vcmask 1044484
      %v546 = vsel %vm545, %v544, %v543
      %v547 = vrot.slane %v514, 3
      %vm548 = vcmask 1045509
      %v549 = vsel %vm548, %v547, %v546
      %v550 = vrot.slane %v517, 2
      %vm551 = vcmask 1046534
      %v552 = vsel %vm551, %v550, %v549
      %v553 = vrot.slane %v520, 1
      %vm554 = vcmask 1047559
      %v555 = vsel %vm554, %v553, %v552
      %v556 = vrot.slane %v503, 7
      %v557 = vsel %vm536, %v556, %v500
      %v558 = vrot.slane %v506, 6
      %v559 = vsel %vm539, %v558, %v557
      %v560 = vrot.slane %v509, 5
      %v561 = vsel %vm542, %v560, %v559
      %v562 = vrot.slane %v512, 4
      %v563 = vsel %vm545, %v562, %v561
      %v564 = vrot.slane %v515, 3
      %v565 = vsel %vm548, %v564, %v563
      %v566 = vrot.slane %v518, 2
      %v567 = vsel %vm551, %v566, %v565
      %v568 = vrot.slane %v521, 1
      %v569 = vsel %vm554, %v568, %v567
      %v570 = vrot.slane %v504, 7
      %v571 = vsel %vm536, %v570, %v501
      %v572 = vrot.slane %v507, 6
      %v573 = vsel %vm539, %v572, %v571
      %v574 = vrot.slane %v510, 5
      %v575 = vsel %vm542, %v574, %v573
      %v576 = vrot.slane %v513, 4
      %v577 = vsel %vm545, %v576, %v575
      %v578 = vrot.slane %v516, 3
      %v579 = vsel %vm548, %v578, %v577
      %v580 = vrot.slane %v519, 2
      %v581 = vsel %vm551, %v580, %v579
      %v582 = vrot.slane %v522, 1
      %v583 = vsel %vm554, %v582, %v581
      %v584 = vrot.slane %v526, 7
      %v585 = vsel %vm536, %v584, %v523
      %v586 = vrot.slane %v529, 6
      %v587 = vsel %vm539, %v586, %v585
      %v588 = vrot.slane %v532, 5
      %v589 = vsel %vm542, %v588, %v587
      %v590 = vrot.slane %v527, 7
      %v591 = vsel %vm536, %v590, %v524
      %v592 = vrot.slane %v530, 6
      %v593 = vsel %vm539, %v592, %v591
      %v594 = vrot.slane %v533, 5
      %v595 = vsel %vm542, %v594, %v593
      %v596 = vrot.slane %v528, 7
      %v597 = vsel %vm536, %v596, %v525
      %v598 = vrot.slane %v531, 6
      %v599 = vsel %vm539, %v598, %v597
      %v600 = vrot.slane %v534, 5
      %v601 = vsel %vm542, %v600, %v599
      %v602 = vpack.c.b16 %v589, %v555
      %v603 = vpack.c.b16 %v595, %v569
      %v604 = vpack.c.b16 %v601, %v583
      %605 = vrot.lane.b32.xlu0 %v602, 127
      %v606 = vpop.permute.xlu0 %605
      %607 = vrot.lane.b32.xlu0 %v603, 127
      %v608 = vpop.permute.xlu0 %607
      %609 = vrot.lane.b32.xlu0 %v604, 127
      %v610 = vpop.permute.xlu0 %609
      %vm611 = vcmask 1039360
      %v612 = vsel %vm611, %v606, %v608
      %v613 = vsel %vm611, %v608, %v610
      %vm614 = vcmask 97280
      %v616 = vsel %vm614, %v210, 0
      %vm618 = vcmask 1045504
      %v620 = vsel %vm618, %v612, 0
      %v623 = vsel %vm618, %v613, 0
      %v626 = vsel %vm618, %v610, 0
      %628 = vmatprep.subr.bf16.mxu0 %v623
      %629 = vmatpush1.bf16.msra.mxu0 %v620
      %630 = vmatprep.subr.bf16.mxu0 0
      %631 = vmatpush1.bf16.msra.mxu0 0
      %632 = vmatprep.subr.bf16.mxu0 0
      %633 = vmatpush1.bf16.msra.mxu0 0
      %634 = vmatprep.subr.bf16.mxu0 0
      %635 = vmatpush1.bf16.msra.mxu0 0
      %636 = vmatprep.subr.bf16.mxu0 0
      %637 = vmatpush1.bf16.msra.mxu0 0
      %638 = vmatprep.subr.bf16.mxu0 0
      %639 = vmatpush1.bf16.msra.mxu0 0
      %640 = vmatprep.subr.bf16.mxu0 0
      %641 = vmatpush1.bf16.msra.mxu0 0
      %642 = vmatprep.subr.bf16.mxu0 0
      %643 = vmatpush1.bf16.msra.mxu0 0
      %644 = vmatprep.subr.bf16.mxu0 0
      %645 = vmatpush1.bf16.msra.mxu0 0
      %646 = vmatprep.subr.bf16.mxu0 0
      %647 = vmatpush1.bf16.msra.mxu0 0
      %648 = vmatprep.subr.bf16.mxu0 0
      %649 = vmatpush1.bf16.msra.mxu0 0
      %650 = vmatprep.subr.bf16.mxu0 0
      %651 = vmatpush1.bf16.msra.mxu0 0
      %652 = vmatprep.subr.bf16.mxu0 0
      %653 = vmatpush1.bf16.msra.mxu0 0
      %654 = vmatprep.subr.bf16.mxu0 0
      %655 = vmatpush1.bf16.msra.mxu0 0
      %656 = vmatprep.subr.bf16.mxu0 0
      %657 = vmatpush1.bf16.msra.mxu0 0
      %658 = vmatprep.subr.bf16.mxu0 0
      %659 = vmatpush1.bf16.msra.mxu0 0
      %660 = vmatprep.mubr.bf16.mxu0 0
      %661 = vmatmul.mubr.bf16.gmra.mrb[0].mxu0 %v616
      %v662 = vpop.f32.mrb[0].mxu0
      %v663 = vadd.f32 0.0, %v662
      %v664 = vpop.f32.mrb[0].mxu0
      %v665 = vadd.f32 0.0, %v664
      %v666 = vpop.f32.mrb[0].mxu0
      %v667 = vpop.f32.mrb[0].mxu0
      %668 = vdwg.mxu0
      %669 = vmatprep.subr.bf16.mxu0 0
      %670 = vmatpush1.bf16.msra.mxu0 %v626
      %671 = vmatprep.subr.bf16.mxu0 0
      %672 = vmatpush1.bf16.msra.mxu0 0
      %673 = vmatprep.subr.bf16.mxu0 0
      %674 = vmatpush1.bf16.msra.mxu0 0
      %675 = vmatprep.subr.bf16.mxu0 0
      %676 = vmatpush1.bf16.msra.mxu0 0
      %677 = vmatprep.subr.bf16.mxu0 0
      %678 = vmatpush1.bf16.msra.mxu0 0
      %679 = vmatprep.subr.bf16.mxu0 0
      %680 = vmatpush1.bf16.msra.mxu0 0
      %681 = vmatprep.subr.bf16.mxu0 0
      %682 = vmatpush1.bf16.msra.mxu0 0
      %683 = vmatprep.subr.bf16.mxu0 0
      %684 = vmatpush1.bf16.msra.mxu0 0
      %685 = vmatprep.subr.bf16.mxu0 0
      %686 = vmatpush1.bf16.msra.mxu0 0
      %687 = vmatprep.subr.bf16.mxu0 0
      %688 = vmatpush1.bf16.msra.mxu0 0
      %689 = vmatprep.subr.bf16.mxu0 0
      %690 = vmatpush1.bf16.msra.mxu0 0
      %691 = vmatprep.subr.bf16.mxu0 0
      %692 = vmatpush1.bf16.msra.mxu0 0
      %693 = vmatprep.subr.bf16.mxu0 0
      %694 = vmatpush1.bf16.msra.mxu0 0
      %695 = vmatprep.subr.bf16.mxu0 0
      %696 = vmatpush1.bf16.msra.mxu0 0
      %697 = vmatprep.subr.bf16.mxu0 0
      %698 = vmatpush1.bf16.msra.mxu0 0
      %699 = vmatprep.subr.bf16.mxu0 0
      %700 = vmatpush1.bf16.msra.mxu0 0
      %701 = vmatprep.mubr.bf16.mxu0 0
      %702 = vmatmul.mubr.bf16.gmra.mrb[0].mxu0 %v616
      %v703 = vpop.f32.mrb[0].mxu0
      %v704 = vadd.f32 0.0, %v703
      %v705 = vpop.f32.mrb[0].mxu0
      %v706 = vpop.f32.mrb[0].mxu0
      %v707 = vpop.f32.mrb[0].mxu0
      %708 = vdwg.mxu0
      %v710 = vsel %vm614, %v208, 0
      %v713 = vsel %vm618, %v602, 0
      %v716 = vsel %vm618, %v603, 0
      %v719 = vsel %vm618, %v604, 0
      %721 = vmatprep.subr.bf16.mxu0 %v716
      %722 = vmatpush1.bf16.msra.mxu0 %v713
      %723 = vmatprep.subr.bf16.mxu0 0
      %724 = vmatpush1.bf16.msra.mxu0 0
      %725 = vmatprep.subr.bf16.mxu0 0
      %726 = vmatpush1.bf16.msra.mxu0 0
      %727 = vmatprep.subr.bf16.mxu0 0
      %728 = vmatpush1.bf16.msra.mxu0 0
      %729 = vmatprep.subr.bf16.mxu0 0
      %730 = vmatpush1.bf16.msra.mxu0 0
      %731 = vmatprep.subr.bf16.mxu0 0
      %732 = vmatpush1.bf16.msra.mxu0 0
      %733 = vmatprep.subr.bf16.mxu0 0
      %734 = vmatpush1.bf16.msra.mxu0 0
      %735 = vmatprep.subr.bf16.mxu0 0
      %736 = vmatpush1.bf16.msra.mxu0 0
      %737 = vmatprep.subr.bf16.mxu0 0
      %738 = vmatpush1.bf16.msra.mxu0 0
      %739 = vmatprep.subr.bf16.mxu0 0
      %740 = vmatpush1.bf16.msra.mxu0 0
      %741 = vmatprep.subr.bf16.mxu0 0
      %742 = vmatpush1.bf16.msra.mxu0 0
      %743 = vmatprep.subr.bf16.mxu0 0
      %744 = vmatpush1.bf16.msra.mxu0 0
      %745 = vmatprep.subr.bf16.mxu0 0
      %746 = vmatpush1.bf16.msra.mxu0 0
      %747 = vmatprep.subr.bf16.mxu0 0
      %748 = vmatpush1.bf16.msra.mxu0 0
      %749 = vmatprep.subr.bf16.mxu0 0
      %750 = vmatpush1.bf16.msra.mxu0 0
      %751 = vmatprep.subr.bf16.mxu0 0
      %752 = vmatpush1.bf16.msra.mxu0 0
      %753 = vmatprep.mubr.bf16.mxu0 0
      %754 = vmatmul.mubr.bf16.gmra.mrb[0].mxu0 %v710
      %v755 = vpop.f32.mrb[0].mxu0
      %v756 = vadd.f32 %v663, %v755
      %v757 = vpop.f32.mrb[0].mxu0
      %v758 = vadd.f32 %v665, %v757
      %v759 = vpop.f32.mrb[0].mxu0
      %v760 = vpop.f32.mrb[0].mxu0
      %761 = vdwg.mxu0
      %762 = vmatprep.subr.bf16.mxu0 0
      %763 = vmatpush1.bf16.msra.mxu0 %v719
      %764 = vmatprep.subr.bf16.mxu0 0
      %765 = vmatpush1.bf16.msra.mxu0 0
      %766 = vmatprep.subr.bf16.mxu0 0
      %767 = vmatpush1.bf16.msra.mxu0 0
      %768 = vmatprep.subr.bf16.mxu0 0
      %769 = vmatpush1.bf16.msra.mxu0 0
      %770 = vmatprep.subr.bf16.mxu0 0
      %771 = vmatpush1.bf16.msra.mxu0 0
      %772 = vmatprep.subr.bf16.mxu0 0
      %773 = vmatpush1.bf16.msra.mxu0 0
      %774 = vmatprep.subr.bf16.mxu0 0
      %775 = vmatpush1.bf16.msra.mxu0 0
      %776 = vmatprep.subr.bf16.mxu0 0
      %777 = vmatpush1.bf16.msra.mxu0 0
      %778 = vmatprep.subr.bf16.mxu0 0
      %779 = vmatpush1.bf16.msra.mxu0 0
      %780 = vmatprep.subr.bf16.mxu0 0
      %781 = vmatpush1.bf16.msra.mxu0 0
      %782 = vmatprep.subr.bf16.mxu0 0
      %783 = vmatpush1.bf16.msra.mxu0 0
      %784 = vmatprep.subr.bf16.mxu0 0
      %785 = vmatpush1.bf16.msra.mxu0 0
      %786 = vmatprep.subr.bf16.mxu0 0
      %787 = vmatpush1.bf16.msra.mxu0 0
      %788 = vmatprep.subr.bf16.mxu0 0
      %789 = vmatpush1.bf16.msra.mxu0 0
      %790 = vmatprep.subr.bf16.mxu0 0
      %791 = vmatpush1.bf16.msra.mxu0 0
      %792 = vmatprep.subr.bf16.mxu0 0
      %793 = vmatpush1.bf16.msra.mxu0 0
      %794 = vmatprep.mubr.bf16.mxu0 0
      %795 = vmatmul.mubr.bf16.gmra.mrb[0].mxu0 %v710
      %v796 = vpop.f32.mrb[0].mxu0
      %v797 = vadd.f32 %v704, %v796
      %v798 = vpop.f32.mrb[0].mxu0
      %v799 = vpop.f32.mrb[0].mxu0
      %v800 = vpop.f32.mrb[0].mxu0
      %801 = vdwg.mxu0
      %v802 = vld [vmem:[%s189] sm:$0x7]
      %v803 = vld [vmem:[%s189 + $0x3] sm:$0x7]
      %v804 = vld [vmem:[%s189 + $0x6] sm:$0x7]
      %v805 = vld [vmem:[%s189 + $0x9] sm:$0x7]
      %v806 = vld [vmem:[%s189 + $0xc] sm:$0x7]
      %v807 = vld [vmem:[%s189 + $0xf] sm:$0x7]
      %v808 = vld [vmem:[%s189 + $0x12] sm:$0x7]
      %v809 = vld [vmem:[%s189 + $0x15] sm:$0x7]
      %v810 = vld [vmem:[%s189 + $0x18] sm:$0x7]
      %v811 = vld [vmem:[%s189 + $0x1b] sm:$0x7]
      %v812 = vld [vmem:[%s189 + $0x1e] sm:$0x7]
      %v813 = vld [vmem:[%s189 + $0x21] sm:$0x7]
      %s814 = scalar_lea.vmem %s1, 4
      %v815 = vld [vmem:[%s814] sm:$0x3]
      %v829 = vunpack.c.l.s4 1966171168
      %v830 = vunpack.c.0.s8 %v829
      %v831 = vlaneseq
      %v832 = vshrl.u32 %v831, 7
      %v833 = vsub.s32 %v830, %v832
      %v834 = vrot.slane %v802, %v833
      %v835 = vcombine.high %v834, %v834
      %v837 = vunpack.c.l.s4 1966171168
      %v838 = vunpack.c.0.s8 %v837
      %v839 = vlaneseq
      %v840 = vshrl.u32 %v839, 7
      %v841 = vsub.s32 %v838, %v840
      %v842 = vrot.slane %v834, %v841
      %v844 = vunpack.c.l.s4 1966171168
      %v845 = vunpack.c.0.s8 %v844
      %v846 = vlaneseq
      %v847 = vshrl.u32 %v846, 7
      %v848 = vsub.s32 %v845, %v847
      %v849 = vrot.slane %v835, %v848
      %v850 = vcombine.high %v842, %v842
      %v852 = vunpack.c.l.s4 1966171168
      %v853 = vunpack.c.0.s8 %v852
      %v854 = vlaneseq
      %v855 = vshrl.u32 %v854, 7
      %v856 = vsub.s32 %v853, %v855
      %v857 = vrot.slane %v803, %v856
      %v858 = vcombine.high %v857, %v857
      %v860 = vunpack.c.l.s4 1966171168
      %v861 = vunpack.c.0.s8 %v860
      %v862 = vlaneseq
      %v863 = vshrl.u32 %v862, 7
      %v864 = vsub.s32 %v861, %v863
      %v865 = vrot.slane %v857, %v864
      %v867 = vunpack.c.l.s4 1966171168
      %v868 = vunpack.c.0.s8 %v867
      %v869 = vlaneseq
      %v870 = vshrl.u32 %v869, 7
      %v871 = vsub.s32 %v868, %v870
      %v872 = vrot.slane %v858, %v871
      %v873 = vcombine.high %v865, %v865
      %v875 = vunpack.c.l.s4 1966171168
      %v876 = vunpack.c.0.s8 %v875
      %v877 = vlaneseq
      %v878 = vshrl.u32 %v877, 7
      %v879 = vsub.s32 %v876, %v878
      %v880 = vrot.slane %v804, %v879
      %v881 = vcombine.high %v880, %v880
      %v883 = vunpack.c.l.s4 1966171168
      %v884 = vunpack.c.0.s8 %v883
      %v885 = vlaneseq
      %v886 = vshrl.u32 %v885, 7
      %v887 = vsub.s32 %v884, %v886
      %v888 = vrot.slane %v880, %v887
      %v890 = vunpack.c.l.s4 1966171168
      %v891 = vunpack.c.0.s8 %v890
      %v892 = vlaneseq
      %v893 = vshrl.u32 %v892, 7
      %v894 = vsub.s32 %v891, %v893
      %v895 = vrot.slane %v881, %v894
      %v896 = vcombine.high %v888, %v888
      %v898 = vunpack.c.l.s4 1966171168
      %v899 = vunpack.c.0.s8 %v898
      %v900 = vlaneseq
      %v901 = vshrl.u32 %v900, 7
      %v902 = vsub.s32 %v899, %v901
      %v903 = vrot.slane %v805, %v902
      %v904 = vcombine.high %v903, %v903
      %v906 = vunpack.c.l.s4 1966171168
      %v907 = vunpack.c.0.s8 %v906
      %v908 = vlaneseq
      %v909 = vshrl.u32 %v908, 7
      %v910 = vsub.s32 %v907, %v909
      %v911 = vrot.slane %v903, %v910
      %v913 = vunpack.c.l.s4 1966171168
      %v914 = vunpack.c.0.s8 %v913
      %v915 = vlaneseq
      %v916 = vshrl.u32 %v915, 7
      %v917 = vsub.s32 %v914, %v916
      %v918 = vrot.slane %v904, %v917
      %v919 = vcombine.high %v911, %v911
      %v921 = vunpack.c.l.s4 1966171168
      %v922 = vunpack.c.0.s8 %v921
      %v923 = vlaneseq
      %v924 = vshrl.u32 %v923, 7
      %v925 = vsub.s32 %v922, %v924
      %v926 = vrot.slane %v806, %v925
      %v927 = vcombine.high %v926, %v926
      %v929 = vunpack.c.l.s4 1966171168
      %v930 = vunpack.c.0.s8 %v929
      %v931 = vlaneseq
      %v932 = vshrl.u32 %v931, 7
      %v933 = vsub.s32 %v930, %v932
      %v934 = vrot.slane %v926, %v933
      %v936 = vunpack.c.l.s4 1966171168
      %v937 = vunpack.c.0.s8 %v936
      %v938 = vlaneseq
      %v939 = vshrl.u32 %v938, 7
      %v940 = vsub.s32 %v937, %v939
      %v941 = vrot.slane %v927, %v940
      %v942 = vcombine.high %v934, %v934
      %v944 = vunpack.c.l.s4 1966171168
      %v945 = vunpack.c.0.s8 %v944
      %v946 = vlaneseq
      %v947 = vshrl.u32 %v946, 7
      %v948 = vsub.s32 %v945, %v947
      %v949 = vrot.slane %v807, %v948
      %v950 = vcombine.high %v949, %v949
      %v952 = vunpack.c.l.s4 1966171168
      %v953 = vunpack.c.0.s8 %v952
      %v954 = vlaneseq
      %v955 = vshrl.u32 %v954, 7
      %v956 = vsub.s32 %v953, %v955
      %v957 = vrot.slane %v949, %v956
      %v959 = vunpack.c.l.s4 1966171168
      %v960 = vunpack.c.0.s8 %v959
      %v961 = vlaneseq
      %v962 = vshrl.u32 %v961, 7
      %v963 = vsub.s32 %v960, %v962
      %v964 = vrot.slane %v950, %v963
      %v965 = vcombine.high %v957, %v957
      %v967 = vunpack.c.l.s4 1966171168
      %v968 = vunpack.c.0.s8 %v967
      %v969 = vlaneseq
      %v970 = vshrl.u32 %v969, 7
      %v971 = vsub.s32 %v968, %v970
      %v972 = vrot.slane %v808, %v971
      %v973 = vcombine.high %v972, %v972
      %v975 = vunpack.c.l.s4 1966171168
      %v976 = vunpack.c.0.s8 %v975
      %v977 = vlaneseq
      %v978 = vshrl.u32 %v977, 7
      %v979 = vsub.s32 %v976, %v978
      %v980 = vrot.slane %v972, %v979
      %v982 = vunpack.c.l.s4 1966171168
      %v983 = vunpack.c.0.s8 %v982
      %v984 = vlaneseq
      %v985 = vshrl.u32 %v984, 7
      %v986 = vsub.s32 %v983, %v985
      %v987 = vrot.slane %v973, %v986
      %v988 = vcombine.high %v980, %v980
      %v990 = vunpack.c.l.s4 1966171168
      %v991 = vunpack.c.0.s8 %v990
      %v992 = vlaneseq
      %v993 = vshrl.u32 %v992, 7
      %v994 = vsub.s32 %v991, %v993
      %v995 = vrot.slane %v809, %v994
      %v996 = vcombine.high %v995, %v995
      %v998 = vunpack.c.l.s4 1966171168
      %v999 = vunpack.c.0.s8 %v998
      %v1000 = vlaneseq
      %v1001 = vshrl.u32 %v1000, 7
      %v1002 = vsub.s32 %v999, %v1001
      %v1003 = vrot.slane %v995, %v1002
      %v1005 = vunpack.c.l.s4 1966171168
      %v1006 = vunpack.c.0.s8 %v1005
      %v1007 = vlaneseq
      %v1008 = vshrl.u32 %v1007, 7
      %v1009 = vsub.s32 %v1006, %v1008
      %v1010 = vrot.slane %v996, %v1009
      %v1011 = vcombine.high %v1003, %v1003
      %v1013 = vunpack.c.l.s4 1966171168
      %v1014 = vunpack.c.0.s8 %v1013
      %v1015 = vlaneseq
      %v1016 = vshrl.u32 %v1015, 7
      %v1017 = vsub.s32 %v1014, %v1016
      %v1018 = vrot.slane %v810, %v1017
      %v1019 = vcombine.high %v1018, %v1018
      %v1021 = vunpack.c.l.s4 1966171168
      %v1022 = vunpack.c.0.s8 %v1021
      %v1023 = vlaneseq
      %v1024 = vshrl.u32 %v1023, 7
      %v1025 = vsub.s32 %v1022, %v1024
      %v1026 = vrot.slane %v1018, %v1025
      %v1028 = vunpack.c.l.s4 1966171168
      %v1029 = vunpack.c.0.s8 %v1028
      %v1030 = vlaneseq
      %v1031 = vshrl.u32 %v1030, 7
      %v1032 = vsub.s32 %v1029, %v1031
      %v1033 = vrot.slane %v1019, %v1032
      %v1034 = vcombine.high %v1026, %v1026
      %v1036 = vunpack.c.l.s4 1966171168
      %v1037 = vunpack.c.0.s8 %v1036
      %v1038 = vlaneseq
      %v1039 = vshrl.u32 %v1038, 7
      %v1040 = vsub.s32 %v1037, %v1039
      %v1041 = vrot.slane %v811, %v1040
      %v1042 = vcombine.high %v1041, %v1041
      %v1044 = vunpack.c.l.s4 1966171168
      %v1045 = vunpack.c.0.s8 %v1044
      %v1046 = vlaneseq
      %v1047 = vshrl.u32 %v1046, 7
      %v1048 = vsub.s32 %v1045, %v1047
      %v1049 = vrot.slane %v1041, %v1048
      %v1051 = vunpack.c.l.s4 1966171168
      %v1052 = vunpack.c.0.s8 %v1051
      %v1053 = vlaneseq
      %v1054 = vshrl.u32 %v1053, 7
      %v1055 = vsub.s32 %v1052, %v1054
      %v1056 = vrot.slane %v1042, %v1055
      %v1057 = vcombine.high %v1049, %v1049
      %v1059 = vunpack.c.l.s4 1966171168
      %v1060 = vunpack.c.0.s8 %v1059
      %v1061 = vlaneseq
      %v1062 = vshrl.u32 %v1061, 7
      %v1063 = vsub.s32 %v1060, %v1062
      %v1064 = vrot.slane %v812, %v1063
      %v1065 = vcombine.high %v1064, %v1064
      %v1067 = vunpack.c.l.s4 1966171168
      %v1068 = vunpack.c.0.s8 %v1067
      %v1069 = vlaneseq
      %v1070 = vshrl.u32 %v1069, 7
      %v1071 = vsub.s32 %v1068, %v1070
      %v1072 = vrot.slane %v1064, %v1071
      %v1074 = vunpack.c.l.s4 1966171168
      %v1075 = vunpack.c.0.s8 %v1074
      %v1076 = vlaneseq
      %v1077 = vshrl.u32 %v1076, 7
      %v1078 = vsub.s32 %v1075, %v1077
      %v1079 = vrot.slane %v1065, %v1078
      %v1080 = vcombine.high %v1072, %v1072
      %v1082 = vunpack.c.l.s4 1966171168
      %v1083 = vunpack.c.0.s8 %v1082
      %v1084 = vlaneseq
      %v1085 = vshrl.u32 %v1084, 7
      %v1086 = vsub.s32 %v1083, %v1085
      %v1087 = vrot.slane %v813, %v1086
      %v1088 = vcombine.high %v1087, %v1087
      %v1090 = vunpack.c.l.s4 1966171168
      %v1091 = vunpack.c.0.s8 %v1090
      %v1092 = vlaneseq
      %v1093 = vshrl.u32 %v1092, 7
      %v1094 = vsub.s32 %v1091, %v1093
      %v1095 = vrot.slane %v1087, %v1094
      %v1097 = vunpack.c.l.s4 1966171168
      %v1098 = vunpack.c.0.s8 %v1097
      %v1099 = vlaneseq
      %v1100 = vshrl.u32 %v1099, 7
      %v1101 = vsub.s32 %v1098, %v1100
      %v1102 = vrot.slane %v1088, %v1101
      %v1103 = vcombine.high %v1095, %v1095
      %v1104 = vunpack.c.l.b16 %v842
      %v1105 = vunpack.c.l.b16 %v849
      %v1106 = vunpack.c.l.b16 %v850
      %v1107 = vunpack.c.l.b16 %v865
      %v1108 = vunpack.c.l.b16 %v872
      %v1109 = vunpack.c.l.b16 %v873
      %v1110 = vunpack.c.l.b16 %v888
      %v1111 = vunpack.c.l.b16 %v895
      %v1112 = vunpack.c.l.b16 %v896
      %v1113 = vunpack.c.l.b16 %v911
      %v1114 = vunpack.c.l.b16 %v918
      %v1115 = vunpack.c.l.b16 %v919
      %v1116 = vunpack.c.l.b16 %v934
      %v1117 = vunpack.c.l.b16 %v941
      %v1118 = vunpack.c.l.b16 %v942
      %v1119 = vunpack.c.l.b16 %v957
      %v1120 = vunpack.c.l.b16 %v964
      %v1121 = vunpack.c.l.b16 %v965
      %v1122 = vunpack.c.l.b16 %v980
      %v1123 = vunpack.c.l.b16 %v987
      %v1124 = vunpack.c.l.b16 %v988
      %v1125 = vunpack.c.l.b16 %v1003
      %v1126 = vunpack.c.l.b16 %v1010
      %v1127 = vunpack.c.l.b16 %v1011
      %v1128 = vunpack.c.l.b16 %v1026
      %v1129 = vunpack.c.l.b16 %v1033
      %v1130 = vunpack.c.l.b16 %v1034
      %v1131 = vunpack.c.l.b16 %v1049
      %v1132 = vunpack.c.l.b16 %v1056
      %v1133 = vunpack.c.l.b16 %v1057
      %v1134 = vunpack.c.l.b16 %v1072
      %v1135 = vunpack.c.l.b16 %v1079
      %v1136 = vunpack.c.l.b16 %v1080
      %v1137 = vunpack.c.l.b16 %v1095
      %v1138 = vunpack.c.l.b16 %v1102
      %v1139 = vunpack.c.l.b16 %v1103
      %v1140 = vrot.slane %v1107, 7
      %v1141 = vsel %vm536, %v1140, %v1104
      %v1142 = vrot.slane %v1110, 6
      %v1143 = vsel %vm539, %v1142, %v1141
      %v1144 = vrot.slane %v1113, 5
      %v1145 = vsel %vm542, %v1144, %v1143
      %v1146 = vrot.slane %v1116, 4
      %v1147 = vsel %vm545, %v1146, %v1145
      %v1148 = vrot.slane %v1119, 3
      %v1149 = vsel %vm548, %v1148, %v1147
      %v1150 = vrot.slane %v1122, 2
      %v1151 = vsel %vm551, %v1150, %v1149
      %v1152 = vrot.slane %v1125, 1
      %v1153 = vsel %vm554, %v1152, %v1151
      %v1154 = vrot.slane %v1108, 7
      %v1155 = vsel %vm536, %v1154, %v1105
      %v1156 = vrot.slane %v1111, 6
      %v1157 = vsel %vm539, %v1156, %v1155
      %v1158 = vrot.slane %v1114, 5
      %v1159 = vsel %vm542, %v1158, %v1157
      %v1160 = vrot.slane %v1117, 4
      %v1161 = vsel %vm545, %v1160, %v1159
      %v1162 = vrot.slane %v1120, 3
      %v1163 = vsel %vm548, %v1162, %v1161
      %v1164 = vrot.slane %v1123, 2
      %v1165 = vsel %vm551, %v1164, %v1163
      %v1166 = vrot.slane %v1126, 1
      %v1167 = vsel %vm554, %v1166, %v1165
      %v1168 = vrot.slane %v1109, 7
      %v1169 = vsel %vm536, %v1168, %v1106
      %v1170 = vrot.slane %v1112, 6
      %v1171 = vsel %vm539, %v1170, %v1169
      %v1172 = vrot.slane %v1115, 5
      %v1173 = vsel %vm542, %v1172, %v1171
      %v1174 = vrot.slane %v1118, 4
      %v1175 = vsel %vm545, %v1174, %v1173
      %v1176 = vrot.slane %v1121, 3
      %v1177 = vsel %vm548, %v1176, %v1175
      %v1178 = vrot.slane %v1124, 2
      %v1179 = vsel %vm551, %v1178, %v1177
      %v1180 = vrot.slane %v1127, 1
      %v1181 = vsel %vm554, %v1180, %v1179
      %v1182 = vrot.slane %v1131, 7
      %v1183 = vsel %vm536, %v1182, %v1128
      %v1184 = vrot.slane %v1134, 6
      %v1185 = vsel %vm539, %v1184, %v1183
      %v1186 = vrot.slane %v1137, 5
      %v1187 = vsel %vm542, %v1186, %v1185
      %v1188 = vrot.slane %v1132, 7
      %v1189 = vsel %vm536, %v1188, %v1129
      %v1190 = vrot.slane %v1135, 6
      %v1191 = vsel %vm539, %v1190, %v1189
      %v1192 = vrot.slane %v1138, 5
      %v1193 = vsel %vm542, %v1192, %v1191
      %v1194 = vrot.slane %v1133, 7
      %v1195 = vsel %vm536, %v1194, %v1130
      %v1196 = vrot.slane %v1136, 6
      %v1197 = vsel %vm539, %v1196, %v1195
      %v1198 = vrot.slane %v1139, 5
      %v1199 = vsel %vm542, %v1198, %v1197
      %v1200 = vpack.c.b16 %v1187, %v1153
      %v1201 = vpack.c.b16 %v1193, %v1167
      %v1202 = vpack.c.b16 %v1199, %v1181
      %1203 = vrot.lane.b32.xlu0 %v1200, 126
      %v1204 = vpop.permute.xlu0 %1203
      %1205 = vrot.lane.b32.xlu0 %v1201, 126
      %v1206 = vpop.permute.xlu0 %1205
      %1207 = vrot.lane.b32.xlu0 %v1202, 126
      %v1208 = vpop.permute.xlu0 %1207
      %vm1209 = vcmask 1031168
      %v1210 = vsel %vm1209, %v1204, %v1206
      %v1211 = vsel %vm1209, %v1206, %v1208
      %v1213 = vsel %vm614, %v815, 0
      %v1216 = vsel %vm618, %v1210, 0
      %v1219 = vsel %vm618, %v1211, 0
      %v1222 = vsel %vm618, %v1208, 0
      %1224 = vmatprep.subr.bf16.mxu0 %v1219
      %1225 = vmatpush1.bf16.msra.mxu0 %v1216
      %1226 = vmatprep.subr.bf16.mxu0 0
      %1227 = vmatpush1.bf16.msra.mxu0 0
      %1228 = vmatprep.subr.bf16.mxu0 0
      %1229 = vmatpush1.bf16.msra.mxu0 0
      %1230 = vmatprep.subr.bf16.mxu0 0
      %1231 = vmatpush1.bf16.msra.mxu0 0
      %1232 = vmatprep.subr.bf16.mxu0 0
      %1233 = vmatpush1.bf16.msra.mxu0 0
      %1234 = vmatprep.subr.bf16.mxu0 0
      %1235 = vmatpush1.bf16.msra.mxu0 0
      %1236 = vmatprep.subr.bf16.mxu0 0
      %1237 = vmatpush1.bf16.msra.mxu0 0
      %1238 = vmatprep.subr.bf16.mxu0 0
      %1239 = vmatpush1.bf16.msra.mxu0 0
      %1240 = vmatprep.subr.bf16.mxu0 0
      %1241 = vmatpush1.bf16.msra.mxu0 0
      %1242 = vmatprep.subr.bf16.mxu0 0
      %1243 = vmatpush1.bf16.msra.mxu0 0
      %1244 = vmatprep.subr.bf16.mxu0 0
      %1245 = vmatpush1.bf16.msra.mxu0 0
      %1246 = vmatprep.subr.bf16.mxu0 0
      %1247 = vmatpush1.bf16.msra.mxu0 0
      %1248 = vmatprep.subr.bf16.mxu0 0
      %1249 = vmatpush1.bf16.msra.mxu0 0
      %1250 = vmatprep.subr.bf16.mxu0 0
      %1251 = vmatpush1.bf16.msra.mxu0 0
      %1252 = vmatprep.subr.bf16.mxu0 0
      %1253 = vmatpush1.bf16.msra.mxu0 0
      %1254 = vmatprep.subr.bf16.mxu0 0
      %1255 = vmatpush1.bf16.msra.mxu0 0
      %1256 = vmatprep.mubr.bf16.mxu0 0
      %1257 = vmatmul.mubr.bf16.gmra.mrb[0].mxu0 %v1213
      %v1258 = vpop.f32.mrb[0].mxu0
      %v1259 = vadd.f32 0.0, %v1258
      %v1260 = vpop.f32.mrb[0].mxu0
      %v1261 = vadd.f32 0.0, %v1260
      %v1262 = vpop.f32.mrb[0].mxu0
      %v1263 = vpop.f32.mrb[0].mxu0
      %1264 = vdwg.mxu0
      %1265 = vmatprep.subr.bf16.mxu0 0
      %1266 = vmatpush1.bf16.msra.mxu0 %v1222
      %1267 = vmatprep.subr.bf16.mxu0 0
      %1268 = vmatpush1.bf16.msra.mxu0 0
      %1269 = vmatprep.subr.bf16.mxu0 0
      %1270 = vmatpush1.bf16.msra.mxu0 0
      %1271 = vmatprep.subr.bf16.mxu0 0
      %1272 = vmatpush1.bf16.msra.mxu0 0
      %1273 = vmatprep.subr.bf16.mxu0 0
      %1274 = vmatpush1.bf16.msra.mxu0 0
      %1275 = vmatprep.subr.bf16.mxu0 0
      %1276 = vmatpush1.bf16.msra.mxu0 0
      %1277 = vmatprep.subr.bf16.mxu0 0
      %1278 = vmatpush1.bf16.msra.mxu0 0
      %1279 = vmatprep.subr.bf16.mxu0 0
      %1280 = vmatpush1.bf16.msra.mxu0 0
      %1281 = vmatprep.subr.bf16.mxu0 0
      %1282 = vmatpush1.bf16.msra.mxu0 0
      %1283 = vmatprep.subr.bf16.mxu0 0
      %1284 = vmatpush1.bf16.msra.mxu0 0
      %1285 = vmatprep.subr.bf16.mxu0 0
      %1286 = vmatpush1.bf16.msra.mxu0 0
      %1287 = vmatprep.subr.bf16.mxu0 0
      %1288 = vmatpush1.bf16.msra.mxu0 0
      %1289 = vmatprep.subr.bf16.mxu0 0
      %1290 = vmatpush1.bf16.msra.mxu0 0
      %1291 = vmatprep.subr.bf16.mxu0 0
      %1292 = vmatpush1.bf16.msra.mxu0 0
      %1293 = vmatprep.subr.bf16.mxu0 0
      %1294 = vmatpush1.bf16.msra.mxu0 0
      %1295 = vmatprep.subr.bf16.mxu0 0
      %1296 = vmatpush1.bf16.msra.mxu0 0
      %1297 = vmatprep.mubr.bf16.mxu0 0
      %1298 = vmatmul.mubr.bf16.gmra.mrb[0].mxu0 %v1213
      %v1299 = vpop.f32.mrb[0].mxu0
      %v1300 = vadd.f32 0.0, %v1299
      %v1301 = vpop.f32.mrb[0].mxu0
      %v1302 = vpop.f32.mrb[0].mxu0
      %v1303 = vpop.f32.mrb[0].mxu0
      %1304 = vdwg.mxu0
      %v1305 = vadd.f32 %v756, %v1259
      %v1306 = vadd.f32 %v758, %v1261
      %v1307 = vadd.f32 %v797, %v1300
      %v1308 = vld [vmem:[%s189] sm:$0x7]
      %v1309 = vld [vmem:[%s189 + $0x3] sm:$0x7]
      %v1310 = vld [vmem:[%s189 + $0x6] sm:$0x7]
      %v1311 = vld [vmem:[%s189 + $0x9] sm:$0x7]
      %v1312 = vld [vmem:[%s189 + $0xc] sm:$0x7]
      %v1313 = vld [vmem:[%s189 + $0xf] sm:$0x7]
      %v1314 = vld [vmem:[%s189 + $0x12] sm:$0x7]
      %v1315 = vld [vmem:[%s189 + $0x15] sm:$0x7]
      %v1316 = vld [vmem:[%s189 + $0x18] sm:$0x7]
      %v1317 = vld [vmem:[%s189 + $0x1b] sm:$0x7]
      %v1318 = vld [vmem:[%s189 + $0x1e] sm:$0x7]
      %v1319 = vld [vmem:[%s189 + $0x21] sm:$0x7]
      %s1320 = scalar_lea.vmem %s1, 6
      %v1321 = vld [vmem:[%s1320] sm:$0x3]
      %v1335 = vunpack.c.l.s4 1966171168
      %v1336 = vunpack.c.0.s8 %v1335
      %v1337 = vlaneseq
      %v1338 = vshrl.u32 %v1337, 7
      %v1339 = vsub.s32 %v1336, %v1338
      %v1340 = vrot.slane %v1308, %v1339
      %v1341 = vcombine.high %v1340, %v1340
      %v1343 = vunpack.c.l.s4 1966171168
      %v1344 = vunpack.c.0.s8 %v1343
      %v1345 = vlaneseq
      %v1346 = vshrl.u32 %v1345, 7
      %v1347 = vsub.s32 %v1344, %v1346
      %v1348 = vrot.slane %v1340, %v1347
      %v1350 = vunpack.c.l.s4 1966171168
      %v1351 = vunpack.c.0.s8 %v1350
      %v1352 = vlaneseq
      %v1353 = vshrl.u32 %v1352, 7
      %v1354 = vsub.s32 %v1351, %v1353
      %v1355 = vrot.slane %v1341, %v1354
      %v1356 = vcombine.high %v1348, %v1348
      %v1358 = vunpack.c.l.s4 1966171168
      %v1359 = vunpack.c.0.s8 %v1358
      %v1360 = vlaneseq
      %v1361 = vshrl.u32 %v1360, 7
      %v1362 = vsub.s32 %v1359, %v1361
      %v1363 = vrot.slane %v1309, %v1362
      %v1364 = vcombine.high %v1363, %v1363
      %v1366 = vunpack.c.l.s4 1966171168
      %v1367 = vunpack.c.0.s8 %v1366
      %v1368 = vlaneseq
      %v1369 = vshrl.u32 %v1368, 7
      %v1370 = vsub.s32 %v1367, %v1369
      %v1371 = vrot.slane %v1363, %v1370
      %v1373 = vunpack.c.l.s4 1966171168
      %v1374 = vunpack.c.0.s8 %v1373
      %v1375 = vlaneseq
      %v1376 = vshrl.u32 %v1375, 7
      %v1377 = vsub.s32 %v1374, %v1376
      %v1378 = vrot.slane %v1364, %v1377
      %v1379 = vcombine.high %v1371, %v1371
      %v1381 = vunpack.c.l.s4 1966171168
      %v1382 = vunpack.c.0.s8 %v1381
      %v1383 = vlaneseq
      %v1384 = vshrl.u32 %v1383, 7
      %v1385 = vsub.s32 %v1382, %v1384
      %v1386 = vrot.slane %v1310, %v1385
      %v1387 = vcombine.high %v1386, %v1386
      %v1389 = vunpack.c.l.s4 1966171168
      %v1390 = vunpack.c.0.s8 %v1389
      %v1391 = vlaneseq
      %v1392 = vshrl.u32 %v1391, 7
      %v1393 = vsub.s32 %v1390, %v1392
      %v1394 = vrot.slane %v1386, %v1393
      %v1396 = vunpack.c.l.s4 1966171168
      %v1397 = vunpack.c.0.s8 %v1396
      %v1398 = vlaneseq
      %v1399 = vshrl.u32 %v1398, 7
      %v1400 = vsub.s32 %v1397, %v1399
      %v1401 = vrot.slane %v1387, %v1400
      %v1402 = vcombine.high %v1394, %v1394
      %v1404 = vunpack.c.l.s4 1966171168
      %v1405 = vunpack.c.0.s8 %v1404
      %v1406 = vlaneseq
      %v1407 = vshrl.u32 %v1406, 7
      %v1408 = vsub.s32 %v1405, %v1407
      %v1409 = vrot.slane %v1311, %v1408
      %v1410 = vcombine.high %v1409, %v1409
      %v1412 = vunpack.c.l.s4 1966171168
      %v1413 = vunpack.c.0.s8 %v1412
      %v1414 = vlaneseq
      %v1415 = vshrl.u32 %v1414, 7
      %v1416 = vsub.s32 %v1413, %v1415
      %v1417 = vrot.slane %v1409, %v1416
      %v1419 = vunpack.c.l.s4 1966171168
      %v1420 = vunpack.c.0.s8 %v1419
      %v1421 = vlaneseq
      %v1422 = vshrl.u32 %v1421, 7
      %v1423 = vsub.s32 %v1420, %v1422
      %v1424 = vrot.slane %v1410, %v1423
      %v1425 = vcombine.high %v1417, %v1417
      %v1427 = vunpack.c.l.s4 1966171168
      %v1428 = vunpack.c.0.s8 %v1427
      %v1429 = vlaneseq
      %v1430 = vshrl.u32 %v1429, 7
      %v1431 = vsub.s32 %v1428, %v1430
      %v1432 = vrot.slane %v1312, %v1431
      %v1433 = vcombine.high %v1432, %v1432
      %v1435 = vunpack.c.l.s4 1966171168
      %v1436 = vunpack.c.0.s8 %v1435
      %v1437 = vlaneseq
      %v1438 = vshrl.u32 %v1437, 7
      %v1439 = vsub.s32 %v1436, %v1438
      %v1440 = vrot.slane %v1432, %v1439
      %v1442 = vunpack.c.l.s4 1966171168
      %v1443 = vunpack.c.0.s8 %v1442
      %v1444 = vlaneseq
      %v1445 = vshrl.u32 %v1444, 7
      %v1446 = vsub.s32 %v1443, %v1445
      %v1447 = vrot.slane %v1433, %v1446
      %v1448 = vcombine.high %v1440, %v1440
      %v1450 = vunpack.c.l.s4 1966171168
      %v1451 = vunpack.c.0.s8 %v1450
      %v1452 = vlaneseq
      %v1453 = vshrl.u32 %v1452, 7
      %v1454 = vsub.s32 %v1451, %v1453
      %v1455 = vrot.slane %v1313, %v1454
      %v1456 = vcombine.high %v1455, %v1455
      %v1458 = vunpack.c.l.s4 1966171168
      %v1459 = vunpack.c.0.s8 %v1458
      %v1460 = vlaneseq
      %v1461 = vshrl.u32 %v1460, 7
      %v1462 = vsub.s32 %v1459, %v1461
      %v1463 = vrot.slane %v1455, %v1462
      %v1465 = vunpack.c.l.s4 1966171168
      %v1466 = vunpack.c.0.s8 %v1465
      %v1467 = vlaneseq
      %v1468 = vshrl.u32 %v1467, 7
      %v1469 = vsub.s32 %v1466, %v1468
      %v1470 = vrot.slane %v1456, %v1469
      %v1471 = vcombine.high %v1463, %v1463
      %v1473 = vunpack.c.l.s4 1966171168
      %v1474 = vunpack.c.0.s8 %v1473
      %v1475 = vlaneseq
      %v1476 = vshrl.u32 %v1475, 7
      %v1477 = vsub.s32 %v1474, %v1476
      %v1478 = vrot.slane %v1314, %v1477
      %v1479 = vcombine.high %v1478, %v1478
      %v1481 = vunpack.c.l.s4 1966171168
      %v1482 = vunpack.c.0.s8 %v1481
      %v1483 = vlaneseq
      %v1484 = vshrl.u32 %v1483, 7
      %v1485 = vsub.s32 %v1482, %v1484
      %v1486 = vrot.slane %v1478, %v1485
      %v1488 = vunpack.c.l.s4 1966171168
      %v1489 = vunpack.c.0.s8 %v1488
      %v1490 = vlaneseq
      %v1491 = vshrl.u32 %v1490, 7
      %v1492 = vsub.s32 %v1489, %v1491
      %v1493 = vrot.slane %v1479, %v1492
      %v1494 = vcombine.high %v1486, %v1486
      %v1496 = vunpack.c.l.s4 1966171168
      %v1497 = vunpack.c.0.s8 %v1496
      %v1498 = vlaneseq
      %v1499 = vshrl.u32 %v1498, 7
      %v1500 = vsub.s32 %v1497, %v1499
      %v1501 = vrot.slane %v1315, %v1500
      %v1502 = vcombine.high %v1501, %v1501
      %v1504 = vunpack.c.l.s4 1966171168
      %v1505 = vunpack.c.0.s8 %v1504
      %v1506 = vlaneseq
      %v1507 = vshrl.u32 %v1506, 7
      %v1508 = vsub.s32 %v1505, %v1507
      %v1509 = vrot.slane %v1501, %v1508
      %v1511 = vunpack.c.l.s4 1966171168
      %v1512 = vunpack.c.0.s8 %v1511
      %v1513 = vlaneseq
      %v1514 = vshrl.u32 %v1513, 7
      %v1515 = vsub.s32 %v1512, %v1514
      %v1516 = vrot.slane %v1502, %v1515
      %v1517 = vcombine.high %v1509, %v1509
      %v1519 = vunpack.c.l.s4 1966171168
      %v1520 = vunpack.c.0.s8 %v1519
      %v1521 = vlaneseq
      %v1522 = vshrl.u32 %v1521, 7
      %v1523 = vsub.s32 %v1520, %v1522
      %v1524 = vrot.slane %v1316, %v1523
      %v1525 = vcombine.high %v1524, %v1524
      %v1527 = vunpack.c.l.s4 1966171168
      %v1528 = vunpack.c.0.s8 %v1527
      %v1529 = vlaneseq
      %v1530 = vshrl.u32 %v1529, 7
      %v1531 = vsub.s32 %v1528, %v1530
      %v1532 = vrot.slane %v1524, %v1531
      %v1534 = vunpack.c.l.s4 1966171168
      %v1535 = vunpack.c.0.s8 %v1534
      %v1536 = vlaneseq
      %v1537 = vshrl.u32 %v1536, 7
      %v1538 = vsub.s32 %v1535, %v1537
      %v1539 = vrot.slane %v1525, %v1538
      %v1540 = vcombine.high %v1532, %v1532
      %v1542 = vunpack.c.l.s4 1966171168
      %v1543 = vunpack.c.0.s8 %v1542
      %v1544 = vlaneseq
      %v1545 = vshrl.u32 %v1544, 7
      %v1546 = vsub.s32 %v1543, %v1545
      %v1547 = vrot.slane %v1317, %v1546
      %v1548 = vcombine.high %v1547, %v1547
      %v1550 = vunpack.c.l.s4 1966171168
      %v1551 = vunpack.c.0.s8 %v1550
      %v1552 = vlaneseq
      %v1553 = vshrl.u32 %v1552, 7
      %v1554 = vsub.s32 %v1551, %v1553
      %v1555 = vrot.slane %v1547, %v1554
      %v1557 = vunpack.c.l.s4 1966171168
      %v1558 = vunpack.c.0.s8 %v1557
      %v1559 = vlaneseq
      %v1560 = vshrl.u32 %v1559, 7
      %v1561 = vsub.s32 %v1558, %v1560
      %v1562 = vrot.slane %v1548, %v1561
      %v1563 = vcombine.high %v1555, %v1555
      %v1565 = vunpack.c.l.s4 1966171168
      %v1566 = vunpack.c.0.s8 %v1565
      %v1567 = vlaneseq
      %v1568 = vshrl.u32 %v1567, 7
      %v1569 = vsub.s32 %v1566, %v1568
      %v1570 = vrot.slane %v1318, %v1569
      %v1571 = vcombine.high %v1570, %v1570
      %v1573 = vunpack.c.l.s4 1966171168
      %v1574 = vunpack.c.0.s8 %v1573
      %v1575 = vlaneseq
      %v1576 = vshrl.u32 %v1575, 7
      %v1577 = vsub.s32 %v1574, %v1576
      %v1578 = vrot.slane %v1570, %v1577
      %v1580 = vunpack.c.l.s4 1966171168
      %v1581 = vunpack.c.0.s8 %v1580
      %v1582 = vlaneseq
      %v1583 = vshrl.u32 %v1582, 7
      %v1584 = vsub.s32 %v1581, %v1583
      %v1585 = vrot.slane %v1571, %v1584
      %v1586 = vcombine.high %v1578, %v1578
      %v1588 = vunpack.c.l.s4 1966171168
      %v1589 = vunpack.c.0.s8 %v1588
      %v1590 = vlaneseq
      %v1591 = vshrl.u32 %v1590, 7
      %v1592 = vsub.s32 %v1589, %v1591
      %v1593 = vrot.slane %v1319, %v1592
      %v1594 = vcombine.high %v1593, %v1593
      %v1596 = vunpack.c.l.s4 1966171168
      %v1597 = vunpack.c.0.s8 %v1596
      %v1598 = vlaneseq
      %v1599 = vshrl.u32 %v1598, 7
      %v1600 = vsub.s32 %v1597, %v1599
      %v1601 = vrot.slane %v1593, %v1600
      %v1603 = vunpack.c.l.s4 1966171168
      %v1604 = vunpack.c.0.s8 %v1603
      %v1605 = vlaneseq
      %v1606 = vshrl.u32 %v1605, 7
      %v1607 = vsub.s32 %v1604, %v1606
      %v1608 = vrot.slane %v1594, %v1607
      %v1609 = vcombine.high %v1601, %v1601
      %v1610 = vunpack.c.l.b16 %v1348
      %v1611 = vunpack.c.l.b16 %v1355
      %v1612 = vunpack.c.l.b16 %v1356
      %v1613 = vunpack.c.l.b16 %v1371
      %v1614 = vunpack.c.l.b16 %v1378
      %v1615 = vunpack.c.l.b16 %v1379
      %v1616 = vunpack.c.l.b16 %v1394
      %v1617 = vunpack.c.l.b16 %v1401
      %v1618 = vunpack.c.l.b16 %v1402
      %v1619 = vunpack.c.l.b16 %v1417
      %v1620 = vunpack.c.l.b16 %v1424
      %v1621 = vunpack.c.l.b16 %v1425
      %v1622 = vunpack.c.l.b16 %v1440
      %v1623 = vunpack.c.l.b16 %v1447
      %v1624 = vunpack.c.l.b16 %v1448
      %v1625 = vunpack.c.l.b16 %v1463
      %v1626 = vunpack.c.l.b16 %v1470
      %v1627 = vunpack.c.l.b16 %v1471
      %v1628 = vunpack.c.l.b16 %v1486
      %v1629 = vunpack.c.l.b16 %v1493
      %v1630 = vunpack.c.l.b16 %v1494
      %v1631 = vunpack.c.l.b16 %v1509
      %v1632 = vunpack.c.l.b16 %v1516
      %v1633 = vunpack.c.l.b16 %v1517
      %v1634 = vunpack.c.l.b16 %v1532
      %v1635 = vunpack.c.l.b16 %v1539
      %v1636 = vunpack.c.l.b16 %v1540
      %v1637 = vunpack.c.l.b16 %v1555
      %v1638 = vunpack.c.l.b16 %v1562
      %v1639 = vunpack.c.l.b16 %v1563
      %v1640 = vunpack.c.l.b16 %v1578
      %v1641 = vunpack.c.l.b16 %v1585
      %v1642 = vunpack.c.l.b16 %v1586
      %v1643 = vunpack.c.l.b16 %v1601
      %v1644 = vunpack.c.l.b16 %v1608
      %v1645 = vunpack.c.l.b16 %v1609
      %v1646 = vrot.slane %v1613, 7
      %v1647 = vsel %vm536, %v1646, %v1610
      %v1648 = vrot.slane %v1616, 6
      %v1649 = vsel %vm539, %v1648, %v1647
      %v1650 = vrot.slane %v1619, 5
      %v1651 = vsel %vm542, %v1650, %v1649
      %v1652 = vrot.slane %v1622, 4
      %v1653 = vsel %vm545, %v1652, %v1651
      %v1654 = vrot.slane %v1625, 3
      %v1655 = vsel %vm548, %v1654, %v1653
      %v1656 = vrot.slane %v1628, 2
      %v1657 = vsel %vm551, %v1656, %v1655
      %v1658 = vrot.slane %v1631, 1
      %v1659 = vsel %vm554, %v1658, %v1657
      %v1660 = vrot.slane %v1614, 7
      %v1661 = vsel %vm536, %v1660, %v1611
      %v1662 = vrot.slane %v1617, 6
      %v1663 = vsel %vm539, %v1662, %v1661
      %v1664 = vrot.slane %v1620, 5
      %v1665 = vsel %vm542, %v1664, %v1663
      %v1666 = vrot.slane %v1623, 4
      %v1667 = vsel %vm545, %v1666, %v1665
      %v1668 = vrot.slane %v1626, 3
      %v1669 = vsel %vm548, %v1668, %v1667
      %v1670 = vrot.slane %v1629, 2
      %v1671 = vsel %vm551, %v1670, %v1669
      %v1672 = vrot.slane %v1632, 1
      %v1673 = vsel %vm554, %v1672, %v1671
      %v1674 = vrot.slane %v1615, 7
      %v1675 = vsel %vm536, %v1674, %v1612
      %v1676 = vrot.slane %v1618, 6
      %v1677 = vsel %vm539, %v1676, %v1675
      %v1678 = vrot.slane %v1621, 5
      %v1679 = vsel %vm542, %v1678, %v1677
      %v1680 = vrot.slane %v1624, 4
      %v1681 = vsel %vm545, %v1680, %v1679
      %v1682 = vrot.slane %v1627, 3
      %v1683 = vsel %vm548, %v1682, %v1681
      %v1684 = vrot.slane %v1630, 2
      %v1685 = vsel %vm551, %v1684, %v1683
      %v1686 = vrot.slane %v1633, 1
      %v1687 = vsel %vm554, %v1686, %v1685
      %v1688 = vrot.slane %v1637, 7
      %v1689 = vsel %vm536, %v1688, %v1634
      %v1690 = vrot.slane %v1640, 6
      %v1691 = vsel %vm539, %v1690, %v1689
      %v1692 = vrot.slane %v1643, 5
      %v1693 = vsel %vm542, %v1692, %v1691
      %v1694 = vrot.slane %v1638, 7
      %v1695 = vsel %vm536, %v1694, %v1635
      %v1696 = vrot.slane %v1641, 6
      %v1697 = vsel %vm539, %v1696, %v1695
      %v1698 = vrot.slane %v1644, 5
      %v1699 = vsel %vm542, %v1698, %v1697
      %v1700 = vrot.slane %v1639, 7
      %v1701 = vsel %vm536, %v1700, %v1636
      %v1702 = vrot.slane %v1642, 6
      %v1703 = vsel %vm539, %v1702, %v1701
      %v1704 = vrot.slane %v1645, 5
      %v1705 = vsel %vm542, %v1704, %v1703
      %v1706 = vpack.c.b16 %v1693, %v1659
      %v1707 = vpack.c.b16 %v1699, %v1673
      %v1708 = vpack.c.b16 %v1705, %v1687
      %1709 = vrot.lane.b32.xlu0 %v1706, 110
      %v1710 = vpop.permute.xlu0 %1709
      %1711 = vrot.lane.b32.xlu0 %v1707, 110
      %v1712 = vpop.permute.xlu0 %1711
      %1713 = vrot.lane.b32.xlu0 %v1708, 110
      %v1714 = vpop.permute.xlu0 %1713
      %vm1715 = vcmask 900096
      %v1716 = vsel %vm1715, %v1710, %v1712
      %v1717 = vsel %vm1715, %v1712, %v1714
      %v1719 = vsel %vm614, %v1321, 0
      %v1722 = vsel %vm618, %v1716, 0
      %v1725 = vsel %vm618, %v1717, 0
      %v1728 = vsel %vm618, %v1714, 0
      %1730 = vmatprep.subr.bf16.mxu0 %v1725
      %1731 = vmatpush1.bf16.msra.mxu0 %v1722
      %1732 = vmatprep.subr.bf16.mxu0 0
      %1733 = vmatpush1.bf16.msra.mxu0 0
      %1734 = vmatprep.subr.bf16.mxu0 0
      %1735 = vmatpush1.bf16.msra.mxu0 0
      %1736 = vmatprep.subr.bf16.mxu0 0
      %1737 = vmatpush1.bf16.msra.mxu0 0
      %1738 = vmatprep.subr.bf16.mxu0 0
      %1739 = vmatpush1.bf16.msra.mxu0 0
      %1740 = vmatprep.subr.bf16.mxu0 0
      %1741 = vmatpush1.bf16.msra.mxu0 0
      %1742 = vmatprep.subr.bf16.mxu0 0
      %1743 = vmatpush1.bf16.msra.mxu0 0
      %1744 = vmatprep.subr.bf16.mxu0 0
      %1745 = vmatpush1.bf16.msra.mxu0 0
      %1746 = vmatprep.subr.bf16.mxu0 0
      %1747 = vmatpush1.bf16.msra.mxu0 0
      %1748 = vmatprep.subr.bf16.mxu0 0
      %1749 = vmatpush1.bf16.msra.mxu0 0
      %1750 = vmatprep.subr.bf16.mxu0 0
      %1751 = vmatpush1.bf16.msra.mxu0 0
      %1752 = vmatprep.subr.bf16.mxu0 0
      %1753 = vmatpush1.bf16.msra.mxu0 0
      %1754 = vmatprep.subr.bf16.mxu0 0
      %1755 = vmatpush1.bf16.msra.mxu0 0
      %1756 = vmatprep.subr.bf16.mxu0 0
      %1757 = vmatpush1.bf16.msra.mxu0 0
      %1758 = vmatprep.subr.bf16.mxu0 0
      %1759 = vmatpush1.bf16.msra.mxu0 0
      %1760 = vmatprep.subr.bf16.mxu0 0
      %1761 = vmatpush1.bf16.msra.mxu0 0
      %1762 = vmatprep.mubr.bf16.mxu0 0
      %1763 = vmatmul.mubr.bf16.gmra.mrb[0].mxu0 %v1719
      %v1764 = vpop.f32.mrb[0].mxu0
      %v1765 = vadd.f32 0.0, %v1764
      %v1766 = vpop.f32.mrb[0].mxu0
      %v1767 = vadd.f32 0.0, %v1766
      %v1768 = vpop.f32.mrb[0].mxu0
      %v1769 = vpop.f32.mrb[0].mxu0
      %1770 = vdwg.mxu0
      %1771 = vmatprep.subr.bf16.mxu0 0
      %1772 = vmatpush1.bf16.msra.mxu0 %v1728
      %1773 = vmatprep.subr.bf16.mxu0 0
      %1774 = vmatpush1.bf16.msra.mxu0 0
      %1775 = vmatprep.subr.bf16.mxu0 0
      %1776 = vmatpush1.bf16.msra.mxu0 0
      %1777 = vmatprep.subr.bf16.mxu0 0
      %1778 = vmatpush1.bf16.msra.mxu0 0
      %1779 = vmatprep.subr.bf16.mxu0 0
      %1780 = vmatpush1.bf16.msra.mxu0 0
      %1781 = vmatprep.subr.bf16.mxu0 0
      %1782 = vmatpush1.bf16.msra.mxu0 0
      %1783 = vmatprep.subr.bf16.mxu0 0
      %1784 = vmatpush1.bf16.msra.mxu0 0
      %1785 = vmatprep.subr.bf16.mxu0 0
      %1786 = vmatpush1.bf16.msra.mxu0 0
      %1787 = vmatprep.subr.bf16.mxu0 0
      %1788 = vmatpush1.bf16.msra.mxu0 0
      %1789 = vmatprep.subr.bf16.mxu0 0
      %1790 = vmatpush1.bf16.msra.mxu0 0
      %1791 = vmatprep.subr.bf16.mxu0 0
      %1792 = vmatpush1.bf16.msra.mxu0 0
      %1793 = vmatprep.subr.bf16.mxu0 0
      %1794 = vmatpush1.bf16.msra.mxu0 0
      %1795 = vmatprep.subr.bf16.mxu0 0
      %1796 = vmatpush1.bf16.msra.mxu0 0
      %1797 = vmatprep.subr.bf16.mxu0 0
      %1798 = vmatpush1.bf16.msra.mxu0 0
      %1799 = vmatprep.subr.bf16.mxu0 0
      %1800 = vmatpush1.bf16.msra.mxu0 0
      %1801 = vmatprep.subr.bf16.mxu0 0
      %1802 = vmatpush1.bf16.msra.mxu0 0
      %1803 = vmatprep.mubr.bf16.mxu0 0
      %1804 = vmatmul.mubr.bf16.gmra.mrb[0].mxu0 %v1719
      %v1805 = vpop.f32.mrb[0].mxu0
      %v1806 = vadd.f32 0.0, %v1805
      %v1807 = vpop.f32.mrb[0].mxu0
      %v1808 = vpop.f32.mrb[0].mxu0
      %v1809 = vpop.f32.mrb[0].mxu0
      %1810 = vdwg.mxu0
      %v1811 = vadd.f32 %v1305, %v1765
      %v1812 = vadd.f32 %v1306, %v1767
      %v1813 = vadd.f32 %v1307, %v1806
      %v1814 = vld [vmem:[%s189] sm:$0x7]
      %v1815 = vld [vmem:[%s189 + $0x3] sm:$0x7]
      %v1816 = vld [vmem:[%s189 + $0x6] sm:$0x7]
      %v1817 = vld [vmem:[%s189 + $0x9] sm:$0x7]
      %v1818 = vld [vmem:[%s189 + $0xc] sm:$0x7]
      %v1819 = vld [vmem:[%s189 + $0xf] sm:$0x7]
      %v1820 = vld [vmem:[%s189 + $0x12] sm:$0x7]
      %v1821 = vld [vmem:[%s189 + $0x15] sm:$0x7]
      %v1822 = vld [vmem:[%s189 + $0x18] sm:$0x7]
      %v1823 = vld [vmem:[%s189 + $0x1b] sm:$0x7]
      %v1824 = vld [vmem:[%s189 + $0x1e] sm:$0x7]
      %v1825 = vld [vmem:[%s189 + $0x21] sm:$0x7]
      %s1826 = scalar_lea.vmem %s1, 8
      %v1827 = vld [vmem:[%s1826] sm:$0x3]
      %v1841 = vunpack.c.l.s4 1966171168
      %v1842 = vunpack.c.0.s8 %v1841
      %v1843 = vlaneseq
      %v1844 = vshrl.u32 %v1843, 7
      %v1845 = vsub.s32 %v1842, %v1844
      %v1846 = vrot.slane %v1814, %v1845
      %v1847 = vcombine.high %v1846, %v1846
      %v1849 = vunpack.c.l.s4 1966171168
      %v1850 = vunpack.c.0.s8 %v1849
      %v1851 = vlaneseq
      %v1852 = vshrl.u32 %v1851, 7
      %v1853 = vsub.s32 %v1850, %v1852
      %v1854 = vrot.slane %v1846, %v1853
      %v1856 = vunpack.c.l.s4 1966171168
      %v1857 = vunpack.c.0.s8 %v1856
      %v1858 = vlaneseq
      %v1859 = vshrl.u32 %v1858, 7
      %v1860 = vsub.s32 %v1857, %v1859
      %v1861 = vrot.slane %v1847, %v1860
      %v1862 = vcombine.high %v1854, %v1854
      %v1864 = vunpack.c.l.s4 1966171168
      %v1865 = vunpack.c.0.s8 %v1864
      %v1866 = vlaneseq
      %v1867 = vshrl.u32 %v1866, 7
      %v1868 = vsub.s32 %v1865, %v1867
      %v1869 = vrot.slane %v1815, %v1868
      %v1870 = vcombine.high %v1869, %v1869
      %v1872 = vunpack.c.l.s4 1966171168
      %v1873 = vunpack.c.0.s8 %v1872
      %v1874 = vlaneseq
      %v1875 = vshrl.u32 %v1874, 7
      %v1876 = vsub.s32 %v1873, %v1875
      %v1877 = vrot.slane %v1869, %v1876
      %v1879 = vunpack.c.l.s4 1966171168
      %v1880 = vunpack.c.0.s8 %v1879
      %v1881 = vlaneseq
      %v1882 = vshrl.u32 %v1881, 7
      %v1883 = vsub.s32 %v1880, %v1882
      %v1884 = vrot.slane %v1870, %v1883
      %v1885 = vcombine.high %v1877, %v1877
      %v1887 = vunpack.c.l.s4 1966171168
      %v1888 = vunpack.c.0.s8 %v1887
      %v1889 = vlaneseq
      %v1890 = vshrl.u32 %v1889, 7
      %v1891 = vsub.s32 %v1888, %v1890
      %v1892 = vrot.slane %v1816, %v1891
      %v1893 = vcombine.high %v1892, %v1892
      %v1895 = vunpack.c.l.s4 1966171168
      %v1896 = vunpack.c.0.s8 %v1895
      %v1897 = vlaneseq
      %v1898 = vshrl.u32 %v1897, 7
      %v1899 = vsub.s32 %v1896, %v1898
      %v1900 = vrot.slane %v1892, %v1899
      %v1902 = vunpack.c.l.s4 1966171168
      %v1903 = vunpack.c.0.s8 %v1902
      %v1904 = vlaneseq
      %v1905 = vshrl.u32 %v1904, 7
      %v1906 = vsub.s32 %v1903, %v1905
      %v1907 = vrot.slane %v1893, %v1906
      %v1908 = vcombine.high %v1900, %v1900
      %v1910 = vunpack.c.l.s4 1966171168
      %v1911 = vunpack.c.0.s8 %v1910
      %v1912 = vlaneseq
      %v1913 = vshrl.u32 %v1912, 7
      %v1914 = vsub.s32 %v1911, %v1913
      %v1915 = vrot.slane %v1817, %v1914
      %v1916 = vcombine.high %v1915, %v1915
      %v1918 = vunpack.c.l.s4 1966171168
      %v1919 = vunpack.c.0.s8 %v1918
      %v1920 = vlaneseq
      %v1921 = vshrl.u32 %v1920, 7
      %v1922 = vsub.s32 %v1919, %v1921
      %v1923 = vrot.slane %v1915, %v1922
      %v1925 = vunpack.c.l.s4 1966171168
      %v1926 = vunpack.c.0.s8 %v1925
      %v1927 = vlaneseq
      %v1928 = vshrl.u32 %v1927, 7
      %v1929 = vsub.s32 %v1926, %v1928
      %v1930 = vrot.slane %v1916, %v1929
      %v1931 = vcombine.high %v1923, %v1923
      %v1933 = vunpack.c.l.s4 1966171168
      %v1934 = vunpack.c.0.s8 %v1933
      %v1935 = vlaneseq
      %v1936 = vshrl.u32 %v1935, 7
      %v1937 = vsub.s32 %v1934, %v1936
      %v1938 = vrot.slane %v1818, %v1937
      %v1939 = vcombine.high %v1938, %v1938
      %v1941 = vunpack.c.l.s4 1966171168
      %v1942 = vunpack.c.0.s8 %v1941
      %v1943 = vlaneseq
      %v1944 = vshrl.u32 %v1943, 7
      %v1945 = vsub.s32 %v1942, %v1944
      %v1946 = vrot.slane %v1938, %v1945
      %v1948 = vunpack.c.l.s4 1966171168
      %v1949 = vunpack.c.0.s8 %v1948
      %v1950 = vlaneseq
      %v1951 = vshrl.u32 %v1950, 7
      %v1952 = vsub.s32 %v1949, %v1951
      %v1953 = vrot.slane %v1939, %v1952
      %v1954 = vcombine.high %v1946, %v1946
      %v1956 = vunpack.c.l.s4 1966171168
      %v1957 = vunpack.c.0.s8 %v1956
      %v1958 = vlaneseq
      %v1959 = vshrl.u32 %v1958, 7
      %v1960 = vsub.s32 %v1957, %v1959
      %v1961 = vrot.slane %v1819, %v1960
      %v1962 = vcombine.high %v1961, %v1961
      %v1964 = vunpack.c.l.s4 1966171168
      %v1965 = vunpack.c.0.s8 %v1964
      %v1966 = vlaneseq
      %v1967 = vshrl.u32 %v1966, 7
      %v1968 = vsub.s32 %v1965, %v1967
      %v1969 = vrot.slane %v1961, %v1968
      %v1971 = vunpack.c.l.s4 1966171168
      %v1972 = vunpack.c.0.s8 %v1971
      %v1973 = vlaneseq
      %v1974 = vshrl.u32 %v1973, 7
      %v1975 = vsub.s32 %v1972, %v1974
      %v1976 = vrot.slane %v1962, %v1975
      %v1977 = vcombine.high %v1969, %v1969
      %v1979 = vunpack.c.l.s4 1966171168
      %v1980 = vunpack.c.0.s8 %v1979
      %v1981 = vlaneseq
      %v1982 = vshrl.u32 %v1981, 7
      %v1983 = vsub.s32 %v1980, %v1982
      %v1984 = vrot.slane %v1820, %v1983
      %v1985 = vcombine.high %v1984, %v1984
      %v1987 = vunpack.c.l.s4 1966171168
      %v1988 = vunpack.c.0.s8 %v1987
      %v1989 = vlaneseq
      %v1990 = vshrl.u32 %v1989, 7
      %v1991 = vsub.s32 %v1988, %v1990
      %v1992 = vrot.slane %v1984, %v1991
      %v1994 = vunpack.c.l.s4 1966171168
      %v1995 = vunpack.c.0.s8 %v1994
      %v1996 = vlaneseq
      %v1997 = vshrl.u32 %v1996, 7
      %v1998 = vsub.s32 %v1995, %v1997
      %v1999 = vrot.slane %v1985, %v1998
      %v2000 = vcombine.high %v1992, %v1992
      %v2002 = vunpack.c.l.s4 1966171168
      %v2003 = vunpack.c.0.s8 %v2002
      %v2004 = vlaneseq
      %v2005 = vshrl.u32 %v2004, 7
      %v2006 = vsub.s32 %v2003, %v2005
      %v2007 = vrot.slane %v1821, %v2006
      %v2008 = vcombine.high %v2007, %v2007
      %v2010 = vunpack.c.l.s4 1966171168
      %v2011 = vunpack.c.0.s8 %v2010
      %v2012 = vlaneseq
      %v2013 = vshrl.u32 %v2012, 7
      %v2014 = vsub.s32 %v2011, %v2013
      %v2015 = vrot.slane %v2007, %v2014
      %v2017 = vunpack.c.l.s4 1966171168
      %v2018 = vunpack.c.0.s8 %v2017
      %v2019 = vlaneseq
      %v2020 = vshrl.u32 %v2019, 7
      %v2021 = vsub.s32 %v2018, %v2020
      %v2022 = vrot.slane %v2008, %v2021
      %v2023 = vcombine.high %v2015, %v2015
      %v2025 = vunpack.c.l.s4 1966171168
      %v2026 = vunpack.c.0.s8 %v2025
      %v2027 = vlaneseq
      %v2028 = vshrl.u32 %v2027, 7
      %v2029 = vsub.s32 %v2026, %v2028
      %v2030 = vrot.slane %v1822, %v2029
      %v2031 = vcombine.high %v2030, %v2030
      %v2033 = vunpack.c.l.s4 1966171168
      %v2034 = vunpack.c.0.s8 %v2033
      %v2035 = vlaneseq
      %v2036 = vshrl.u32 %v2035, 7
      %v2037 = vsub.s32 %v2034, %v2036
      %v2038 = vrot.slane %v2030, %v2037
      %v2040 = vunpack.c.l.s4 1966171168
      %v2041 = vunpack.c.0.s8 %v2040
      %v2042 = vlaneseq
      %v2043 = vshrl.u32 %v2042, 7
      %v2044 = vsub.s32 %v2041, %v2043
      %v2045 = vrot.slane %v2031, %v2044
      %v2046 = vcombine.high %v2038, %v2038
      %v2048 = vunpack.c.l.s4 1966171168
      %v2049 = vunpack.c.0.s8 %v2048
      %v2050 = vlaneseq
      %v2051 = vshrl.u32 %v2050, 7
      %v2052 = vsub.s32 %v2049, %v2051
      %v2053 = vrot.slane %v1823, %v2052
      %v2054 = vcombine.high %v2053, %v2053
      %v2056 = vunpack.c.l.s4 1966171168
      %v2057 = vunpack.c.0.s8 %v2056
      %v2058 = vlaneseq
      %v2059 = vshrl.u32 %v2058, 7
      %v2060 = vsub.s32 %v2057, %v2059
      %v2061 = vrot.slane %v2053, %v2060
      %v2063 = vunpack.c.l.s4 1966171168
      %v2064 = vunpack.c.0.s8 %v2063
      %v2065 = vlaneseq
      %v2066 = vshrl.u32 %v2065, 7
      %v2067 = vsub.s32 %v2064, %v2066
      %v2068 = vrot.slane %v2054, %v2067
      %v2069 = vcombine.high %v2061, %v2061
      %v2071 = vunpack.c.l.s4 1966171168
      %v2072 = vunpack.c.0.s8 %v2071
      %v2073 = vlaneseq
      %v2074 = vshrl.u32 %v2073, 7
      %v2075 = vsub.s32 %v2072, %v2074
      %v2076 = vrot.slane %v1824, %v2075
      %v2077 = vcombine.high %v2076, %v2076
      %v2079 = vunpack.c.l.s4 1966171168
      %v2080 = vunpack.c.0.s8 %v2079
      %v2081 = vlaneseq
      %v2082 = vshrl.u32 %v2081, 7
      %v2083 = vsub.s32 %v2080, %v2082
      %v2084 = vrot.slane %v2076, %v2083
      %v2086 = vunpack.c.l.s4 1966171168
      %v2087 = vunpack.c.0.s8 %v2086
      %v2088 = vlaneseq
      %v2089 = vshrl.u32 %v2088, 7
      %v2090 = vsub.s32 %v2087, %v2089
      %v2091 = vrot.slane %v2077, %v2090
      %v2092 = vcombine.high %v2084, %v2084
      %v2094 = vunpack.c.l.s4 1966171168
      %v2095 = vunpack.c.0.s8 %v2094
      %v2096 = vlaneseq
      %v2097 = vshrl.u32 %v2096, 7
      %v2098 = vsub.s32 %v2095, %v2097
      %v2099 = vrot.slane %v1825, %v2098
      %v2100 = vcombine.high %v2099, %v2099
      %v2102 = vunpack.c.l.s4 1966171168
      %v2103 = vunpack.c.0.s8 %v2102
      %v2104 = vlaneseq
      %v2105 = vshrl.u32 %v2104, 7
      %v2106 = vsub.s32 %v2103, %v2105
      %v2107 = vrot.slane %v2099, %v2106
      %v2109 = vunpack.c.l.s4 1966171168
      %v2110 = vunpack.c.0.s8 %v2109
      %v2111 = vlaneseq
      %v2112 = vshrl.u32 %v2111, 7
      %v2113 = vsub.s32 %v2110, %v2112
      %v2114 = vrot.slane %v2100, %v2113
      %v2115 = vcombine.high %v2107, %v2107
      %v2116 = vunpack.c.l.b16 %v1854
      %v2117 = vunpack.c.l.b16 %v1861
      %v2118 = vunpack.c.l.b16 %v1862
      %v2119 = vunpack.c.l.b16 %v1877
      %v2120 = vunpack.c.l.b16 %v1884
      %v2121 = vunpack.c.l.b16 %v1885
      %v2122 = vunpack.c.l.b16 %v1900
      %v2123 = vunpack.c.l.b16 %v1907
      %v2124 = vunpack.c.l.b16 %v1908
      %v2125 = vunpack.c.l.b16 %v1923
      %v2126 = vunpack.c.l.b16 %v1930
      %v2127 = vunpack.c.l.b16 %v1931
      %v2128 = vunpack.c.l.b16 %v1946
      %v2129 = vunpack.c.l.b16 %v1953
      %v2130 = vunpack.c.l.b16 %v1954
      %v2131 = vunpack.c.l.b16 %v1969
      %v2132 = vunpack.c.l.b16 %v1976
      %v2133 = vunpack.c.l.b16 %v1977
      %v2134 = vunpack.c.l.b16 %v1992
      %v2135 = vunpack.c.l.b16 %v1999
      %v2136 = vunpack.c.l.b16 %v2000
      %v2137 = vunpack.c.l.b16 %v2015
      %v2138 = vunpack.c.l.b16 %v2022
      %v2139 = vunpack.c.l.b16 %v2023
      %v2140 = vunpack.c.l.b16 %v2038
      %v2141 = vunpack.c.l.b16 %v2045
      %v2142 = vunpack.c.l.b16 %v2046
      %v2143 = vunpack.c.l.b16 %v2061
      %v2144 = vunpack.c.l.b16 %v2068
      %v2145 = vunpack.c.l.b16 %v2069
      %v2146 = vunpack.c.l.b16 %v2084
      %v2147 = vunpack.c.l.b16 %v2091
      %v2148 = vunpack.c.l.b16 %v2092
      %v2149 = vunpack.c.l.b16 %v2107
      %v2150 = vunpack.c.l.b16 %v2114
      %v2151 = vunpack.c.l.b16 %v2115
      %v2152 = vrot.slane %v2119, 7
      %v2153 = vsel %vm536, %v2152, %v2116
      %v2154 = vrot.slane %v2122, 6
      %v2155 = vsel %vm539, %v2154, %v2153
      %v2156 = vrot.slane %v2125, 5
      %v2157 = vsel %vm542, %v2156, %v2155
      %v2158 = vrot.slane %v2128, 4
      %v2159 = vsel %vm545, %v2158, %v2157
      %v2160 = vrot.slane %v2131, 3
      %v2161 = vsel %vm548, %v2160, %v2159
      %v2162 = vrot.slane %v2134, 2
      %v2163 = vsel %vm551, %v2162, %v2161
      %v2164 = vrot.slane %v2137, 1
      %v2165 = vsel %vm554, %v2164, %v2163
      %v2166 = vrot.slane %v2120, 7
      %v2167 = vsel %vm536, %v2166, %v2117
      %v2168 = vrot.slane %v2123, 6
      %v2169 = vsel %vm539, %v2168, %v2167
      %v2170 = vrot.slane %v2126, 5
      %v2171 = vsel %vm542, %v2170, %v2169
      %v2172 = vrot.slane %v2129, 4
      %v2173 = vsel %vm545, %v2172, %v2171
      %v2174 = vrot.slane %v2132, 3
      %v2175 = vsel %vm548, %v2174, %v2173
      %v2176 = vrot.slane %v2135, 2
      %v2177 = vsel %vm551, %v2176, %v2175
      %v2178 = vrot.slane %v2138, 1
      %v2179 = vsel %vm554, %v2178, %v2177
      %v2180 = vrot.slane %v2121, 7
      %v2181 = vsel %vm536, %v2180, %v2118
      %v2182 = vrot.slane %v2124, 6
      %v2183 = vsel %vm539, %v2182, %v2181
      %v2184 = vrot.slane %v2127, 5
      %v2185 = vsel %vm542, %v2184, %v2183
      %v2186 = vrot.slane %v2130, 4
      %v2187 = vsel %vm545, %v2186, %v2185
      %v2188 = vrot.slane %v2133, 3
      %v2189 = vsel %vm548, %v2188, %v2187
      %v2190 = vrot.slane %v2136, 2
      %v2191 = vsel %vm551, %v2190, %v2189
      %v2192 = vrot.slane %v2139, 1
      %v2193 = vsel %vm554, %v2192, %v2191
      %v2194 = vrot.slane %v2143, 7
      %v2195 = vsel %vm536, %v2194, %v2140
      %v2196 = vrot.slane %v2146, 6
      %v2197 = vsel %vm539, %v2196, %v2195
      %v2198 = vrot.slane %v2149, 5
      %v2199 = vsel %vm542, %v2198, %v2197
      %v2200 = vrot.slane %v2144, 7
      %v2201 = vsel %vm536, %v2200, %v2141
      %v2202 = vrot.slane %v2147, 6
      %v2203 = vsel %vm539, %v2202, %v2201
      %v2204 = vrot.slane %v2150, 5
      %v2205 = vsel %vm542, %v2204, %v2203
      %v2206 = vrot.slane %v2145, 7
      %v2207 = vsel %vm536, %v2206, %v2142
      %v2208 = vrot.slane %v2148, 6
      %v2209 = vsel %vm539, %v2208, %v2207
      %v2210 = vrot.slane %v2151, 5
      %v2211 = vsel %vm542, %v2210, %v2209
      %v2212 = vpack.c.b16 %v2199, %v2165
      %v2213 = vpack.c.b16 %v2205, %v2179
      %v2214 = vpack.c.b16 %v2211, %v2193
      %2215 = vrot.lane.b32.xlu0 %v2212, 109
      %v2216 = vpop.permute.xlu0 %2215
      %2217 = vrot.lane.b32.xlu0 %v2213, 109
      %v2218 = vpop.permute.xlu0 %2217
      %2219 = vrot.lane.b32.xlu0 %v2214, 109
      %v2220 = vpop.permute.xlu0 %2219
      %vm2221 = vcmask 891904
      %v2222 = vsel %vm2221, %v2216, %v2218
      %v2223 = vsel %vm2221, %v2218, %v2220
      %v2225 = vsel %vm614, %v1827, 0
      %v2228 = vsel %vm618, %v2222, 0
      %v2231 = vsel %vm618, %v2223, 0
      %v2234 = vsel %vm618, %v2220, 0
      %2236 = vmatprep.subr.bf16.mxu0 %v2231
      %2237 = vmatpush1.bf16.msra.mxu0 %v2228
      %2238 = vmatprep.subr.bf16.mxu0 0
      %2239 = vmatpush1.bf16.msra.mxu0 0
      %2240 = vmatprep.subr.bf16.mxu0 0
      %2241 = vmatpush1.bf16.msra.mxu0 0
      %2242 = vmatprep.subr.bf16.mxu0 0
      %2243 = vmatpush1.bf16.msra.mxu0 0
      %2244 = vmatprep.subr.bf16.mxu0 0
      %2245 = vmatpush1.bf16.msra.mxu0 0
      %2246 = vmatprep.subr.bf16.mxu0 0
      %2247 = vmatpush1.bf16.msra.mxu0 0
      %2248 = vmatprep.subr.bf16.mxu0 0
      %2249 = vmatpush1.bf16.msra.mxu0 0
      %2250 = vmatprep.subr.bf16.mxu0 0
      %2251 = vmatpush1.bf16.msra.mxu0 0
      %2252 = vmatprep.subr.bf16.mxu0 0
      %2253 = vmatpush1.bf16.msra.mxu0 0
      %2254 = vmatprep.subr.bf16.mxu0 0
      %2255 = vmatpush1.bf16.msra.mxu0 0
      %2256 = vmatprep.subr.bf16.mxu0 0
      %2257 = vmatpush1.bf16.msra.mxu0 0
      %2258 = vmatprep.subr.bf16.mxu0 0
      %2259 = vmatpush1.bf16.msra.mxu0 0
      %2260 = vmatprep.subr.bf16.mxu0 0
      %2261 = vmatpush1.bf16.msra.mxu0 0
      %2262 = vmatprep.subr.bf16.mxu0 0
      %2263 = vmatpush1.bf16.msra.mxu0 0
      %2264 = vmatprep.subr.bf16.mxu0 0
      %2265 = vmatpush1.bf16.msra.mxu0 0
      %2266 = vmatprep.subr.bf16.mxu0 0
      %2267 = vmatpush1.bf16.msra.mxu0 0
      %2268 = vmatprep.mubr.bf16.mxu0 0
      %2269 = vmatmul.mubr.bf16.gmra.mrb[0].mxu0 %v2225
      %v2270 = vpop.f32.mrb[0].mxu0
      %v2271 = vadd.f32 0.0, %v2270
      %v2272 = vpop.f32.mrb[0].mxu0
      %v2273 = vadd.f32 0.0, %v2272
      %v2274 = vpop.f32.mrb[0].mxu0
      %v2275 = vpop.f32.mrb[0].mxu0
      %2276 = vdwg.mxu0
      %2277 = vmatprep.subr.bf16.mxu0 0
      %2278 = vmatpush1.bf16.msra.mxu0 %v2234
      %2279 = vmatprep.subr.bf16.mxu0 0
      %2280 = vmatpush1.bf16.msra.mxu0 0
      %2281 = vmatprep.subr.bf16.mxu0 0
      %2282 = vmatpush1.bf16.msra.mxu0 0
      %2283 = vmatprep.subr.bf16.mxu0 0
      %2284 = vmatpush1.bf16.msra.mxu0 0
      %2285 = vmatprep.subr.bf16.mxu0 0
      %2286 = vmatpush1.bf16.msra.mxu0 0
      %2287 = vmatprep.subr.bf16.mxu0 0
      %2288 = vmatpush1.bf16.msra.mxu0 0
      %2289 = vmatprep.subr.bf16.mxu0 0
      %2290 = vmatpush1.bf16.msra.mxu0 0
      %2291 = vmatprep.subr.bf16.mxu0 0
      %2292 = vmatpush1.bf16.msra.mxu0 0
      %2293 = vmatprep.subr.bf16.mxu0 0
      %2294 = vmatpush1.bf16.msra.mxu0 0
      %2295 = vmatprep.subr.bf16.mxu0 0
      %2296 = vmatpush1.bf16.msra.mxu0 0
      %2297 = vmatprep.subr.bf16.mxu0 0
      %2298 = vmatpush1.bf16.msra.mxu0 0
      %2299 = vmatprep.subr.bf16.mxu0 0
      %2300 = vmatpush1.bf16.msra.mxu0 0
      %2301 = vmatprep.subr.bf16.mxu0 0
      %2302 = vmatpush1.bf16.msra.mxu0 0
      %2303 = vmatprep.subr.bf16.mxu0 0
      %2304 = vmatpush1.bf16.msra.mxu0 0
      %2305 = vmatprep.subr.bf16.mxu0 0
      %2306 = vmatpush1.bf16.msra.mxu0 0
      %2307 = vmatprep.subr.bf16.mxu0 0
      %2308 = vmatpush1.bf16.msra.mxu0 0
      %2309 = vmatprep.mubr.bf16.mxu0 0
      %2310 = vmatmul.mubr.bf16.gmra.mrb[0].mxu0 %v2225
      %v2311 = vpop.f32.mrb[0].mxu0
      %v2312 = vadd.f32 0.0, %v2311
      %v2313 = vpop.f32.mrb[0].mxu0
      %v2314 = vpop.f32.mrb[0].mxu0
      %v2315 = vpop.f32.mrb[0].mxu0
      %2316 = vdwg.mxu0
      %v2317 = vadd.f32 %v1811, %v2271
      %v2318 = vadd.f32 %v1812, %v2273
      %v2319 = vadd.f32 %v1813, %v2312
      %v2320 = vld [vmem:[%s189] sm:$0x7]
      %v2321 = vld [vmem:[%s189 + $0x3] sm:$0x7]
      %v2322 = vld [vmem:[%s189 + $0x6] sm:$0x7]
      %v2323 = vld [vmem:[%s189 + $0x9] sm:$0x7]
      %v2324 = vld [vmem:[%s189 + $0xc] sm:$0x7]
      %v2325 = vld [vmem:[%s189 + $0xf] sm:$0x7]
      %v2326 = vld [vmem:[%s189 + $0x12] sm:$0x7]
      %v2327 = vld [vmem:[%s189 + $0x15] sm:$0x7]
      %v2328 = vld [vmem:[%s189 + $0x18] sm:$0x7]
      %v2329 = vld [vmem:[%s189 + $0x1b] sm:$0x7]
      %v2330 = vld [vmem:[%s189 + $0x1e] sm:$0x7]
      %v2331 = vld [vmem:[%s189 + $0x21] sm:$0x7]
      %s2332 = scalar_lea.vmem %s1, 10
      %v2333 = vld [vmem:[%s2332] sm:$0x3]
      %v2347 = vunpack.c.l.s4 1966171168
      %v2348 = vunpack.c.0.s8 %v2347
      %v2349 = vlaneseq
      %v2350 = vshrl.u32 %v2349, 7
      %v2351 = vsub.s32 %v2348, %v2350
      %v2352 = vrot.slane %v2320, %v2351
      %v2353 = vcombine.high %v2352, %v2352
      %v2355 = vunpack.c.l.s4 1966171168
      %v2356 = vunpack.c.0.s8 %v2355
      %v2357 = vlaneseq
      %v2358 = vshrl.u32 %v2357, 7
      %v2359 = vsub.s32 %v2356, %v2358
      %v2360 = vrot.slane %v2352, %v2359
      %v2362 = vunpack.c.l.s4 1966171168
      %v2363 = vunpack.c.0.s8 %v2362
      %v2364 = vlaneseq
      %v2365 = vshrl.u32 %v2364, 7
      %v2366 = vsub.s32 %v2363, %v2365
      %v2367 = vrot.slane %v2353, %v2366
      %v2368 = vcombine.high %v2360, %v2360
      %v2370 = vunpack.c.l.s4 1966171168
      %v2371 = vunpack.c.0.s8 %v2370
      %v2372 = vlaneseq
      %v2373 = vshrl.u32 %v2372, 7
      %v2374 = vsub.s32 %v2371, %v2373
      %v2375 = vrot.slane %v2321, %v2374
      %v2376 = vcombine.high %v2375, %v2375
      %v2378 = vunpack.c.l.s4 1966171168
      %v2379 = vunpack.c.0.s8 %v2378
      %v2380 = vlaneseq
      %v2381 = vshrl.u32 %v2380, 7
      %v2382 = vsub.s32 %v2379, %v2381
      %v2383 = vrot.slane %v2375, %v2382
      %v2385 = vunpack.c.l.s4 1966171168
      %v2386 = vunpack.c.0.s8 %v2385
      %v2387 = vlaneseq
      %v2388 = vshrl.u32 %v2387, 7
      %v2389 = vsub.s32 %v2386, %v2388
      %v2390 = vrot.slane %v2376, %v2389
      %v2391 = vcombine.high %v2383, %v2383
      %v2393 = vunpack.c.l.s4 1966171168
      %v2394 = vunpack.c.0.s8 %v2393
      %v2395 = vlaneseq
      %v2396 = vshrl.u32 %v2395, 7
      %v2397 = vsub.s32 %v2394, %v2396
      %v2398 = vrot.slane %v2322, %v2397
      %v2399 = vcombine.high %v2398, %v2398
      %v2401 = vunpack.c.l.s4 1966171168
      %v2402 = vunpack.c.0.s8 %v2401
      %v2403 = vlaneseq
      %v2404 = vshrl.u32 %v2403, 7
      %v2405 = vsub.s32 %v2402, %v2404
      %v2406 = vrot.slane %v2398, %v2405
      %v2408 = vunpack.c.l.s4 1966171168
      %v2409 = vunpack.c.0.s8 %v2408
      %v2410 = vlaneseq
      %v2411 = vshrl.u32 %v2410, 7
      %v2412 = vsub.s32 %v2409, %v2411
      %v2413 = vrot.slane %v2399, %v2412
      %v2414 = vcombine.high %v2406, %v2406
      %v2416 = vunpack.c.l.s4 1966171168
      %v2417 = vunpack.c.0.s8 %v2416
      %v2418 = vlaneseq
      %v2419 = vshrl.u32 %v2418, 7
      %v2420 = vsub.s32 %v2417, %v2419
      %v2421 = vrot.slane %v2323, %v2420
      %v2422 = vcombine.high %v2421, %v2421
      %v2424 = vunpack.c.l.s4 1966171168
      %v2425 = vunpack.c.0.s8 %v2424
      %v2426 = vlaneseq
      %v2427 = vshrl.u32 %v2426, 7
      %v2428 = vsub.s32 %v2425, %v2427
      %v2429 = vrot.slane %v2421, %v2428
      %v2431 = vunpack.c.l.s4 1966171168
      %v2432 = vunpack.c.0.s8 %v2431
      %v2433 = vlaneseq
      %v2434 = vshrl.u32 %v2433, 7
      %v2435 = vsub.s32 %v2432, %v2434
      %v2436 = vrot.slane %v2422, %v2435
      %v2437 = vcombine.high %v2429, %v2429
      %v2439 = vunpack.c.l.s4 1966171168
      %v2440 = vunpack.c.0.s8 %v2439
      %v2441 = vlaneseq
      %v2442 = vshrl.u32 %v2441, 7
      %v2443 = vsub.s32 %v2440, %v2442
      %v2444 = vrot.slane %v2324, %v2443
      %v2445 = vcombine.high %v2444, %v2444
      %v2447 = vunpack.c.l.s4 1966171168
      %v2448 = vunpack.c.0.s8 %v2447
      %v2449 = vlaneseq
      %v2450 = vshrl.u32 %v2449, 7
      %v2451 = vsub.s32 %v2448, %v2450
      %v2452 = vrot.slane %v2444, %v2451
      %v2454 = vunpack.c.l.s4 1966171168
      %v2455 = vunpack.c.0.s8 %v2454
      %v2456 = vlaneseq
      %v2457 = vshrl.u32 %v2456, 7
      %v2458 = vsub.s32 %v2455, %v2457
      %v2459 = vrot.slane %v2445, %v2458
      %v2460 = vcombine.high %v2452, %v2452
      %v2462 = vunpack.c.l.s4 1966171168
      %v2463 = vunpack.c.0.s8 %v2462
      %v2464 = vlaneseq
      %v2465 = vshrl.u32 %v2464, 7
      %v2466 = vsub.s32 %v2463, %v2465
      %v2467 = vrot.slane %v2325, %v2466
      %v2468 = vcombine.high %v2467, %v2467
      %v2470 = vunpack.c.l.s4 1966171168
      %v2471 = vunpack.c.0.s8 %v2470
      %v2472 = vlaneseq
      %v2473 = vshrl.u32 %v2472, 7
      %v2474 = vsub.s32 %v2471, %v2473
      %v2475 = vrot.slane %v2467, %v2474
      %v2477 = vunpack.c.l.s4 1966171168
      %v2478 = vunpack.c.0.s8 %v2477
      %v2479 = vlaneseq
      %v2480 = vshrl.u32 %v2479, 7
      %v2481 = vsub.s32 %v2478, %v2480
      %v2482 = vrot.slane %v2468, %v2481
      %v2483 = vcombine.high %v2475, %v2475
      %v2485 = vunpack.c.l.s4 1966171168
      %v2486 = vunpack.c.0.s8 %v2485
      %v2487 = vlaneseq
      %v2488 = vshrl.u32 %v2487, 7
      %v2489 = vsub.s32 %v2486, %v2488
      %v2490 = vrot.slane %v2326, %v2489
      %v2491 = vcombine.high %v2490, %v2490
      %v2493 = vunpack.c.l.s4 1966171168
      %v2494 = vunpack.c.0.s8 %v2493
      %v2495 = vlaneseq
      %v2496 = vshrl.u32 %v2495, 7
      %v2497 = vsub.s32 %v2494, %v2496
      %v2498 = vrot.slane %v2490, %v2497
      %v2500 = vunpack.c.l.s4 1966171168
      %v2501 = vunpack.c.0.s8 %v2500
      %v2502 = vlaneseq
      %v2503 = vshrl.u32 %v2502, 7
      %v2504 = vsub.s32 %v2501, %v2503
      %v2505 = vrot.slane %v2491, %v2504
      %v2506 = vcombine.high %v2498, %v2498
      %v2508 = vunpack.c.l.s4 1966171168
      %v2509 = vunpack.c.0.s8 %v2508
      %v2510 = vlaneseq
      %v2511 = vshrl.u32 %v2510, 7
      %v2512 = vsub.s32 %v2509, %v2511
      %v2513 = vrot.slane %v2327, %v2512
      %v2514 = vcombine.high %v2513, %v2513
      %v2516 = vunpack.c.l.s4 1966171168
      %v2517 = vunpack.c.0.s8 %v2516
      %v2518 = vlaneseq
      %v2519 = vshrl.u32 %v2518, 7
      %v2520 = vsub.s32 %v2517, %v2519
      %v2521 = vrot.slane %v2513, %v2520
      %v2523 = vunpack.c.l.s4 1966171168
      %v2524 = vunpack.c.0.s8 %v2523
      %v2525 = vlaneseq
      %v2526 = vshrl.u32 %v2525, 7
      %v2527 = vsub.s32 %v2524, %v2526
      %v2528 = vrot.slane %v2514, %v2527
      %v2529 = vcombine.high %v2521, %v2521
      %v2531 = vunpack.c.l.s4 1966171168
      %v2532 = vunpack.c.0.s8 %v2531
      %v2533 = vlaneseq
      %v2534 = vshrl.u32 %v2533, 7
      %v2535 = vsub.s32 %v2532, %v2534
      %v2536 = vrot.slane %v2328, %v2535
      %v2537 = vcombine.high %v2536, %v2536
      %v2539 = vunpack.c.l.s4 1966171168
      %v2540 = vunpack.c.0.s8 %v2539
      %v2541 = vlaneseq
      %v2542 = vshrl.u32 %v2541, 7
      %v2543 = vsub.s32 %v2540, %v2542
      %v2544 = vrot.slane %v2536, %v2543
      %v2546 = vunpack.c.l.s4 1966171168
      %v2547 = vunpack.c.0.s8 %v2546
      %v2548 = vlaneseq
      %v2549 = vshrl.u32 %v2548, 7
      %v2550 = vsub.s32 %v2547, %v2549
      %v2551 = vrot.slane %v2537, %v2550
      %v2552 = vcombine.high %v2544, %v2544
      %v2554 = vunpack.c.l.s4 1966171168
      %v2555 = vunpack.c.0.s8 %v2554
      %v2556 = vlaneseq
      %v2557 = vshrl.u32 %v2556, 7
      %v2558 = vsub.s32 %v2555, %v2557
      %v2559 = vrot.slane %v2329, %v2558
      %v2560 = vcombine.high %v2559, %v2559
      %v2562 = vunpack.c.l.s4 1966171168
      %v2563 = vunpack.c.0.s8 %v2562
      %v2564 = vlaneseq
      %v2565 = vshrl.u32 %v2564, 7
      %v2566 = vsub.s32 %v2563, %v2565
      %v2567 = vrot.slane %v2559, %v2566
      %v2569 = vunpack.c.l.s4 1966171168
      %v2570 = vunpack.c.0.s8 %v2569
      %v2571 = vlaneseq
      %v2572 = vshrl.u32 %v2571, 7
      %v2573 = vsub.s32 %v2570, %v2572
      %v2574 = vrot.slane %v2560, %v2573
      %v2575 = vcombine.high %v2567, %v2567
      %v2577 = vunpack.c.l.s4 1966171168
      %v2578 = vunpack.c.0.s8 %v2577
      %v2579 = vlaneseq
      %v2580 = vshrl.u32 %v2579, 7
      %v2581 = vsub.s32 %v2578, %v2580
      %v2582 = vrot.slane %v2330, %v2581
      %v2583 = vcombine.high %v2582, %v2582
      %v2585 = vunpack.c.l.s4 1966171168
      %v2586 = vunpack.c.0.s8 %v2585
      %v2587 = vlaneseq
      %v2588 = vshrl.u32 %v2587, 7
      %v2589 = vsub.s32 %v2586, %v2588
      %v2590 = vrot.slane %v2582, %v2589
      %v2592 = vunpack.c.l.s4 1966171168
      %v2593 = vunpack.c.0.s8 %v2592
      %v2594 = vlaneseq
      %v2595 = vshrl.u32 %v2594, 7
      %v2596 = vsub.s32 %v2593, %v2595
      %v2597 = vrot.slane %v2583, %v2596
      %v2598 = vcombine.high %v2590, %v2590
      %v2600 = vunpack.c.l.s4 1966171168
      %v2601 = vunpack.c.0.s8 %v2600
      %v2602 = vlaneseq
      %v2603 = vshrl.u32 %v2602, 7
      %v2604 = vsub.s32 %v2601, %v2603
      %v2605 = vrot.slane %v2331, %v2604
      %v2606 = vcombine.high %v2605, %v2605
      %v2608 = vunpack.c.l.s4 1966171168
      %v2609 = vunpack.c.0.s8 %v2608
      %v2610 = vlaneseq
      %v2611 = vshrl.u32 %v2610, 7
      %v2612 = vsub.s32 %v2609, %v2611
      %v2613 = vrot.slane %v2605, %v2612
      %v2615 = vunpack.c.l.s4 1966171168
      %v2616 = vunpack.c.0.s8 %v2615
      %v2617 = vlaneseq
      %v2618 = vshrl.u32 %v2617, 7
      %v2619 = vsub.s32 %v2616, %v2618
      %v2620 = vrot.slane %v2606, %v2619
      %v2621 = vcombine.high %v2613, %v2613
      %v2622 = vunpack.c.l.b16 %v2360
      %v2623 = vunpack.c.l.b16 %v2367
      %v2624 = vunpack.c.l.b16 %v2368
      %v2625 = vunpack.c.l.b16 %v2383
      %v2626 = vunpack.c.l.b16 %v2390
      %v2627 = vunpack.c.l.b16 %v2391
      %v2628 = vunpack.c.l.b16 %v2406
      %v2629 = vunpack.c.l.b16 %v2413
      %v2630 = vunpack.c.l.b16 %v2414
      %v2631 = vunpack.c.l.b16 %v2429
      %v2632 = vunpack.c.l.b16 %v2436
      %v2633 = vunpack.c.l.b16 %v2437
      %v2634 = vunpack.c.l.b16 %v2452
      %v2635 = vunpack.c.l.b16 %v2459
      %v2636 = vunpack.c.l.b16 %v2460
      %v2637 = vunpack.c.l.b16 %v2475
      %v2638 = vunpack.c.l.b16 %v2482
      %v2639 = vunpack.c.l.b16 %v2483
      %v2640 = vunpack.c.l.b16 %v2498
      %v2641 = vunpack.c.l.b16 %v2505
      %v2642 = vunpack.c.l.b16 %v2506
      %v2643 = vunpack.c.l.b16 %v2521
      %v2644 = vunpack.c.l.b16 %v2528
      %v2645 = vunpack.c.l.b16 %v2529
      %v2646 = vunpack.c.l.b16 %v2544
      %v2647 = vunpack.c.l.b16 %v2551
      %v2648 = vunpack.c.l.b16 %v2552
      %v2649 = vunpack.c.l.b16 %v2567
      %v2650 = vunpack.c.l.b16 %v2574
      %v2651 = vunpack.c.l.b16 %v2575
      %v2652 = vunpack.c.l.b16 %v2590
      %v2653 = vunpack.c.l.b16 %v2597
      %v2654 = vunpack.c.l.b16 %v2598
      %v2655 = vunpack.c.l.b16 %v2613
      %v2656 = vunpack.c.l.b16 %v2620
      %v2657 = vunpack.c.l.b16 %v2621
      %v2658 = vrot.slane %v2625, 7
      %v2659 = vsel %vm536, %v2658, %v2622
      %v2660 = vrot.slane %v2628, 6
      %v2661 = vsel %vm539, %v2660, %v2659
      %v2662 = vrot.slane %v2631, 5
      %v2663 = vsel %vm542, %v2662, %v2661
      %v2664 = vrot.slane %v2634, 4
      %v2665 = vsel %vm545, %v2664, %v2663
      %v2666 = vrot.slane %v2637, 3
      %v2667 = vsel %vm548, %v2666, %v2665
      %v2668 = vrot.slane %v2640, 2
      %v2669 = vsel %vm551, %v2668, %v2667
      %v2670 = vrot.slane %v2643, 1
      %v2671 = vsel %vm554, %v2670, %v2669
      %v2672 = vrot.slane %v2626, 7
      %v2673 = vsel %vm536, %v2672, %v2623
      %v2674 = vrot.slane %v2629, 6
      %v2675 = vsel %vm539, %v2674, %v2673
      %v2676 = vrot.slane %v2632, 5
      %v2677 = vsel %vm542, %v2676, %v2675
      %v2678 = vrot.slane %v2635, 4
      %v2679 = vsel %vm545, %v2678, %v2677
      %v2680 = vrot.slane %v2638, 3
      %v2681 = vsel %vm548, %v2680, %v2679
      %v2682 = vrot.slane %v2641, 2
      %v2683 = vsel %vm551, %v2682, %v2681
      %v2684 = vrot.slane %v2644, 1
      %v2685 = vsel %vm554, %v2684, %v2683
      %v2686 = vrot.slane %v2627, 7
      %v2687 = vsel %vm536, %v2686, %v2624
      %v2688 = vrot.slane %v2630, 6
      %v2689 = vsel %vm539, %v2688, %v2687
      %v2690 = vrot.slane %v2633, 5
      %v2691 = vsel %vm542, %v2690, %v2689
      %v2692 = vrot.slane %v2636, 4
      %v2693 = vsel %vm545, %v2692, %v2691
      %v2694 = vrot.slane %v2639, 3
      %v2695 = vsel %vm548, %v2694, %v2693
      %v2696 = vrot.slane %v2642, 2
      %v2697 = vsel %vm551, %v2696, %v2695
      %v2698 = vrot.slane %v2645, 1
      %v2699 = vsel %vm554, %v2698, %v2697
      %v2700 = vrot.slane %v2649, 7
      %v2701 = vsel %vm536, %v2700, %v2646
      %v2702 = vrot.slane %v2652, 6
      %v2703 = vsel %vm539, %v2702, %v2701
      %v2704 = vrot.slane %v2655, 5
      %v2705 = vsel %vm542, %v2704, %v2703
      %v2706 = vrot.slane %v2650, 7
      %v2707 = vsel %vm536, %v2706, %v2647
      %v2708 = vrot.slane %v2653, 6
      %v2709 = vsel %vm539, %v2708, %v2707
      %v2710 = vrot.slane %v2656, 5
      %v2711 = vsel %vm542, %v2710, %v2709
      %v2712 = vrot.slane %v2651, 7
      %v2713 = vsel %vm536, %v2712, %v2648
      %v2714 = vrot.slane %v2654, 6
      %v2715 = vsel %vm539, %v2714, %v2713
      %v2716 = vrot.slane %v2657, 5
      %v2717 = vsel %vm542, %v2716, %v2715
      %v2718 = vpack.c.b16 %v2705, %v2671
      %v2719 = vpack.c.b16 %v2711, %v2685
      %v2720 = vpack.c.b16 %v2717, %v2699
      %2721 = vrot.lane.b32.xlu0 %v2718, 108
      %v2722 = vpop.permute.xlu0 %2721
      %2723 = vrot.lane.b32.xlu0 %v2719, 108
      %v2724 = vpop.permute.xlu0 %2723
      %2725 = vrot.lane.b32.xlu0 %v2720, 108
      %v2726 = vpop.permute.xlu0 %2725
      %vm2727 = vcmask 883712
      %v2728 = vsel %vm2727, %v2722, %v2724
      %v2729 = vsel %vm2727, %v2724, %v2726
      %v2731 = vsel %vm614, %v2333, 0
      %v2734 = vsel %vm618, %v2728, 0
      %v2737 = vsel %vm618, %v2729, 0
      %v2740 = vsel %vm618, %v2726, 0
      %2742 = vmatprep.subr.bf16.mxu0 %v2737
      %2743 = vmatpush1.bf16.msra.mxu0 %v2734
      %2744 = vmatprep.subr.bf16.mxu0 0
      %2745 = vmatpush1.bf16.msra.mxu0 0
      %2746 = vmatprep.subr.bf16.mxu0 0
      %2747 = vmatpush1.bf16.msra.mxu0 0
      %2748 = vmatprep.subr.bf16.mxu0 0
      %2749 = vmatpush1.bf16.msra.mxu0 0
      %2750 = vmatprep.subr.bf16.mxu0 0
      %2751 = vmatpush1.bf16.msra.mxu0 0
      %2752 = vmatprep.subr.bf16.mxu0 0
      %2753 = vmatpush1.bf16.msra.mxu0 0
      %2754 = vmatprep.subr.bf16.mxu0 0
      %2755 = vmatpush1.bf16.msra.mxu0 0
      %2756 = vmatprep.subr.bf16.mxu0 0
      %2757 = vmatpush1.bf16.msra.mxu0 0
      %2758 = vmatprep.subr.bf16.mxu0 0
      %2759 = vmatpush1.bf16.msra.mxu0 0
      %2760 = vmatprep.subr.bf16.mxu0 0
      %2761 = vmatpush1.bf16.msra.mxu0 0
      %2762 = vmatprep.subr.bf16.mxu0 0
      %2763 = vmatpush1.bf16.msra.mxu0 0
      %2764 = vmatprep.subr.bf16.mxu0 0
      %2765 = vmatpush1.bf16.msra.mxu0 0
      %2766 = vmatprep.subr.bf16.mxu0 0
      %2767 = vmatpush1.bf16.msra.mxu0 0
      %2768 = vmatprep.subr.bf16.mxu0 0
      %2769 = vmatpush1.bf16.msra.mxu0 0
      %2770 = vmatprep.subr.bf16.mxu0 0
      %2771 = vmatpush1.bf16.msra.mxu0 0
      %2772 = vmatprep.subr.bf16.mxu0 0
      %2773 = vmatpush1.bf16.msra.mxu0 0
      %2774 = vmatprep.mubr.bf16.mxu0 0
      %2775 = vmatmul.mubr.bf16.gmra.mrb[0].mxu0 %v2731
      %v2776 = vpop.f32.mrb[0].mxu0
      %v2777 = vadd.f32 0.0, %v2776
      %v2778 = vpop.f32.mrb[0].mxu0
      %v2779 = vadd.f32 0.0, %v2778
      %v2780 = vpop.f32.mrb[0].mxu0
      %v2781 = vpop.f32.mrb[0].mxu0
      %2782 = vdwg.mxu0
      %2783 = vmatprep.subr.bf16.mxu0 0
      %2784 = vmatpush1.bf16.msra.mxu0 %v2740
      %2785 = vmatprep.subr.bf16.mxu0 0
      %2786 = vmatpush1.bf16.msra.mxu0 0
      %2787 = vmatprep.subr.bf16.mxu0 0
      %2788 = vmatpush1.bf16.msra.mxu0 0
      %2789 = vmatprep.subr.bf16.mxu0 0
      %2790 = vmatpush1.bf16.msra.mxu0 0
      %2791 = vmatprep.subr.bf16.mxu0 0
      %2792 = vmatpush1.bf16.msra.mxu0 0
      %2793 = vmatprep.subr.bf16.mxu0 0
      %2794 = vmatpush1.bf16.msra.mxu0 0
      %2795 = vmatprep.subr.bf16.mxu0 0
      %2796 = vmatpush1.bf16.msra.mxu0 0
      %2797 = vmatprep.subr.bf16.mxu0 0
      %2798 = vmatpush1.bf16.msra.mxu0 0
      %2799 = vmatprep.subr.bf16.mxu0 0
      %2800 = vmatpush1.bf16.msra.mxu0 0
      %2801 = vmatprep.subr.bf16.mxu0 0
      %2802 = vmatpush1.bf16.msra.mxu0 0
      %2803 = vmatprep.subr.bf16.mxu0 0
      %2804 = vmatpush1.bf16.msra.mxu0 0
      %2805 = vmatprep.subr.bf16.mxu0 0
      %2806 = vmatpush1.bf16.msra.mxu0 0
      %2807 = vmatprep.subr.bf16.mxu0 0
      %2808 = vmatpush1.bf16.msra.mxu0 0
      %2809 = vmatprep.subr.bf16.mxu0 0
      %2810 = vmatpush1.bf16.msra.mxu0 0
      %2811 = vmatprep.subr.bf16.mxu0 0
      %2812 = vmatpush1.bf16.msra.mxu0 0
      %2813 = vmatprep.subr.bf16.mxu0 0
      %2814 = vmatpush1.bf16.msra.mxu0 0
      %2815 = vmatprep.mubr.bf16.mxu0 0
      %2816 = vmatmul.mubr.bf16.gmra.mrb[0].mxu0 %v2731
      %v2817 = vpop.f32.mrb[0].mxu0
      %v2818 = vadd.f32 0.0, %v2817
      %v2819 = vpop.f32.mrb[0].mxu0
      %v2820 = vpop.f32.mrb[0].mxu0
      %v2821 = vpop.f32.mrb[0].mxu0
      %2822 = vdwg.mxu0
      %v2823 = vadd.f32 %v2317, %v2777
      %v2824 = vadd.f32 %v2318, %v2779
      %v2825 = vadd.f32 %v2319, %v2818
      %v2826 = vld [vmem:[%s189] sm:$0x7]
      %v2827 = vld [vmem:[%s189 + $0x3] sm:$0x7]
      %v2828 = vld [vmem:[%s189 + $0x6] sm:$0x7]
      %v2829 = vld [vmem:[%s189 + $0x9] sm:$0x7]
      %v2830 = vld [vmem:[%s189 + $0xc] sm:$0x7]
      %v2831 = vld [vmem:[%s189 + $0xf] sm:$0x7]
      %v2832 = vld [vmem:[%s189 + $0x12] sm:$0x7]
      %v2833 = vld [vmem:[%s189 + $0x15] sm:$0x7]
      %v2834 = vld [vmem:[%s189 + $0x18] sm:$0x7]
      %v2835 = vld [vmem:[%s189 + $0x1b] sm:$0x7]
      %v2836 = vld [vmem:[%s189 + $0x1e] sm:$0x7]
      %v2837 = vld [vmem:[%s189 + $0x21] sm:$0x7]
      %s2838 = scalar_lea.vmem %s1, 12
      %v2839 = vld [vmem:[%s2838] sm:$0x3]
      %v2853 = vunpack.c.l.s4 1966171168
      %v2854 = vunpack.c.0.s8 %v2853
      %v2855 = vlaneseq
      %v2856 = vshrl.u32 %v2855, 7
      %v2857 = vsub.s32 %v2854, %v2856
      %v2858 = vrot.slane %v2826, %v2857
      %v2859 = vcombine.high %v2858, %v2858
      %v2861 = vunpack.c.l.s4 1966171168
      %v2862 = vunpack.c.0.s8 %v2861
      %v2863 = vlaneseq
      %v2864 = vshrl.u32 %v2863, 7
      %v2865 = vsub.s32 %v2862, %v2864
      %v2866 = vrot.slane %v2858, %v2865
      %v2868 = vunpack.c.l.s4 1966171168
      %v2869 = vunpack.c.0.s8 %v2868
      %v2870 = vlaneseq
      %v2871 = vshrl.u32 %v2870, 7
      %v2872 = vsub.s32 %v2869, %v2871
      %v2873 = vrot.slane %v2859, %v2872
      %v2874 = vcombine.high %v2866, %v2866
      %v2876 = vunpack.c.l.s4 1966171168
      %v2877 = vunpack.c.0.s8 %v2876
      %v2878 = vlaneseq
      %v2879 = vshrl.u32 %v2878, 7
      %v2880 = vsub.s32 %v2877, %v2879
      %v2881 = vrot.slane %v2827, %v2880
      %v2882 = vcombine.high %v2881, %v2881
      %v2884 = vunpack.c.l.s4 1966171168
      %v2885 = vunpack.c.0.s8 %v2884
      %v2886 = vlaneseq
      %v2887 = vshrl.u32 %v2886, 7
      %v2888 = vsub.s32 %v2885, %v2887
      %v2889 = vrot.slane %v2881, %v2888
      %v2891 = vunpack.c.l.s4 1966171168
      %v2892 = vunpack.c.0.s8 %v2891
      %v2893 = vlaneseq
      %v2894 = vshrl.u32 %v2893, 7
      %v2895 = vsub.s32 %v2892, %v2894
      %v2896 = vrot.slane %v2882, %v2895
      %v2897 = vcombine.high %v2889, %v2889
      %v2899 = vunpack.c.l.s4 1966171168
      %v2900 = vunpack.c.0.s8 %v2899
      %v2901 = vlaneseq
      %v2902 = vshrl.u32 %v2901, 7
      %v2903 = vsub.s32 %v2900, %v2902
      %v2904 = vrot.slane %v2828, %v2903
      %v2905 = vcombine.high %v2904, %v2904
      %v2907 = vunpack.c.l.s4 1966171168
      %v2908 = vunpack.c.0.s8 %v2907
      %v2909 = vlaneseq
      %v2910 = vshrl.u32 %v2909, 7
      %v2911 = vsub.s32 %v2908, %v2910
      %v2912 = vrot.slane %v2904, %v2911
      %v2914 = vunpack.c.l.s4 1966171168
      %v2915 = vunpack.c.0.s8 %v2914
      %v2916 = vlaneseq
      %v2917 = vshrl.u32 %v2916, 7
      %v2918 = vsub.s32 %v2915, %v2917
      %v2919 = vrot.slane %v2905, %v2918
      %v2920 = vcombine.high %v2912, %v2912
      %v2922 = vunpack.c.l.s4 1966171168
      %v2923 = vunpack.c.0.s8 %v2922
      %v2924 = vlaneseq
      %v2925 = vshrl.u32 %v2924, 7
      %v2926 = vsub.s32 %v2923, %v2925
      %v2927 = vrot.slane %v2829, %v2926
      %v2928 = vcombine.high %v2927, %v2927
      %v2930 = vunpack.c.l.s4 1966171168
      %v2931 = vunpack.c.0.s8 %v2930
      %v2932 = vlaneseq
      %v2933 = vshrl.u32 %v2932, 7
      %v2934 = vsub.s32 %v2931, %v2933
      %v2935 = vrot.slane %v2927, %v2934
      %v2937 = vunpack.c.l.s4 1966171168
      %v2938 = vunpack.c.0.s8 %v2937
      %v2939 = vlaneseq
      %v2940 = vshrl.u32 %v2939, 7
      %v2941 = vsub.s32 %v2938, %v2940
      %v2942 = vrot.slane %v2928, %v2941
      %v2943 = vcombine.high %v2935, %v2935
      %v2945 = vunpack.c.l.s4 1966171168
      %v2946 = vunpack.c.0.s8 %v2945
      %v2947 = vlaneseq
      %v2948 = vshrl.u32 %v2947, 7
      %v2949 = vsub.s32 %v2946, %v2948
      %v2950 = vrot.slane %v2830, %v2949
      %v2951 = vcombine.high %v2950, %v2950
      %v2953 = vunpack.c.l.s4 1966171168
      %v2954 = vunpack.c.0.s8 %v2953
      %v2955 = vlaneseq
      %v2956 = vshrl.u32 %v2955, 7
      %v2957 = vsub.s32 %v2954, %v2956
      %v2958 = vrot.slane %v2950, %v2957
      %v2960 = vunpack.c.l.s4 1966171168
      %v2961 = vunpack.c.0.s8 %v2960
      %v2962 = vlaneseq
      %v2963 = vshrl.u32 %v2962, 7
      %v2964 = vsub.s32 %v2961, %v2963
      %v2965 = vrot.slane %v2951, %v2964
      %v2966 = vcombine.high %v2958, %v2958
      %v2968 = vunpack.c.l.s4 1966171168
      %v2969 = vunpack.c.0.s8 %v2968
      %v2970 = vlaneseq
      %v2971 = vshrl.u32 %v2970, 7
      %v2972 = vsub.s32 %v2969, %v2971
      %v2973 = vrot.slane %v2831, %v2972
      %v2974 = vcombine.high %v2973, %v2973
      %v2976 = vunpack.c.l.s4 1966171168
      %v2977 = vunpack.c.0.s8 %v2976
      %v2978 = vlaneseq
      %v2979 = vshrl.u32 %v2978, 7
      %v2980 = vsub.s32 %v2977, %v2979
      %v2981 = vrot.slane %v2973, %v2980
      %v2983 = vunpack.c.l.s4 1966171168
      %v2984 = vunpack.c.0.s8 %v2983
      %v2985 = vlaneseq
      %v2986 = vshrl.u32 %v2985, 7
      %v2987 = vsub.s32 %v2984, %v2986
      %v2988 = vrot.slane %v2974, %v2987
      %v2989 = vcombine.high %v2981, %v2981
      %v2991 = vunpack.c.l.s4 1966171168
      %v2992 = vunpack.c.0.s8 %v2991
      %v2993 = vlaneseq
      %v2994 = vshrl.u32 %v2993, 7
      %v2995 = vsub.s32 %v2992, %v2994
      %v2996 = vrot.slane %v2832, %v2995
      %v2997 = vcombine.high %v2996, %v2996
      %v2999 = vunpack.c.l.s4 1966171168
      %v3000 = vunpack.c.0.s8 %v2999
      %v3001 = vlaneseq
      %v3002 = vshrl.u32 %v3001, 7
      %v3003 = vsub.s32 %v3000, %v3002
      %v3004 = vrot.slane %v2996, %v3003
      %v3006 = vunpack.c.l.s4 1966171168
      %v3007 = vunpack.c.0.s8 %v3006
      %v3008 = vlaneseq
      %v3009 = vshrl.u32 %v3008, 7
      %v3010 = vsub.s32 %v3007, %v3009
      %v3011 = vrot.slane %v2997, %v3010
      %v3012 = vcombine.high %v3004, %v3004
      %v3014 = vunpack.c.l.s4 1966171168
      %v3015 = vunpack.c.0.s8 %v3014
      %v3016 = vlaneseq
      %v3017 = vshrl.u32 %v3016, 7
      %v3018 = vsub.s32 %v3015, %v3017
      %v3019 = vrot.slane %v2833, %v3018
      %v3020 = vcombine.high %v3019, %v3019
      %v3022 = vunpack.c.l.s4 1966171168
      %v3023 = vunpack.c.0.s8 %v3022
      %v3024 = vlaneseq
      %v3025 = vshrl.u32 %v3024, 7
      %v3026 = vsub.s32 %v3023, %v3025
      %v3027 = vrot.slane %v3019, %v3026
      %v3029 = vunpack.c.l.s4 1966171168
      %v3030 = vunpack.c.0.s8 %v3029
      %v3031 = vlaneseq
      %v3032 = vshrl.u32 %v3031, 7
      %v3033 = vsub.s32 %v3030, %v3032
      %v3034 = vrot.slane %v3020, %v3033
      %v3035 = vcombine.high %v3027, %v3027
      %v3037 = vunpack.c.l.s4 1966171168
      %v3038 = vunpack.c.0.s8 %v3037
      %v3039 = vlaneseq
      %v3040 = vshrl.u32 %v3039, 7
      %v3041 = vsub.s32 %v3038, %v3040
      %v3042 = vrot.slane %v2834, %v3041
      %v3043 = vcombine.high %v3042, %v3042
      %v3045 = vunpack.c.l.s4 1966171168
      %v3046 = vunpack.c.0.s8 %v3045
      %v3047 = vlaneseq
      %v3048 = vshrl.u32 %v3047, 7
      %v3049 = vsub.s32 %v3046, %v3048
      %v3050 = vrot.slane %v3042, %v3049
      %v3052 = vunpack.c.l.s4 1966171168
      %v3053 = vunpack.c.0.s8 %v3052
      %v3054 = vlaneseq
      %v3055 = vshrl.u32 %v3054, 7
      %v3056 = vsub.s32 %v3053, %v3055
      %v3057 = vrot.slane %v3043, %v3056
      %v3058 = vcombine.high %v3050, %v3050
      %v3060 = vunpack.c.l.s4 1966171168
      %v3061 = vunpack.c.0.s8 %v3060
      %v3062 = vlaneseq
      %v3063 = vshrl.u32 %v3062, 7
      %v3064 = vsub.s32 %v3061, %v3063
      %v3065 = vrot.slane %v2835, %v3064
      %v3066 = vcombine.high %v3065, %v3065
      %v3068 = vunpack.c.l.s4 1966171168
      %v3069 = vunpack.c.0.s8 %v3068
      %v3070 = vlaneseq
      %v3071 = vshrl.u32 %v3070, 7
      %v3072 = vsub.s32 %v3069, %v3071
      %v3073 = vrot.slane %v3065, %v3072
      %v3075 = vunpack.c.l.s4 1966171168
      %v3076 = vunpack.c.0.s8 %v3075
      %v3077 = vlaneseq
      %v3078 = vshrl.u32 %v3077, 7
      %v3079 = vsub.s32 %v3076, %v3078
      %v3080 = vrot.slane %v3066, %v3079
      %v3081 = vcombine.high %v3073, %v3073
      %v3083 = vunpack.c.l.s4 1966171168
      %v3084 = vunpack.c.0.s8 %v3083
      %v3085 = vlaneseq
      %v3086 = vshrl.u32 %v3085, 7
      %v3087 = vsub.s32 %v3084, %v3086
      %v3088 = vrot.slane %v2836, %v3087
      %v3089 = vcombine.high %v3088, %v3088
      %v3091 = vunpack.c.l.s4 1966171168
      %v3092 = vunpack.c.0.s8 %v3091
      %v3093 = vlaneseq
      %v3094 = vshrl.u32 %v3093, 7
      %v3095 = vsub.s32 %v3092, %v3094
      %v3096 = vrot.slane %v3088, %v3095
      %v3098 = vunpack.c.l.s4 1966171168
      %v3099 = vunpack.c.0.s8 %v3098
      %v3100 = vlaneseq
      %v3101 = vshrl.u32 %v3100, 7
      %v3102 = vsub.s32 %v3099, %v3101
      %v3103 = vrot.slane %v3089, %v3102
      %v3104 = vcombine.high %v3096, %v3096
      %v3106 = vunpack.c.l.s4 1966171168
      %v3107 = vunpack.c.0.s8 %v3106
      %v3108 = vlaneseq
      %v3109 = vshrl.u32 %v3108, 7
      %v3110 = vsub.s32 %v3107, %v3109
      %v3111 = vrot.slane %v2837, %v3110
      %v3112 = vcombine.high %v3111, %v3111
      %v3114 = vunpack.c.l.s4 1966171168
      %v3115 = vunpack.c.0.s8 %v3114
      %v3116 = vlaneseq
      %v3117 = vshrl.u32 %v3116, 7
      %v3118 = vsub.s32 %v3115, %v3117
      %v3119 = vrot.slane %v3111, %v3118
      %v3121 = vunpack.c.l.s4 1966171168
      %v3122 = vunpack.c.0.s8 %v3121
      %v3123 = vlaneseq
      %v3124 = vshrl.u32 %v3123, 7
      %v3125 = vsub.s32 %v3122, %v3124
      %v3126 = vrot.slane %v3112, %v3125
      %v3127 = vcombine.high %v3119, %v3119
      %v3128 = vunpack.c.l.b16 %v2866
      %v3129 = vunpack.c.l.b16 %v2873
      %v3130 = vunpack.c.l.b16 %v2874
      %v3131 = vunpack.c.l.b16 %v2889
      %v3132 = vunpack.c.l.b16 %v2896
      %v3133 = vunpack.c.l.b16 %v2897
      %v3134 = vunpack.c.l.b16 %v2912
      %v3135 = vunpack.c.l.b16 %v2919
      %v3136 = vunpack.c.l.b16 %v2920
      %v3137 = vunpack.c.l.b16 %v2935
      %v3138 = vunpack.c.l.b16 %v2942
      %v3139 = vunpack.c.l.b16 %v2943
      %v3140 = vunpack.c.l.b16 %v2958
      %v3141 = vunpack.c.l.b16 %v2965
      %v3142 = vunpack.c.l.b16 %v2966
      %v3143 = vunpack.c.l.b16 %v2981
      %v3144 = vunpack.c.l.b16 %v2988
      %v3145 = vunpack.c.l.b16 %v2989
      %v3146 = vunpack.c.l.b16 %v3004
      %v3147 = vunpack.c.l.b16 %v3011
      %v3148 = vunpack.c.l.b16 %v3012
      %v3149 = vunpack.c.l.b16 %v3027
      %v3150 = vunpack.c.l.b16 %v3034
      %v3151 = vunpack.c.l.b16 %v3035
      %v3152 = vunpack.c.l.b16 %v3050
      %v3153 = vunpack.c.l.b16 %v3057
      %v3154 = vunpack.c.l.b16 %v3058
      %v3155 = vunpack.c.l.b16 %v3073
      %v3156 = vunpack.c.l.b16 %v3080
      %v3157 = vunpack.c.l.b16 %v3081
      %v3158 = vunpack.c.l.b16 %v3096
      %v3159 = vunpack.c.l.b16 %v3103
      %v3160 = vunpack.c.l.b16 %v3104
      %v3161 = vunpack.c.l.b16 %v3119
      %v3162 = vunpack.c.l.b16 %v3126
      %v3163 = vunpack.c.l.b16 %v3127
      %v3164 = vrot.slane %v3131, 7
      %v3165 = vsel %vm536, %v3164, %v3128
      %v3166 = vrot.slane %v3134, 6
      %v3167 = vsel %vm539, %v3166, %v3165
      %v3168 = vrot.slane %v3137, 5
      %v3169 = vsel %vm542, %v3168, %v3167
      %v3170 = vrot.slane %v3140, 4
      %v3171 = vsel %vm545, %v3170, %v3169
      %v3172 = vrot.slane %v3143, 3
      %v3173 = vsel %vm548, %v3172, %v3171
      %v3174 = vrot.slane %v3146, 2
      %v3175 = vsel %vm551, %v3174, %v3173
      %v3176 = vrot.slane %v3149, 1
      %v3177 = vsel %vm554, %v3176, %v3175
      %v3178 = vrot.slane %v3132, 7
      %v3179 = vsel %vm536, %v3178, %v3129
      %v3180 = vrot.slane %v3135, 6
      %v3181 = vsel %vm539, %v3180, %v3179
      %v3182 = vrot.slane %v3138, 5
      %v3183 = vsel %vm542, %v3182, %v3181
      %v3184 = vrot.slane %v3141, 4
      %v3185 = vsel %vm545, %v3184, %v3183
      %v3186 = vrot.slane %v3144, 3
      %v3187 = vsel %vm548, %v3186, %v3185
      %v3188 = vrot.slane %v3147, 2
      %v3189 = vsel %vm551, %v3188, %v3187
      %v3190 = vrot.slane %v3150, 1
      %v3191 = vsel %vm554, %v3190, %v3189
      %v3192 = vrot.slane %v3133, 7
      %v3193 = vsel %vm536, %v3192, %v3130
      %v3194 = vrot.slane %v3136, 6
      %v3195 = vsel %vm539, %v3194, %v3193
      %v3196 = vrot.slane %v3139, 5
      %v3197 = vsel %vm542, %v3196, %v3195
      %v3198 = vrot.slane %v3142, 4
      %v3199 = vsel %vm545, %v3198, %v3197
      %v3200 = vrot.slane %v3145, 3
      %v3201 = vsel %vm548, %v3200, %v3199
      %v3202 = vrot.slane %v3148, 2
      %v3203 = vsel %vm551, %v3202, %v3201
      %v3204 = vrot.slane %v3151, 1
      %v3205 = vsel %vm554, %v3204, %v3203
      %v3206 = vrot.slane %v3155, 7
      %v3207 = vsel %vm536, %v3206, %v3152
      %v3208 = vrot.slane %v3158, 6
      %v3209 = vsel %vm539, %v3208, %v3207
      %v3210 = vrot.slane %v3161, 5
      %v3211 = vsel %vm542, %v3210, %v3209
      %v3212 = vrot.slane %v3156, 7
      %v3213 = vsel %vm536, %v3212, %v3153
      %v3214 = vrot.slane %v3159, 6
      %v3215 = vsel %vm539, %v3214, %v3213
      %v3216 = vrot.slane %v3162, 5
      %v3217 = vsel %vm542, %v3216, %v3215
      %v3218 = vrot.slane %v3157, 7
      %v3219 = vsel %vm536, %v3218, %v3154
      %v3220 = vrot.slane %v3160, 6
      %v3221 = vsel %vm539, %v3220, %v3219
      %v3222 = vrot.slane %v3163, 5
      %v3223 = vsel %vm542, %v3222, %v3221
      %v3224 = vpack.c.b16 %v3211, %v3177
      %v3225 = vpack.c.b16 %v3217, %v3191
      %v3226 = vpack.c.b16 %v3223, %v3205
      %3227 = vrot.lane.b32.xlu0 %v3224, 92
      %v3228 = vpop.permute.xlu0 %3227
      %3229 = vrot.lane.b32.xlu0 %v3225, 92
      %v3230 = vpop.permute.xlu0 %3229
      %3231 = vrot.lane.b32.xlu0 %v3226, 92
      %v3232 = vpop.permute.xlu0 %3231
      %vm3233 = vcmask 752640
      %v3234 = vsel %vm3233, %v3228, %v3230
      %v3235 = vsel %vm3233, %v3230, %v3232
      %v3237 = vsel %vm614, %v2839, 0
      %v3240 = vsel %vm618, %v3234, 0
      %v3243 = vsel %vm618, %v3235, 0
      %v3246 = vsel %vm618, %v3232, 0
      %3248 = vmatprep.subr.bf16.mxu0 %v3243
      %3249 = vmatpush1.bf16.msra.mxu0 %v3240
      %3250 = vmatprep.subr.bf16.mxu0 0
      %3251 = vmatpush1.bf16.msra.mxu0 0
      %3252 = vmatprep.subr.bf16.mxu0 0
      %3253 = vmatpush1.bf16.msra.mxu0 0
      %3254 = vmatprep.subr.bf16.mxu0 0
      %3255 = vmatpush1.bf16.msra.mxu0 0
      %3256 = vmatprep.subr.bf16.mxu0 0
      %3257 = vmatpush1.bf16.msra.mxu0 0
      %3258 = vmatprep.subr.bf16.mxu0 0
      %3259 = vmatpush1.bf16.msra.mxu0 0
      %3260 = vmatprep.subr.bf16.mxu0 0
      %3261 = vmatpush1.bf16.msra.mxu0 0
      %3262 = vmatprep.subr.bf16.mxu0 0
      %3263 = vmatpush1.bf16.msra.mxu0 0
      %3264 = vmatprep.subr.bf16.mxu0 0
      %3265 = vmatpush1.bf16.msra.mxu0 0
      %3266 = vmatprep.subr.bf16.mxu0 0
      %3267 = vmatpush1.bf16.msra.mxu0 0
      %3268 = vmatprep.subr.bf16.mxu0 0
      %3269 = vmatpush1.bf16.msra.mxu0 0
      %3270 = vmatprep.subr.bf16.mxu0 0
      %3271 = vmatpush1.bf16.msra.mxu0 0
      %3272 = vmatprep.subr.bf16.mxu0 0
      %3273 = vmatpush1.bf16.msra.mxu0 0
      %3274 = vmatprep.subr.bf16.mxu0 0
      %3275 = vmatpush1.bf16.msra.mxu0 0
      %3276 = vmatprep.subr.bf16.mxu0 0
      %3277 = vmatpush1.bf16.msra.mxu0 0
      %3278 = vmatprep.subr.bf16.mxu0 0
      %3279 = vmatpush1.bf16.msra.mxu0 0
      %3280 = vmatprep.mubr.bf16.mxu0 0
      %3281 = vmatmul.mubr.bf16.gmra.mrb[0].mxu0 %v3237
      %v3282 = vpop.f32.mrb[0].mxu0
      %v3283 = vadd.f32 0.0, %v3282
      %v3284 = vpop.f32.mrb[0].mxu0
      %v3285 = vadd.f32 0.0, %v3284
      %v3286 = vpop.f32.mrb[0].mxu0
      %v3287 = vpop.f32.mrb[0].mxu0
      %3288 = vdwg.mxu0
      %3289 = vmatprep.subr.bf16.mxu0 0
      %3290 = vmatpush1.bf16.msra.mxu0 %v3246
      %3291 = vmatprep.subr.bf16.mxu0 0
      %3292 = vmatpush1.bf16.msra.mxu0 0
      %3293 = vmatprep.subr.bf16.mxu0 0
      %3294 = vmatpush1.bf16.msra.mxu0 0
      %3295 = vmatprep.subr.bf16.mxu0 0
      %3296 = vmatpush1.bf16.msra.mxu0 0
      %3297 = vmatprep.subr.bf16.mxu0 0
      %3298 = vmatpush1.bf16.msra.mxu0 0
      %3299 = vmatprep.subr.bf16.mxu0 0
      %3300 = vmatpush1.bf16.msra.mxu0 0
      %3301 = vmatprep.subr.bf16.mxu0 0
      %3302 = vmatpush1.bf16.msra.mxu0 0
      %3303 = vmatprep.subr.bf16.mxu0 0
      %3304 = vmatpush1.bf16.msra.mxu0 0
      %3305 = vmatprep.subr.bf16.mxu0 0
      %3306 = vmatpush1.bf16.msra.mxu0 0
      %3307 = vmatprep.subr.bf16.mxu0 0
      %3308 = vmatpush1.bf16.msra.mxu0 0
      %3309 = vmatprep.subr.bf16.mxu0 0
      %3310 = vmatpush1.bf16.msra.mxu0 0
      %3311 = vmatprep.subr.bf16.mxu0 0
      %3312 = vmatpush1.bf16.msra.mxu0 0
      %3313 = vmatprep.subr.bf16.mxu0 0
      %3314 = vmatpush1.bf16.msra.mxu0 0
      %3315 = vmatprep.subr.bf16.mxu0 0
      %3316 = vmatpush1.bf16.msra.mxu0 0
      %3317 = vmatprep.subr.bf16.mxu0 0
      %3318 = vmatpush1.bf16.msra.mxu0 0
      %3319 = vmatprep.subr.bf16.mxu0 0
      %3320 = vmatpush1.bf16.msra.mxu0 0
      %3321 = vmatprep.mubr.bf16.mxu0 0
      %3322 = vmatmul.mubr.bf16.gmra.mrb[0].mxu0 %v3237
      %v3323 = vpop.f32.mrb[0].mxu0
      %v3324 = vadd.f32 0.0, %v3323
      %v3325 = vpop.f32.mrb[0].mxu0
      %v3326 = vpop.f32.mrb[0].mxu0
      %v3327 = vpop.f32.mrb[0].mxu0
      %3328 = vdwg.mxu0
      %v3329 = vadd.f32 %v2823, %v3283
      %v3330 = vadd.f32 %v2824, %v3285
      %v3331 = vadd.f32 %v2825, %v3324
      %v3332 = vld [vmem:[%s189] sm:$0x7]
      %v3333 = vld [vmem:[%s189 + $0x3] sm:$0x7]
      %v3334 = vld [vmem:[%s189 + $0x6] sm:$0x7]
      %v3335 = vld [vmem:[%s189 + $0x9] sm:$0x7]
      %v3336 = vld [vmem:[%s189 + $0xc] sm:$0x7]
      %v3337 = vld [vmem:[%s189 + $0xf] sm:$0x7]
      %v3338 = vld [vmem:[%s189 + $0x12] sm:$0x7]
      %v3339 = vld [vmem:[%s189 + $0x15] sm:$0x7]
      %v3340 = vld [vmem:[%s189 + $0x18] sm:$0x7]
      %v3341 = vld [vmem:[%s189 + $0x1b] sm:$0x7]
      %v3342 = vld [vmem:[%s189 + $0x1e] sm:$0x7]
      %v3343 = vld [vmem:[%s189 + $0x21] sm:$0x7]
      %s3344 = scalar_lea.vmem %s1, 14
      %v3345 = vld [vmem:[%s3344] sm:$0x3]
      %v3359 = vunpack.c.l.s4 1966171168
      %v3360 = vunpack.c.0.s8 %v3359
      %v3361 = vlaneseq
      %v3362 = vshrl.u32 %v3361, 7
      %v3363 = vsub.s32 %v3360, %v3362
      %v3364 = vrot.slane %v3332, %v3363
      %v3365 = vcombine.high %v3364, %v3364
      %v3367 = vunpack.c.l.s4 1966171168
      %v3368 = vunpack.c.0.s8 %v3367
      %v3369 = vlaneseq
      %v3370 = vshrl.u32 %v3369, 7
      %v3371 = vsub.s32 %v3368, %v3370
      %v3372 = vrot.slane %v3364, %v3371
      %v3374 = vunpack.c.l.s4 1966171168
      %v3375 = vunpack.c.0.s8 %v3374
      %v3376 = vlaneseq
      %v3377 = vshrl.u32 %v3376, 7
      %v3378 = vsub.s32 %v3375, %v3377
      %v3379 = vrot.slane %v3365, %v3378
      %v3380 = vcombine.high %v3372, %v3372
      %v3382 = vunpack.c.l.s4 1966171168
      %v3383 = vunpack.c.0.s8 %v3382
      %v3384 = vlaneseq
      %v3385 = vshrl.u32 %v3384, 7
      %v3386 = vsub.s32 %v3383, %v3385
      %v3387 = vrot.slane %v3333, %v3386
      %v3388 = vcombine.high %v3387, %v3387
      %v3390 = vunpack.c.l.s4 1966171168
      %v3391 = vunpack.c.0.s8 %v3390
      %v3392 = vlaneseq
      %v3393 = vshrl.u32 %v3392, 7
      %v3394 = vsub.s32 %v3391, %v3393
      %v3395 = vrot.slane %v3387, %v3394
      %v3397 = vunpack.c.l.s4 1966171168
      %v3398 = vunpack.c.0.s8 %v3397
      %v3399 = vlaneseq
      %v3400 = vshrl.u32 %v3399, 7
      %v3401 = vsub.s32 %v3398, %v3400
      %v3402 = vrot.slane %v3388, %v3401
      %v3403 = vcombine.high %v3395, %v3395
      %v3405 = vunpack.c.l.s4 1966171168
      %v3406 = vunpack.c.0.s8 %v3405
      %v3407 = vlaneseq
      %v3408 = vshrl.u32 %v3407, 7
      %v3409 = vsub.s32 %v3406, %v3408
      %v3410 = vrot.slane %v3334, %v3409
      %v3411 = vcombine.high %v3410, %v3410
      %v3413 = vunpack.c.l.s4 1966171168
      %v3414 = vunpack.c.0.s8 %v3413
      %v3415 = vlaneseq
      %v3416 = vshrl.u32 %v3415, 7
      %v3417 = vsub.s32 %v3414, %v3416
      %v3418 = vrot.slane %v3410, %v3417
      %v3420 = vunpack.c.l.s4 1966171168
      %v3421 = vunpack.c.0.s8 %v3420
      %v3422 = vlaneseq
      %v3423 = vshrl.u32 %v3422, 7
      %v3424 = vsub.s32 %v3421, %v3423
      %v3425 = vrot.slane %v3411, %v3424
      %v3426 = vcombine.high %v3418, %v3418
      %v3428 = vunpack.c.l.s4 1966171168
      %v3429 = vunpack.c.0.s8 %v3428
      %v3430 = vlaneseq
      %v3431 = vshrl.u32 %v3430, 7
      %v3432 = vsub.s32 %v3429, %v3431
      %v3433 = vrot.slane %v3335, %v3432
      %v3434 = vcombine.high %v3433, %v3433
      %v3436 = vunpack.c.l.s4 1966171168
      %v3437 = vunpack.c.0.s8 %v3436
      %v3438 = vlaneseq
      %v3439 = vshrl.u32 %v3438, 7
      %v3440 = vsub.s32 %v3437, %v3439
      %v3441 = vrot.slane %v3433, %v3440
      %v3443 = vunpack.c.l.s4 1966171168
      %v3444 = vunpack.c.0.s8 %v3443
      %v3445 = vlaneseq
      %v3446 = vshrl.u32 %v3445, 7
      %v3447 = vsub.s32 %v3444, %v3446
      %v3448 = vrot.slane %v3434, %v3447
      %v3449 = vcombine.high %v3441, %v3441
      %v3451 = vunpack.c.l.s4 1966171168
      %v3452 = vunpack.c.0.s8 %v3451
      %v3453 = vlaneseq
      %v3454 = vshrl.u32 %v3453, 7
      %v3455 = vsub.s32 %v3452, %v3454
      %v3456 = vrot.slane %v3336, %v3455
      %v3457 = vcombine.high %v3456, %v3456
      %v3459 = vunpack.c.l.s4 1966171168
      %v3460 = vunpack.c.0.s8 %v3459
      %v3461 = vlaneseq
      %v3462 = vshrl.u32 %v3461, 7
      %v3463 = vsub.s32 %v3460, %v3462
      %v3464 = vrot.slane %v3456, %v3463
      %v3466 = vunpack.c.l.s4 1966171168
      %v3467 = vunpack.c.0.s8 %v3466
      %v3468 = vlaneseq
      %v3469 = vshrl.u32 %v3468, 7
      %v3470 = vsub.s32 %v3467, %v3469
      %v3471 = vrot.slane %v3457, %v3470
      %v3472 = vcombine.high %v3464, %v3464
      %v3474 = vunpack.c.l.s4 1966171168
      %v3475 = vunpack.c.0.s8 %v3474
      %v3476 = vlaneseq
      %v3477 = vshrl.u32 %v3476, 7
      %v3478 = vsub.s32 %v3475, %v3477
      %v3479 = vrot.slane %v3337, %v3478
      %v3480 = vcombine.high %v3479, %v3479
      %v3482 = vunpack.c.l.s4 1966171168
      %v3483 = vunpack.c.0.s8 %v3482
      %v3484 = vlaneseq
      %v3485 = vshrl.u32 %v3484, 7
      %v3486 = vsub.s32 %v3483, %v3485
      %v3487 = vrot.slane %v3479, %v3486
      %v3489 = vunpack.c.l.s4 1966171168
      %v3490 = vunpack.c.0.s8 %v3489
      %v3491 = vlaneseq
      %v3492 = vshrl.u32 %v3491, 7
      %v3493 = vsub.s32 %v3490, %v3492
      %v3494 = vrot.slane %v3480, %v3493
      %v3495 = vcombine.high %v3487, %v3487
      %v3497 = vunpack.c.l.s4 1966171168
      %v3498 = vunpack.c.0.s8 %v3497
      %v3499 = vlaneseq
      %v3500 = vshrl.u32 %v3499, 7
      %v3501 = vsub.s32 %v3498, %v3500
      %v3502 = vrot.slane %v3338, %v3501
      %v3503 = vcombine.high %v3502, %v3502
      %v3505 = vunpack.c.l.s4 1966171168
      %v3506 = vunpack.c.0.s8 %v3505
      %v3507 = vlaneseq
      %v3508 = vshrl.u32 %v3507, 7
      %v3509 = vsub.s32 %v3506, %v3508
      %v3510 = vrot.slane %v3502, %v3509
      %v3512 = vunpack.c.l.s4 1966171168
      %v3513 = vunpack.c.0.s8 %v3512
      %v3514 = vlaneseq
      %v3515 = vshrl.u32 %v3514, 7
      %v3516 = vsub.s32 %v3513, %v3515
      %v3517 = vrot.slane %v3503, %v3516
      %v3518 = vcombine.high %v3510, %v3510
      %v3520 = vunpack.c.l.s4 1966171168
      %v3521 = vunpack.c.0.s8 %v3520
      %v3522 = vlaneseq
      %v3523 = vshrl.u32 %v3522, 7
      %v3524 = vsub.s32 %v3521, %v3523
      %v3525 = vrot.slane %v3339, %v3524
      %v3526 = vcombine.high %v3525, %v3525
      %v3528 = vunpack.c.l.s4 1966171168
      %v3529 = vunpack.c.0.s8 %v3528
      %v3530 = vlaneseq
      %v3531 = vshrl.u32 %v3530, 7
      %v3532 = vsub.s32 %v3529, %v3531
      %v3533 = vrot.slane %v3525, %v3532
      %v3535 = vunpack.c.l.s4 1966171168
      %v3536 = vunpack.c.0.s8 %v3535
      %v3537 = vlaneseq
      %v3538 = vshrl.u32 %v3537, 7
      %v3539 = vsub.s32 %v3536, %v3538
      %v3540 = vrot.slane %v3526, %v3539
      %v3541 = vcombine.high %v3533, %v3533
      %v3543 = vunpack.c.l.s4 1966171168
      %v3544 = vunpack.c.0.s8 %v3543
      %v3545 = vlaneseq
      %v3546 = vshrl.u32 %v3545, 7
      %v3547 = vsub.s32 %v3544, %v3546
      %v3548 = vrot.slane %v3340, %v3547
      %v3549 = vcombine.high %v3548, %v3548
      %v3551 = vunpack.c.l.s4 1966171168
      %v3552 = vunpack.c.0.s8 %v3551
      %v3553 = vlaneseq
      %v3554 = vshrl.u32 %v3553, 7
      %v3555 = vsub.s32 %v3552, %v3554
      %v3556 = vrot.slane %v3548, %v3555
      %v3558 = vunpack.c.l.s4 1966171168
      %v3559 = vunpack.c.0.s8 %v3558
      %v3560 = vlaneseq
      %v3561 = vshrl.u32 %v3560, 7
      %v3562 = vsub.s32 %v3559, %v3561
      %v3563 = vrot.slane %v3549, %v3562
      %v3564 = vcombine.high %v3556, %v3556
      %v3566 = vunpack.c.l.s4 1966171168
      %v3567 = vunpack.c.0.s8 %v3566
      %v3568 = vlaneseq
      %v3569 = vshrl.u32 %v3568, 7
      %v3570 = vsub.s32 %v3567, %v3569
      %v3571 = vrot.slane %v3341, %v3570
      %v3572 = vcombine.high %v3571, %v3571
      %v3574 = vunpack.c.l.s4 1966171168
      %v3575 = vunpack.c.0.s8 %v3574
      %v3576 = vlaneseq
      %v3577 = vshrl.u32 %v3576, 7
      %v3578 = vsub.s32 %v3575, %v3577
      %v3579 = vrot.slane %v3571, %v3578
      %v3581 = vunpack.c.l.s4 1966171168
      %v3582 = vunpack.c.0.s8 %v3581
      %v3583 = vlaneseq
      %v3584 = vshrl.u32 %v3583, 7
      %v3585 = vsub.s32 %v3582, %v3584
      %v3586 = vrot.slane %v3572, %v3585
      %v3587 = vcombine.high %v3579, %v3579
      %v3589 = vunpack.c.l.s4 1966171168
      %v3590 = vunpack.c.0.s8 %v3589
      %v3591 = vlaneseq
      %v3592 = vshrl.u32 %v3591, 7
      %v3593 = vsub.s32 %v3590, %v3592
      %v3594 = vrot.slane %v3342, %v3593
      %v3595 = vcombine.high %v3594, %v3594
      %v3597 = vunpack.c.l.s4 1966171168
      %v3598 = vunpack.c.0.s8 %v3597
      %v3599 = vlaneseq
      %v3600 = vshrl.u32 %v3599, 7
      %v3601 = vsub.s32 %v3598, %v3600
      %v3602 = vrot.slane %v3594, %v3601
      %v3604 = vunpack.c.l.s4 1966171168
      %v3605 = vunpack.c.0.s8 %v3604
      %v3606 = vlaneseq
      %v3607 = vshrl.u32 %v3606, 7
      %v3608 = vsub.s32 %v3605, %v3607
      %v3609 = vrot.slane %v3595, %v3608
      %v3610 = vcombine.high %v3602, %v3602
      %v3612 = vunpack.c.l.s4 1966171168
      %v3613 = vunpack.c.0.s8 %v3612
      %v3614 = vlaneseq
      %v3615 = vshrl.u32 %v3614, 7
      %v3616 = vsub.s32 %v3613, %v3615
      %v3617 = vrot.slane %v3343, %v3616
      %v3618 = vcombine.high %v3617, %v3617
      %v3620 = vunpack.c.l.s4 1966171168
      %v3621 = vunpack.c.0.s8 %v3620
      %v3622 = vlaneseq
      %v3623 = vshrl.u32 %v3622, 7
      %v3624 = vsub.s32 %v3621, %v3623
      %v3625 = vrot.slane %v3617, %v3624
      %v3627 = vunpack.c.l.s4 1966171168
      %v3628 = vunpack.c.0.s8 %v3627
      %v3629 = vlaneseq
      %v3630 = vshrl.u32 %v3629, 7
      %v3631 = vsub.s32 %v3628, %v3630
      %v3632 = vrot.slane %v3618, %v3631
      %v3633 = vcombine.high %v3625, %v3625
      %v3634 = vunpack.c.l.b16 %v3372
      %v3635 = vunpack.c.l.b16 %v3379
      %v3636 = vunpack.c.l.b16 %v3380
      %v3637 = vunpack.c.l.b16 %v3395
      %v3638 = vunpack.c.l.b16 %v3402
      %v3639 = vunpack.c.l.b16 %v3403
      %v3640 = vunpack.c.l.b16 %v3418
      %v3641 = vunpack.c.l.b16 %v3425
      %v3642 = vunpack.c.l.b16 %v3426
      %v3643 = vunpack.c.l.b16 %v3441
      %v3644 = vunpack.c.l.b16 %v3448
      %v3645 = vunpack.c.l.b16 %v3449
      %v3646 = vunpack.c.l.b16 %v3464
      %v3647 = vunpack.c.l.b16 %v3471
      %v3648 = vunpack.c.l.b16 %v3472
      %v3649 = vunpack.c.l.b16 %v3487
      %v3650 = vunpack.c.l.b16 %v3494
      %v3651 = vunpack.c.l.b16 %v3495
      %v3652 = vunpack.c.l.b16 %v3510
      %v3653 = vunpack.c.l.b16 %v3517
      %v3654 = vunpack.c.l.b16 %v3518
      %v3655 = vunpack.c.l.b16 %v3533
      %v3656 = vunpack.c.l.b16 %v3540
      %v3657 = vunpack.c.l.b16 %v3541
      %v3658 = vunpack.c.l.b16 %v3556
      %v3659 = vunpack.c.l.b16 %v3563
      %v3660 = vunpack.c.l.b16 %v3564
      %v3661 = vunpack.c.l.b16 %v3579
      %v3662 = vunpack.c.l.b16 %v3586
      %v3663 = vunpack.c.l.b16 %v3587
      %v3664 = vunpack.c.l.b16 %v3602
      %v3665 = vunpack.c.l.b16 %v3609
      %v3666 = vunpack.c.l.b16 %v3610
      %v3667 = vunpack.c.l.b16 %v3625
      %v3668 = vunpack.c.l.b16 %v3632
      %v3669 = vunpack.c.l.b16 %v3633
      %v3670 = vrot.slane %v3637, 7
      %v3671 = vsel %vm536, %v3670, %v3634
      %v3672 = vrot.slane %v3640, 6
      %v3673 = vsel %vm539, %v3672, %v3671
      %v3674 = vrot.slane %v3643, 5
      %v3675 = vsel %vm542, %v3674, %v3673
      %v3676 = vrot.slane %v3646, 4
      %v3677 = vsel %vm545, %v3676, %v3675
      %v3678 = vrot.slane %v3649, 3
      %v3679 = vsel %vm548, %v3678, %v3677
      %v3680 = vrot.slane %v3652, 2
      %v3681 = vsel %vm551, %v3680, %v3679
      %v3682 = vrot.slane %v3655, 1
      %v3683 = vsel %vm554, %v3682, %v3681
      %v3684 = vrot.slane %v3638, 7
      %v3685 = vsel %vm536, %v3684, %v3635
      %v3686 = vrot.slane %v3641, 6
      %v3687 = vsel %vm539, %v3686, %v3685
      %v3688 = vrot.slane %v3644, 5
      %v3689 = vsel %vm542, %v3688, %v3687
      %v3690 = vrot.slane %v3647, 4
      %v3691 = vsel %vm545, %v3690, %v3689
      %v3692 = vrot.slane %v3650, 3
      %v3693 = vsel %vm548, %v3692, %v3691
      %v3694 = vrot.slane %v3653, 2
      %v3695 = vsel %vm551, %v3694, %v3693
      %v3696 = vrot.slane %v3656, 1
      %v3697 = vsel %vm554, %v3696, %v3695
      %v3698 = vrot.slane %v3639, 7
      %v3699 = vsel %vm536, %v3698, %v3636
      %v3700 = vrot.slane %v3642, 6
      %v3701 = vsel %vm539, %v3700, %v3699
      %v3702 = vrot.slane %v3645, 5
      %v3703 = vsel %vm542, %v3702, %v3701
      %v3704 = vrot.slane %v3648, 4
      %v3705 = vsel %vm545, %v3704, %v3703
      %v3706 = vrot.slane %v3651, 3
      %v3707 = vsel %vm548, %v3706, %v3705
      %v3708 = vrot.slane %v3654, 2
      %v3709 = vsel %vm551, %v3708, %v3707
      %v3710 = vrot.slane %v3657, 1
      %v3711 = vsel %vm554, %v3710, %v3709
      %v3712 = vrot.slane %v3661, 7
      %v3713 = vsel %vm536, %v3712, %v3658
      %v3714 = vrot.slane %v3664, 6
      %v3715 = vsel %vm539, %v3714, %v3713
      %v3716 = vrot.slane %v3667, 5
      %v3717 = vsel %vm542, %v3716, %v3715
      %v3718 = vrot.slane %v3662, 7
      %v3719 = vsel %vm536, %v3718, %v3659
      %v3720 = vrot.slane %v3665, 6
      %v3721 = vsel %vm539, %v3720, %v3719
      %v3722 = vrot.slane %v3668, 5
      %v3723 = vsel %vm542, %v3722, %v3721
      %v3724 = vrot.slane %v3663, 7
      %v3725 = vsel %vm536, %v3724, %v3660
      %v3726 = vrot.slane %v3666, 6
      %v3727 = vsel %vm539, %v3726, %v3725
      %v3728 = vrot.slane %v3669, 5
      %v3729 = vsel %vm542, %v3728, %v3727
      %v3730 = vpack.c.b16 %v3717, %v3683
      %v3731 = vpack.c.b16 %v3723, %v3697
      %v3732 = vpack.c.b16 %v3729, %v3711
      %3733 = vrot.lane.b32.xlu0 %v3730, 91
      %v3734 = vpop.permute.xlu0 %3733
      %3735 = vrot.lane.b32.xlu0 %v3731, 91
      %v3736 = vpop.permute.xlu0 %3735
      %3737 = vrot.lane.b32.xlu0 %v3732, 91
      %v3738 = vpop.permute.xlu0 %3737
      %vm3739 = vcmask 744448
      %v3740 = vsel %vm3739, %v3734, %v3736
      %v3741 = vsel %vm3739, %v3736, %v3738
      %v3743 = vsel %vm614, %v3345, 0
      %v3746 = vsel %vm618, %v3740, 0
      %v3749 = vsel %vm618, %v3741, 0
      %v3752 = vsel %vm618, %v3738, 0
      %3754 = vmatprep.subr.bf16.mxu0 %v3749
      %3755 = vmatpush1.bf16.msra.mxu0 %v3746
      %3756 = vmatprep.subr.bf16.mxu0 0
      %3757 = vmatpush1.bf16.msra.mxu0 0
      %3758 = vmatprep.subr.bf16.mxu0 0
      %3759 = vmatpush1.bf16.msra.mxu0 0
      %3760 = vmatprep.subr.bf16.mxu0 0
      %3761 = vmatpush1.bf16.msra.mxu0 0
      %3762 = vmatprep.subr.bf16.mxu0 0
      %3763 = vmatpush1.bf16.msra.mxu0 0
      %3764 = vmatprep.subr.bf16.mxu0 0
      %3765 = vmatpush1.bf16.msra.mxu0 0
      %3766 = vmatprep.subr.bf16.mxu0 0
      %3767 = vmatpush1.bf16.msra.mxu0 0
      %3768 = vmatprep.subr.bf16.mxu0 0
      %3769 = vmatpush1.bf16.msra.mxu0 0
      %3770 = vmatprep.subr.bf16.mxu0 0
      %3771 = vmatpush1.bf16.msra.mxu0 0
      %3772 = vmatprep.subr.bf16.mxu0 0
      %3773 = vmatpush1.bf16.msra.mxu0 0
      %3774 = vmatprep.subr.bf16.mxu0 0
      %3775 = vmatpush1.bf16.msra.mxu0 0
      %3776 = vmatprep.subr.bf16.mxu0 0
      %3777 = vmatpush1.bf16.msra.mxu0 0
      %3778 = vmatprep.subr.bf16.mxu0 0
      %3779 = vmatpush1.bf16.msra.mxu0 0
      %3780 = vmatprep.subr.bf16.mxu0 0
      %3781 = vmatpush1.bf16.msra.mxu0 0
      %3782 = vmatprep.subr.bf16.mxu0 0
      %3783 = vmatpush1.bf16.msra.mxu0 0
      %3784 = vmatprep.subr.bf16.mxu0 0
      %3785 = vmatpush1.bf16.msra.mxu0 0
      %3786 = vmatprep.mubr.bf16.mxu0 0
      %3787 = vmatmul.mubr.bf16.gmra.mrb[0].mxu0 %v3743
      %v3788 = vpop.f32.mrb[0].mxu0
      %v3789 = vadd.f32 0.0, %v3788
      %v3790 = vpop.f32.mrb[0].mxu0
      %v3791 = vadd.f32 0.0, %v3790
      %v3792 = vpop.f32.mrb[0].mxu0
      %v3793 = vpop.f32.mrb[0].mxu0
      %3794 = vdwg.mxu0
      %3795 = vmatprep.subr.bf16.mxu0 0
      %3796 = vmatpush1.bf16.msra.mxu0 %v3752
      %3797 = vmatprep.subr.bf16.mxu0 0
      %3798 = vmatpush1.bf16.msra.mxu0 0
      %3799 = vmatprep.subr.bf16.mxu0 0
      %3800 = vmatpush1.bf16.msra.mxu0 0
      %3801 = vmatprep.subr.bf16.mxu0 0
      %3802 = vmatpush1.bf16.msra.mxu0 0
      %3803 = vmatprep.subr.bf16.mxu0 0
      %3804 = vmatpush1.bf16.msra.mxu0 0
      %3805 = vmatprep.subr.bf16.mxu0 0
      %3806 = vmatpush1.bf16.msra.mxu0 0
      %3807 = vmatprep.subr.bf16.mxu0 0
      %3808 = vmatpush1.bf16.msra.mxu0 0
      %3809 = vmatprep.subr.bf16.mxu0 0
      %3810 = vmatpush1.bf16.msra.mxu0 0
      %3811 = vmatprep.subr.bf16.mxu0 0
      %3812 = vmatpush1.bf16.msra.mxu0 0
      %3813 = vmatprep.subr.bf16.mxu0 0
      %3814 = vmatpush1.bf16.msra.mxu0 0
      %3815 = vmatprep.subr.bf16.mxu0 0
      %3816 = vmatpush1.bf16.msra.mxu0 0
      %3817 = vmatprep.subr.bf16.mxu0 0
      %3818 = vmatpush1.bf16.msra.mxu0 0
      %3819 = vmatprep.subr.bf16.mxu0 0
      %3820 = vmatpush1.bf16.msra.mxu0 0
      %3821 = vmatprep.subr.bf16.mxu0 0
      %3822 = vmatpush1.bf16.msra.mxu0 0
      %3823 = vmatprep.subr.bf16.mxu0 0
      %3824 = vmatpush1.bf16.msra.mxu0 0
      %3825 = vmatprep.subr.bf16.mxu0 0
      %3826 = vmatpush1.bf16.msra.mxu0 0
      %3827 = vmatprep.mubr.bf16.mxu0 0
      %3828 = vmatmul.mubr.bf16.gmra.mrb[0].mxu0 %v3743
      %v3829 = vpop.f32.mrb[0].mxu0
      %v3830 = vadd.f32 0.0, %v3829
      %v3831 = vpop.f32.mrb[0].mxu0
      %v3832 = vpop.f32.mrb[0].mxu0
      %v3833 = vpop.f32.mrb[0].mxu0
      %3834 = vdwg.mxu0
      %v3835 = vadd.f32 %v3329, %v3789
      %v3836 = vadd.f32 %v3330, %v3791
      %v3837 = vadd.f32 %v3331, %v3830
      %v3838 = vld [vmem:[%s189] sm:$0x7]
      %v3839 = vld [vmem:[%s189 + $0x3] sm:$0x7]
      %v3840 = vld [vmem:[%s189 + $0x6] sm:$0x7]
      %v3841 = vld [vmem:[%s189 + $0x9] sm:$0x7]
      %v3842 = vld [vmem:[%s189 + $0xc] sm:$0x7]
      %v3843 = vld [vmem:[%s189 + $0xf] sm:$0x7]
      %v3844 = vld [vmem:[%s189 + $0x12] sm:$0x7]
      %v3845 = vld [vmem:[%s189 + $0x15] sm:$0x7]
      %v3846 = vld [vmem:[%s189 + $0x18] sm:$0x7]
      %v3847 = vld [vmem:[%s189 + $0x1b] sm:$0x7]
      %v3848 = vld [vmem:[%s189 + $0x1e] sm:$0x7]
      %v3849 = vld [vmem:[%s189 + $0x21] sm:$0x7]
      %s3850 = scalar_lea.vmem %s1, 16
      %v3851 = vld [vmem:[%s3850] sm:$0x3]
      %v3865 = vunpack.c.l.s4 1966171168
      %v3866 = vunpack.c.0.s8 %v3865
      %v3867 = vlaneseq
      %v3868 = vshrl.u32 %v3867, 7
      %v3869 = vsub.s32 %v3866, %v3868
      %v3870 = vrot.slane %v3838, %v3869
      %v3871 = vcombine.high %v3870, %v3870
      %v3873 = vunpack.c.l.s4 1966171168
      %v3874 = vunpack.c.0.s8 %v3873
      %v3875 = vlaneseq
      %v3876 = vshrl.u32 %v3875, 7
      %v3877 = vsub.s32 %v3874, %v3876
      %v3878 = vrot.slane %v3870, %v3877
      %v3880 = vunpack.c.l.s4 1966171168
      %v3881 = vunpack.c.0.s8 %v3880
      %v3882 = vlaneseq
      %v3883 = vshrl.u32 %v3882, 7
      %v3884 = vsub.s32 %v3881, %v3883
      %v3885 = vrot.slane %v3871, %v3884
      %v3886 = vcombine.high %v3878, %v3878
      %v3888 = vunpack.c.l.s4 1966171168
      %v3889 = vunpack.c.0.s8 %v3888
      %v3890 = vlaneseq
      %v3891 = vshrl.u32 %v3890, 7
      %v3892 = vsub.s32 %v3889, %v3891
      %v3893 = vrot.slane %v3839, %v3892
      %v3894 = vcombine.high %v3893, %v3893
      %v3896 = vunpack.c.l.s4 1966171168
      %v3897 = vunpack.c.0.s8 %v3896
      %v3898 = vlaneseq
      %v3899 = vshrl.u32 %v3898, 7
      %v3900 = vsub.s32 %v3897, %v3899
      %v3901 = vrot.slane %v3893, %v3900
      %v3903 = vunpack.c.l.s4 1966171168
      %v3904 = vunpack.c.0.s8 %v3903
      %v3905 = vlaneseq
      %v3906 = vshrl.u32 %v3905, 7
      %v3907 = vsub.s32 %v3904, %v3906
      %v3908 = vrot.slane %v3894, %v3907
      %v3909 = vcombine.high %v3901, %v3901
      %v3911 = vunpack.c.l.s4 1966171168
      %v3912 = vunpack.c.0.s8 %v3911
      %v3913 = vlaneseq
      %v3914 = vshrl.u32 %v3913, 7
      %v3915 = vsub.s32 %v3912, %v3914
      %v3916 = vrot.slane %v3840, %v3915
      %v3917 = vcombine.high %v3916, %v3916
      %v3919 = vunpack.c.l.s4 1966171168
      %v3920 = vunpack.c.0.s8 %v3919
      %v3921 = vlaneseq
      %v3922 = vshrl.u32 %v3921, 7
      %v3923 = vsub.s32 %v3920, %v3922
      %v3924 = vrot.slane %v3916, %v3923
      %v3926 = vunpack.c.l.s4 1966171168
      %v3927 = vunpack.c.0.s8 %v3926
      %v3928 = vlaneseq
      %v3929 = vshrl.u32 %v3928, 7
      %v3930 = vsub.s32 %v3927, %v3929
      %v3931 = vrot.slane %v3917, %v3930
      %v3932 = vcombine.high %v3924, %v3924
      %v3934 = vunpack.c.l.s4 1966171168
      %v3935 = vunpack.c.0.s8 %v3934
      %v3936 = vlaneseq
      %v3937 = vshrl.u32 %v3936, 7
      %v3938 = vsub.s32 %v3935, %v3937
      %v3939 = vrot.slane %v3841, %v3938
      %v3940 = vcombine.high %v3939, %v3939
      %v3942 = vunpack.c.l.s4 1966171168
      %v3943 = vunpack.c.0.s8 %v3942
      %v3944 = vlaneseq
      %v3945 = vshrl.u32 %v3944, 7
      %v3946 = vsub.s32 %v3943, %v3945
      %v3947 = vrot.slane %v3939, %v3946
      %v3949 = vunpack.c.l.s4 1966171168
      %v3950 = vunpack.c.0.s8 %v3949
      %v3951 = vlaneseq
      %v3952 = vshrl.u32 %v3951, 7
      %v3953 = vsub.s32 %v3950, %v3952
      %v3954 = vrot.slane %v3940, %v3953
      %v3955 = vcombine.high %v3947, %v3947
      %v3957 = vunpack.c.l.s4 1966171168
      %v3958 = vunpack.c.0.s8 %v3957
      %v3959 = vlaneseq
      %v3960 = vshrl.u32 %v3959, 7
      %v3961 = vsub.s32 %v3958, %v3960
      %v3962 = vrot.slane %v3842, %v3961
      %v3963 = vcombine.high %v3962, %v3962
      %v3965 = vunpack.c.l.s4 1966171168
      %v3966 = vunpack.c.0.s8 %v3965
      %v3967 = vlaneseq
      %v3968 = vshrl.u32 %v3967, 7
      %v3969 = vsub.s32 %v3966, %v3968
      %v3970 = vrot.slane %v3962, %v3969
      %v3972 = vunpack.c.l.s4 1966171168
      %v3973 = vunpack.c.0.s8 %v3972
      %v3974 = vlaneseq
      %v3975 = vshrl.u32 %v3974, 7
      %v3976 = vsub.s32 %v3973, %v3975
      %v3977 = vrot.slane %v3963, %v3976
      %v3978 = vcombine.high %v3970, %v3970
      %v3980 = vunpack.c.l.s4 1966171168
      %v3981 = vunpack.c.0.s8 %v3980
      %v3982 = vlaneseq
      %v3983 = vshrl.u32 %v3982, 7
      %v3984 = vsub.s32 %v3981, %v3983
      %v3985 = vrot.slane %v3843, %v3984
      %v3986 = vcombine.high %v3985, %v3985
      %v3988 = vunpack.c.l.s4 1966171168
      %v3989 = vunpack.c.0.s8 %v3988
      %v3990 = vlaneseq
      %v3991 = vshrl.u32 %v3990, 7
      %v3992 = vsub.s32 %v3989, %v3991
      %v3993 = vrot.slane %v3985, %v3992
      %v3995 = vunpack.c.l.s4 1966171168
      %v3996 = vunpack.c.0.s8 %v3995
      %v3997 = vlaneseq
      %v3998 = vshrl.u32 %v3997, 7
      %v3999 = vsub.s32 %v3996, %v3998
      %v4000 = vrot.slane %v3986, %v3999
      %v4001 = vcombine.high %v3993, %v3993
      %v4003 = vunpack.c.l.s4 1966171168
      %v4004 = vunpack.c.0.s8 %v4003
      %v4005 = vlaneseq
      %v4006 = vshrl.u32 %v4005, 7
      %v4007 = vsub.s32 %v4004, %v4006
      %v4008 = vrot.slane %v3844, %v4007
      %v4009 = vcombine.high %v4008, %v4008
      %v4011 = vunpack.c.l.s4 1966171168
      %v4012 = vunpack.c.0.s8 %v4011
      %v4013 = vlaneseq
      %v4014 = vshrl.u32 %v4013, 7
      %v4015 = vsub.s32 %v4012, %v4014
      %v4016 = vrot.slane %v4008, %v4015
      %v4018 = vunpack.c.l.s4 1966171168
      %v4019 = vunpack.c.0.s8 %v4018
      %v4020 = vlaneseq
      %v4021 = vshrl.u32 %v4020, 7
      %v4022 = vsub.s32 %v4019, %v4021
      %v4023 = vrot.slane %v4009, %v4022
      %v4024 = vcombine.high %v4016, %v4016
      %v4026 = vunpack.c.l.s4 1966171168
      %v4027 = vunpack.c.0.s8 %v4026
      %v4028 = vlaneseq
      %v4029 = vshrl.u32 %v4028, 7
      %v4030 = vsub.s32 %v4027, %v4029
      %v4031 = vrot.slane %v3845, %v4030
      %v4032 = vcombine.high %v4031, %v4031
      %v4034 = vunpack.c.l.s4 1966171168
      %v4035 = vunpack.c.0.s8 %v4034
      %v4036 = vlaneseq
      %v4037 = vshrl.u32 %v4036, 7
      %v4038 = vsub.s32 %v4035, %v4037
      %v4039 = vrot.slane %v4031, %v4038
      %v4041 = vunpack.c.l.s4 1966171168
      %v4042 = vunpack.c.0.s8 %v4041
      %v4043 = vlaneseq
      %v4044 = vshrl.u32 %v4043, 7
      %v4045 = vsub.s32 %v4042, %v4044
      %v4046 = vrot.slane %v4032, %v4045
      %v4047 = vcombine.high %v4039, %v4039
      %v4049 = vunpack.c.l.s4 1966171168
      %v4050 = vunpack.c.0.s8 %v4049
      %v4051 = vlaneseq
      %v4052 = vshrl.u32 %v4051, 7
      %v4053 = vsub.s32 %v4050, %v4052
      %v4054 = vrot.slane %v3846, %v4053
      %v4055 = vcombine.high %v4054, %v4054
      %v4057 = vunpack.c.l.s4 1966171168
      %v4058 = vunpack.c.0.s8 %v4057
      %v4059 = vlaneseq
      %v4060 = vshrl.u32 %v4059, 7
      %v4061 = vsub.s32 %v4058, %v4060
      %v4062 = vrot.slane %v4054, %v4061
      %v4064 = vunpack.c.l.s4 1966171168
      %v4065 = vunpack.c.0.s8 %v4064
      %v4066 = vlaneseq
      %v4067 = vshrl.u32 %v4066, 7
      %v4068 = vsub.s32 %v4065, %v4067
      %v4069 = vrot.slane %v4055, %v4068
      %v4070 = vcombine.high %v4062, %v4062
      %v4072 = vunpack.c.l.s4 1966171168
      %v4073 = vunpack.c.0.s8 %v4072
      %v4074 = vlaneseq
      %v4075 = vshrl.u32 %v4074, 7
      %v4076 = vsub.s32 %v4073, %v4075
      %v4077 = vrot.slane %v3847, %v4076
      %v4078 = vcombine.high %v4077, %v4077
      %v4080 = vunpack.c.l.s4 1966171168
      %v4081 = vunpack.c.0.s8 %v4080
      %v4082 = vlaneseq
      %v4083 = vshrl.u32 %v4082, 7
      %v4084 = vsub.s32 %v4081, %v4083
      %v4085 = vrot.slane %v4077, %v4084
      %v4087 = vunpack.c.l.s4 1966171168
      %v4088 = vunpack.c.0.s8 %v4087
      %v4089 = vlaneseq
      %v4090 = vshrl.u32 %v4089, 7
      %v4091 = vsub.s32 %v4088, %v4090
      %v4092 = vrot.slane %v4078, %v4091
      %v4093 = vcombine.high %v4085, %v4085
      %v4095 = vunpack.c.l.s4 1966171168
      %v4096 = vunpack.c.0.s8 %v4095
      %v4097 = vlaneseq
      %v4098 = vshrl.u32 %v4097, 7
      %v4099 = vsub.s32 %v4096, %v4098
      %v4100 = vrot.slane %v3848, %v4099
      %v4101 = vcombine.high %v4100, %v4100
      %v4103 = vunpack.c.l.s4 1966171168
      %v4104 = vunpack.c.0.s8 %v4103
      %v4105 = vlaneseq
      %v4106 = vshrl.u32 %v4105, 7
      %v4107 = vsub.s32 %v4104, %v4106
      %v4108 = vrot.slane %v4100, %v4107
      %v4110 = vunpack.c.l.s4 1966171168
      %v4111 = vunpack.c.0.s8 %v4110
      %v4112 = vlaneseq
      %v4113 = vshrl.u32 %v4112, 7
      %v4114 = vsub.s32 %v4111, %v4113
      %v4115 = vrot.slane %v4101, %v4114
      %v4116 = vcombine.high %v4108, %v4108
      %v4118 = vunpack.c.l.s4 1966171168
      %v4119 = vunpack.c.0.s8 %v4118
      %v4120 = vlaneseq
      %v4121 = vshrl.u32 %v4120, 7
      %v4122 = vsub.s32 %v4119, %v4121
      %v4123 = vrot.slane %v3849, %v4122
      %v4124 = vcombine.high %v4123, %v4123
      %v4126 = vunpack.c.l.s4 1966171168
      %v4127 = vunpack.c.0.s8 %v4126
      %v4128 = vlaneseq
      %v4129 = vshrl.u32 %v4128, 7
      %v4130 = vsub.s32 %v4127, %v4129
      %v4131 = vrot.slane %v4123, %v4130
      %v4133 = vunpack.c.l.s4 1966171168
      %v4134 = vunpack.c.0.s8 %v4133
      %v4135 = vlaneseq
      %v4136 = vshrl.u32 %v4135, 7
      %v4137 = vsub.s32 %v4134, %v4136
      %v4138 = vrot.slane %v4124, %v4137
      %v4139 = vcombine.high %v4131, %v4131
      %v4140 = vunpack.c.l.b16 %v3878
      %v4141 = vunpack.c.l.b16 %v3885
      %v4142 = vunpack.c.l.b16 %v3886
      %v4143 = vunpack.c.l.b16 %v3901
      %v4144 = vunpack.c.l.b16 %v3908
      %v4145 = vunpack.c.l.b16 %v3909
      %v4146 = vunpack.c.l.b16 %v3924
      %v4147 = vunpack.c.l.b16 %v3931
      %v4148 = vunpack.c.l.b16 %v3932
      %v4149 = vunpack.c.l.b16 %v3947
      %v4150 = vunpack.c.l.b16 %v3954
      %v4151 = vunpack.c.l.b16 %v3955
      %v4152 = vunpack.c.l.b16 %v3970
      %v4153 = vunpack.c.l.b16 %v3977
      %v4154 = vunpack.c.l.b16 %v3978
      %v4155 = vunpack.c.l.b16 %v3993
      %v4156 = vunpack.c.l.b16 %v4000
      %v4157 = vunpack.c.l.b16 %v4001
      %v4158 = vunpack.c.l.b16 %v4016
      %v4159 = vunpack.c.l.b16 %v4023
      %v4160 = vunpack.c.l.b16 %v4024
      %v4161 = vunpack.c.l.b16 %v4039
      %v4162 = vunpack.c.l.b16 %v4046
      %v4163 = vunpack.c.l.b16 %v4047
      %v4164 = vunpack.c.l.b16 %v4062
      %v4165 = vunpack.c.l.b16 %v4069
      %v4166 = vunpack.c.l.b16 %v4070
      %v4167 = vunpack.c.l.b16 %v4085
      %v4168 = vunpack.c.l.b16 %v4092
      %v4169 = vunpack.c.l.b16 %v4093
      %v4170 = vunpack.c.l.b16 %v4108
      %v4171 = vunpack.c.l.b16 %v4115
      %v4172 = vunpack.c.l.b16 %v4116
      %v4173 = vunpack.c.l.b16 %v4131
      %v4174 = vunpack.c.l.b16 %v4138
      %v4175 = vunpack.c.l.b16 %v4139
      %v4176 = vrot.slane %v4143, 7
      %v4177 = vsel %vm536, %v4176, %v4140
      %v4178 = vrot.slane %v4146, 6
      %v4179 = vsel %vm539, %v4178, %v4177
      %v4180 = vrot.slane %v4149, 5
      %v4181 = vsel %vm542, %v4180, %v4179
      %v4182 = vrot.slane %v4152, 4
      %v4183 = vsel %vm545, %v4182, %v4181
      %v4184 = vrot.slane %v4155, 3
      %v4185 = vsel %vm548, %v4184, %v4183
      %v4186 = vrot.slane %v4158, 2
      %v4187 = vsel %vm551, %v4186, %v4185
      %v4188 = vrot.slane %v4161, 1
      %v4189 = vsel %vm554, %v4188, %v4187
      %v4190 = vrot.slane %v4144, 7
      %v4191 = vsel %vm536, %v4190, %v4141
      %v4192 = vrot.slane %v4147, 6
      %v4193 = vsel %vm539, %v4192, %v4191
      %v4194 = vrot.slane %v4150, 5
      %v4195 = vsel %vm542, %v4194, %v4193
      %v4196 = vrot.slane %v4153, 4
      %v4197 = vsel %vm545, %v4196, %v4195
      %v4198 = vrot.slane %v4156, 3
      %v4199 = vsel %vm548, %v4198, %v4197
      %v4200 = vrot.slane %v4159, 2
      %v4201 = vsel %vm551, %v4200, %v4199
      %v4202 = vrot.slane %v4162, 1
      %v4203 = vsel %vm554, %v4202, %v4201
      %v4204 = vrot.slane %v4145, 7
      %v4205 = vsel %vm536, %v4204, %v4142
      %v4206 = vrot.slane %v4148, 6
      %v4207 = vsel %vm539, %v4206, %v4205
      %v4208 = vrot.slane %v4151, 5
      %v4209 = vsel %vm542, %v4208, %v4207
      %v4210 = vrot.slane %v4154, 4
      %v4211 = vsel %vm545, %v4210, %v4209
      %v4212 = vrot.slane %v4157, 3
      %v4213 = vsel %vm548, %v4212, %v4211
      %v4214 = vrot.slane %v4160, 2
      %v4215 = vsel %vm551, %v4214, %v4213
      %v4216 = vrot.slane %v4163, 1
      %v4217 = vsel %vm554, %v4216, %v4215
      %v4218 = vrot.slane %v4167, 7
      %v4219 = vsel %vm536, %v4218, %v4164
      %v4220 = vrot.slane %v4170, 6
      %v4221 = vsel %vm539, %v4220, %v4219
      %v4222 = vrot.slane %v4173, 5
      %v4223 = vsel %vm542, %v4222, %v4221
      %v4224 = vrot.slane %v4168, 7
      %v4225 = vsel %vm536, %v4224, %v4165
      %v4226 = vrot.slane %v4171, 6
      %v4227 = vsel %vm539, %v4226, %v4225
      %v4228 = vrot.slane %v4174, 5
      %v4229 = vsel %vm542, %v4228, %v4227
      %v4230 = vrot.slane %v4169, 7
      %v4231 = vsel %vm536, %v4230, %v4166
      %v4232 = vrot.slane %v4172, 6
      %v4233 = vsel %vm539, %v4232, %v4231
      %v4234 = vrot.slane %v4175, 5
      %v4235 = vsel %vm542, %v4234, %v4233
      %v4236 = vpack.c.b16 %v4223, %v4189
      %v4237 = vpack.c.b16 %v4229, %v4203
      %v4238 = vpack.c.b16 %v4235, %v4217
      %4239 = vrot.lane.b32.xlu0 %v4236, 90
      %v4240 = vpop.permute.xlu0 %4239
      %4241 = vrot.lane.b32.xlu0 %v4237, 90
      %v4242 = vpop.permute.xlu0 %4241
      %4243 = vrot.lane.b32.xlu0 %v4238, 90
      %v4244 = vpop.permute.xlu0 %4243
      %vm4245 = vcmask 736256
      %v4246 = vsel %vm4245, %v4240, %v4242
      %v4247 = vsel %vm4245, %v4242, %v4244
      %v4249 = vsel %vm614, %v3851, 0
      %v4252 = vsel %vm618, %v4246, 0
      %v4255 = vsel %vm618, %v4247, 0
      %v4258 = vsel %vm618, %v4244, 0
      %4260 = vmatprep.subr.bf16.mxu0 %v4255
      %4261 = vmatpush1.bf16.msra.mxu0 %v4252
      %4262 = vmatprep.subr.bf16.mxu0 0
      %4263 = vmatpush1.bf16.msra.mxu0 0
      %4264 = vmatprep.subr.bf16.mxu0 0
      %4265 = vmatpush1.bf16.msra.mxu0 0
      %4266 = vmatprep.subr.bf16.mxu0 0
      %4267 = vmatpush1.bf16.msra.mxu0 0
      %4268 = vmatprep.subr.bf16.mxu0 0
      %4269 = vmatpush1.bf16.msra.mxu0 0
      %4270 = vmatprep.subr.bf16.mxu0 0
      %4271 = vmatpush1.bf16.msra.mxu0 0
      %4272 = vmatprep.subr.bf16.mxu0 0
      %4273 = vmatpush1.bf16.msra.mxu0 0
      %4274 = vmatprep.subr.bf16.mxu0 0
      %4275 = vmatpush1.bf16.msra.mxu0 0
      %4276 = vmatprep.subr.bf16.mxu0 0
      %4277 = vmatpush1.bf16.msra.mxu0 0
      %4278 = vmatprep.subr.bf16.mxu0 0
      %4279 = vmatpush1.bf16.msra.mxu0 0
      %4280 = vmatprep.subr.bf16.mxu0 0
      %4281 = vmatpush1.bf16.msra.mxu0 0
      %4282 = vmatprep.subr.bf16.mxu0 0
      %4283 = vmatpush1.bf16.msra.mxu0 0
      %4284 = vmatprep.subr.bf16.mxu0 0
      %4285 = vmatpush1.bf16.msra.mxu0 0
      %4286 = vmatprep.subr.bf16.mxu0 0
      %4287 = vmatpush1.bf16.msra.mxu0 0
      %4288 = vmatprep.subr.bf16.mxu0 0
      %4289 = vmatpush1.bf16.msra.mxu0 0
      %4290 = vmatprep.subr.bf16.mxu0 0
      %4291 = vmatpush1.bf16.msra.mxu0 0
      %4292 = vmatprep.mubr.bf16.mxu0 0
      %4293 = vmatmul.mubr.bf16.gmra.mrb[0].mxu0 %v4249
      %v4294 = vpop.f32.mrb[0].mxu0
      %v4295 = vadd.f32 0.0, %v4294
      %v4296 = vpop.f32.mrb[0].mxu0
      %v4297 = vadd.f32 0.0, %v4296
      %v4298 = vpop.f32.mrb[0].mxu0
      %v4299 = vpop.f32.mrb[0].mxu0
      %4300 = vdwg.mxu0
      %4301 = vmatprep.subr.bf16.mxu0 0
      %4302 = vmatpush1.bf16.msra.mxu0 %v4258
      %4303 = vmatprep.subr.bf16.mxu0 0
      %4304 = vmatpush1.bf16.msra.mxu0 0
      %4305 = vmatprep.subr.bf16.mxu0 0
      %4306 = vmatpush1.bf16.msra.mxu0 0
      %4307 = vmatprep.subr.bf16.mxu0 0
      %4308 = vmatpush1.bf16.msra.mxu0 0
      %4309 = vmatprep.subr.bf16.mxu0 0
      %4310 = vmatpush1.bf16.msra.mxu0 0
      %4311 = vmatprep.subr.bf16.mxu0 0
      %4312 = vmatpush1.bf16.msra.mxu0 0
      %4313 = vmatprep.subr.bf16.mxu0 0
      %4314 = vmatpush1.bf16.msra.mxu0 0
      %4315 = vmatprep.subr.bf16.mxu0 0
      %4316 = vmatpush1.bf16.msra.mxu0 0
      %4317 = vmatprep.subr.bf16.mxu0 0
      %4318 = vmatpush1.bf16.msra.mxu0 0
      %4319 = vmatprep.subr.bf16.mxu0 0
      %4320 = vmatpush1.bf16.msra.mxu0 0
      %4321 = vmatprep.subr.bf16.mxu0 0
      %4322 = vmatpush1.bf16.msra.mxu0 0
      %4323 = vmatprep.subr.bf16.mxu0 0
      %4324 = vmatpush1.bf16.msra.mxu0 0
      %4325 = vmatprep.subr.bf16.mxu0 0
      %4326 = vmatpush1.bf16.msra.mxu0 0
      %4327 = vmatprep.subr.bf16.mxu0 0
      %4328 = vmatpush1.bf16.msra.mxu0 0
      %4329 = vmatprep.subr.bf16.mxu0 0
      %4330 = vmatpush1.bf16.msra.mxu0 0
      %4331 = vmatprep.subr.bf16.mxu0 0
      %4332 = vmatpush1.bf16.msra.mxu0 0
      %4333 = vmatprep.mubr.bf16.mxu0 0
      %4334 = vmatmul.mubr.bf16.gmra.mrb[0].mxu0 %v4249
      %v4335 = vpop.f32.mrb[0].mxu0
      %v4336 = vadd.f32 0.0, %v4335
      %v4337 = vpop.f32.mrb[0].mxu0
      %v4338 = vpop.f32.mrb[0].mxu0
      %v4339 = vpop.f32.mrb[0].mxu0
      %4340 = vdwg.mxu0
      %v4341 = vadd.f32 %v3835, %v4295
      %v4342 = vadd.f32 %v3836, %v4297
      %v4343 = vadd.f32 %v3837, %v4336
      %v4344 = vld [vmem:[%s2] sm:$0xf]
      %4346 = vset.pattern.permute.xlu0 0
      %4347 = vperm.xlu0 %4346, %v4344
      %v4348 = vpop.permute.xlu0 %4347
      %v4350 = vadd.f32 %v4341, %v4348
      %v4351 = vadd.f32 %v4342, %v4348
      %v4352 = vadd.f32 %v4343, %v4348
      %v4353 = vmax.f32 %v4350, 0.0
      %v4354 = vmax.f32 %v4351, 0.0
      %v4355 = vmax.f32 %v4352, 0.0
      %v4356 = vld [vmem:[%s3] sm:$0x7]
      %v4358 = vlaneseq
      %v4359 = vshrl.u32 %v4358, 7
      %v4360 = vsub.s32 0, %v4359
      %v4361 = vrot.slane %v4356, %v4360
      %v4362 = vlaneseq
      %v4363 = vshrl.u32 %v4362, 7
      %v4364 = vsub.s32 1, %v4363
      %v4365 = vrot.slane %v4356, %v4364
      %v4366 = vlaneseq
      %v4367 = vshrl.u32 %v4366, 7
      %v4368 = vsub.s32 2, %v4367
      %v4369 = vrot.slane %v4356, %v4368
      %v4373 = vmul.f32 %v4353, %v4361
      %v4374 = vmul.f32 %v4354, %v4365
      %v4375 = vmul.f32 %v4355, %v4369
      %vm4376 = vcmask 1040384
      %vm4377 = vsmask.f32 256
      %vm4378 = vmand %vm4376, %vm4377
      %vm4379 = vcmask 1041409
      %vm4380 = vsmask.f32 1280
      %vm4381 = vmand %vm4379, %vm4380
      %vm4382 = vmor %vm4381, %vm4378
      %vm4383 = vcmask 1042434
      %vm4384 = vsmask.f32 2304
      %vm4385 = vmand %vm4383, %vm4384
      %vm4386 = vmor %vm4385, %vm4382
      %v4387 = vld [vmem:[%s194] sm:$0x7]
      %v4388 = vsel %vm4386, 0, %v4387
      %4389 = vst [vmem:[%s194] sm:$0x7] %v4388
      %v4390 = vld [vmem:[%s194 + $0x3] sm:$0x7]
      %v4391 = vsel %vm4386, 0, %v4390
      %4392 = vst [vmem:[%s194 + $0x3] sm:$0x7] %v4391
      %v4393 = vld [vmem:[%s194 + $0x6] sm:$0x7]
      %v4394 = vsel %vm4386, 0, %v4393
      %4395 = vst [vmem:[%s194 + $0x6] sm:$0x7] %v4394
      %v4396 = vld [vmem:[%s194 + $0x9] sm:$0x7]
      %v4397 = vsel %vm4386, 0, %v4396
      %4398 = vst [vmem:[%s194 + $0x9] sm:$0x7] %v4397
      %v4399 = vpack.c.bf16 %v4373, %v4373
      %v4400 = vpack.c.bf16 %v4374, %v4374
      %v4401 = vpack.c.bf16 %v4375, %v4375
      %v4405 = vcombine.low %v4399, %v4400
      %v4407 = vunpack.c.l.s4 1966171168
      %v4408 = vunpack.c.0.s8 %v4407
      %v4409 = vlaneseq
      %v4410 = vshrl.u32 %v4409, 7
      %v4411 = vsub.s32 %v4408, %v4410
      %v4412 = vrot.slane %v4405, %v4411
      %v4414 = vunpack.c.l.s4 1966171168
      %v4415 = vunpack.c.0.s8 %v4414
      %v4416 = vlaneseq
      %v4417 = vshrl.u32 %v4416, 7
      %v4418 = vsub.s32 %v4415, %v4417
      %v4419 = vrot.slane %v4401, %v4418
      %v4420 = vcombine.low %v4412, %v4419
      %v4421 = vcombine.high %v4412, %v4419
      %v4423 = vunpack.c.l.s4 1966171168
      %v4424 = vunpack.c.0.s8 %v4423
      %v4425 = vlaneseq
      %v4426 = vshrl.u32 %v4425, 7
      %v4427 = vsub.s32 %v4424, %v4426
      %v4428 = vrot.slane %v4420, %v4427
      %v4430 = vunpack.c.l.s4 1966171168
      %v4431 = vunpack.c.0.s8 %v4430
      %v4432 = vlaneseq
      %v4433 = vshrl.u32 %v4432, 7
      %v4434 = vsub.s32 %v4431, %v4433
      %v4435 = vrot.slane %v4421, %v4434
      %v4436 = vunpack.i.l.s16 %v4428
      %v4437 = vunpack.i.h.s16 %v4428
      %v4438 = vunpack.i.l.s16 %v4435
      %v4439 = vunpack.i.h.s16 %v4435
      %v4440 = vpack.i.b16 %v4436, %v4436
      %v4441 = vpack.i.b16 %v4437, %v4437
      %v4442 = vpack.i.b16 %v4438, %v4438
      %v4443 = vpack.i.b16 %v4439, %v4439
      %4444 = vrot.lane.b32.xlu0 %v4440, 19
      %v4445 = vpop.permute.xlu0 %4444
      %4446 = vrot.lane.b32.xlu0 %v4441, 19
      %v4447 = vpop.permute.xlu0 %4446
      %4448 = vrot.lane.b32.xlu0 %v4442, 19
      %v4449 = vpop.permute.xlu0 %4448
      %4450 = vrot.lane.b32.xlu0 %v4443, 19
      %v4451 = vpop.permute.xlu0 %4450
      %v4452 = vrot.slane %v4445, 7
      %v4453 = vrot.slane %v4447, 7
      %v4454 = vrot.slane %v4449, 7
      %v4455 = vrot.slane %v4451, 7
      %vm4456 = vcmask 154624
      %v4457 = vsel %vm4456, %v4452, %v4445
      %v4458 = vsel %vm4456, %v4453, %v4447
      %v4459 = vsel %vm4456, %v4454, %v4449
      %v4460 = vsel %vm4456, %v4455, %v4451
      %vm4465 = vcmask 1040536
      %vm4466 = vmand %vm4465, %vm4377
      %vm4467 = vmor %vm4381, %vm4466
      %vm4468 = vcmask 411650
      %vm4469 = vmand %vm4468, %vm4384
      %vm4470 = vmor %vm4469, %vm4467
      %v4471 = vld [vmem:[%s194] sm:$0x7]
      %v4472 = vsel %vm4470, %v4457, %v4471
      %4473 = vst [vmem:[%s194] sm:$0x7] %v4472
      %v4474 = vld [vmem:[%s194 + $0x3] sm:$0x7]
      %v4475 = vsel %vm4470, %v4458, %v4474
      %4476 = vst [vmem:[%s194 + $0x3] sm:$0x7] %v4475
      %v4477 = vld [vmem:[%s194 + $0x6] sm:$0x7]
      %v4478 = vsel %vm4470, %v4459, %v4477
      %4479 = vst [vmem:[%s194 + $0x6] sm:$0x7] %v4478
      %v4480 = vld [vmem:[%s194 + $0x9] sm:$0x7]
      %v4481 = vsel %vm4470, %v4460, %v4480
      %4482 = vst [vmem:[%s194 + $0x9] sm:$0x7] %v4481
      %p4483 = scmp.lt.s32.totalorder %s15, 1
      %s4484 = scalar_select %p4483, %s15, 1
      %s4485 = smul.addr %s4484, 48
      %s4486 = sadd.s32 36, %s4485
      %s4487 = scalar_lea.vmem %s4, %s4486
      // Predicated region
      $region37: #{_lambda_.6} parent=35 // pred_check
        %p4488 = pneg %p122
      $region38: #{_lambda_.6} parent=35 // pred_check_branch
        %4490 = sbr.rel (%p4488) target = $region40
      $region39: #{_lambda_.6} parent=35 // pred_region
        _
      $region40: #{_lambda_.6} parent=35 // pred_fallthru
        _
    $region36: #{_lambda_.6} parent=5 // pred_fallthru
      _
    %p4491 = scmp.le.s32.totalorder 2, %s10
    // Predicated region
    $region41: #{_lambda_.6} parent=5 // pred_check
      %p4492 = pneg %p4491
    $region42: #{_lambda_.6} parent=5 // pred_check_branch
      %4494 = sbr.rel (%p4492) target = $region44
    $region43: #{_lambda_.6} parent=5 // pred_region
      %s4495 = ssub.s32 %s10, 2
      // Predicated region
      $region45: #{_lambda_.6} parent=43 // pred_check
        %p4496 = pneg %p128
      $region46: #{_lambda_.6} parent=43 // pred_check_branch
        %4498 = sbr.rel (%p4496) target = $region48
      $region47: #{_lambda_.6} parent=43 // pred_region
        %p4499 = scmp.lt.s32.totalorder %s16, 1
        %s4500 = scalar_select %p4499, %s16, 1
        %s4501 = smul.addr %s4500, 48
        %s4502 = sadd.s32 36, %s4501
        %s4503 = scalar_lea.vmem %s4, %s4502
      $region48: #{_lambda_.6} parent=43 // pred_fallthru
        _
    $region44: #{_lambda_.6} parent=5 // pred_fallthru
      _
  $region6: #{_lambda_.6} parent=0 // loop_footer
    %s14 = sadd.s32 1, %s10
  $region7: #{_lambda_.6} parent=0 // loop_footer_branch
    %9 = sbr.rel target = $region3
  $region8: #{_lambda_.6} parent=0 // loop_exit
    _

</llo_original>
